<compile_context>
chip_gen: v7x
topology: tpu7x:2x2x1
jax: 0.10.0
libtpu: 0.0.40
codegen_flags: <defaults>
</compile_context>

<pallas_src>
import numpy as np
import jax
import jax.numpy as jnp
from jax import lax
from jax.experimental import pallas as pl
from jax.experimental.pallas import tpu as pltpu


# ----------------------------- the fused kernel ------------------------------

def _kernel(x_ref,
            m1_ref, b1_ref, l1_ref, s1_ref,
            m2_ref, b2_ref, l2_ref, s2_ref,
            m3_ref, b3_ref, l3_ref, s3_ref,
            we_ref, be_ref, wn_ref,
            out_ref,
            p2s, p3s, hps):
    f32 = jnp.float32

    def conv_pool(src_ref, m_ref, b_ref, l_ref, s_ref, h):
        # conv3x3 (padding=1) + bias + ReLU: three banded matmuls (one per
        # vertical tap), accumulated in registers/values.
        y = jnp.dot(src_ref[pl.ds(0, h), :], m_ref[0],
                    preferred_element_type=f32)
        y = y + jnp.dot(src_ref[pl.ds(1, h), :], m_ref[1],
                        preferred_element_type=f32)
        y = y + jnp.dot(src_ref[pl.ds(2, h), :], m_ref[2],
                        preferred_element_type=f32)
        y = jnp.maximum(y + b_ref[...], 0.0)
        # 2x2 stride-2 max-pool: row-selection matmuls + max, then
        # lane-selection matmuls + max.  The selection matrices also write the
        # pooled values straight into the next stage's zero-padded layout.
        v = jnp.maximum(jnp.dot(l_ref[0], y, preferred_element_type=f32),
                        jnp.dot(l_ref[1], y, preferred_element_type=f32))
        return jnp.maximum(jnp.dot(v, s_ref[0], preferred_element_type=f32),
                           jnp.dot(v, s_ref[1], preferred_element_type=f32))

    # x_ref: (30, 30) zero-padded 28x28 image (width on lanes).
    p2s[...] = conv_pool(x_ref, m1_ref, b1_ref, l1_ref, s1_ref, 28)  # (16,192)
    p3s[...] = conv_pool(p2s,   m2_ref, b2_ref, l2_ref, s2_ref, 14)  # (9, 216)
    hps[...] = conv_pool(p3s,   m3_ref, b3_ref, l3_ref, s3_ref, 7)   # (3, 144)

    # Embedding linear over the pooled (io, jo, c) grid; PyTorch's
    # h3.view(B,-1) flatten order is folded into we_ref's layout.
    z = be_ref[...]                                                   # (1, E)
    for io in range(3):
        z = z + jnp.dot(hps[pl.ds(io, 1), :], we_ref[io],
                        preferred_element_type=f32)
    # L2 normalize (tiny eps guard; torch.norm has none and would NaN on 0),
    # then cosine similarities against the pre-normalized Wstar columns.
    inv = lax.rsqrt(jnp.maximum(jnp.sum(z * z, axis=1, keepdims=True), 1e-24))
    out_ref[...] = jnp.dot(z * inv, wn_ref[...], preferred_element_type=f32)


# ------------------------- host-side matrix building -------------------------

def _conv_band_matrices(w, width):
    """PyTorch conv weight (Cout, Cin, 3, 3) -> 3 banded matrices (one per
    vertical tap dh) of shape ((width+2)*Cin, width*Cout) so that
      y[i, j*Cout + o] = sum_dh (P[i + dh, :] @ M[dh])[j*Cout + o]
    reproduces conv2d(padding=1) on the zero-padded (row, width*Cin) layout."""
    cout, cin = int(w.shape[0]), int(w.shape[1])
    eye = jnp.eye(width, dtype=jnp.float32)
    mats = []
    for dh in range(3):
        m = jnp.zeros(((width + 2) * cin, width * cout), jnp.float32)
        for dw in range(3):
            band = jnp.kron(eye, w[:, :, dh, dw].T.astype(jnp.float32))
            m = m + jnp.pad(band, ((dw * cin, (2 - dw) * cin), (0, 0)))
        mats.append(m)
    return jnp.stack(mats)                      # (3, (W+2)*Cin, W*Cout)


def _pool_matrices(h, w, c, pad_next):
    """0/1 selection matrices implementing the 2x2 stride-2 max pool plus
    placement into the next stage's zero-padded (row, lane) layout."""
    hn, wn = h // 2, w // 2
    off = 1 if pad_next else 0
    lmat = np.zeros((2, hn + 2 * off, h), np.float32)
    for io in range(hn):
        lmat[0, io + off, 2 * io] = 1.0
        lmat[1, io + off, 2 * io + 1] = 1.0
    smat = np.zeros((2, w * c, (wn + 2 * off) * c), np.float32)
    eye_c = np.eye(c, dtype=np.float32)
    for jo in range(wn):
        dst = slice((jo + off) * c, (jo + off + 1) * c)
        smat[0, 2 * jo * c:(2 * jo + 1) * c, dst] = eye_c
        smat[1, (2 * jo + 1) * c:(2 * jo + 2) * c, dst] = eye_c
    return jnp.asarray(lmat), jnp.asarray(smat)


def _replicated_spec(a):
    ndim = a.ndim
    return pl.BlockSpec(a.shape, lambda b, _n=ndim: (0,) * _n)


# --------------------------------- wrapper ------------------------------------

def model_forward(x_nchw, params):
    B = x_nchw.shape[0]
    emb = params["w_emb"].shape[0]
    n_classes = params["w_star"].shape[0]

    # zero-padded input: one padded image row per sublane row, width on lanes.
    xp = jnp.pad(x_nchw[:, 0].astype(jnp.float32),
                 ((0, 0), (1, 1), (1, 1)))                     # (B, 30, 30)

    m1 = _conv_band_matrices(params["w1"], 28)                 # (3, 30, 336)
    m2 = _conv_band_matrices(params["w2"], 14)                 # (3, 192, 336)
    m3 = _conv_band_matrices(params["w3"], 7)                  # (3, 216, 336)
    b1 = jnp.tile(params["b1"], 28).reshape(1, -1)             # (1, 336)
    b2 = jnp.tile(params["b2"], 14).reshape(1, -1)             # (1, 336)
    b3 = jnp.tile(params["b3"], 7).reshape(1, -1)              # (1, 336)
    l1, s1 = _pool_matrices(28, 28, 12, True)                  # (2,16,28) (2,336,192)
    l2, s2 = _pool_matrices(14, 14, 24, True)                  # (2,9,14)  (2,336,216)
    l3, s3 = _pool_matrices(7, 7, 48, False)                   # (2,3,7)   (2,336,144)

    # Embedding weight regrouped to the pooled (io, jo, c) lane layout,
    # reproducing PyTorch's (C, H, W) flatten order: we[io, jo*48+c, e].
    we = jnp.transpose(params["w_emb"].reshape(emb, 48, 3, 3),
                       (2, 3, 1, 0)).reshape(3, 3 * 48, emb)
    be = params["b_emb"].reshape(1, emb)

    ws = params["w_star"].T                                    # (E, n_classes)
    wn = ws / jnp.maximum(
        jnp.sqrt(jnp.sum(ws * ws, axis=0, keepdims=True)), 1e-12)

    consts = (m1, b1, l1, s1, m2, b2, l2, s2, m3, b3, l3, s3, we, be, wn)

    out = pl.pallas_call(
        _kernel,
        out_shape=jax.ShapeDtypeStruct((B, 1, n_classes), jnp.float32),
        grid=(B,),
        in_specs=[pl.BlockSpec((None, 30, 30), lambda b: (b, 0, 0))]
                 + [_replicated_spec(a) for a in consts],
        out_specs=pl.BlockSpec((None, 1, n_classes), lambda b: (b, 0, 0)),
        scratch_shapes=[
            pltpu.VMEM((16, 16 * 12), jnp.float32),   # stage-2 padded input
            pltpu.VMEM((9, 9 * 24), jnp.float32),     # stage-3 padded input
            pltpu.VMEM((3, 3 * 48), jnp.float32),     # pooled stage-3 tile
        ],
        compiler_params=pltpu.CompilerParams(
            dimension_semantics=("parallel",)),
    )(xp, *consts)
    return out[:, 0, :]


# --------------------------- pure-JAX reference -------------------------------

def reference_forward(x, params):
    hi = lax.Precision.HIGHEST
    dn = ("NCHW", "OIHW", "NCHW")

    def conv(h, w, b):
        y = lax.conv_general_dilated(h, w, (1, 1), "SAME",
                                     dimension_numbers=dn, precision=hi)
        return jnp.maximum(y + b.reshape(1, -1, 1, 1), 0.0)

    def pool(h):
        return lax.reduce_window(h, -jnp.inf, lax.max,
                                 (1, 1, 2, 2), (1, 1, 2, 2), "VALID")

    h = pool(conv(x, params["w1"], params["b1"]))
    h = pool(conv(h, params["w2"], params["b2"]))
    h = pool(conv(h, params["w3"], params["b3"]))
    hf = h.reshape(x.shape[0], -1)
    z = jnp.dot(hf, params["w_emb"].T, precision=hi) + params["b_emb"]
    zn = z / jnp.sqrt(jnp.sum(z * z, axis=1, keepdims=True))
    ws = params["w_star"].T
    wnorm = ws / jnp.sqrt(jnp.sum(ws * ws, axis=0, keepdims=True))
    return jnp.dot(zn, wnorm, precision=hi)


def init_params(key, emb=2, n_classes=10):
    ks = jax.random.split(key, 8)

    def nrm(k, shape, scale):
        return scale * jax.random.normal(k, shape, dtype=jnp.float32)

    return {
        "w1": nrm(ks[0], (12, 1, 3, 3), 0.2),
        "b1": nrm(ks[1], (12,), 0.1),
        "w2": nrm(ks[2], (24, 12, 3, 3), 0.08),
        "b2": nrm(ks[3], (24,), 0.05),
        "w3": nrm(ks[4], (48, 24, 3, 3), 0.06),
        "b3": nrm(ks[5], (48,), 0.05),
        "w_emb": nrm(ks[6], (emb, 48 * 3 * 3), 0.05),   # Linear weight (out, in)
        "b_emb": jnp.zeros((emb,), jnp.float32),
        "w_star": nrm(ks[7], (n_classes, emb), 0.3),    # Wstar_layer.weight
    }


if __name__ == "__main__":
    key = jax.random.PRNGKey(0)
    k_x, k_p = jax.random.split(key)
    # batch=2, single channel, 28x28 (required by the 48*3*3 flatten)
    x = jax.random.normal(k_x, (2, 1, 28, 28), dtype=jnp.float32)
    params = init_params(k_p)

    out = jax.block_until_ready(jax.jit(model_forward)(x, params))
    assert out.shape == (2, 10), out.shape
    assert bool(jnp.all(jnp.isfinite(out)))
    # cosine similarities must lie in [-1, 1]
    assert bool(jnp.all(jnp.abs(out) <= 1.0 + 1e-5))

    ref = reference_forward(x, params)
    err = float(jnp.max(jnp.abs(out - ref)))
    assert err < 5e-3, f"mismatch vs reference: {err}"
    print("KERNEL_OK")
</pallas_src>

<mosaic_0001>
module attributes {stable_mosaic.version = 11 : i64} {
  func.func @_kernel(%arg0: i32, %arg1: memref<1x30x30xf32, #tpu.memory_space<vmem>>, %arg2: memref<3x30x336xf32, #tpu.memory_space<vmem>>, %arg3: memref<1x336xf32, #tpu.memory_space<vmem>>, %arg4: memref<2x16x28xf32, #tpu.memory_space<vmem>>, %arg5: memref<2x336x192xf32, #tpu.memory_space<vmem>>, %arg6: memref<3x192x336xf32, #tpu.memory_space<vmem>>, %arg7: memref<1x336xf32, #tpu.memory_space<vmem>>, %arg8: memref<2x9x14xf32, #tpu.memory_space<vmem>>, %arg9: memref<2x336x216xf32, #tpu.memory_space<vmem>>, %arg10: memref<3x216x336xf32, #tpu.memory_space<vmem>>, %arg11: memref<1x336xf32, #tpu.memory_space<vmem>>, %arg12: memref<2x3x7xf32, #tpu.memory_space<vmem>>, %arg13: memref<2x336x144xf32, #tpu.memory_space<vmem>>, %arg14: memref<3x144x2xf32, #tpu.memory_space<vmem>>, %arg15: memref<1x2xf32, #tpu.memory_space<vmem>>, %arg16: memref<2x10xf32, #tpu.memory_space<vmem>>, %arg17: memref<1x1x10xf32, #tpu.memory_space<vmem>>, %arg18: memref<16x192xf32, #tpu.memory_space<vmem>>, %arg19: memref<9x216xf32, #tpu.memory_space<vmem>>, %arg20: memref<3x144xf32, #tpu.memory_space<vmem>>) attributes {dimension_semantics = [#tpu.dimension_semantics<parallel>], iteration_bounds = array<i64: 2>, scalar_prefetch = 0 : i64, scratch_operands = 3 : i64, tpu.core_type = #tpu.core_type<tc>, window_params = [{transform_indices = @transform_0, window_bounds = array<i64: 1, 30, 30>}, {pipeline_mode = #tpu.pipeline_mode<synchronous>, transform_indices = @transform_1, window_bounds = array<i64: 3, 30, 336>}, {pipeline_mode = #tpu.pipeline_mode<synchronous>, transform_indices = @transform_2, window_bounds = array<i64: 1, 336>}, {pipeline_mode = #tpu.pipeline_mode<synchronous>, transform_indices = @transform_3, window_bounds = array<i64: 2, 16, 28>}, {pipeline_mode = #tpu.pipeline_mode<synchronous>, transform_indices = @transform_4, window_bounds = array<i64: 2, 336, 192>}, {pipeline_mode = #tpu.pipeline_mode<synchronous>, transform_indices = @transform_5, window_bounds = array<i64: 3, 192, 336>}, {pipeline_mode = #tpu.pipeline_mode<synchronous>, transform_indices = @transform_6, window_bounds = array<i64: 1, 336>}, {pipeline_mode = #tpu.pipeline_mode<synchronous>, transform_indices = @transform_7, window_bounds = array<i64: 2, 9, 14>}, {pipeline_mode = #tpu.pipeline_mode<synchronous>, transform_indices = @transform_8, window_bounds = array<i64: 2, 336, 216>}, {pipeline_mode = #tpu.pipeline_mode<synchronous>, transform_indices = @transform_9, window_bounds = array<i64: 3, 216, 336>}, {pipeline_mode = #tpu.pipeline_mode<synchronous>, transform_indices = @transform_10, window_bounds = array<i64: 1, 336>}, {pipeline_mode = #tpu.pipeline_mode<synchronous>, transform_indices = @transform_11, window_bounds = array<i64: 2, 3, 7>}, {pipeline_mode = #tpu.pipeline_mode<synchronous>, transform_indices = @transform_12, window_bounds = array<i64: 2, 336, 144>}, {pipeline_mode = #tpu.pipeline_mode<synchronous>, transform_indices = @transform_13, window_bounds = array<i64: 3, 144, 2>}, {pipeline_mode = #tpu.pipeline_mode<synchronous>, transform_indices = @transform_14, window_bounds = array<i64: 1, 2>}, {pipeline_mode = #tpu.pipeline_mode<synchronous>, transform_indices = @transform_15, window_bounds = array<i64: 2, 10>}, {transform_indices = @transform_16, window_bounds = array<i64: 1, 1, 10>}]} {
    %c0 = arith.constant 0 : index
    %c0_0 = arith.constant 0 : index
    %c0_1 = arith.constant 0 : index
    %0 = vector.load %arg1[%c0, %c0_0, %c0_1] : memref<1x30x30xf32, #tpu.memory_space<vmem>>, vector<1x28x30xf32>
    %1 = vector.shape_cast %0 : vector<1x28x30xf32> to vector<28x30xf32>
    %c0_2 = arith.constant 0 : index
    %c0_3 = arith.constant 0 : index
    %c0_4 = arith.constant 0 : index
    %2 = vector.load %arg2[%c0_2, %c0_3, %c0_4] : memref<3x30x336xf32, #tpu.memory_space<vmem>>, vector<1x30x336xf32>
    %3 = vector.shape_cast %2 : vector<1x30x336xf32> to vector<30x336xf32>
    %cst = arith.constant dense<0.000000e+00> : vector<28x336xf32>
    %4 = tpu.matmul %1, %3, %cst {dimension_numbers = #tpu.dot_dimension_numbers<[1], [0], [0], [1], [0, 0, 1, 1], [], []>} : vector<28x30xf32>, vector<30x336xf32>, vector<28x336xf32> -> vector<28x336xf32>
    %c0_5 = arith.constant 0 : index
    %c1 = arith.constant 1 : index
    %c0_6 = arith.constant 0 : index
    %5 = vector.load %arg1[%c0_5, %c1, %c0_6] : memref<1x30x30xf32, #tpu.memory_space<vmem>>, vector<1x28x30xf32>
    %6 = vector.shape_cast %5 : vector<1x28x30xf32> to vector<28x30xf32>
    %c1_7 = arith.constant 1 : index
    %c0_8 = arith.constant 0 : index
    %c0_9 = arith.constant 0 : index
    %7 = vector.load %arg2[%c1_7, %c0_8, %c0_9] : memref<3x30x336xf32, #tpu.memory_space<vmem>>, vector<1x30x336xf32>
    %8 = vector.shape_cast %7 : vector<1x30x336xf32> to vector<30x336xf32>
    %cst_10 = arith.constant dense<0.000000e+00> : vector<28x336xf32>
    %9 = tpu.matmul %6, %8, %cst_10 {dimension_numbers = #tpu.dot_dimension_numbers<[1], [0], [0], [1], [0, 0, 1, 1], [], []>} : vector<28x30xf32>, vector<30x336xf32>, vector<28x336xf32> -> vector<28x336xf32>
    %10 = arith.addf %4, %9 : vector<28x336xf32>
    %c0_11 = arith.constant 0 : index
    %c2 = arith.constant 2 : index
    %c0_12 = arith.constant 0 : index
    %11 = vector.load %arg1[%c0_11, %c2, %c0_12] : memref<1x30x30xf32, #tpu.memory_space<vmem>>, vector<1x28x30xf32>
    %12 = vector.shape_cast %11 : vector<1x28x30xf32> to vector<28x30xf32>
    %c2_13 = arith.constant 2 : index
    %c0_14 = arith.constant 0 : index
    %c0_15 = arith.constant 0 : index
    %13 = vector.load %arg2[%c2_13, %c0_14, %c0_15] : memref<3x30x336xf32, #tpu.memory_space<vmem>>, vector<1x30x336xf32>
    %14 = vector.shape_cast %13 : vector<1x30x336xf32> to vector<30x336xf32>
    %cst_16 = arith.constant dense<0.000000e+00> : vector<28x336xf32>
    %15 = tpu.matmul %12, %14, %cst_16 {dimension_numbers = #tpu.dot_dimension_numbers<[1], [0], [0], [1], [0, 0, 1, 1], [], []>} : vector<28x30xf32>, vector<30x336xf32>, vector<28x336xf32> -> vector<28x336xf32>
    %16 = arith.addf %10, %15 : vector<28x336xf32>
    %c0_17 = arith.constant 0 : index
    %c0_18 = arith.constant 0 : index
    %17 = vector.load %arg3[%c0_17, %c0_18] : memref<1x336xf32, #tpu.memory_space<vmem>>, vector<1x336xf32>
    %18 = vector.broadcast %17 : vector<1x336xf32> to vector<28x336xf32>
    %19 = arith.addf %16, %18 : vector<28x336xf32>
    %cst_19 = arith.constant 0.000000e+00 : f32
    %20 = vector.broadcast %cst_19 : f32 to vector<28x336xf32>
    %21 = arith.maximumf %19, %20 : vector<28x336xf32>
    %c0_20 = arith.constant 0 : index
    %c0_21 = arith.constant 0 : index
    %c0_22 = arith.constant 0 : index
    %22 = vector.load %arg4[%c0_20, %c0_21, %c0_22] : memref<2x16x28xf32, #tpu.memory_space<vmem>>, vector<1x16x28xf32>
    %23 = vector.shape_cast %22 : vector<1x16x28xf32> to vector<16x28xf32>
    %cst_23 = arith.constant dense<0.000000e+00> : vector<16x336xf32>
    %24 = tpu.matmul %23, %21, %cst_23 {dimension_numbers = #tpu.dot_dimension_numbers<[1], [0], [0], [1], [0, 0, 1, 1], [], []>} : vector<16x28xf32>, vector<28x336xf32>, vector<16x336xf32> -> vector<16x336xf32>
    %c1_24 = arith.constant 1 : index
    %c0_25 = arith.constant 0 : index
    %c0_26 = arith.constant 0 : index
    %25 = vector.load %arg4[%c1_24, %c0_25, %c0_26] : memref<2x16x28xf32, #tpu.memory_space<vmem>>, vector<1x16x28xf32>
    %26 = vector.shape_cast %25 : vector<1x16x28xf32> to vector<16x28xf32>
    %cst_27 = arith.constant dense<0.000000e+00> : vector<16x336xf32>
    %27 = tpu.matmul %26, %21, %cst_27 {dimension_numbers = #tpu.dot_dimension_numbers<[1], [0], [0], [1], [0, 0, 1, 1], [], []>} : vector<16x28xf32>, vector<28x336xf32>, vector<16x336xf32> -> vector<16x336xf32>
    %28 = arith.maximumf %24, %27 : vector<16x336xf32>
    %c0_28 = arith.constant 0 : index
    %c0_29 = arith.constant 0 : index
    %c0_30 = arith.constant 0 : index
    %29 = vector.load %arg5[%c0_28, %c0_29, %c0_30] : memref<2x336x192xf32, #tpu.memory_space<vmem>>, vector<1x336x192xf32>
    %30 = vector.shape_cast %29 : vector<1x336x192xf32> to vector<336x192xf32>
    %cst_31 = arith.constant dense<0.000000e+00> : vector<16x192xf32>
    %31 = tpu.matmul %28, %30, %cst_31 {dimension_numbers = #tpu.dot_dimension_numbers<[1], [0], [0], [1], [0, 0, 1, 1], [], []>} : vector<16x336xf32>, vector<336x192xf32>, vector<16x192xf32> -> vector<16x192xf32>
    %c1_32 = arith.constant 1 : index
    %c0_33 = arith.constant 0 : index
    %c0_34 = arith.constant 0 : index
    %32 = vector.load %arg5[%c1_32, %c0_33, %c0_34] : memref<2x336x192xf32, #tpu.memory_space<vmem>>, vector<1x336x192xf32>
    %33 = vector.shape_cast %32 : vector<1x336x192xf32> to vector<336x192xf32>
    %cst_35 = arith.constant dense<0.000000e+00> : vector<16x192xf32>
    %34 = tpu.matmul %28, %33, %cst_35 {dimension_numbers = #tpu.dot_dimension_numbers<[1], [0], [0], [1], [0, 0, 1, 1], [], []>} : vector<16x336xf32>, vector<336x192xf32>, vector<16x192xf32> -> vector<16x192xf32>
    %35 = arith.maximumf %31, %34 : vector<16x192xf32>
    %c0_36 = arith.constant 0 : index
    %c0_37 = arith.constant 0 : index
    %36 = vector.load %arg18[%c0_36, %c0_37] : memref<16x192xf32, #tpu.memory_space<vmem>>, vector<16x192xf32>
    tpu.vector_store %arg18[%c0_36, %c0_37], %35 {strides = array<i32>} : memref<16x192xf32, #tpu.memory_space<vmem>>, vector<16x192xf32>,
    %c0_38 = arith.constant 0 : index
    %c0_39 = arith.constant 0 : index
    %37 = vector.load %arg18[%c0_38, %c0_39] : memref<16x192xf32, #tpu.memory_space<vmem>>, vector<14x192xf32>
    %c0_40 = arith.constant 0 : index
    %c0_41 = arith.constant 0 : index
    %c0_42 = arith.constant 0 : index
    %38 = vector.load %arg6[%c0_40, %c0_41, %c0_42] : memref<3x192x336xf32, #tpu.memory_space<vmem>>, vector<1x192x336xf32>
    %39 = vector.shape_cast %38 : vector<1x192x336xf32> to vector<192x336xf32>
    %cst_43 = arith.constant dense<0.000000e+00> : vector<14x336xf32>
    %40 = tpu.matmul %37, %39, %cst_43 {dimension_numbers = #tpu.dot_dimension_numbers<[1], [0], [0], [1], [0, 0, 1, 1], [], []>} : vector<14x192xf32>, vector<192x336xf32>, vector<14x336xf32> -> vector<14x336xf32>
    %c1_44 = arith.constant 1 : index
    %c0_45 = arith.constant 0 : index
    %41 = vector.load %arg18[%c1_44, %c0_45] : memref<16x192xf32, #tpu.memory_space<vmem>>, vector<14x192xf32>
    %c1_46 = arith.constant 1 : index
    %c0_47 = arith.constant 0 : index
    %c0_48 = arith.constant 0 : index
    %42 = vector.load %arg6[%c1_46, %c0_47, %c0_48] : memref<3x192x336xf32, #tpu.memory_space<vmem>>, vector<1x192x336xf32>
    %43 = vector.shape_cast %42 : vector<1x192x336xf32> to vector<192x336xf32>
    %cst_49 = arith.constant dense<0.000000e+00> : vector<14x336xf32>
    %44 = tpu.matmul %41, %43, %cst_49 {dimension_numbers = #tpu.dot_dimension_numbers<[1], [0], [0], [1], [0, 0, 1, 1], [], []>} : vector<14x192xf32>, vector<192x336xf32>, vector<14x336xf32> -> vector<14x336xf32>
    %45 = arith.addf %40, %44 : vector<14x336xf32>
    %c2_50 = arith.constant 2 : index
    %c0_51 = arith.constant 0 : index
    %46 = vector.load %arg18[%c2_50, %c0_51] : memref<16x192xf32, #tpu.memory_space<vmem>>, vector<14x192xf32>
    %c2_52 = arith.constant 2 : index
    %c0_53 = arith.constant 0 : index
    %c0_54 = arith.constant 0 : index
    %47 = vector.load %arg6[%c2_52, %c0_53, %c0_54] : memref<3x192x336xf32, #tpu.memory_space<vmem>>, vector<1x192x336xf32>
    %48 = vector.shape_cast %47 : vector<1x192x336xf32> to vector<192x336xf32>
    %cst_55 = arith.constant dense<0.000000e+00> : vector<14x336xf32>
    %49 = tpu.matmul %46, %48, %cst_55 {dimension_numbers = #tpu.dot_dimension_numbers<[1], [0], [0], [1], [0, 0, 1, 1], [], []>} : vector<14x192xf32>, vector<192x336xf32>, vector<14x336xf32> -> vector<14x336xf32>
    %50 = arith.addf %45, %49 : vector<14x336xf32>
    %c0_56 = arith.constant 0 : index
    %c0_57 = arith.constant 0 : index
    %51 = vector.load %arg7[%c0_56, %c0_57] : memref<1x336xf32, #tpu.memory_space<vmem>>, vector<1x336xf32>
    %52 = vector.broadcast %51 : vector<1x336xf32> to vector<14x336xf32>
    %53 = arith.addf %50, %52 : vector<14x336xf32>
    %cst_58 = arith.constant 0.000000e+00 : f32
    %54 = vector.broadcast %cst_58 : f32 to vector<14x336xf32>
    %55 = arith.maximumf %53, %54 : vector<14x336xf32>
    %c0_59 = arith.constant 0 : index
    %c0_60 = arith.constant 0 : index
    %c0_61 = arith.constant 0 : index
    %56 = vector.load %arg8[%c0_59, %c0_60, %c0_61] : memref<2x9x14xf32, #tpu.memory_space<vmem>>, vector<1x9x14xf32>
    %57 = vector.shape_cast %56 : vector<1x9x14xf32> to vector<9x14xf32>
    %cst_62 = arith.constant dense<0.000000e+00> : vector<9x336xf32>
    %58 = tpu.matmul %57, %55, %cst_62 {dimension_numbers = #tpu.dot_dimension_numbers<[1], [0], [0], [1], [0, 0, 1, 1], [], []>} : vector<9x14xf32>, vector<14x336xf32>, vector<9x336xf32> -> vector<9x336xf32>
    %c1_63 = arith.constant 1 : index
    %c0_64 = arith.constant 0 : index
    %c0_65 = arith.constant 0 : index
    %59 = vector.load %arg8[%c1_63, %c0_64, %c0_65] : memref<2x9x14xf32, #tpu.memory_space<vmem>>, vector<1x9x14xf32>
    %60 = vector.shape_cast %59 : vector<1x9x14xf32> to vector<9x14xf32>
    %cst_66 = arith.constant dense<0.000000e+00> : vector<9x336xf32>
    %61 = tpu.matmul %60, %55, %cst_66 {dimension_numbers = #tpu.dot_dimension_numbers<[1], [0], [0], [1], [0, 0, 1, 1], [], []>} : vector<9x14xf32>, vector<14x336xf32>, vector<9x336xf32> -> vector<9x336xf32>
    %62 = arith.maximumf %58, %61 : vector<9x336xf32>
    %c0_67 = arith.constant 0 : index
    %c0_68 = arith.constant 0 : index
    %c0_69 = arith.constant 0 : index
    %63 = vector.load %arg9[%c0_67, %c0_68, %c0_69] : memref<2x336x216xf32, #tpu.memory_space<vmem>>, vector<1x336x216xf32>
    %64 = vector.shape_cast %63 : vector<1x336x216xf32> to vector<336x216xf32>
    %cst_70 = arith.constant dense<0.000000e+00> : vector<9x216xf32>
    %65 = tpu.matmul %62, %64, %cst_70 {dimension_numbers = #tpu.dot_dimension_numbers<[1], [0], [0], [1], [0, 0, 1, 1], [], []>} : vector<9x336xf32>, vector<336x216xf32>, vector<9x216xf32> -> vector<9x216xf32>
    %c1_71 = arith.constant 1 : index
    %c0_72 = arith.constant 0 : index
    %c0_73 = arith.constant 0 : index
    %66 = vector.load %arg9[%c1_71, %c0_72, %c0_73] : memref<2x336x216xf32, #tpu.memory_space<vmem>>, vector<1x336x216xf32>
    %67 = vector.shape_cast %66 : vector<1x336x216xf32> to vector<336x216xf32>
    %cst_74 = arith.constant dense<0.000000e+00> : vector<9x216xf32>
    %68 = tpu.matmul %62, %67, %cst_74 {dimension_numbers = #tpu.dot_dimension_numbers<[1], [0], [0], [1], [0, 0, 1, 1], [], []>} : vector<9x336xf32>, vector<336x216xf32>, vector<9x216xf32> -> vector<9x216xf32>
    %69 = arith.maximumf %65, %68 : vector<9x216xf32>
    %c0_75 = arith.constant 0 : index
    %c0_76 = arith.constant 0 : index
    %70 = vector.load %arg19[%c0_75, %c0_76] : memref<9x216xf32, #tpu.memory_space<vmem>>, vector<9x216xf32>
    tpu.vector_store %arg19[%c0_75, %c0_76], %69 {strides = array<i32>} : memref<9x216xf32, #tpu.memory_space<vmem>>, vector<9x216xf32>,
    %c0_77 = arith.constant 0 : index
    %c0_78 = arith.constant 0 : index
    %71 = vector.load %arg19[%c0_77, %c0_78] : memref<9x216xf32, #tpu.memory_space<vmem>>, vector<7x216xf32>
    %c0_79 = arith.constant 0 : index
    %c0_80 = arith.constant 0 : index
    %c0_81 = arith.constant 0 : index
    %72 = vector.load %arg10[%c0_79, %c0_80, %c0_81] : memref<3x216x336xf32, #tpu.memory_space<vmem>>, vector<1x216x336xf32>
    %73 = vector.shape_cast %72 : vector<1x216x336xf32> to vector<216x336xf32>
    %cst_82 = arith.constant dense<0.000000e+00> : vector<7x336xf32>
    %74 = tpu.matmul %71, %73, %cst_82 {dimension_numbers = #tpu.dot_dimension_numbers<[1], [0], [0], [1], [0, 0, 1, 1], [], []>} : vector<7x216xf32>, vector<216x336xf32>, vector<7x336xf32> -> vector<7x336xf32>
    %c1_83 = arith.constant 1 : index
    %c0_84 = arith.constant 0 : index
    %75 = vector.load %arg19[%c1_83, %c0_84] : memref<9x216xf32, #tpu.memory_space<vmem>>, vector<7x216xf32>
    %c1_85 = arith.constant 1 : index
    %c0_86 = arith.constant 0 : index
    %c0_87 = arith.constant 0 : index
    %76 = vector.load %arg10[%c1_85, %c0_86, %c0_87] : memref<3x216x336xf32, #tpu.memory_space<vmem>>, vector<1x216x336xf32>
    %77 = vector.shape_cast %76 : vector<1x216x336xf32> to vector<216x336xf32>
    %cst_88 = arith.constant dense<0.000000e+00> : vector<7x336xf32>
    %78 = tpu.matmul %75, %77, %cst_88 {dimension_numbers = #tpu.dot_dimension_numbers<[1], [0], [0], [1], [0, 0, 1, 1], [], []>} : vector<7x216xf32>, vector<216x336xf32>, vector<7x336xf32> -> vector<7x336xf32>
    %79 = arith.addf %74, %78 : vector<7x336xf32>
    %c2_89 = arith.constant 2 : index
    %c0_90 = arith.constant 0 : index
    %80 = vector.load %arg19[%c2_89, %c0_90] : memref<9x216xf32, #tpu.memory_space<vmem>>, vector<7x216xf32>
    %c2_91 = arith.constant 2 : index
    %c0_92 = arith.constant 0 : index
    %c0_93 = arith.constant 0 : index
    %81 = vector.load %arg10[%c2_91, %c0_92, %c0_93] : memref<3x216x336xf32, #tpu.memory_space<vmem>>, vector<1x216x336xf32>
    %82 = vector.shape_cast %81 : vector<1x216x336xf32> to vector<216x336xf32>
    %cst_94 = arith.constant dense<0.000000e+00> : vector<7x336xf32>
    %83 = tpu.matmul %80, %82, %cst_94 {dimension_numbers = #tpu.dot_dimension_numbers<[1], [0], [0], [1], [0, 0, 1, 1], [], []>} : vector<7x216xf32>, vector<216x336xf32>, vector<7x336xf32> -> vector<7x336xf32>
    %84 = arith.addf %79, %83 : vector<7x336xf32>
    %c0_95 = arith.constant 0 : index
    %c0_96 = arith.constant 0 : index
    %85 = vector.load %arg11[%c0_95, %c0_96] : memref<1x336xf32, #tpu.memory_space<vmem>>, vector<1x336xf32>
    %86 = vector.broadcast %85 : vector<1x336xf32> to vector<7x336xf32>
    %87 = arith.addf %84, %86 : vector<7x336xf32>
    %cst_97 = arith.constant 0.000000e+00 : f32
    %88 = vector.broadcast %cst_97 : f32 to vector<7x336xf32>
    %89 = arith.maximumf %87, %88 : vector<7x336xf32>
    %c0_98 = arith.constant 0 : index
    %c0_99 = arith.constant 0 : index
    %c0_100 = arith.constant 0 : index
    %90 = vector.load %arg12[%c0_98, %c0_99, %c0_100] : memref<2x3x7xf32, #tpu.memory_space<vmem>>, vector<1x3x7xf32>
    %91 = vector.shape_cast %90 : vector<1x3x7xf32> to vector<3x7xf32>
    %cst_101 = arith.constant dense<0.000000e+00> : vector<3x336xf32>
    %92 = tpu.matmul %91, %89, %cst_101 {dimension_numbers = #tpu.dot_dimension_numbers<[1], [0], [0], [1], [0, 0, 1, 1], [], []>} : vector<3x7xf32>, vector<7x336xf32>, vector<3x336xf32> -> vector<3x336xf32>
    %c1_102 = arith.constant 1 : index
    %c0_103 = arith.constant 0 : index
    %c0_104 = arith.constant 0 : index
    %93 = vector.load %arg12[%c1_102, %c0_103, %c0_104] : memref<2x3x7xf32, #tpu.memory_space<vmem>>, vector<1x3x7xf32>
    %94 = vector.shape_cast %93 : vector<1x3x7xf32> to vector<3x7xf32>
    %cst_105 = arith.constant dense<0.000000e+00> : vector<3x336xf32>
    %95 = tpu.matmul %94, %89, %cst_105 {dimension_numbers = #tpu.dot_dimension_numbers<[1], [0], [0], [1], [0, 0, 1, 1], [], []>} : vector<3x7xf32>, vector<7x336xf32>, vector<3x336xf32> -> vector<3x336xf32>
    %96 = arith.maximumf %92, %95 : vector<3x336xf32>
    %c0_106 = arith.constant 0 : index
    %c0_107 = arith.constant 0 : index
    %c0_108 = arith.constant 0 : index
    %97 = vector.load %arg13[%c0_106, %c0_107, %c0_108] : memref<2x336x144xf32, #tpu.memory_space<vmem>>, vector<1x336x144xf32>
    %98 = vector.shape_cast %97 : vector<1x336x144xf32> to vector<336x144xf32>
    %cst_109 = arith.constant dense<0.000000e+00> : vector<3x144xf32>
    %99 = tpu.matmul %96, %98, %cst_109 {dimension_numbers = #tpu.dot_dimension_numbers<[1], [0], [0], [1], [0, 0, 1, 1], [], []>} : vector<3x336xf32>, vector<336x144xf32>, vector<3x144xf32> -> vector<3x144xf32>
    %c1_110 = arith.constant 1 : index
    %c0_111 = arith.constant 0 : index
    %c0_112 = arith.constant 0 : index
    %100 = vector.load %arg13[%c1_110, %c0_111, %c0_112] : memref<2x336x144xf32, #tpu.memory_space<vmem>>, vector<1x336x144xf32>
    %101 = vector.shape_cast %100 : vector<1x336x144xf32> to vector<336x144xf32>
    %cst_113 = arith.constant dense<0.000000e+00> : vector<3x144xf32>
    %102 = tpu.matmul %96, %101, %cst_113 {dimension_numbers = #tpu.dot_dimension_numbers<[1], [0], [0], [1], [0, 0, 1, 1], [], []>} : vector<3x336xf32>, vector<336x144xf32>, vector<3x144xf32> -> vector<3x144xf32>
    %103 = arith.maximumf %99, %102 : vector<3x144xf32>
    %c0_114 = arith.constant 0 : index
    %c0_115 = arith.constant 0 : index
    %104 = vector.load %arg20[%c0_114, %c0_115] : memref<3x144xf32, #tpu.memory_space<vmem>>, vector<3x144xf32>
    tpu.vector_store %arg20[%c0_114, %c0_115], %103 {strides = array<i32>} : memref<3x144xf32, #tpu.memory_space<vmem>>, vector<3x144xf32>,
    %c0_116 = arith.constant 0 : index
    %c0_117 = arith.constant 0 : index
    %105 = vector.load %arg15[%c0_116, %c0_117] : memref<1x2xf32, #tpu.memory_space<vmem>>, vector<1x2xf32>
    %c0_118 = arith.constant 0 : index
    %c0_119 = arith.constant 0 : index
    %106 = vector.load %arg20[%c0_118, %c0_119] : memref<3x144xf32, #tpu.memory_space<vmem>>, vector<1x144xf32>
    %c0_120 = arith.constant 0 : index
    %c0_121 = arith.constant 0 : index
    %c0_122 = arith.constant 0 : index
    %107 = vector.load %arg14[%c0_120, %c0_121, %c0_122] : memref<3x144x2xf32, #tpu.memory_space<vmem>>, vector<1x144x2xf32>
    %108 = vector.shape_cast %107 : vector<1x144x2xf32> to vector<144x2xf32>
    %cst_123 = arith.constant dense<0.000000e+00> : vector<1x2xf32>
    %109 = tpu.matmul %106, %108, %cst_123 {dimension_numbers = #tpu.dot_dimension_numbers<[1], [0], [0], [1], [0, 0, 1, 1], [], []>} : vector<1x144xf32>, vector<144x2xf32>, vector<1x2xf32> -> vector<1x2xf32>
    %110 = arith.addf %105, %109 : vector<1x2xf32>
    %c1_124 = arith.constant 1 : index
    %c0_125 = arith.constant 0 : index
    %111 = vector.load %arg20[%c1_124, %c0_125] : memref<3x144xf32, #tpu.memory_space<vmem>>, vector<1x144xf32>
    %c1_126 = arith.constant 1 : index
    %c0_127 = arith.constant 0 : index
    %c0_128 = arith.constant 0 : index
    %112 = vector.load %arg14[%c1_126, %c0_127, %c0_128] : memref<3x144x2xf32, #tpu.memory_space<vmem>>, vector<1x144x2xf32>
    %113 = vector.shape_cast %112 : vector<1x144x2xf32> to vector<144x2xf32>
    %cst_129 = arith.constant dense<0.000000e+00> : vector<1x2xf32>
    %114 = tpu.matmul %111, %113, %cst_129 {dimension_numbers = #tpu.dot_dimension_numbers<[1], [0], [0], [1], [0, 0, 1, 1], [], []>} : vector<1x144xf32>, vector<144x2xf32>, vector<1x2xf32> -> vector<1x2xf32>
    %115 = arith.addf %110, %114 : vector<1x2xf32>
    %c2_130 = arith.constant 2 : index
    %c0_131 = arith.constant 0 : index
    %116 = vector.load %arg20[%c2_130, %c0_131] : memref<3x144xf32, #tpu.memory_space<vmem>>, vector<1x144xf32>
    %c2_132 = arith.constant 2 : index
    %c0_133 = arith.constant 0 : index
    %c0_134 = arith.constant 0 : index
    %117 = vector.load %arg14[%c2_132, %c0_133, %c0_134] : memref<3x144x2xf32, #tpu.memory_space<vmem>>, vector<1x144x2xf32>
    %118 = vector.shape_cast %117 : vector<1x144x2xf32> to vector<144x2xf32>
    %cst_135 = arith.constant dense<0.000000e+00> : vector<1x2xf32>
    %119 = tpu.matmul %116, %118, %cst_135 {dimension_numbers = #tpu.dot_dimension_numbers<[1], [0], [0], [1], [0, 0, 1, 1], [], []>} : vector<1x144xf32>, vector<144x2xf32>, vector<1x2xf32> -> vector<1x2xf32>
    %120 = arith.addf %115, %119 : vector<1x2xf32>
    %121 = arith.mulf %120, %120 : vector<1x2xf32>
    %cst_136 = arith.constant dense<0.000000e+00> : vector<1xf32>
    %122 = vector.multi_reduction <add>, %121, %cst_136 [1] : vector<1x2xf32> to vector<1xf32>
    %123 = vector.shape_cast %122 : vector<1xf32> to vector<1x1xf32>
    %cst_137 = arith.constant 1.000000e-24 : f32
    %124 = vector.broadcast %cst_137 : f32 to vector<1x1xf32>
    %125 = arith.maximumf %123, %124 : vector<1x1xf32>
    %126 = math.rsqrt %125 : vector<1x1xf32>
    %127 = vector.broadcast %126 : vector<1x1xf32> to vector<1x2xf32>
    %128 = arith.mulf %120, %127 : vector<1x2xf32>
    %c0_138 = arith.constant 0 : index
    %c0_139 = arith.constant 0 : index
    %129 = vector.load %arg16[%c0_138, %c0_139] : memref<2x10xf32, #tpu.memory_space<vmem>>, vector<2x10xf32>
    %cst_140 = arith.constant dense<0.000000e+00> : vector<1x10xf32>
    %130 = tpu.matmul %128, %129, %cst_140 {dimension_numbers = #tpu.dot_dimension_numbers<[1], [0], [0], [1], [0, 0, 1, 1], [], []>} : vector<1x2xf32>, vector<2x10xf32>, vector<1x10xf32> -> vector<1x10xf32>
    %c0_141 = arith.constant 0 : index
    %c0_142 = arith.constant 0 : index
    %c0_143 = arith.constant 0 : index
    %131 = vector.load %arg17[%c0_141, %c0_142, %c0_143] : memref<1x1x10xf32, #tpu.memory_space<vmem>>, vector<1x1x10xf32>
    %132 = vector.shape_cast %131 : vector<1x1x10xf32> to vector<1x10xf32>
    %133 = vector.shape_cast %130 : vector<1x10xf32> to vector<1x1x10xf32>
    tpu.vector_store %arg17[%c0_141, %c0_142, %c0_143], %133 {strides = array<i32>} : memref<1x1x10xf32, #tpu.memory_space<vmem>>, vector<1x1x10xf32>,
    return
  }
  func.func @transform_0(%arg0: i32) -> (i32, i32, i32) {
    %c0_i32 = arith.constant 0 : i32
    %c0_i32_0 = arith.constant 0 : i32
    %c0_i32_1 = arith.constant 0 : i32
    return %arg0, %c0_i32, %c0_i32_0 : i32, i32, i32
  }
  func.func @transform_1(%arg0: i32) -> (i32, i32, i32) {
    %c0_i32 = arith.constant 0 : i32
    %c0_i32_0 = arith.constant 0 : i32
    %c0_i32_1 = arith.constant 0 : i32
    %c0_i32_2 = arith.constant 0 : i32
    return %c0_i32, %c0_i32_0, %c0_i32_1 : i32, i32, i32
  }
  func.func @transform_2(%arg0: i32) -> (i32, i32) {
    %c0_i32 = arith.constant 0 : i32
    %c0_i32_0 = arith.constant 0 : i32
    %c0_i32_1 = arith.constant 0 : i32
    return %c0_i32, %c0_i32_0 : i32, i32
  }
  func.func @transform_3(%arg0: i32) -> (i32, i32, i32) {
    %c0_i32 = arith.constant 0 : i32
    %c0_i32_0 = arith.constant 0 : i32
    %c0_i32_1 = arith.constant 0 : i32
    %c0_i32_2 = arith.constant 0 : i32
    return %c0_i32, %c0_i32_0, %c0_i32_1 : i32, i32, i32
  }
  func.func @transform_4(%arg0: i32) -> (i32, i32, i32) {
    %c0_i32 = arith.constant 0 : i32
    %c0_i32_0 = arith.constant 0 : i32
    %c0_i32_1 = arith.constant 0 : i32
    %c0_i32_2 = arith.constant 0 : i32
    return %c0_i32, %c0_i32_0, %c0_i32_1 : i32, i32, i32
  }
  func.func @transform_5(%arg0: i32) -> (i32, i32, i32) {
    %c0_i32 = arith.constant 0 : i32
    %c0_i32_0 = arith.constant 0 : i32
    %c0_i32_1 = arith.constant 0 : i32
    %c0_i32_2 = arith.constant 0 : i32
    return %c0_i32, %c0_i32_0, %c0_i32_1 : i32, i32, i32
  }
  func.func @transform_6(%arg0: i32) -> (i32, i32) {
    %c0_i32 = arith.constant 0 : i32
    %c0_i32_0 = arith.constant 0 : i32
    %c0_i32_1 = arith.constant 0 : i32
    return %c0_i32, %c0_i32_0 : i32, i32
  }
  func.func @transform_7(%arg0: i32) -> (i32, i32, i32) {
    %c0_i32 = arith.constant 0 : i32
    %c0_i32_0 = arith.constant 0 : i32
    %c0_i32_1 = arith.constant 0 : i32
    %c0_i32_2 = arith.constant 0 : i32
    return %c0_i32, %c0_i32_0, %c0_i32_1 : i32, i32, i32
  }
  func.func @transform_8(%arg0: i32) -> (i32, i32, i32) {
    %c0_i32 = arith.constant 0 : i32
    %c0_i32_0 = arith.constant 0 : i32
    %c0_i32_1 = arith.constant 0 : i32
    %c0_i32_2 = arith.constant 0 : i32
    return %c0_i32, %c0_i32_0, %c0_i32_1 : i32, i32, i32
  }
  func.func @transform_9(%arg0: i32) -> (i32, i32, i32) {
    %c0_i32 = arith.constant 0 : i32
    %c0_i32_0 = arith.constant 0 : i32
    %c0_i32_1 = arith.constant 0 : i32
    %c0_i32_2 = arith.constant 0 : i32
    return %c0_i32, %c0_i32_0, %c0_i32_1 : i32, i32, i32
  }
  func.func @transform_10(%arg0: i32) -> (i32, i32) {
    %c0_i32 = arith.constant 0 : i32
    %c0_i32_0 = arith.constant 0 : i32
    %c0_i32_1 = arith.constant 0 : i32
    return %c0_i32, %c0_i32_0 : i32, i32
  }
  func.func @transform_11(%arg0: i32) -> (i32, i32, i32) {
    %c0_i32 = arith.constant 0 : i32
    %c0_i32_0 = arith.constant 0 : i32
    %c0_i32_1 = arith.constant 0 : i32
    %c0_i32_2 = arith.constant 0 : i32
    return %c0_i32, %c0_i32_0, %c0_i32_1 : i32, i32, i32
  }
  func.func @transform_12(%arg0: i32) -> (i32, i32, i32) {
    %c0_i32 = arith.constant 0 : i32
    %c0_i32_0 = arith.constant 0 : i32
    %c0_i32_1 = arith.constant 0 : i32
    %c0_i32_2 = arith.constant 0 : i32
    return %c0_i32, %c0_i32_0, %c0_i32_1 : i32, i32, i32
  }
  func.func @transform_13(%arg0: i32) -> (i32, i32, i32) {
    %c0_i32 = arith.constant 0 : i32
    %c0_i32_0 = arith.constant 0 : i32
    %c0_i32_1 = arith.constant 0 : i32
    %c0_i32_2 = arith.constant 0 : i32
    return %c0_i32, %c0_i32_0, %c0_i32_1 : i32, i32, i32
  }
  func.func @transform_14(%arg0: i32) -> (i32, i32) {
    %c0_i32 = arith.constant 0 : i32
    %c0_i32_0 = arith.constant 0 : i32
    %c0_i32_1 = arith.constant 0 : i32
    return %c0_i32, %c0_i32_0 : i32, i32
  }
  func.func @transform_15(%arg0: i32) -> (i32, i32) {
    %c0_i32 = arith.constant 0 : i32
    %c0_i32_0 = arith.constant 0 : i32
    %c0_i32_1 = arith.constant 0 : i32
    return %c0_i32, %c0_i32_0 : i32, i32
  }
  func.func @transform_16(%arg0: i32) -> (i32, i32, i32) {
    %c0_i32 = arith.constant 0 : i32
    %c0_i32_0 = arith.constant 0 : i32
    %c0_i32_1 = arith.constant 0 : i32
    return %arg0, %c0_i32, %c0_i32_0 : i32, i32, i32
  }
}

</mosaic_0001>

<llo_original>
// kernel: tile.19
$region0: #{tile.19}
  %s0 = inlined_call_operand.vmem [shape: f32[28,12], index: 0, kind: input, shape index: {}]
  %s1 = inlined_call_operand.vmem [shape: f32[1,336], index: 1, kind: output, shape index: {}]
  $region1: #{tile.19} parent=0
    #allocation0 [shape = 'u8[12288]{0}', space=vmem, size = 0x3000, scoped, tag = 'scoped mem for output reshape']
    %v2 = vld [vmem:[%s0] sm:$0x1]
    %vm3 = vcmask 97280
    %4 = vst.msk [vmem:[#allocation0] sm:$0x1] %vm3, %v2
    %s5 = scalar_lea.vmem %s0, 21
    %v6 = vld [vmem:[%s5] sm:$0x1]
    %s7 = scalar_lea.vmem %s0, 21
    %v8 = vld [vmem:[%s7] sm:$0x1]
    %vm9 = vcmask 31744
    %v10 = vsel %vm9, %v8, %v6
    %11 = vrot.lane.b32.xlu0 %v10, 124
    %v12 = vpop.permute.xlu0 %11
    %vm13 = vcmask 64512
    %s14 = scalar_lea.vmem [#allocation0], 16
    %15 = vst.msk [vmem:[%s14] sm:$0x1] %vm13, %v12
    %vm16 = vcmask 1048544
    %s17 = scalar_lea.vmem [#allocation0], 8
    %18 = vst.msk [vmem:[%s17] sm:$0x1] %vm16, %v12
    %s19 = scalar_lea.vmem %s0, 10
    %v20 = vld [vmem:[%s19] sm:$0x1]
    %s21 = scalar_lea.vmem %s0, 10
    %v22 = vld [vmem:[%s21] sm:$0x1]
    %vm23 = vcmask 64512
    %v24 = vsel %vm23, %v22, %v20
    %25 = vrot.lane.b32.xlu0 %v24, 120
    %v26 = vpop.permute.xlu0 %25
    %vm27 = vcmask 31744
    %s28 = scalar_lea.vmem [#allocation0], 8
    %29 = vst.msk [vmem:[%s28] sm:$0x1] %vm27, %v26
    %vm30 = vcmask 1048512
    %31 = vst.msk [vmem:[#allocation0] sm:$0x1] %vm30, %v26
    %s32 = scalar_lea.vmem %s0, 20
    %v33 = vld [vmem:[%s32] sm:$0x1]
    %34 = vrot.lane.b32.xlu0 %v33, 112
    %v35 = vpop.permute.xlu0 %34
    %vm36 = vcmask 1015680
    %s37 = scalar_lea.vmem [#allocation0], 8
    %38 = vst.msk [vmem:[%s37] sm:$0x1] %vm36, %v35
    %s39 = scalar_lea.vmem %s0, 9
    %v40 = vld [vmem:[%s39] sm:$0x1]
    %41 = vrot.lane.b32.xlu0 %v40, 108
    %v42 = vpop.permute.xlu0 %41
    %vm43 = vcmask 982880
    %44 = vst.msk [vmem:[#allocation0] sm:$0x1] %vm43, %v42
    %s45 = scalar_lea.vmem %s0, 19
    %v46 = vld [vmem:[%s45] sm:$0x1]
    %47 = vrot.lane.b32.xlu0 %v46, 100
    %v48 = vpop.permute.xlu0 %47
    %vm49 = vcmask 917280
    %s50 = scalar_lea.vmem [#allocation0], 8
    %51 = vst.msk [vmem:[%s50] sm:$0x1] %vm49, %v48
    %s52 = scalar_lea.vmem %s0, 8
    %v53 = vld [vmem:[%s52] sm:$0x1]
    %54 = vrot.lane.b32.xlu0 %v53, 96
    %v55 = vpop.permute.xlu0 %54
    %vm56 = vcmask 884480
    %57 = vst.msk [vmem:[#allocation0] sm:$0x1] %vm56, %v55
    %s58 = scalar_lea.vmem %s0, 18
    %v59 = vld [vmem:[%s58] sm:$0x1]
    %60 = vrot.lane.b32.xlu0 %v59, 88
    %v61 = vpop.permute.xlu0 %60
    %vm62 = vcmask 818880
    %s63 = scalar_lea.vmem [#allocation0], 8
    %64 = vst.msk [vmem:[%s63] sm:$0x1] %vm62, %v61
    %s65 = scalar_lea.vmem %s0, 7
    %v66 = vld [vmem:[%s65] sm:$0x1]
    %67 = vrot.lane.b32.xlu0 %v66, 84
    %v68 = vpop.permute.xlu0 %67
    %vm69 = vcmask 786080
    %70 = vst.msk [vmem:[#allocation0] sm:$0x1] %vm69, %v68
    %s71 = scalar_lea.vmem %s0, 17
    %v72 = vld [vmem:[%s71] sm:$0x1]
    %73 = vrot.lane.b32.xlu0 %v72, 76
    %v74 = vpop.permute.xlu0 %73
    %vm75 = vcmask 720480
    %s76 = scalar_lea.vmem [#allocation0], 8
    %77 = vst.msk [vmem:[%s76] sm:$0x1] %vm75, %v74
    %s78 = scalar_lea.vmem %s0, 6
    %v79 = vld [vmem:[%s78] sm:$0x1]
    %80 = vrot.lane.b32.xlu0 %v79, 72
    %v81 = vpop.permute.xlu0 %80
    %vm82 = vcmask 687680
    %83 = vst.msk [vmem:[#allocation0] sm:$0x1] %vm82, %v81
    %s84 = scalar_lea.vmem %s0, 27
    %v85 = vld [vmem:[%s84] sm:$0x1]
    %86 = vrot.lane.b32.xlu0 %v85, 68
    %v87 = vpop.permute.xlu0 %86
    %vm88 = vcmask 654880
    %s89 = scalar_lea.vmem [#allocation0], 16
    %90 = vst.msk [vmem:[%s89] sm:$0x1] %vm88, %v87
    %s91 = scalar_lea.vmem %s0, 16
    %v92 = vld [vmem:[%s91] sm:$0x1]
    %93 = vrot.lane.b32.xlu0 %v92, 64
    %v94 = vpop.permute.xlu0 %93
    %vm95 = vcmask 622080
    %s96 = scalar_lea.vmem [#allocation0], 8
    %97 = vst.msk [vmem:[%s96] sm:$0x1] %vm95, %v94
    %s98 = scalar_lea.vmem %s0, 5
    %v99 = vld [vmem:[%s98] sm:$0x1]
    %100 = vrot.lane.b32.xlu0 %v99, 60
    %v101 = vpop.permute.xlu0 %100
    %vm102 = vcmask 589280
    %103 = vst.msk [vmem:[#allocation0] sm:$0x1] %vm102, %v101
    %s104 = scalar_lea.vmem %s0, 26
    %v105 = vld [vmem:[%s104] sm:$0x1]
    %106 = vrot.lane.b32.xlu0 %v105, 56
    %v107 = vpop.permute.xlu0 %106
    %vm108 = vcmask 556480
    %s109 = scalar_lea.vmem [#allocation0], 16
    %110 = vst.msk [vmem:[%s109] sm:$0x1] %vm108, %v107
    %s111 = scalar_lea.vmem %s0, 15
    %v112 = vld [vmem:[%s111] sm:$0x1]
    %113 = vrot.lane.b32.xlu0 %v112, 52
    %v114 = vpop.permute.xlu0 %113
    %vm115 = vcmask 523680
    %s116 = scalar_lea.vmem [#allocation0], 8
    %117 = vst.msk [vmem:[%s116] sm:$0x1] %vm115, %v114
    %s118 = scalar_lea.vmem %s0, 4
    %v119 = vld [vmem:[%s118] sm:$0x1]
    %120 = vrot.lane.b32.xlu0 %v119, 48
    %v121 = vpop.permute.xlu0 %120
    %vm122 = vcmask 490880
    %123 = vst.msk [vmem:[#allocation0] sm:$0x1] %vm122, %v121
    %s124 = scalar_lea.vmem %s0, 25
    %v125 = vld [vmem:[%s124] sm:$0x1]
    %126 = vrot.lane.b32.xlu0 %v125, 44
    %v127 = vpop.permute.xlu0 %126
    %vm128 = vcmask 458080
    %s129 = scalar_lea.vmem [#allocation0], 16
    %130 = vst.msk [vmem:[%s129] sm:$0x1] %vm128, %v127
    %s131 = scalar_lea.vmem %s0, 14
    %v132 = vld [vmem:[%s131] sm:$0x1]
    %133 = vrot.lane.b32.xlu0 %v132, 40
    %v134 = vpop.permute.xlu0 %133
    %vm135 = vcmask 425280
    %s136 = scalar_lea.vmem [#allocation0], 8
    %137 = vst.msk [vmem:[%s136] sm:$0x1] %vm135, %v134
    %s138 = scalar_lea.vmem %s0, 3
    %v139 = vld [vmem:[%s138] sm:$0x1]
    %140 = vrot.lane.b32.xlu0 %v139, 36
    %v141 = vpop.permute.xlu0 %140
    %vm142 = vcmask 392480
    %143 = vst.msk [vmem:[#allocation0] sm:$0x1] %vm142, %v141
    %s144 = scalar_lea.vmem %s0, 24
    %v145 = vld [vmem:[%s144] sm:$0x1]
    %146 = vrot.lane.b32.xlu0 %v145, 32
    %v147 = vpop.permute.xlu0 %146
    %vm148 = vcmask 359680
    %s149 = scalar_lea.vmem [#allocation0], 16
    %150 = vst.msk [vmem:[%s149] sm:$0x1] %vm148, %v147
    %s151 = scalar_lea.vmem %s0, 13
    %v152 = vld [vmem:[%s151] sm:$0x1]
    %153 = vrot.lane.b32.xlu0 %v152, 28
    %v154 = vpop.permute.xlu0 %153
    %vm155 = vcmask 326880
    %s156 = scalar_lea.vmem [#allocation0], 8
    %157 = vst.msk [vmem:[%s156] sm:$0x1] %vm155, %v154
    %s158 = scalar_lea.vmem %s0, 2
    %v159 = vld [vmem:[%s158] sm:$0x1]
    %160 = vrot.lane.b32.xlu0 %v159, 24
    %v161 = vpop.permute.xlu0 %160
    %vm162 = vcmask 294080
    %163 = vst.msk [vmem:[#allocation0] sm:$0x1] %vm162, %v161
    %s164 = scalar_lea.vmem %s0, 23
    %v165 = vld [vmem:[%s164] sm:$0x1]
    %166 = vrot.lane.b32.xlu0 %v165, 20
    %v167 = vpop.permute.xlu0 %166
    %vm168 = vcmask 261280
    %s169 = scalar_lea.vmem [#allocation0], 16
    %170 = vst.msk [vmem:[%s169] sm:$0x1] %vm168, %v167
    %s171 = scalar_lea.vmem %s0, 12
    %v172 = vld [vmem:[%s171] sm:$0x1]
    %173 = vrot.lane.b32.xlu0 %v172, 16
    %v174 = vpop.permute.xlu0 %173
    %vm175 = vcmask 228480
    %s176 = scalar_lea.vmem [#allocation0], 8
    %177 = vst.msk [vmem:[%s176] sm:$0x1] %vm175, %v174
    %s178 = scalar_lea.vmem %s0, 1
    %v179 = vld [vmem:[%s178] sm:$0x1]
    %180 = vrot.lane.b32.xlu0 %v179, 12
    %v181 = vpop.permute.xlu0 %180
    %vm182 = vcmask 195680
    %183 = vst.msk [vmem:[#allocation0] sm:$0x1] %vm182, %v181
    %s184 = scalar_lea.vmem %s0, 22
    %v185 = vld [vmem:[%s184] sm:$0x1]
    %186 = vrot.lane.b32.xlu0 %v185, 8
    %v187 = vpop.permute.xlu0 %186
    %vm188 = vcmask 162880
    %s189 = scalar_lea.vmem [#allocation0], 16
    %190 = vst.msk [vmem:[%s189] sm:$0x1] %vm188, %v187
    %s191 = scalar_lea.vmem %s0, 11
    %v192 = vld [vmem:[%s191] sm:$0x1]
    %193 = vrot.lane.b32.xlu0 %v192, 4
    %v194 = vpop.permute.xlu0 %193
    %vm195 = vcmask 130080
    %s196 = scalar_lea.vmem [#allocation0], 8
    %197 = vst.msk [vmem:[%s196] sm:$0x1] %vm195, %v194
    %s199 = sshllo.u32 0, 1
    %v201 = vld [vmem:[#allocation0] sm:%s199]
    %s202 = sshllo.u32 0, 1
    %203 = vst [vmem:[%s1] sm:%s202] %v201
    %s204 = scalar_lea.vmem [#allocation0], 8
    %v205 = vld [vmem:[%s204] sm:%s199]
    %s206 = sshllo.u32 0, 1
    %s207 = scalar_lea.vmem %s1, 1
    %208 = vst [vmem:[%s207] sm:%s206] %v205
    %s209 = scalar_lea.vmem [#allocation0], 16
    %v210 = vld [vmem:[%s209] sm:%s199]
    %s211 = sshllo.u32 0, 1
    %s212 = smul.addr 1, 2
    %s213 = scalar_lea.vmem %s1, %s212
    %214 = vst [vmem:[%s213] sm:%s211] %v210

// kernel: tile.23
$region0: #{tile.23}
  #allocation0 [shape = 's32[1]{0}', space=sflag, size = 0x4, scoped, tag = 'scoped memory for tile.23']
  %s0 = inlined_call_operand.vmem [shape: f32[24], index: 0, kind: input, shape index: {}]
  %s1 = inlined_call_operand.vmem [shape: f32[14,24], index: 1, kind: output, shape index: {}]
  // Predicated region
  $region2: #{tile.23} parent=0 // pred_check
    _
  $region3: #{tile.23} parent=0 // pred_check_branch
    %3 = sbr.rel (0) target = $region5
  $region4: #{tile.23} parent=0 // pred_region
    _
  $region5: #{tile.23} parent=0 // pred_fallthru
    _
  %v4 = vld [vmem:[%s0] ss:$0 sm:$0xff]
  %5 = vst [vmem:[%s1] sm:$0xff] %v4
  %s6 = scalar_lea.vmem %s1, 8
  %7 = vst [vmem:[%s6] sm:$0xff] %v4

// kernel: tile.24
$region0: #{tile.24}
  %s0 = inlined_call_operand.vmem [shape: f32[14,24], index: 0, kind: input, shape index: {}]
  %s1 = inlined_call_operand.vmem [shape: f32[1,336], index: 1, kind: output, shape index: {}]
  $region1: #{tile.24} parent=0
    #allocation0 [shape = 'u8[12288]{0}', space=vmem, size = 0x3000, scoped, tag = 'scoped mem for output reshape']
    %v2 = vld [vmem:[%s0] sm:$0x1]
    %vm3 = vcmask 195584
    %4 = vst.msk [vmem:[#allocation0] sm:$0x1] %vm3, %v2
    %s5 = scalar_lea.vmem %s0, 5
    %v6 = vld [vmem:[%s5] sm:$0x1]
    %s7 = scalar_lea.vmem %s0, 5
    %v8 = vld [vmem:[%s7] sm:$0x1]
    %vm9 = vcmask 64512
    %v10 = vsel %vm9, %v8, %v6
    %11 = vrot.lane.b32.xlu0 %v10, 120
    %v12 = vpop.permute.xlu0 %11
    %vm13 = vcmask 130048
    %s14 = scalar_lea.vmem [#allocation0], 8
    %15 = vst.msk [vmem:[%s14] sm:$0x1] %vm13, %v12
    %vm16 = vcmask 1048512
    %17 = vst.msk [vmem:[#allocation0] sm:$0x1] %vm16, %v12
    %s18 = scalar_lea.vmem %s0, 10
    %v19 = vld [vmem:[%s18] sm:$0x1]
    %s20 = scalar_lea.vmem %s0, 10
    %v21 = vld [vmem:[%s20] sm:$0x1]
    %vm22 = vcmask 130048
    %v23 = vsel %vm22, %v21, %v19
    %24 = vrot.lane.b32.xlu0 %v23, 112
    %v25 = vpop.permute.xlu0 %24
    %vm26 = vcmask 64512
    %s27 = scalar_lea.vmem [#allocation0], 16
    %28 = vst.msk [vmem:[%s27] sm:$0x1] %vm26, %v25
    %vm29 = vcmask 1048448
    %s30 = scalar_lea.vmem [#allocation0], 8
    %31 = vst.msk [vmem:[%s30] sm:$0x1] %vm29, %v25
    %s32 = scalar_lea.vmem %s0, 4
    %v33 = vld [vmem:[%s32] sm:$0x1]
    %34 = vrot.lane.b32.xlu0 %v33, 96
    %v35 = vpop.permute.xlu0 %34
    %vm36 = vcmask 982784
    %37 = vst.msk [vmem:[#allocation0] sm:$0x1] %vm36, %v35
    %s38 = scalar_lea.vmem %s0, 9
    %v39 = vld [vmem:[%s38] sm:$0x1]
    %40 = vrot.lane.b32.xlu0 %v39, 88
    %v41 = vpop.permute.xlu0 %40
    %vm42 = vcmask 917184
    %s43 = scalar_lea.vmem [#allocation0], 8
    %44 = vst.msk [vmem:[%s43] sm:$0x1] %vm42, %v41
    %s45 = scalar_lea.vmem %s0, 3
    %v46 = vld [vmem:[%s45] sm:$0x1]
    %47 = vrot.lane.b32.xlu0 %v46, 72
    %v48 = vpop.permute.xlu0 %47
    %vm49 = vcmask 785984
    %50 = vst.msk [vmem:[#allocation0] sm:$0x1] %vm49, %v48
    %s51 = scalar_lea.vmem %s0, 8
    %v52 = vld [vmem:[%s51] sm:$0x1]
    %53 = vrot.lane.b32.xlu0 %v52, 64
    %v54 = vpop.permute.xlu0 %53
    %vm55 = vcmask 720384
    %s56 = scalar_lea.vmem [#allocation0], 8
    %57 = vst.msk [vmem:[%s56] sm:$0x1] %vm55, %v54
    %s58 = scalar_lea.vmem %s0, 13
    %v59 = vld [vmem:[%s58] sm:$0x1]
    %60 = vrot.lane.b32.xlu0 %v59, 56
    %v61 = vpop.permute.xlu0 %60
    %vm62 = vcmask 654784
    %s63 = scalar_lea.vmem [#allocation0], 16
    %64 = vst.msk [vmem:[%s63] sm:$0x1] %vm62, %v61
    %s65 = scalar_lea.vmem %s0, 2
    %v66 = vld [vmem:[%s65] sm:$0x1]
    %67 = vrot.lane.b32.xlu0 %v66, 48
    %v68 = vpop.permute.xlu0 %67
    %vm69 = vcmask 589184
    %70 = vst.msk [vmem:[#allocation0] sm:$0x1] %vm69, %v68
    %s71 = scalar_lea.vmem %s0, 7
    %v72 = vld [vmem:[%s71] sm:$0x1]
    %73 = vrot.lane.b32.xlu0 %v72, 40
    %v74 = vpop.permute.xlu0 %73
    %vm75 = vcmask 523584
    %s76 = scalar_lea.vmem [#allocation0], 8
    %77 = vst.msk [vmem:[%s76] sm:$0x1] %vm75, %v74
    %s78 = scalar_lea.vmem %s0, 12
    %v79 = vld [vmem:[%s78] sm:$0x1]
    %80 = vrot.lane.b32.xlu0 %v79, 32
    %v81 = vpop.permute.xlu0 %80
    %vm82 = vcmask 457984
    %s83 = scalar_lea.vmem [#allocation0], 16
    %84 = vst.msk [vmem:[%s83] sm:$0x1] %vm82, %v81
    %s85 = scalar_lea.vmem %s0, 1
    %v86 = vld [vmem:[%s85] sm:$0x1]
    %87 = vrot.lane.b32.xlu0 %v86, 24
    %v88 = vpop.permute.xlu0 %87
    %vm89 = vcmask 392384
    %90 = vst.msk [vmem:[#allocation0] sm:$0x1] %vm89, %v88
    %s91 = scalar_lea.vmem %s0, 6
    %v92 = vld [vmem:[%s91] sm:$0x1]
    %93 = vrot.lane.b32.xlu0 %v92, 16
    %v94 = vpop.permute.xlu0 %93
    %vm95 = vcmask 326784
    %s96 = scalar_lea.vmem [#allocation0], 8
    %97 = vst.msk [vmem:[%s96] sm:$0x1] %vm95, %v94
    %s98 = scalar_lea.vmem %s0, 11
    %v99 = vld [vmem:[%s98] sm:$0x1]
    %100 = vrot.lane.b32.xlu0 %v99, 8
    %v101 = vpop.permute.xlu0 %100
    %vm102 = vcmask 261184
    %s103 = scalar_lea.vmem [#allocation0], 16
    %104 = vst.msk [vmem:[%s103] sm:$0x1] %vm102, %v101
    %s106 = sshllo.u32 0, 1
    %v108 = vld [vmem:[#allocation0] sm:%s106]
    %s109 = sshllo.u32 0, 1
    %110 = vst [vmem:[%s1] sm:%s109] %v108
    %s111 = scalar_lea.vmem [#allocation0], 8
    %v112 = vld [vmem:[%s111] sm:%s106]
    %s113 = sshllo.u32 0, 1
    %s114 = scalar_lea.vmem %s1, 1
    %115 = vst [vmem:[%s114] sm:%s113] %v112
    %s116 = scalar_lea.vmem [#allocation0], 16
    %v117 = vld [vmem:[%s116] sm:%s106]
    %s118 = sshllo.u32 0, 1
    %s119 = smul.addr 1, 2
    %s120 = scalar_lea.vmem %s1, %s119
    %121 = vst [vmem:[%s120] sm:%s118] %v117

// kernel: tile.28
$region0: #{tile.28}
  #allocation0 [shape = 's32[1]{0}', space=sflag, size = 0x4, scoped, tag = 'scoped memory for tile.28']
  %s0 = inlined_call_operand.vmem [shape: f32[48], index: 0, kind: input, shape index: {}]
  %s1 = inlined_call_operand.vmem [shape: f32[7,48], index: 1, kind: output, shape index: {}]
  // Predicated region
  $region2: #{tile.28} parent=0 // pred_check
    _
  $region3: #{tile.28} parent=0 // pred_check_branch
    %3 = sbr.rel (0) target = $region5
  $region4: #{tile.28} parent=0 // pred_region
    _
  $region5: #{tile.28} parent=0 // pred_fallthru
    _
  %v4 = vld [vmem:[%s0] ss:$0 sm:$0xff]
  %5 = vst [vmem:[%s1] sm:$0xff] %v4

// kernel: tile.29
$region0: #{tile.29}
  %s0 = inlined_call_operand.vmem [shape: f32[7,48], index: 0, kind: input, shape index: {}]
  %s1 = inlined_call_operand.vmem [shape: f32[1,336], index: 1, kind: output, shape index: {}]
  $region1: #{tile.29} parent=0
    #allocation0 [shape = 'u8[12288]{0}', space=vmem, size = 0x3000, scoped, tag = 'scoped mem for output reshape']
    %v2 = vld [vmem:[%s0] sm:$0x1]
    %vm3 = vcmask 392192
    %4 = vst.msk [vmem:[#allocation0] sm:$0x1] %vm3, %v2
    %s5 = scalar_lea.vmem %s0, 5
    %v6 = vld [vmem:[%s5] sm:$0x1]
    %s7 = scalar_lea.vmem %s0, 5
    %v8 = vld [vmem:[%s7] sm:$0x1]
    %vm9 = vcmask 130048
    %v10 = vsel %vm9, %v8, %v6
    %11 = vrot.lane.b32.xlu0 %v10, 112
    %v12 = vpop.permute.xlu0 %11
    %vm13 = vcmask 261120
    %s14 = scalar_lea.vmem [#allocation0], 16
    %15 = vst.msk [vmem:[%s14] sm:$0x1] %vm13, %v12
    %vm16 = vcmask 1048448
    %s17 = scalar_lea.vmem [#allocation0], 8
    %18 = vst.msk [vmem:[%s17] sm:$0x1] %vm16, %v12
    %s19 = scalar_lea.vmem %s0, 2
    %v20 = vld [vmem:[%s19] sm:$0x1]
    %s21 = scalar_lea.vmem %s0, 2
    %v22 = vld [vmem:[%s21] sm:$0x1]
    %vm23 = vcmask 261120
    %v24 = vsel %vm23, %v22, %v20
    %25 = vrot.lane.b32.xlu0 %v24, 96
    %v26 = vpop.permute.xlu0 %25
    %vm27 = vcmask 130048
    %s28 = scalar_lea.vmem [#allocation0], 8
    %29 = vst.msk [vmem:[%s28] sm:$0x1] %vm27, %v26
    %vm30 = vcmask 1048320
    %31 = vst.msk [vmem:[#allocation0] sm:$0x1] %vm30, %v26
    %s32 = scalar_lea.vmem %s0, 4
    %v33 = vld [vmem:[%s32] sm:$0x1]
    %34 = vrot.lane.b32.xlu0 %v33, 64
    %v35 = vpop.permute.xlu0 %34
    %vm36 = vcmask 916992
    %s37 = scalar_lea.vmem [#allocation0], 8
    %38 = vst.msk [vmem:[%s37] sm:$0x1] %vm36, %v35
    %s39 = scalar_lea.vmem %s0, 1
    %v40 = vld [vmem:[%s39] sm:$0x1]
    %41 = vrot.lane.b32.xlu0 %v40, 48
    %v42 = vpop.permute.xlu0 %41
    %vm43 = vcmask 785792
    %44 = vst.msk [vmem:[#allocation0] sm:$0x1] %vm43, %v42
    %s45 = scalar_lea.vmem %s0, 6
    %v46 = vld [vmem:[%s45] sm:$0x1]
    %47 = vrot.lane.b32.xlu0 %v46, 32
    %v48 = vpop.permute.xlu0 %47
    %vm49 = vcmask 654592
    %s50 = scalar_lea.vmem [#allocation0], 16
    %51 = vst.msk [vmem:[%s50] sm:$0x1] %vm49, %v48
    %s52 = scalar_lea.vmem %s0, 3
    %v53 = vld [vmem:[%s52] sm:$0x1]
    %54 = vrot.lane.b32.xlu0 %v53, 16
    %v55 = vpop.permute.xlu0 %54
    %vm56 = vcmask 523392
    %s57 = scalar_lea.vmem [#allocation0], 8
    %58 = vst.msk [vmem:[%s57] sm:$0x1] %vm56, %v55
    %s60 = sshllo.u32 0, 1
    %v62 = vld [vmem:[#allocation0] sm:%s60]
    %s63 = sshllo.u32 0, 1
    %64 = vst [vmem:[%s1] sm:%s63] %v62
    %s65 = scalar_lea.vmem [#allocation0], 8
    %v66 = vld [vmem:[%s65] sm:%s60]
    %s67 = sshllo.u32 0, 1
    %s68 = scalar_lea.vmem %s1, 1
    %69 = vst [vmem:[%s68] sm:%s67] %v66
    %s70 = scalar_lea.vmem [#allocation0], 16
    %v71 = vld [vmem:[%s70] sm:%s60]
    %s72 = sshllo.u32 0, 1
    %s73 = smul.addr 1, 2
    %s74 = scalar_lea.vmem %s1, %s73
    %75 = vst [vmem:[%s74] sm:%s72] %v71

// kernel: model_forward.1
$region0: #{model_forward.1}
  #allocation0 [shape = 'u32[]', space=smem, size = 0x4, offset = 0x4, fixed_abs, tag = 'smem constant byte address 0x4 - core index']
  #allocation1 [shape = 'u32[144,128]{1,0:T(1,128)}', space=vmem, size = 0x12000, scoped, tag = 'internal scratch']
  #allocation2 [shape = 'f32[16,192]{1,0:T(8,128)}', space=vmem, size = 0x4000, scoped, tag = 'scratch operand']
  #allocation3 [shape = 'f32[9,216]{1,0:T(8,128)}', space=vmem, size = 0x4000, scoped, tag = 'scratch operand']
  #allocation4 [shape = 'f32[3,144]{1,0:T(4,128)}', space=vmem, size = 0x1000, scoped, tag = 'scratch operand']
  %s0 = inlined_call_operand.vmem [shape: f32[2,30,30], index: 0, kind: input, shape index: {}]
  %s1 = inlined_call_operand.vmem [shape: f32[3,30,336], index: 1, kind: input, shape index: {}]
  %s2 = inlined_call_operand.vmem [shape: f32[1,336], index: 2, kind: input, shape index: {}]
  %s3 = inlined_call_operand.vmem [shape: f32[2,16,28], index: 3, kind: input, shape index: {}]
  %s4 = inlined_call_operand.vmem [shape: f32[2,336,192], index: 4, kind: input, shape index: {}]
  %s5 = inlined_call_operand.vmem [shape: f32[3,192,336], index: 5, kind: input, shape index: {}]
  %s6 = inlined_call_operand.vmem [shape: f32[1,336], index: 6, kind: input, shape index: {}]
  %s7 = inlined_call_operand.vmem [shape: f32[2,9,14], index: 7, kind: input, shape index: {}]
  %s8 = inlined_call_operand.vmem [shape: f32[2,336,216], index: 8, kind: input, shape index: {}]
  %s9 = inlined_call_operand.vmem [shape: f32[3,216,336], index: 9, kind: input, shape index: {}]
  %s10 = inlined_call_operand.vmem [shape: f32[1,336], index: 10, kind: input, shape index: {}]
  %s11 = inlined_call_operand.vmem [shape: f32[2,3,7], index: 11, kind: input, shape index: {}]
  %s12 = inlined_call_operand.vmem [shape: f32[2,336,144], index: 12, kind: input, shape index: {}]
  %s13 = inlined_call_operand.vmem [shape: f32[3,144,2], index: 13, kind: input, shape index: {}]
  %s14 = inlined_call_operand.vmem [shape: f32[1,2], index: 14, kind: input, shape index: {}]
  %s15 = inlined_call_operand.vmem [shape: f32[2,10], index: 15, kind: input, shape index: {}]
  %s16 = inlined_call_operand.hbm [shape: f32[2,1,10], index: 16, kind: output, shape index: {}]
  %s17 = sld [smem:[#allocation0]]
  $region97: #{model_forward.1} parent=0
    _
  %s19 = ssub.s32 1, %s17
  %s20 = scalar_select 0, %s19, %s17
  $region1: #{model_forward.1} parent=0
    #allocation5 [shape = 'u8[1024]{0}', space=vmem, size = 0x400, scoped, tag = 'output window, operand 0']
    #allocation6 [shape = 's32[2]{0}', space=sflag, size = 0x8, scoped, tag = 'scoped memory for model_forward.1']
    %21 = vsyncpa [#allocation6], 0
    %s22 = scalar_lea.sflag [#allocation6], 1
    %23 = vsyncpa %s22, 0
    loop: start=0, step=1, limit=4
    $region2: #{model_forward.1} parent=1 // loop_pre_header
      _
    $region3: #{model_forward.1} parent=1 // loop_header
      %s25 = sphi 0, %s29
      %p26 = scmp.ge.s32.totalorder %s25, 4
      %s35 = sphi 0, %s37
      %s38 = sphi 0, %s35
      %s39 = sphi 0, %s38
      %s55 = sphi 0, %s39
      %s59 = sphi 0, %s59
      %s61 = sphi 0, %s59
      %s62 = sphi 0, %s61
      %s76 = sphi 0, %s62
      %s80 = sphi 0, %s80
      %s82 = sphi 0, %s80
      %s83 = sphi 0, %s82
      %s97 = sphi 0, %s83
      %s101 = sphi 0, %s101
      %s103 = sphi 0, %s101
      %s104 = sphi 0, %s103
      %s118 = sphi 0, %s104
      %s122 = sphi 0, %s122
      %s124 = sphi 0, %s122
      %s125 = sphi 0, %s124
      %s139 = sphi 0, %s125
      %s143 = sphi 0, %s143
      %s145 = sphi 0, %s143
      %s146 = sphi 0, %s145
      %s160 = sphi 0, %s146
      %s164 = sphi 0, %s164
      %s166 = sphi 0, %s164
      %s167 = sphi 0, %s166
      %s181 = sphi 0, %s167
      %s185 = sphi 0, %s185
      %s187 = sphi 0, %s185
      %s188 = sphi 0, %s187
      %s202 = sphi 0, %s188
      %s206 = sphi 0, %s206
      %s208 = sphi 0, %s206
      %s209 = sphi 0, %s208
      %s223 = sphi 0, %s209
      %s227 = sphi 0, %s227
      %s229 = sphi 0, %s227
      %s230 = sphi 0, %s229
      %s244 = sphi 0, %s230
      %s248 = sphi 0, %s248
      %s250 = sphi 0, %s248
      %s251 = sphi 0, %s250
      %s265 = sphi 0, %s251
      %s269 = sphi 0, %s269
      %s271 = sphi 0, %s269
      %s272 = sphi 0, %s271
      %s286 = sphi 0, %s272
      %s290 = sphi 0, %s290
      %s292 = sphi 0, %s290
      %s293 = sphi 0, %s292
      %s307 = sphi 0, %s293
      %s311 = sphi 0, %s311
      %s313 = sphi 0, %s311
      %s314 = sphi 0, %s313
      %s328 = sphi 0, %s314
      %s332 = sphi 0, %s332
      %s334 = sphi 0, %s332
      %s335 = sphi 0, %s334
      %s349 = sphi 0, %s335
      %s353 = sphi 0, %s353
      %s355 = sphi 0, %s353
      %s356 = sphi 0, %s355
      %s370 = sphi 0, %s356
      %s376 = sphi 0, %s378
      %s379 = sphi 0, %s376
      %s380 = sphi 0, %s379
      %s396 = sphi 0, %s380
    $region4: #{model_forward.1} parent=1 // loop_header_branch
      %28 = sbr.rel (%p26) target = $region8
    $region5: #{model_forward.1} parent=1 // loop_body
      %s30 = ssub.s32 %s25, 1
      %s31 = ssub.s32 %s25, 2
      %s32 = sadd.s32 %s25, 1
      %s33 = ssub.s32 %s25, %s32
      %p34 = scmp.eq.s32.totalorder %s33, 0
      %s36 = sadd.s32 %s35, 1
      %s37 = scalar_select %p34, %s35, %s36
      %p40 = pneg %p34
      %p41 = scmp.eq.s32.totalorder %s25, 1
      %p42 = por %p40, %p41
      %p43 = scmp.ne.s32.totalorder %s35, %s38
      %p44 = scmp.eq.s32.totalorder %s25, 0
      %p45 = por %p43, %p44
      %p46 = scmp.ne.s32.totalorder %s35, %s38
      %p47 = scmp.eq.s32.totalorder %s30, 1
      %p48 = por %p46, %p47
      %p49 = scmp.ne.s32.totalorder %s38, %s39
      %p50 = scmp.eq.s32.totalorder %s30, 0
      %p51 = por %p49, %p50
      %p52 = scmp.ne.s32.totalorder %s38, %s39
      %p53 = scmp.eq.s32.totalorder %s31, 1
      %p54 = por %p52, %p53
      %p56 = scmp.ne.s32.totalorder %s39, %s55
      %p57 = scmp.eq.s32.totalorder %s31, 0
      %p58 = por %p56, %p57
      %s60 = sadd.s32 %s59, 1
      %p63 = scmp.eq.s32.totalorder %s25, 1
      %p64 = scmp.ne.s32.totalorder %s59, %s61
      %p65 = scmp.eq.s32.totalorder %s25, 0
      %p66 = por %p64, %p65
      %p67 = scmp.ne.s32.totalorder %s59, %s61
      %p68 = scmp.eq.s32.totalorder %s30, 1
      %p69 = por %p67, %p68
      %p70 = scmp.ne.s32.totalorder %s61, %s62
      %p71 = scmp.eq.s32.totalorder %s30, 0
      %p72 = por %p70, %p71
      %p73 = scmp.ne.s32.totalorder %s61, %s62
      %p74 = scmp.eq.s32.totalorder %s31, 1
      %p75 = por %p73, %p74
      %p77 = scmp.ne.s32.totalorder %s62, %s76
      %p78 = scmp.eq.s32.totalorder %s31, 0
      %p79 = por %p77, %p78
      %s81 = sadd.s32 %s80, 1
      %p84 = scmp.eq.s32.totalorder %s25, 1
      %p85 = scmp.ne.s32.totalorder %s80, %s82
      %p86 = scmp.eq.s32.totalorder %s25, 0
      %p87 = por %p85, %p86
      %p88 = scmp.ne.s32.totalorder %s80, %s82
      %p89 = scmp.eq.s32.totalorder %s30, 1
      %p90 = por %p88, %p89
      %p91 = scmp.ne.s32.totalorder %s82, %s83
      %p92 = scmp.eq.s32.totalorder %s30, 0
      %p93 = por %p91, %p92
      %p94 = scmp.ne.s32.totalorder %s82, %s83
      %p95 = scmp.eq.s32.totalorder %s31, 1
      %p96 = por %p94, %p95
      %p98 = scmp.ne.s32.totalorder %s83, %s97
      %p99 = scmp.eq.s32.totalorder %s31, 0
      %p100 = por %p98, %p99
      %s102 = sadd.s32 %s101, 1
      %p105 = scmp.eq.s32.totalorder %s25, 1
      %p106 = scmp.ne.s32.totalorder %s101, %s103
      %p107 = scmp.eq.s32.totalorder %s25, 0
      %p108 = por %p106, %p107
      %p109 = scmp.ne.s32.totalorder %s101, %s103
      %p110 = scmp.eq.s32.totalorder %s30, 1
      %p111 = por %p109, %p110
      %p112 = scmp.ne.s32.totalorder %s103, %s104
      %p113 = scmp.eq.s32.totalorder %s30, 0
      %p114 = por %p112, %p113
      %p115 = scmp.ne.s32.totalorder %s103, %s104
      %p116 = scmp.eq.s32.totalorder %s31, 1
      %p117 = por %p115, %p116
      %p119 = scmp.ne.s32.totalorder %s104, %s118
      %p120 = scmp.eq.s32.totalorder %s31, 0
      %p121 = por %p119, %p120
      %s123 = sadd.s32 %s122, 1
      %p126 = scmp.eq.s32.totalorder %s25, 1
      %p127 = scmp.ne.s32.totalorder %s122, %s124
      %p128 = scmp.eq.s32.totalorder %s25, 0
      %p129 = por %p127, %p128
      %p130 = scmp.ne.s32.totalorder %s122, %s124
      %p131 = scmp.eq.s32.totalorder %s30, 1
      %p132 = por %p130, %p131
      %p133 = scmp.ne.s32.totalorder %s124, %s125
      %p134 = scmp.eq.s32.totalorder %s30, 0
      %p135 = por %p133, %p134
      %p136 = scmp.ne.s32.totalorder %s124, %s125
      %p137 = scmp.eq.s32.totalorder %s31, 1
      %p138 = por %p136, %p137
      %p140 = scmp.ne.s32.totalorder %s125, %s139
      %p141 = scmp.eq.s32.totalorder %s31, 0
      %p142 = por %p140, %p141
      %s144 = sadd.s32 %s143, 1
      %p147 = scmp.eq.s32.totalorder %s25, 1
      %p148 = scmp.ne.s32.totalorder %s143, %s145
      %p149 = scmp.eq.s32.totalorder %s25, 0
      %p150 = por %p148, %p149
      %p151 = scmp.ne.s32.totalorder %s143, %s145
      %p152 = scmp.eq.s32.totalorder %s30, 1
      %p153 = por %p151, %p152
      %p154 = scmp.ne.s32.totalorder %s145, %s146
      %p155 = scmp.eq.s32.totalorder %s30, 0
      %p156 = por %p154, %p155
      %p157 = scmp.ne.s32.totalorder %s145, %s146
      %p158 = scmp.eq.s32.totalorder %s31, 1
      %p159 = por %p157, %p158
      %p161 = scmp.ne.s32.totalorder %s146, %s160
      %p162 = scmp.eq.s32.totalorder %s31, 0
      %p163 = por %p161, %p162
      %s165 = sadd.s32 %s164, 1
      %p168 = scmp.eq.s32.totalorder %s25, 1
      %p169 = scmp.ne.s32.totalorder %s164, %s166
      %p170 = scmp.eq.s32.totalorder %s25, 0
      %p171 = por %p169, %p170
      %p172 = scmp.ne.s32.totalorder %s164, %s166
      %p173 = scmp.eq.s32.totalorder %s30, 1
      %p174 = por %p172, %p173
      %p175 = scmp.ne.s32.totalorder %s166, %s167
      %p176 = scmp.eq.s32.totalorder %s30, 0
      %p177 = por %p175, %p176
      %p178 = scmp.ne.s32.totalorder %s166, %s167
      %p179 = scmp.eq.s32.totalorder %s31, 1
      %p180 = por %p178, %p179
      %p182 = scmp.ne.s32.totalorder %s167, %s181
      %p183 = scmp.eq.s32.totalorder %s31, 0
      %p184 = por %p182, %p183
      %s186 = sadd.s32 %s185, 1
      %p189 = scmp.eq.s32.totalorder %s25, 1
      %p190 = scmp.ne.s32.totalorder %s185, %s187
      %p191 = scmp.eq.s32.totalorder %s25, 0
      %p192 = por %p190, %p191
      %p193 = scmp.ne.s32.totalorder %s185, %s187
      %p194 = scmp.eq.s32.totalorder %s30, 1
      %p195 = por %p193, %p194
      %p196 = scmp.ne.s32.totalorder %s187, %s188
      %p197 = scmp.eq.s32.totalorder %s30, 0
      %p198 = por %p196, %p197
      %p199 = scmp.ne.s32.totalorder %s187, %s188
      %p200 = scmp.eq.s32.totalorder %s31, 1
      %p201 = por %p199, %p200
      %p203 = scmp.ne.s32.totalorder %s188, %s202
      %p204 = scmp.eq.s32.totalorder %s31, 0
      %p205 = por %p203, %p204
      %s207 = sadd.s32 %s206, 1
      %p210 = scmp.eq.s32.totalorder %s25, 1
      %p211 = scmp.ne.s32.totalorder %s206, %s208
      %p212 = scmp.eq.s32.totalorder %s25, 0
      %p213 = por %p211, %p212
      %p214 = scmp.ne.s32.totalorder %s206, %s208
      %p215 = scmp.eq.s32.totalorder %s30, 1
      %p216 = por %p214, %p215
      %p217 = scmp.ne.s32.totalorder %s208, %s209
      %p218 = scmp.eq.s32.totalorder %s30, 0
      %p219 = por %p217, %p218
      %p220 = scmp.ne.s32.totalorder %s208, %s209
      %p221 = scmp.eq.s32.totalorder %s31, 1
      %p222 = por %p220, %p221
      %p224 = scmp.ne.s32.totalorder %s209, %s223
      %p225 = scmp.eq.s32.totalorder %s31, 0
      %p226 = por %p224, %p225
      %s228 = sadd.s32 %s227, 1
      %p231 = scmp.eq.s32.totalorder %s25, 1
      %p232 = scmp.ne.s32.totalorder %s227, %s229
      %p233 = scmp.eq.s32.totalorder %s25, 0
      %p234 = por %p232, %p233
      %p235 = scmp.ne.s32.totalorder %s227, %s229
      %p236 = scmp.eq.s32.totalorder %s30, 1
      %p237 = por %p235, %p236
      %p238 = scmp.ne.s32.totalorder %s229, %s230
      %p239 = scmp.eq.s32.totalorder %s30, 0
      %p240 = por %p238, %p239
      %p241 = scmp.ne.s32.totalorder %s229, %s230
      %p242 = scmp.eq.s32.totalorder %s31, 1
      %p243 = por %p241, %p242
      %p245 = scmp.ne.s32.totalorder %s230, %s244
      %p246 = scmp.eq.s32.totalorder %s31, 0
      %p247 = por %p245, %p246
      %s249 = sadd.s32 %s248, 1
      %p252 = scmp.eq.s32.totalorder %s25, 1
      %p253 = scmp.ne.s32.totalorder %s248, %s250
      %p254 = scmp.eq.s32.totalorder %s25, 0
      %p255 = por %p253, %p254
      %p256 = scmp.ne.s32.totalorder %s248, %s250
      %p257 = scmp.eq.s32.totalorder %s30, 1
      %p258 = por %p256, %p257
      %p259 = scmp.ne.s32.totalorder %s250, %s251
      %p260 = scmp.eq.s32.totalorder %s30, 0
      %p261 = por %p259, %p260
      %p262 = scmp.ne.s32.totalorder %s250, %s251
      %p263 = scmp.eq.s32.totalorder %s31, 1
      %p264 = por %p262, %p263
      %p266 = scmp.ne.s32.totalorder %s251, %s265
      %p267 = scmp.eq.s32.totalorder %s31, 0
      %p268 = por %p266, %p267
      %s270 = sadd.s32 %s269, 1
      %p273 = scmp.eq.s32.totalorder %s25, 1
      %p274 = scmp.ne.s32.totalorder %s269, %s271
      %p275 = scmp.eq.s32.totalorder %s25, 0
      %p276 = por %p274, %p275
      %p277 = scmp.ne.s32.totalorder %s269, %s271
      %p278 = scmp.eq.s32.totalorder %s30, 1
      %p279 = por %p277, %p278
      %p280 = scmp.ne.s32.totalorder %s271, %s272
      %p281 = scmp.eq.s32.totalorder %s30, 0
      %p282 = por %p280, %p281
      %p283 = scmp.ne.s32.totalorder %s271, %s272
      %p284 = scmp.eq.s32.totalorder %s31, 1
      %p285 = por %p283, %p284
      %p287 = scmp.ne.s32.totalorder %s272, %s286
      %p288 = scmp.eq.s32.totalorder %s31, 0
      %p289 = por %p287, %p288
      %s291 = sadd.s32 %s290, 1
      %p294 = scmp.eq.s32.totalorder %s25, 1
      %p295 = scmp.ne.s32.totalorder %s290, %s292
      %p296 = scmp.eq.s32.totalorder %s25, 0
      %p297 = por %p295, %p296
      %p298 = scmp.ne.s32.totalorder %s290, %s292
      %p299 = scmp.eq.s32.totalorder %s30, 1
      %p300 = por %p298, %p299
      %p301 = scmp.ne.s32.totalorder %s292, %s293
      %p302 = scmp.eq.s32.totalorder %s30, 0
      %p303 = por %p301, %p302
      %p304 = scmp.ne.s32.totalorder %s292, %s293
      %p305 = scmp.eq.s32.totalorder %s31, 1
      %p306 = por %p304, %p305
      %p308 = scmp.ne.s32.totalorder %s293, %s307
      %p309 = scmp.eq.s32.totalorder %s31, 0
      %p310 = por %p308, %p309
      %s312 = sadd.s32 %s311, 1
      %p315 = scmp.eq.s32.totalorder %s25, 1
      %p316 = scmp.ne.s32.totalorder %s311, %s313
      %p317 = scmp.eq.s32.totalorder %s25, 0
      %p318 = por %p316, %p317
      %p319 = scmp.ne.s32.totalorder %s311, %s313
      %p320 = scmp.eq.s32.totalorder %s30, 1
      %p321 = por %p319, %p320
      %p322 = scmp.ne.s32.totalorder %s313, %s314
      %p323 = scmp.eq.s32.totalorder %s30, 0
      %p324 = por %p322, %p323
      %p325 = scmp.ne.s32.totalorder %s313, %s314
      %p326 = scmp.eq.s32.totalorder %s31, 1
      %p327 = por %p325, %p326
      %p329 = scmp.ne.s32.totalorder %s314, %s328
      %p330 = scmp.eq.s32.totalorder %s31, 0
      %p331 = por %p329, %p330
      %s333 = sadd.s32 %s332, 1
      %p336 = scmp.eq.s32.totalorder %s25, 1
      %p337 = scmp.ne.s32.totalorder %s332, %s334
      %p338 = scmp.eq.s32.totalorder %s25, 0
      %p339 = por %p337, %p338
      %p340 = scmp.ne.s32.totalorder %s332, %s334
      %p341 = scmp.eq.s32.totalorder %s30, 1
      %p342 = por %p340, %p341
      %p343 = scmp.ne.s32.totalorder %s334, %s335
      %p344 = scmp.eq.s32.totalorder %s30, 0
      %p345 = por %p343, %p344
      %p346 = scmp.ne.s32.totalorder %s334, %s335
      %p347 = scmp.eq.s32.totalorder %s31, 1
      %p348 = por %p346, %p347
      %p350 = scmp.ne.s32.totalorder %s335, %s349
      %p351 = scmp.eq.s32.totalorder %s31, 0
      %p352 = por %p350, %p351
      %s354 = sadd.s32 %s353, 1
      %p357 = scmp.eq.s32.totalorder %s25, 1
      %p358 = scmp.ne.s32.totalorder %s353, %s355
      %p359 = scmp.eq.s32.totalorder %s25, 0
      %p360 = por %p358, %p359
      %p361 = scmp.ne.s32.totalorder %s353, %s355
      %p362 = scmp.eq.s32.totalorder %s30, 1
      %p363 = por %p361, %p362
      %p364 = scmp.ne.s32.totalorder %s355, %s356
      %p365 = scmp.eq.s32.totalorder %s30, 0
      %p366 = por %p364, %p365
      %p367 = scmp.ne.s32.totalorder %s355, %s356
      %p368 = scmp.eq.s32.totalorder %s31, 1
      %p369 = por %p367, %p368
      %p371 = scmp.ne.s32.totalorder %s356, %s370
      %p372 = scmp.eq.s32.totalorder %s31, 0
      %p373 = por %p371, %p372
      %s374 = ssub.s32 %s25, %s32
      %p375 = scmp.eq.s32.totalorder %s374, 0
      %s377 = sadd.s32 %s376, 1
      %s378 = scalar_select %p375, %s376, %s377
      %p381 = pneg %p375
      %p382 = scmp.eq.s32.totalorder %s25, 1
      %p383 = por %p381, %p382
      %p384 = scmp.ne.s32.totalorder %s376, %s379
      %p385 = scmp.eq.s32.totalorder %s25, 0
      %p386 = por %p384, %p385
      %p387 = scmp.ne.s32.totalorder %s376, %s379
      %p388 = scmp.eq.s32.totalorder %s30, 1
      %p389 = por %p387, %p388
      %p390 = scmp.ne.s32.totalorder %s379, %s380
      %p391 = scmp.eq.s32.totalorder %s30, 0
      %p392 = por %p390, %p391
      %p393 = scmp.ne.s32.totalorder %s379, %s380
      %p394 = scmp.eq.s32.totalorder %s31, 1
      %p395 = por %p393, %p394
      %p397 = scmp.ne.s32.totalorder %s380, %s396
      %p398 = scmp.eq.s32.totalorder %s31, 0
      %p399 = por %p397, %p398
      %p400 = scmp.le.s32.totalorder 1, %s25
      %p401 = scmp.lt.s32.totalorder %s25, 3
      %p402 = pnand %p400, %p401
      %p403 = pneg %p402
      // Predicated region
      $region9: #{model_forward.1} parent=5 // pred_check
        _
      $region10: #{model_forward.1} parent=5 // pred_check_branch
        %405 = sbr.rel (%p402) target = $region12
      $region11: #{model_forward.1} parent=5 // pred_region
        %s406 = ssub.s32 %s25, 1
        // Predicated region
        $region13: #{model_forward.1} parent=11 // pred_check
          %p407 = pneg %p72
        $region14: #{model_forward.1} parent=11 // pred_check_branch
          %409 = sbr.rel (%p407) target = $region16
        $region15: #{model_forward.1} parent=11 // pred_region
          _
        $region16: #{model_forward.1} parent=11 // pred_fallthru
          _
        // Predicated region
        $region17: #{model_forward.1} parent=11 // pred_check
          %p410 = pneg %p93
        $region18: #{model_forward.1} parent=11 // pred_check_branch
          %412 = sbr.rel (%p410) target = $region20
        $region19: #{model_forward.1} parent=11 // pred_region
          _
        $region20: #{model_forward.1} parent=11 // pred_fallthru
          _
        // Predicated region
        $region21: #{model_forward.1} parent=11 // pred_check
          %p413 = pneg %p114
        $region22: #{model_forward.1} parent=11 // pred_check_branch
          %415 = sbr.rel (%p413) target = $region24
        $region23: #{model_forward.1} parent=11 // pred_region
          _
        $region24: #{model_forward.1} parent=11 // pred_fallthru
          _
        // Predicated region
        $region25: #{model_forward.1} parent=11 // pred_check
          %p416 = pneg %p135
        $region26: #{model_forward.1} parent=11 // pred_check_branch
          %418 = sbr.rel (%p416) target = $region28
        $region27: #{model_forward.1} parent=11 // pred_region
          _
        $region28: #{model_forward.1} parent=11 // pred_fallthru
          _
        // Predicated region
        $region29: #{model_forward.1} parent=11 // pred_check
          %p419 = pneg %p156
        $region30: #{model_forward.1} parent=11 // pred_check_branch
          %421 = sbr.rel (%p419) target = $region32
        $region31: #{model_forward.1} parent=11 // pred_region
          _
        $region32: #{model_forward.1} parent=11 // pred_fallthru
          _
        // Predicated region
        $region33: #{model_forward.1} parent=11 // pred_check
          %p422 = pneg %p177
        $region34: #{model_forward.1} parent=11 // pred_check_branch
          %424 = sbr.rel (%p422) target = $region36
        $region35: #{model_forward.1} parent=11 // pred_region
          _
        $region36: #{model_forward.1} parent=11 // pred_fallthru
          _
        // Predicated region
        $region37: #{model_forward.1} parent=11 // pred_check
          %p425 = pneg %p198
        $region38: #{model_forward.1} parent=11 // pred_check_branch
          %427 = sbr.rel (%p425) target = $region40
        $region39: #{model_forward.1} parent=11 // pred_region
          _
        $region40: #{model_forward.1} parent=11 // pred_fallthru
          _
        // Predicated region
        $region41: #{model_forward.1} parent=11 // pred_check
          %p428 = pneg %p219
        $region42: #{model_forward.1} parent=11 // pred_check_branch
          %430 = sbr.rel (%p428) target = $region44
        $region43: #{model_forward.1} parent=11 // pred_region
          _
        $region44: #{model_forward.1} parent=11 // pred_fallthru
          _
        // Predicated region
        $region45: #{model_forward.1} parent=11 // pred_check
          %p431 = pneg %p240
        $region46: #{model_forward.1} parent=11 // pred_check_branch
          %433 = sbr.rel (%p431) target = $region48
        $region47: #{model_forward.1} parent=11 // pred_region
          _
        $region48: #{model_forward.1} parent=11 // pred_fallthru
          _
        // Predicated region
        $region49: #{model_forward.1} parent=11 // pred_check
          %p434 = pneg %p261
        $region50: #{model_forward.1} parent=11 // pred_check_branch
          %436 = sbr.rel (%p434) target = $region52
        $region51: #{model_forward.1} parent=11 // pred_region
          _
        $region52: #{model_forward.1} parent=11 // pred_fallthru
          _
        // Predicated region
        $region53: #{model_forward.1} parent=11 // pred_check
          %p437 = pneg %p282
        $region54: #{model_forward.1} parent=11 // pred_check_branch
          %439 = sbr.rel (%p437) target = $region56
        $region55: #{model_forward.1} parent=11 // pred_region
          _
        $region56: #{model_forward.1} parent=11 // pred_fallthru
          _
        // Predicated region
        $region57: #{model_forward.1} parent=11 // pred_check
          %p440 = pneg %p303
        $region58: #{model_forward.1} parent=11 // pred_check_branch
          %442 = sbr.rel (%p440) target = $region60
        $region59: #{model_forward.1} parent=11 // pred_region
          _
        $region60: #{model_forward.1} parent=11 // pred_fallthru
          _
        // Predicated region
        $region61: #{model_forward.1} parent=11 // pred_check
          %p443 = pneg %p324
        $region62: #{model_forward.1} parent=11 // pred_check_branch
          %445 = sbr.rel (%p443) target = $region64
        $region63: #{model_forward.1} parent=11 // pred_region
          _
        $region64: #{model_forward.1} parent=11 // pred_fallthru
          _
        // Predicated region
        $region65: #{model_forward.1} parent=11 // pred_check
          %p446 = pneg %p345
        $region66: #{model_forward.1} parent=11 // pred_check_branch
          %448 = sbr.rel (%p446) target = $region68
        $region67: #{model_forward.1} parent=11 // pred_region
          _
        $region68: #{model_forward.1} parent=11 // pred_fallthru
          _
        // Predicated region
        $region69: #{model_forward.1} parent=11 // pred_check
          %p449 = pneg %p366
        $region70: #{model_forward.1} parent=11 // pred_check_branch
          %451 = sbr.rel (%p449) target = $region72
        $region71: #{model_forward.1} parent=11 // pred_region
          _
        $region72: #{model_forward.1} parent=11 // pred_fallthru
          _
      $region12: #{model_forward.1} parent=5 // pred_fallthru
        _
      %p452 = scmp.lt.s32.totalorder %s25, 2
      // Predicated region
      $region73: #{model_forward.1} parent=5 // pred_check
        %p453 = pneg %p452
      $region74: #{model_forward.1} parent=5 // pred_check_branch
        %455 = sbr.rel (%p453) target = $region76
      $region75: #{model_forward.1} parent=5 // pred_region
        // Predicated region
        $region77: #{model_forward.1} parent=75 // pred_check
          %p456 = pneg %p45
        $region78: #{model_forward.1} parent=75 // pred_check_branch
          %458 = sbr.rel (%p456) target = $region80
        $region79: #{model_forward.1} parent=75 // pred_region
          %p459 = scmp.lt.s32.totalorder %s25, 1
          %s460 = scalar_select %p459, %s25, 1
          %s461 = smul.addr %s460, 4
          %s462 = smul.addr %s461, 8
          %s463 = scalar_lea.vmem %s0, %s462
        $region80: #{model_forward.1} parent=75 // pred_fallthru
          _
      $region76: #{model_forward.1} parent=5 // pred_fallthru
        _
      %p464 = scmp.le.s32.totalorder 1, %s25
      %p465 = scmp.lt.s32.totalorder %s25, 3
      %p466 = pnand %p464, %p465
      %p467 = pneg %p466
      // Predicated region
      $region81: #{model_forward.1} parent=5 // pred_check
        _
      $region82: #{model_forward.1} parent=5 // pred_check_branch
        %469 = sbr.rel (%p466) target = $region84
      $region83: #{model_forward.1} parent=5 // pred_region
        %s470 = ssub.s32 %s25, 1
        %p471 = scmp.lt.s32.totalorder %s30, 1
        %s472 = scalar_select %p471, %s30, 1
        %s473 = smul.addr %s472, 4
        %s474 = smul.addr %s473, 8
        %s475 = scalar_lea.vmem %s0, %s474
        %p476 = pneg %p51
        %p477 = pneg %p48
        %p478 = pneg %p72
        %p479 = pneg %p69
        %p480 = pneg %p93
        %p481 = pneg %p90
        %p482 = pneg %p114
        %p483 = pneg %p111
        %p484 = pneg %p135
        %p485 = pneg %p132
        %p486 = pneg %p156
        %p487 = pneg %p153
        %p488 = pneg %p177
        %p489 = pneg %p174
        %p490 = pneg %p198
        %p491 = pneg %p195
        %p492 = pneg %p219
        %p493 = pneg %p216
        %p494 = pneg %p240
        %p495 = pneg %p237
        %p496 = pneg %p261
        %p497 = pneg %p258
        %p498 = pneg %p282
        %p499 = pneg %p279
        %p500 = pneg %p303
        %p501 = pneg %p300
        %p502 = pneg %p324
        %p503 = pneg %p321
        %p504 = pneg %p345
        %p505 = pneg %p342
        %p506 = pneg %p366
        %p507 = pneg %p363
        %p508 = pneg %p392
        %p509 = pneg %p389
        %s510 = sand.u32 %s379, 1
        %s511 = scalar_lea.sflag [#allocation6], %s510
        %s512 = sand.u32 %s379, 1
        %s513 = scalar_lea.vmem [#allocation5], %s512
        %p514 = scmp.lt.s32.totalorder %s30, 1
        %s515 = scalar_select %p514, %s30, 1
        %s516 = smul.addr %s515, 4
        %s517 = smul.addr %s516, 8
        %s518 = scalar_lea.vmem %s0, %s517
        %v519 = vld [vmem:[%s518] sm:$0xff]
        %v520 = vld [vmem:[%s518 + $0x8] sm:$0xff]
        %v521 = vld [vmem:[%s518 + $0x10] sm:$0xff]
        %v522 = vld [vmem:[%s518 + $0x18] sm:$0xf]
        %v523 = vld [vmem:[%s1] sm:$0xff]
        %v524 = vld [vmem:[%s1 + $0x8] sm:$0xff]
        %v525 = vld [vmem:[%s1 + $0x10] sm:$0xff]
        %v526 = vld [vmem:[%s1 + $0x18] sm:$0xff]
        %v527 = vld [vmem:[%s1 + $0x20] sm:$0xff]
        %v528 = vld [vmem:[%s1 + $0x28] sm:$0xff]
        %v529 = vld [vmem:[%s1 + $0x30] sm:$0xff]
        %v530 = vld [vmem:[%s1 + $0x38] sm:$0xff]
        %v531 = vld [vmem:[%s1 + $0x40] sm:$0xff]
        %v532 = vld [vmem:[%s1 + $0x48] sm:$0x3f]
        %v533 = vld [vmem:[%s1 + $0x50] sm:$0x3f]
        %v534 = vld [vmem:[%s1 + $0x58] sm:$0x3f]
        %v535 = vld [vmem:[%s518 + $0x1] sm:$0xff]
        %v536 = vld [vmem:[%s518 + $0x9] sm:$0xff]
        %v537 = vld [vmem:[%s518 + $0x11] sm:$0xff]
        %v538 = vld [vmem:[%s518 + $0x19] sm:$0xf]
        %s539 = scalar_lea.vmem %s1, 96
        %v540 = vld [vmem:[%s539] sm:$0xff]
        %v541 = vld [vmem:[%s539 + $0x8] sm:$0xff]
        %v542 = vld [vmem:[%s539 + $0x10] sm:$0xff]
        %v543 = vld [vmem:[%s539 + $0x18] sm:$0xff]
        %v544 = vld [vmem:[%s539 + $0x20] sm:$0xff]
        %v545 = vld [vmem:[%s539 + $0x28] sm:$0xff]
        %v546 = vld [vmem:[%s539 + $0x30] sm:$0xff]
        %v547 = vld [vmem:[%s539 + $0x38] sm:$0xff]
        %v548 = vld [vmem:[%s539 + $0x40] sm:$0xff]
        %v549 = vld [vmem:[%s539 + $0x48] sm:$0x3f]
        %v550 = vld [vmem:[%s539 + $0x50] sm:$0x3f]
        %v551 = vld [vmem:[%s539 + $0x58] sm:$0x3f]
        %vm552 = vcmask 244736
        %v554 = vsel %vm552, %v535, 0
        %v557 = vsel %vm552, %v536, 0
        %v560 = vsel %vm552, %v537, 0
        %v563 = vsel %vm552, %v538, 0
        %vm565 = vcmask 1045504
        %v567 = vsel %vm565, %v549, 0
        %v570 = vsel %vm565, %v550, 0
        %v573 = vsel %vm565, %v551, 0
        %575 = vmatprep.subr.mxu0 %v541
        %576 = vmatpush1.msra.mxu0 %v540
        %577 = vmatprep.subr.mxu0 %v544
        %578 = vmatpush1.msra.mxu0 %v543
        %579 = vmatprep.subr.mxu0 %v547
        %580 = vmatpush1.msra.mxu0 %v546
        %581 = vmatprep.subr.mxu0 %v570
        %582 = vmatpush1.msra.mxu0 %v567
        %583 = vmatprep.subr.mxu0 0.0
        %584 = vmatpush1.msra.mxu0 0.0
        %585 = vmatprep.subr.mxu0 0.0
        %586 = vmatpush1.msra.mxu0 0.0
        %587 = vmatprep.subr.mxu0 0.0
        %588 = vmatpush1.msra.mxu0 0.0
        %589 = vmatprep.subr.mxu0 0.0
        %590 = vmatpush1.msra.mxu0 0.0
        %591 = vmatprep.subr.mxu0 0.0
        %592 = vmatpush1.msra.mxu0 0.0
        %593 = vmatprep.subr.mxu0 0.0
        %594 = vmatpush1.msra.mxu0 0.0
        %595 = vmatprep.subr.mxu0 0.0
        %596 = vmatpush1.msra.mxu0 0.0
        %597 = vmatprep.subr.mxu0 0.0
        %598 = vmatpush1.msra.mxu0 0.0
        %599 = vmatprep.subr.mxu0 0.0
        %600 = vmatpush1.msra.mxu0 0.0
        %601 = vmatprep.subr.mxu0 0.0
        %602 = vmatpush1.msra.mxu0 0.0
        %603 = vmatprep.subr.mxu0 0.0
        %604 = vmatpush1.msra.mxu0 0.0
        %605 = vmatprep.subr.mxu0 0.0
        %606 = vmatpush1.msra.mxu0 0.0
        %607 = vmatprep.subr.mxu0 0.0
        %608 = vmatpush1.msra.mxu0 0.0
        %609 = vmatprep.subr.mxu0 0.0
        %610 = vmatpush1.msra.mxu0 0.0
        %611 = vmatprep.subr.mxu0 0.0
        %612 = vmatpush1.msra.mxu0 0.0
        %613 = vmatprep.subr.mxu0 0.0
        %614 = vmatpush1.msra.mxu0 0.0
        %615 = vmatprep.subr.mxu0 0.0
        %616 = vmatpush1.msra.mxu0 0.0
        %617 = vmatprep.subr.mxu0 0.0
        %618 = vmatpush1.msra.mxu0 0.0
        %619 = vmatprep.subr.mxu0 0.0
        %620 = vmatpush1.msra.mxu0 0.0
        %621 = vmatprep.subr.mxu0 0.0
        %622 = vmatpush1.msra.mxu0 0.0
        %623 = vmatprep.subr.mxu0 0.0
        %624 = vmatpush1.msra.mxu0 0.0
        %625 = vmatprep.subr.mxu0 0.0
        %626 = vmatpush1.msra.mxu0 0.0
        %627 = vmatprep.subr.mxu0 0.0
        %628 = vmatpush1.msra.mxu0 0.0
        %629 = vmatprep.subr.mxu0 0.0
        %630 = vmatpush1.msra.mxu0 0.0
        %631 = vmatprep.subr.mxu0 0.0
        %632 = vmatpush1.msra.mxu0 0.0
        %633 = vmatprep.subr.mxu0 0.0
        %634 = vmatpush1.msra.mxu0 0.0
        %635 = vmatprep.subr.mxu0 0.0
        %636 = vmatpush1.msra.mxu0 0.0
        %637 = vmatprep.subr.mxu0 0.0
        %638 = vmatpush1.msra.mxu0 0.0
        %639 = vmatprep.mubr.f32.mxu0 0.0
        %640 = vmatmul.mubr.f32.gmra.mrb[0].mxu0 %v554
        %v641 = vpop.f32.mrb[0].mxu0
        %v642 = vadd.f32 0.0, %v641
        %v643 = vpop.f32.mrb[0].mxu0
        %v644 = vadd.f32 0.0, %v643
        %645 = vmatprep.mubr.f32.mxu0 0.0
        %646 = vmatmul.mubr.f32.gmra.mrb[0].mxu0 %v557
        %v647 = vpop.f32.mrb[0].mxu0
        %v648 = vadd.f32 0.0, %v647
        %v649 = vpop.f32.mrb[0].mxu0
        %v650 = vadd.f32 0.0, %v649
        %651 = vmatprep.mubr.f32.mxu0 0.0
        %652 = vmatmul.mubr.f32.gmra.mrb[0].mxu0 %v560
        %v653 = vpop.f32.mrb[0].mxu0
        %v654 = vadd.f32 0.0, %v653
        %v655 = vpop.f32.mrb[0].mxu0
        %v656 = vadd.f32 0.0, %v655
        %657 = vmatprep.mubr.f32.mxu0 0.0
        %658 = vmatmul.mubr.f32.gmra.mrb[0].mxu0 %v563
        %v659 = vpop.f32.mrb[0].mxu0
        %v660 = vadd.f32 0.0, %v659
        %v661 = vpop.f32.mrb[0].mxu0
        %v662 = vadd.f32 0.0, %v661
        %663 = vdwg.mxu0
        %664 = vmatprep.subr.mxu0 0.0
        %665 = vmatpush1.msra.mxu0 %v542
        %666 = vmatprep.subr.mxu0 0.0
        %667 = vmatpush1.msra.mxu0 %v545
        %668 = vmatprep.subr.mxu0 0.0
        %669 = vmatpush1.msra.mxu0 %v548
        %670 = vmatprep.subr.mxu0 0.0
        %671 = vmatpush1.msra.mxu0 %v573
        %672 = vmatprep.subr.mxu0 0.0
        %673 = vmatpush1.msra.mxu0 0.0
        %674 = vmatprep.subr.mxu0 0.0
        %675 = vmatpush1.msra.mxu0 0.0
        %676 = vmatprep.subr.mxu0 0.0
        %677 = vmatpush1.msra.mxu0 0.0
        %678 = vmatprep.subr.mxu0 0.0
        %679 = vmatpush1.msra.mxu0 0.0
        %680 = vmatprep.subr.mxu0 0.0
        %681 = vmatpush1.msra.mxu0 0.0
        %682 = vmatprep.subr.mxu0 0.0
        %683 = vmatpush1.msra.mxu0 0.0
        %684 = vmatprep.subr.mxu0 0.0
        %685 = vmatpush1.msra.mxu0 0.0
        %686 = vmatprep.subr.mxu0 0.0
        %687 = vmatpush1.msra.mxu0 0.0
        %688 = vmatprep.subr.mxu0 0.0
        %689 = vmatpush1.msra.mxu0 0.0
        %690 = vmatprep.subr.mxu0 0.0
        %691 = vmatpush1.msra.mxu0 0.0
        %692 = vmatprep.subr.mxu0 0.0
        %693 = vmatpush1.msra.mxu0 0.0
        %694 = vmatprep.subr.mxu0 0.0
        %695 = vmatpush1.msra.mxu0 0.0
        %696 = vmatprep.subr.mxu0 0.0
        %697 = vmatpush1.msra.mxu0 0.0
        %698 = vmatprep.subr.mxu0 0.0
        %699 = vmatpush1.msra.mxu0 0.0
        %700 = vmatprep.subr.mxu0 0.0
        %701 = vmatpush1.msra.mxu0 0.0
        %702 = vmatprep.subr.mxu0 0.0
        %703 = vmatpush1.msra.mxu0 0.0
        %704 = vmatprep.subr.mxu0 0.0
        %705 = vmatpush1.msra.mxu0 0.0
        %706 = vmatprep.subr.mxu0 0.0
        %707 = vmatpush1.msra.mxu0 0.0
        %708 = vmatprep.subr.mxu0 0.0
        %709 = vmatpush1.msra.mxu0 0.0
        %710 = vmatprep.subr.mxu0 0.0
        %711 = vmatpush1.msra.mxu0 0.0
        %712 = vmatprep.subr.mxu0 0.0
        %713 = vmatpush1.msra.mxu0 0.0
        %714 = vmatprep.subr.mxu0 0.0
        %715 = vmatpush1.msra.mxu0 0.0
        %716 = vmatprep.subr.mxu0 0.0
        %717 = vmatpush1.msra.mxu0 0.0
        %718 = vmatprep.subr.mxu0 0.0
        %719 = vmatpush1.msra.mxu0 0.0
        %720 = vmatprep.subr.mxu0 0.0
        %721 = vmatpush1.msra.mxu0 0.0
        %722 = vmatprep.subr.mxu0 0.0
        %723 = vmatpush1.msra.mxu0 0.0
        %724 = vmatprep.subr.mxu0 0.0
        %725 = vmatpush1.msra.mxu0 0.0
        %726 = vmatprep.subr.mxu0 0.0
        %727 = vmatpush1.msra.mxu0 0.0
        %728 = vmatprep.mubr.f32.mxu0 0.0
        %729 = vmatmul.mubr.f32.gmra.mrb[0].mxu0 %v554
        %v730 = vpop.f32.mrb[0].mxu0
        %v731 = vadd.f32 0.0, %v730
        %v732 = vpop.f32.mrb[0].mxu0
        %733 = vmatprep.mubr.f32.mxu0 0.0
        %734 = vmatmul.mubr.f32.gmra.mrb[0].mxu0 %v557
        %v735 = vpop.f32.mrb[0].mxu0
        %v736 = vadd.f32 0.0, %v735
        %v737 = vpop.f32.mrb[0].mxu0
        %738 = vmatprep.mubr.f32.mxu0 0.0
        %739 = vmatmul.mubr.f32.gmra.mrb[0].mxu0 %v560
        %v740 = vpop.f32.mrb[0].mxu0
        %v741 = vadd.f32 0.0, %v740
        %v742 = vpop.f32.mrb[0].mxu0
        %743 = vmatprep.mubr.f32.mxu0 0.0
        %744 = vmatmul.mubr.f32.gmra.mrb[0].mxu0 %v563
        %v745 = vpop.f32.mrb[0].mxu0
        %v746 = vadd.f32 0.0, %v745
        %v747 = vpop.f32.mrb[0].mxu0
        %748 = vdwg.mxu0
        %v750 = vsel %vm552, %v519, 0
        %v753 = vsel %vm552, %v520, 0
        %v756 = vsel %vm552, %v521, 0
        %v759 = vsel %vm552, %v522, 0
        %v762 = vsel %vm565, %v532, 0
        %v765 = vsel %vm565, %v533, 0
        %v768 = vsel %vm565, %v534, 0
        %770 = vmatprep.subr.mxu0 %v524
        %771 = vmatpush1.msra.mxu0 %v523
        %772 = vmatprep.subr.mxu0 %v527
        %773 = vmatpush1.msra.mxu0 %v526
        %774 = vmatprep.subr.mxu0 %v530
        %775 = vmatpush1.msra.mxu0 %v529
        %776 = vmatprep.subr.mxu0 %v765
        %777 = vmatpush1.msra.mxu0 %v762
        %778 = vmatprep.subr.mxu0 0.0
        %779 = vmatpush1.msra.mxu0 0.0
        %780 = vmatprep.subr.mxu0 0.0
        %781 = vmatpush1.msra.mxu0 0.0
        %782 = vmatprep.subr.mxu0 0.0
        %783 = vmatpush1.msra.mxu0 0.0
        %784 = vmatprep.subr.mxu0 0.0
        %785 = vmatpush1.msra.mxu0 0.0
        %786 = vmatprep.subr.mxu0 0.0
        %787 = vmatpush1.msra.mxu0 0.0
        %788 = vmatprep.subr.mxu0 0.0
        %789 = vmatpush1.msra.mxu0 0.0
        %790 = vmatprep.subr.mxu0 0.0
        %791 = vmatpush1.msra.mxu0 0.0
        %792 = vmatprep.subr.mxu0 0.0
        %793 = vmatpush1.msra.mxu0 0.0
        %794 = vmatprep.subr.mxu0 0.0
        %795 = vmatpush1.msra.mxu0 0.0
        %796 = vmatprep.subr.mxu0 0.0
        %797 = vmatpush1.msra.mxu0 0.0
        %798 = vmatprep.subr.mxu0 0.0
        %799 = vmatpush1.msra.mxu0 0.0
        %800 = vmatprep.subr.mxu0 0.0
        %801 = vmatpush1.msra.mxu0 0.0
        %802 = vmatprep.subr.mxu0 0.0
        %803 = vmatpush1.msra.mxu0 0.0
        %804 = vmatprep.subr.mxu0 0.0
        %805 = vmatpush1.msra.mxu0 0.0
        %806 = vmatprep.subr.mxu0 0.0
        %807 = vmatpush1.msra.mxu0 0.0
        %808 = vmatprep.subr.mxu0 0.0
        %809 = vmatpush1.msra.mxu0 0.0
        %810 = vmatprep.subr.mxu0 0.0
        %811 = vmatpush1.msra.mxu0 0.0
        %812 = vmatprep.subr.mxu0 0.0
        %813 = vmatpush1.msra.mxu0 0.0
        %814 = vmatprep.subr.mxu0 0.0
        %815 = vmatpush1.msra.mxu0 0.0
        %816 = vmatprep.subr.mxu0 0.0
        %817 = vmatpush1.msra.mxu0 0.0
        %818 = vmatprep.subr.mxu0 0.0
        %819 = vmatpush1.msra.mxu0 0.0
        %820 = vmatprep.subr.mxu0 0.0
        %821 = vmatpush1.msra.mxu0 0.0
        %822 = vmatprep.subr.mxu0 0.0
        %823 = vmatpush1.msra.mxu0 0.0
        %824 = vmatprep.subr.mxu0 0.0
        %825 = vmatpush1.msra.mxu0 0.0
        %826 = vmatprep.subr.mxu0 0.0
        %827 = vmatpush1.msra.mxu0 0.0
        %828 = vmatprep.subr.mxu0 0.0
        %829 = vmatpush1.msra.mxu0 0.0
        %830 = vmatprep.subr.mxu0 0.0
        %831 = vmatpush1.msra.mxu0 0.0
        %832 = vmatprep.subr.mxu0 0.0
        %833 = vmatpush1.msra.mxu0 0.0
        %834 = vmatprep.mubr.f32.mxu0 0.0
        %835 = vmatmul.mubr.f32.gmra.mrb[0].mxu0 %v750
        %v836 = vpop.f32.mrb[0].mxu0
        %v837 = vadd.f32 %v642, %v836
        %v838 = vpop.f32.mrb[0].mxu0
        %v839 = vadd.f32 %v644, %v838
        %840 = vmatprep.mubr.f32.mxu0 0.0
        %841 = vmatmul.mubr.f32.gmra.mrb[0].mxu0 %v753
        %v842 = vpop.f32.mrb[0].mxu0
        %v843 = vadd.f32 %v648, %v842
        %v844 = vpop.f32.mrb[0].mxu0
        %v845 = vadd.f32 %v650, %v844
        %846 = vmatprep.mubr.f32.mxu0 0.0
        %847 = vmatmul.mubr.f32.gmra.mrb[0].mxu0 %v756
        %v848 = vpop.f32.mrb[0].mxu0
        %v849 = vadd.f32 %v654, %v848
        %v850 = vpop.f32.mrb[0].mxu0
        %v851 = vadd.f32 %v656, %v850
        %852 = vmatprep.mubr.f32.mxu0 0.0
        %853 = vmatmul.mubr.f32.gmra.mrb[0].mxu0 %v759
        %v854 = vpop.f32.mrb[0].mxu0
        %v855 = vadd.f32 %v660, %v854
        %v856 = vpop.f32.mrb[0].mxu0
        %v857 = vadd.f32 %v662, %v856
        %858 = vdwg.mxu0
        %859 = vmatprep.subr.mxu0 0.0
        %860 = vmatpush1.msra.mxu0 %v525
        %861 = vmatprep.subr.mxu0 0.0
        %862 = vmatpush1.msra.mxu0 %v528
        %863 = vmatprep.subr.mxu0 0.0
        %864 = vmatpush1.msra.mxu0 %v531
        %865 = vmatprep.subr.mxu0 0.0
        %866 = vmatpush1.msra.mxu0 %v768
        %867 = vmatprep.subr.mxu0 0.0
        %868 = vmatpush1.msra.mxu0 0.0
        %869 = vmatprep.subr.mxu0 0.0
        %870 = vmatpush1.msra.mxu0 0.0
        %871 = vmatprep.subr.mxu0 0.0
        %872 = vmatpush1.msra.mxu0 0.0
        %873 = vmatprep.subr.mxu0 0.0
        %874 = vmatpush1.msra.mxu0 0.0
        %875 = vmatprep.subr.mxu0 0.0
        %876 = vmatpush1.msra.mxu0 0.0
        %877 = vmatprep.subr.mxu0 0.0
        %878 = vmatpush1.msra.mxu0 0.0
        %879 = vmatprep.subr.mxu0 0.0
        %880 = vmatpush1.msra.mxu0 0.0
        %881 = vmatprep.subr.mxu0 0.0
        %882 = vmatpush1.msra.mxu0 0.0
        %883 = vmatprep.subr.mxu0 0.0
        %884 = vmatpush1.msra.mxu0 0.0
        %885 = vmatprep.subr.mxu0 0.0
        %886 = vmatpush1.msra.mxu0 0.0
        %887 = vmatprep.subr.mxu0 0.0
        %888 = vmatpush1.msra.mxu0 0.0
        %889 = vmatprep.subr.mxu0 0.0
        %890 = vmatpush1.msra.mxu0 0.0
        %891 = vmatprep.subr.mxu0 0.0
        %892 = vmatpush1.msra.mxu0 0.0
        %893 = vmatprep.subr.mxu0 0.0
        %894 = vmatpush1.msra.mxu0 0.0
        %895 = vmatprep.subr.mxu0 0.0
        %896 = vmatpush1.msra.mxu0 0.0
        %897 = vmatprep.subr.mxu0 0.0
        %898 = vmatpush1.msra.mxu0 0.0
        %899 = vmatprep.subr.mxu0 0.0
        %900 = vmatpush1.msra.mxu0 0.0
        %901 = vmatprep.subr.mxu0 0.0
        %902 = vmatpush1.msra.mxu0 0.0
        %903 = vmatprep.subr.mxu0 0.0
        %904 = vmatpush1.msra.mxu0 0.0
        %905 = vmatprep.subr.mxu0 0.0
        %906 = vmatpush1.msra.mxu0 0.0
        %907 = vmatprep.subr.mxu0 0.0
        %908 = vmatpush1.msra.mxu0 0.0
        %909 = vmatprep.subr.mxu0 0.0
        %910 = vmatpush1.msra.mxu0 0.0
        %911 = vmatprep.subr.mxu0 0.0
        %912 = vmatpush1.msra.mxu0 0.0
        %913 = vmatprep.subr.mxu0 0.0
        %914 = vmatpush1.msra.mxu0 0.0
        %915 = vmatprep.subr.mxu0 0.0
        %916 = vmatpush1.msra.mxu0 0.0
        %917 = vmatprep.subr.mxu0 0.0
        %918 = vmatpush1.msra.mxu0 0.0
        %919 = vmatprep.subr.mxu0 0.0
        %920 = vmatpush1.msra.mxu0 0.0
        %921 = vmatprep.subr.mxu0 0.0
        %922 = vmatpush1.msra.mxu0 0.0
        %923 = vmatprep.mubr.f32.mxu0 0.0
        %924 = vmatmul.mubr.f32.gmra.mrb[0].mxu0 %v750
        %v925 = vpop.f32.mrb[0].mxu0
        %v926 = vadd.f32 %v731, %v925
        %v927 = vpop.f32.mrb[0].mxu0
        %928 = vmatprep.mubr.f32.mxu0 0.0
        %929 = vmatmul.mubr.f32.gmra.mrb[0].mxu0 %v753
        %v930 = vpop.f32.mrb[0].mxu0
        %v931 = vadd.f32 %v736, %v930
        %v932 = vpop.f32.mrb[0].mxu0
        %933 = vmatprep.mubr.f32.mxu0 0.0
        %934 = vmatmul.mubr.f32.gmra.mrb[0].mxu0 %v756
        %v935 = vpop.f32.mrb[0].mxu0
        %v936 = vadd.f32 %v741, %v935
        %v937 = vpop.f32.mrb[0].mxu0
        %938 = vmatprep.mubr.f32.mxu0 0.0
        %939 = vmatmul.mubr.f32.gmra.mrb[0].mxu0 %v759
        %v940 = vpop.f32.mrb[0].mxu0
        %v941 = vadd.f32 %v746, %v940
        %v942 = vpop.f32.mrb[0].mxu0
        %943 = vdwg.mxu0
        %v944 = vld [vmem:[%s518 + $0x2] sm:$0xff]
        %v945 = vld [vmem:[%s518 + $0xa] sm:$0xff]
        %v946 = vld [vmem:[%s518 + $0x12] sm:$0xff]
        %v947 = vld [vmem:[%s518 + $0x1a] sm:$0xf]
        %s948 = scalar_lea.vmem %s1, 192
        %v949 = vld [vmem:[%s948] sm:$0xff]
        %v950 = vld [vmem:[%s948 + $0x8] sm:$0xff]
        %v951 = vld [vmem:[%s948 + $0x10] sm:$0xff]
        %v952 = vld [vmem:[%s948 + $0x18] sm:$0xff]
        %v953 = vld [vmem:[%s948 + $0x20] sm:$0xff]
        %v954 = vld [vmem:[%s948 + $0x28] sm:$0xff]
        %v955 = vld [vmem:[%s948 + $0x30] sm:$0xff]
        %v956 = vld [vmem:[%s948 + $0x38] sm:$0xff]
        %v957 = vld [vmem:[%s948 + $0x40] sm:$0xff]
        %v958 = vld [vmem:[%s948 + $0x48] sm:$0x3f]
        %v959 = vld [vmem:[%s948 + $0x50] sm:$0x3f]
        %v960 = vld [vmem:[%s948 + $0x58] sm:$0x3f]
        %v962 = vsel %vm552, %v944, 0
        %v965 = vsel %vm552, %v945, 0
        %v968 = vsel %vm552, %v946, 0
        %v971 = vsel %vm552, %v947, 0
        %v974 = vsel %vm565, %v958, 0
        %v977 = vsel %vm565, %v959, 0
        %v980 = vsel %vm565, %v960, 0
        %982 = vmatprep.subr.mxu0 %v950
        %983 = vmatpush1.msra.mxu0 %v949
        %984 = vmatprep.subr.mxu0 %v953
        %985 = vmatpush1.msra.mxu0 %v952
        %986 = vmatprep.subr.mxu0 %v956
        %987 = vmatpush1.msra.mxu0 %v955
        %988 = vmatprep.subr.mxu0 %v977
        %989 = vmatpush1.msra.mxu0 %v974
        %990 = vmatprep.subr.mxu0 0.0
        %991 = vmatpush1.msra.mxu0 0.0
        %992 = vmatprep.subr.mxu0 0.0
        %993 = vmatpush1.msra.mxu0 0.0
        %994 = vmatprep.subr.mxu0 0.0
        %995 = vmatpush1.msra.mxu0 0.0
        %996 = vmatprep.subr.mxu0 0.0
        %997 = vmatpush1.msra.mxu0 0.0
        %998 = vmatprep.subr.mxu0 0.0
        %999 = vmatpush1.msra.mxu0 0.0
        %1000 = vmatprep.subr.mxu0 0.0
        %1001 = vmatpush1.msra.mxu0 0.0
        %1002 = vmatprep.subr.mxu0 0.0
        %1003 = vmatpush1.msra.mxu0 0.0
        %1004 = vmatprep.subr.mxu0 0.0
        %1005 = vmatpush1.msra.mxu0 0.0
        %1006 = vmatprep.subr.mxu0 0.0
        %1007 = vmatpush1.msra.mxu0 0.0
        %1008 = vmatprep.subr.mxu0 0.0
        %1009 = vmatpush1.msra.mxu0 0.0
        %1010 = vmatprep.subr.mxu0 0.0
        %1011 = vmatpush1.msra.mxu0 0.0
        %1012 = vmatprep.subr.mxu0 0.0
        %1013 = vmatpush1.msra.mxu0 0.0
        %1014 = vmatprep.subr.mxu0 0.0
        %1015 = vmatpush1.msra.mxu0 0.0
        %1016 = vmatprep.subr.mxu0 0.0
        %1017 = vmatpush1.msra.mxu0 0.0
        %1018 = vmatprep.subr.mxu0 0.0
        %1019 = vmatpush1.msra.mxu0 0.0
        %1020 = vmatprep.subr.mxu0 0.0
        %1021 = vmatpush1.msra.mxu0 0.0
        %1022 = vmatprep.subr.mxu0 0.0
        %1023 = vmatpush1.msra.mxu0 0.0
        %1024 = vmatprep.subr.mxu0 0.0
        %1025 = vmatpush1.msra.mxu0 0.0
        %1026 = vmatprep.subr.mxu0 0.0
        %1027 = vmatpush1.msra.mxu0 0.0
        %1028 = vmatprep.subr.mxu0 0.0
        %1029 = vmatpush1.msra.mxu0 0.0
        %1030 = vmatprep.subr.mxu0 0.0
        %1031 = vmatpush1.msra.mxu0 0.0
        %1032 = vmatprep.subr.mxu0 0.0
        %1033 = vmatpush1.msra.mxu0 0.0
        %1034 = vmatprep.subr.mxu0 0.0
        %1035 = vmatpush1.msra.mxu0 0.0
        %1036 = vmatprep.subr.mxu0 0.0
        %1037 = vmatpush1.msra.mxu0 0.0
        %1038 = vmatprep.subr.mxu0 0.0
        %1039 = vmatpush1.msra.mxu0 0.0
        %1040 = vmatprep.subr.mxu0 0.0
        %1041 = vmatpush1.msra.mxu0 0.0
        %1042 = vmatprep.subr.mxu0 0.0
        %1043 = vmatpush1.msra.mxu0 0.0
        %1044 = vmatprep.subr.mxu0 0.0
        %1045 = vmatpush1.msra.mxu0 0.0
        %1046 = vmatprep.mubr.f32.mxu0 0.0
        %1047 = vmatmul.mubr.f32.gmra.mrb[0].mxu0 %v962
        %v1048 = vpop.f32.mrb[0].mxu0
        %v1049 = vadd.f32 0.0, %v1048
        %v1050 = vpop.f32.mrb[0].mxu0
        %v1051 = vadd.f32 0.0, %v1050
        %1052 = vmatprep.mubr.f32.mxu0 0.0
        %1053 = vmatmul.mubr.f32.gmra.mrb[0].mxu0 %v965
        %v1054 = vpop.f32.mrb[0].mxu0
        %v1055 = vadd.f32 0.0, %v1054
        %v1056 = vpop.f32.mrb[0].mxu0
        %v1057 = vadd.f32 0.0, %v1056
        %1058 = vmatprep.mubr.f32.mxu0 0.0
        %1059 = vmatmul.mubr.f32.gmra.mrb[0].mxu0 %v968
        %v1060 = vpop.f32.mrb[0].mxu0
        %v1061 = vadd.f32 0.0, %v1060
        %v1062 = vpop.f32.mrb[0].mxu0
        %v1063 = vadd.f32 0.0, %v1062
        %1064 = vmatprep.mubr.f32.mxu0 0.0
        %1065 = vmatmul.mubr.f32.gmra.mrb[0].mxu0 %v971
        %v1066 = vpop.f32.mrb[0].mxu0
        %v1067 = vadd.f32 0.0, %v1066
        %v1068 = vpop.f32.mrb[0].mxu0
        %v1069 = vadd.f32 0.0, %v1068
        %1070 = vdwg.mxu0
        %1071 = vmatprep.subr.mxu0 0.0
        %1072 = vmatpush1.msra.mxu0 %v951
        %1073 = vmatprep.subr.mxu0 0.0
        %1074 = vmatpush1.msra.mxu0 %v954
        %1075 = vmatprep.subr.mxu0 0.0
        %1076 = vmatpush1.msra.mxu0 %v957
        %1077 = vmatprep.subr.mxu0 0.0
        %1078 = vmatpush1.msra.mxu0 %v980
        %1079 = vmatprep.subr.mxu0 0.0
        %1080 = vmatpush1.msra.mxu0 0.0
        %1081 = vmatprep.subr.mxu0 0.0
        %1082 = vmatpush1.msra.mxu0 0.0
        %1083 = vmatprep.subr.mxu0 0.0
        %1084 = vmatpush1.msra.mxu0 0.0
        %1085 = vmatprep.subr.mxu0 0.0
        %1086 = vmatpush1.msra.mxu0 0.0
        %1087 = vmatprep.subr.mxu0 0.0
        %1088 = vmatpush1.msra.mxu0 0.0
        %1089 = vmatprep.subr.mxu0 0.0
        %1090 = vmatpush1.msra.mxu0 0.0
        %1091 = vmatprep.subr.mxu0 0.0
        %1092 = vmatpush1.msra.mxu0 0.0
        %1093 = vmatprep.subr.mxu0 0.0
        %1094 = vmatpush1.msra.mxu0 0.0
        %1095 = vmatprep.subr.mxu0 0.0
        %1096 = vmatpush1.msra.mxu0 0.0
        %1097 = vmatprep.subr.mxu0 0.0
        %1098 = vmatpush1.msra.mxu0 0.0
        %1099 = vmatprep.subr.mxu0 0.0
        %1100 = vmatpush1.msra.mxu0 0.0
        %1101 = vmatprep.subr.mxu0 0.0
        %1102 = vmatpush1.msra.mxu0 0.0
        %1103 = vmatprep.subr.mxu0 0.0
        %1104 = vmatpush1.msra.mxu0 0.0
        %1105 = vmatprep.subr.mxu0 0.0
        %1106 = vmatpush1.msra.mxu0 0.0
        %1107 = vmatprep.subr.mxu0 0.0
        %1108 = vmatpush1.msra.mxu0 0.0
        %1109 = vmatprep.subr.mxu0 0.0
        %1110 = vmatpush1.msra.mxu0 0.0
        %1111 = vmatprep.subr.mxu0 0.0
        %1112 = vmatpush1.msra.mxu0 0.0
        %1113 = vmatprep.subr.mxu0 0.0
        %1114 = vmatpush1.msra.mxu0 0.0
        %1115 = vmatprep.subr.mxu0 0.0
        %1116 = vmatpush1.msra.mxu0 0.0
        %1117 = vmatprep.subr.mxu0 0.0
        %1118 = vmatpush1.msra.mxu0 0.0
        %1119 = vmatprep.subr.mxu0 0.0
        %1120 = vmatpush1.msra.mxu0 0.0
        %1121 = vmatprep.subr.mxu0 0.0
        %1122 = vmatpush1.msra.mxu0 0.0
        %1123 = vmatprep.subr.mxu0 0.0
        %1124 = vmatpush1.msra.mxu0 0.0
        %1125 = vmatprep.subr.mxu0 0.0
        %1126 = vmatpush1.msra.mxu0 0.0
        %1127 = vmatprep.subr.mxu0 0.0
        %1128 = vmatpush1.msra.mxu0 0.0
        %1129 = vmatprep.subr.mxu0 0.0
        %1130 = vmatpush1.msra.mxu0 0.0
        %1131 = vmatprep.subr.mxu0 0.0
        %1132 = vmatpush1.msra.mxu0 0.0
        %1133 = vmatprep.subr.mxu0 0.0
        %1134 = vmatpush1.msra.mxu0 0.0
        %1135 = vmatprep.mubr.f32.mxu0 0.0
        %1136 = vmatmul.mubr.f32.gmra.mrb[0].mxu0 %v962
        %v1137 = vpop.f32.mrb[0].mxu0
        %v1138 = vadd.f32 0.0, %v1137
        %v1139 = vpop.f32.mrb[0].mxu0
        %1140 = vmatprep.mubr.f32.mxu0 0.0
        %1141 = vmatmul.mubr.f32.gmra.mrb[0].mxu0 %v965
        %v1142 = vpop.f32.mrb[0].mxu0
        %v1143 = vadd.f32 0.0, %v1142
        %v1144 = vpop.f32.mrb[0].mxu0
        %1145 = vmatprep.mubr.f32.mxu0 0.0
        %1146 = vmatmul.mubr.f32.gmra.mrb[0].mxu0 %v968
        %v1147 = vpop.f32.mrb[0].mxu0
        %v1148 = vadd.f32 0.0, %v1147
        %v1149 = vpop.f32.mrb[0].mxu0
        %1150 = vmatprep.mubr.f32.mxu0 0.0
        %1151 = vmatmul.mubr.f32.gmra.mrb[0].mxu0 %v971
        %v1152 = vpop.f32.mrb[0].mxu0
        %v1153 = vadd.f32 0.0, %v1152
        %v1154 = vpop.f32.mrb[0].mxu0
        %1155 = vdwg.mxu0
        %v1156 = vadd.f32 %v837, %v1049
        %v1157 = vadd.f32 %v839, %v1051
        %v1158 = vadd.f32 %v926, %v1138
        %v1159 = vadd.f32 %v843, %v1055
        %v1160 = vadd.f32 %v845, %v1057
        %v1161 = vadd.f32 %v931, %v1143
        %v1162 = vadd.f32 %v849, %v1061
        %v1163 = vadd.f32 %v851, %v1063
        %v1164 = vadd.f32 %v936, %v1148
        %v1165 = vadd.f32 %v855, %v1067
        %v1166 = vadd.f32 %v857, %v1069
        %v1167 = vadd.f32 %v941, %v1153
        %v1168 = vld [vmem:[%s2] sm:$0x7]
        %v1170 = vlaneseq
        %v1171 = vshrl.u32 %v1170, 7
        %v1172 = vsub.s32 0, %v1171
        %v1173 = vrot.slane %v1168, %v1172
        %v1174 = vlaneseq
        %v1175 = vshrl.u32 %v1174, 7
        %v1176 = vsub.s32 1, %v1175
        %v1177 = vrot.slane %v1168, %v1176
        %v1178 = vlaneseq
        %v1179 = vshrl.u32 %v1178, 7
        %v1180 = vsub.s32 2, %v1179
        %v1181 = vrot.slane %v1168, %v1180
        %v1185 = vadd.f32 %v1156, %v1173
        %v1186 = vadd.f32 %v1157, %v1177
        %v1187 = vadd.f32 %v1158, %v1181
        %v1188 = vadd.f32 %v1159, %v1173
        %v1189 = vadd.f32 %v1160, %v1177
        %v1190 = vadd.f32 %v1161, %v1181
        %v1191 = vadd.f32 %v1162, %v1173
        %v1192 = vadd.f32 %v1163, %v1177
        %v1193 = vadd.f32 %v1164, %v1181
        %v1194 = vadd.f32 %v1165, %v1173
        %v1195 = vadd.f32 %v1166, %v1177
        %v1196 = vadd.f32 %v1167, %v1181
        %v1197 = vmax.f32 %v1185, 0.0
        %v1198 = vmax.f32 %v1186, 0.0
        %v1199 = vmax.f32 %v1187, 0.0
        %v1200 = vmax.f32 %v1188, 0.0
        %v1201 = vmax.f32 %v1189, 0.0
        %v1202 = vmax.f32 %v1190, 0.0
        %v1203 = vmax.f32 %v1191, 0.0
        %v1204 = vmax.f32 %v1192, 0.0
        %v1205 = vmax.f32 %v1193, 0.0
        %v1206 = vmax.f32 %v1194, 0.0
        %v1207 = vmax.f32 %v1195, 0.0
        %v1208 = vmax.f32 %v1196, 0.0
        %v1209 = vld [vmem:[%s3] sm:$0xff]
        %v1210 = vld [vmem:[%s3 + $0x8] sm:$0xff]
        %vm1211 = vcmask 228352
        %v1213 = vsel %vm1211, %v1209, 0
        %v1216 = vsel %vm1211, %v1210, 0
        %vm1218 = vcmask 1043456
        %v1220 = vsel %vm1218, %v1206, 0
        %v1223 = vsel %vm1218, %v1207, 0
        %v1226 = vsel %vm1218, %v1208, 0
        %1228 = vmatprep.subr.mxu0 %v1198
        %1229 = vmatpush1.msra.mxu0 %v1197
        %1230 = vmatprep.subr.mxu0 %v1201
        %1231 = vmatpush1.msra.mxu0 %v1200
        %1232 = vmatprep.subr.mxu0 %v1204
        %1233 = vmatpush1.msra.mxu0 %v1203
        %1234 = vmatprep.subr.mxu0 %v1223
        %1235 = vmatpush1.msra.mxu0 %v1220
        %1236 = vmatprep.subr.mxu0 0.0
        %1237 = vmatpush1.msra.mxu0 0.0
        %1238 = vmatprep.subr.mxu0 0.0
        %1239 = vmatpush1.msra.mxu0 0.0
        %1240 = vmatprep.subr.mxu0 0.0
        %1241 = vmatpush1.msra.mxu0 0.0
        %1242 = vmatprep.subr.mxu0 0.0
        %1243 = vmatpush1.msra.mxu0 0.0
        %1244 = vmatprep.subr.mxu0 0.0
        %1245 = vmatpush1.msra.mxu0 0.0
        %1246 = vmatprep.subr.mxu0 0.0
        %1247 = vmatpush1.msra.mxu0 0.0
        %1248 = vmatprep.subr.mxu0 0.0
        %1249 = vmatpush1.msra.mxu0 0.0
        %1250 = vmatprep.subr.mxu0 0.0
        %1251 = vmatpush1.msra.mxu0 0.0
        %1252 = vmatprep.subr.mxu0 0.0
        %1253 = vmatpush1.msra.mxu0 0.0
        %1254 = vmatprep.subr.mxu0 0.0
        %1255 = vmatpush1.msra.mxu0 0.0
        %1256 = vmatprep.subr.mxu0 0.0
        %1257 = vmatpush1.msra.mxu0 0.0
        %1258 = vmatprep.subr.mxu0 0.0
        %1259 = vmatpush1.msra.mxu0 0.0
        %1260 = vmatprep.subr.mxu0 0.0
        %1261 = vmatpush1.msra.mxu0 0.0
        %1262 = vmatprep.subr.mxu0 0.0
        %1263 = vmatpush1.msra.mxu0 0.0
        %1264 = vmatprep.subr.mxu0 0.0
        %1265 = vmatpush1.msra.mxu0 0.0
        %1266 = vmatprep.subr.mxu0 0.0
        %1267 = vmatpush1.msra.mxu0 0.0
        %1268 = vmatprep.subr.mxu0 0.0
        %1269 = vmatpush1.msra.mxu0 0.0
        %1270 = vmatprep.subr.mxu0 0.0
        %1271 = vmatpush1.msra.mxu0 0.0
        %1272 = vmatprep.subr.mxu0 0.0
        %1273 = vmatpush1.msra.mxu0 0.0
        %1274 = vmatprep.subr.mxu0 0.0
        %1275 = vmatpush1.msra.mxu0 0.0
        %1276 = vmatprep.subr.mxu0 0.0
        %1277 = vmatpush1.msra.mxu0 0.0
        %1278 = vmatprep.subr.mxu0 0.0
        %1279 = vmatpush1.msra.mxu0 0.0
        %1280 = vmatprep.subr.mxu0 0.0
        %1281 = vmatpush1.msra.mxu0 0.0
        %1282 = vmatprep.subr.mxu0 0.0
        %1283 = vmatpush1.msra.mxu0 0.0
        %1284 = vmatprep.subr.mxu0 0.0
        %1285 = vmatpush1.msra.mxu0 0.0
        %1286 = vmatprep.subr.mxu0 0.0
        %1287 = vmatpush1.msra.mxu0 0.0
        %1288 = vmatprep.subr.mxu0 0.0
        %1289 = vmatpush1.msra.mxu0 0.0
        %1290 = vmatprep.subr.mxu0 0.0
        %1291 = vmatpush1.msra.mxu0 0.0
        %1292 = vmatprep.mubr.f32.mxu0 0.0
        %1293 = vmatmul.mubr.f32.gmra.mrb[0].mxu0 %v1213
        %v1294 = vpop.f32.mrb[0].mxu0
        %v1295 = vadd.f32 0.0, %v1294
        %v1296 = vpop.f32.mrb[0].mxu0
        %v1297 = vadd.f32 0.0, %v1296
        %1298 = vmatprep.mubr.f32.mxu0 0.0
        %1299 = vmatmul.mubr.f32.gmra.mrb[0].mxu0 %v1216
        %v1300 = vpop.f32.mrb[0].mxu0
        %v1301 = vadd.f32 0.0, %v1300
        %v1302 = vpop.f32.mrb[0].mxu0
        %v1303 = vadd.f32 0.0, %v1302
        %1304 = vdwg.mxu0
        %1305 = vmatprep.subr.mxu0 0.0
        %1306 = vmatpush1.msra.mxu0 %v1199
        %1307 = vmatprep.subr.mxu0 0.0
        %1308 = vmatpush1.msra.mxu0 %v1202
        %1309 = vmatprep.subr.mxu0 0.0
        %1310 = vmatpush1.msra.mxu0 %v1205
        %1311 = vmatprep.subr.mxu0 0.0
        %1312 = vmatpush1.msra.mxu0 %v1226
        %1313 = vmatprep.subr.mxu0 0.0
        %1314 = vmatpush1.msra.mxu0 0.0
        %1315 = vmatprep.subr.mxu0 0.0
        %1316 = vmatpush1.msra.mxu0 0.0
        %1317 = vmatprep.subr.mxu0 0.0
        %1318 = vmatpush1.msra.mxu0 0.0
        %1319 = vmatprep.subr.mxu0 0.0
        %1320 = vmatpush1.msra.mxu0 0.0
        %1321 = vmatprep.subr.mxu0 0.0
        %1322 = vmatpush1.msra.mxu0 0.0
        %1323 = vmatprep.subr.mxu0 0.0
        %1324 = vmatpush1.msra.mxu0 0.0
        %1325 = vmatprep.subr.mxu0 0.0
        %1326 = vmatpush1.msra.mxu0 0.0
        %1327 = vmatprep.subr.mxu0 0.0
        %1328 = vmatpush1.msra.mxu0 0.0
        %1329 = vmatprep.subr.mxu0 0.0
        %1330 = vmatpush1.msra.mxu0 0.0
        %1331 = vmatprep.subr.mxu0 0.0
        %1332 = vmatpush1.msra.mxu0 0.0
        %1333 = vmatprep.subr.mxu0 0.0
        %1334 = vmatpush1.msra.mxu0 0.0
        %1335 = vmatprep.subr.mxu0 0.0
        %1336 = vmatpush1.msra.mxu0 0.0
        %1337 = vmatprep.subr.mxu0 0.0
        %1338 = vmatpush1.msra.mxu0 0.0
        %1339 = vmatprep.subr.mxu0 0.0
        %1340 = vmatpush1.msra.mxu0 0.0
        %1341 = vmatprep.subr.mxu0 0.0
        %1342 = vmatpush1.msra.mxu0 0.0
        %1343 = vmatprep.subr.mxu0 0.0
        %1344 = vmatpush1.msra.mxu0 0.0
        %1345 = vmatprep.subr.mxu0 0.0
        %1346 = vmatpush1.msra.mxu0 0.0
        %1347 = vmatprep.subr.mxu0 0.0
        %1348 = vmatpush1.msra.mxu0 0.0
        %1349 = vmatprep.subr.mxu0 0.0
        %1350 = vmatpush1.msra.mxu0 0.0
        %1351 = vmatprep.subr.mxu0 0.0
        %1352 = vmatpush1.msra.mxu0 0.0
        %1353 = vmatprep.subr.mxu0 0.0
        %1354 = vmatpush1.msra.mxu0 0.0
        %1355 = vmatprep.subr.mxu0 0.0
        %1356 = vmatpush1.msra.mxu0 0.0
        %1357 = vmatprep.subr.mxu0 0.0
        %1358 = vmatpush1.msra.mxu0 0.0
        %1359 = vmatprep.subr.mxu0 0.0
        %1360 = vmatpush1.msra.mxu0 0.0
        %1361 = vmatprep.subr.mxu0 0.0
        %1362 = vmatpush1.msra.mxu0 0.0
        %1363 = vmatprep.subr.mxu0 0.0
        %1364 = vmatpush1.msra.mxu0 0.0
        %1365 = vmatprep.subr.mxu0 0.0
        %1366 = vmatpush1.msra.mxu0 0.0
        %1367 = vmatprep.subr.mxu0 0.0
        %1368 = vmatpush1.msra.mxu0 0.0
        %1369 = vmatprep.mubr.f32.mxu0 0.0
        %1370 = vmatmul.mubr.f32.gmra.mrb[0].mxu0 %v1213
        %v1371 = vpop.f32.mrb[0].mxu0
        %v1372 = vadd.f32 0.0, %v1371
        %v1373 = vpop.f32.mrb[0].mxu0
        %1374 = vmatprep.mubr.f32.mxu0 0.0
        %1375 = vmatmul.mubr.f32.gmra.mrb[0].mxu0 %v1216
        %v1376 = vpop.f32.mrb[0].mxu0
        %v1377 = vadd.f32 0.0, %v1376
        %v1378 = vpop.f32.mrb[0].mxu0
        %1379 = vdwg.mxu0
        %s1380 = scalar_lea.vmem %s3, 16
        %v1381 = vld [vmem:[%s1380] sm:$0xff]
        %v1382 = vld [vmem:[%s1380 + $0x8] sm:$0xff]
        %v1384 = vsel %vm1211, %v1381, 0
        %v1387 = vsel %vm1211, %v1382, 0
        %1389 = vmatprep.subr.mxu0 %v1198
        %1390 = vmatpush1.msra.mxu0 %v1197
        %1391 = vmatprep.subr.mxu0 %v1201
        %1392 = vmatpush1.msra.mxu0 %v1200
        %1393 = vmatprep.subr.mxu0 %v1204
        %1394 = vmatpush1.msra.mxu0 %v1203
        %1395 = vmatprep.subr.mxu0 %v1223
        %1396 = vmatpush1.msra.mxu0 %v1220
        %1397 = vmatprep.subr.mxu0 0.0
        %1398 = vmatpush1.msra.mxu0 0.0
        %1399 = vmatprep.subr.mxu0 0.0
        %1400 = vmatpush1.msra.mxu0 0.0
        %1401 = vmatprep.subr.mxu0 0.0
        %1402 = vmatpush1.msra.mxu0 0.0
        %1403 = vmatprep.subr.mxu0 0.0
        %1404 = vmatpush1.msra.mxu0 0.0
        %1405 = vmatprep.subr.mxu0 0.0
        %1406 = vmatpush1.msra.mxu0 0.0
        %1407 = vmatprep.subr.mxu0 0.0
        %1408 = vmatpush1.msra.mxu0 0.0
        %1409 = vmatprep.subr.mxu0 0.0
        %1410 = vmatpush1.msra.mxu0 0.0
        %1411 = vmatprep.subr.mxu0 0.0
        %1412 = vmatpush1.msra.mxu0 0.0
        %1413 = vmatprep.subr.mxu0 0.0
        %1414 = vmatpush1.msra.mxu0 0.0
        %1415 = vmatprep.subr.mxu0 0.0
        %1416 = vmatpush1.msra.mxu0 0.0
        %1417 = vmatprep.subr.mxu0 0.0
        %1418 = vmatpush1.msra.mxu0 0.0
        %1419 = vmatprep.subr.mxu0 0.0
        %1420 = vmatpush1.msra.mxu0 0.0
        %1421 = vmatprep.subr.mxu0 0.0
        %1422 = vmatpush1.msra.mxu0 0.0
        %1423 = vmatprep.subr.mxu0 0.0
        %1424 = vmatpush1.msra.mxu0 0.0
        %1425 = vmatprep.subr.mxu0 0.0
        %1426 = vmatpush1.msra.mxu0 0.0
        %1427 = vmatprep.subr.mxu0 0.0
        %1428 = vmatpush1.msra.mxu0 0.0
        %1429 = vmatprep.subr.mxu0 0.0
        %1430 = vmatpush1.msra.mxu0 0.0
        %1431 = vmatprep.subr.mxu0 0.0
        %1432 = vmatpush1.msra.mxu0 0.0
        %1433 = vmatprep.subr.mxu0 0.0
        %1434 = vmatpush1.msra.mxu0 0.0
        %1435 = vmatprep.subr.mxu0 0.0
        %1436 = vmatpush1.msra.mxu0 0.0
        %1437 = vmatprep.subr.mxu0 0.0
        %1438 = vmatpush1.msra.mxu0 0.0
        %1439 = vmatprep.subr.mxu0 0.0
        %1440 = vmatpush1.msra.mxu0 0.0
        %1441 = vmatprep.subr.mxu0 0.0
        %1442 = vmatpush1.msra.mxu0 0.0
        %1443 = vmatprep.subr.mxu0 0.0
        %1444 = vmatpush1.msra.mxu0 0.0
        %1445 = vmatprep.subr.mxu0 0.0
        %1446 = vmatpush1.msra.mxu0 0.0
        %1447 = vmatprep.subr.mxu0 0.0
        %1448 = vmatpush1.msra.mxu0 0.0
        %1449 = vmatprep.subr.mxu0 0.0
        %1450 = vmatpush1.msra.mxu0 0.0
        %1451 = vmatprep.subr.mxu0 0.0
        %1452 = vmatpush1.msra.mxu0 0.0
        %1453 = vmatprep.mubr.f32.mxu0 0.0
        %1454 = vmatmul.mubr.f32.gmra.mrb[0].mxu0 %v1384
        %v1455 = vpop.f32.mrb[0].mxu0
        %v1456 = vadd.f32 0.0, %v1455
        %v1457 = vpop.f32.mrb[0].mxu0
        %v1458 = vadd.f32 0.0, %v1457
        %1459 = vmatprep.mubr.f32.mxu0 0.0
        %1460 = vmatmul.mubr.f32.gmra.mrb[0].mxu0 %v1387
        %v1461 = vpop.f32.mrb[0].mxu0
        %v1462 = vadd.f32 0.0, %v1461
        %v1463 = vpop.f32.mrb[0].mxu0
        %v1464 = vadd.f32 0.0, %v1463
        %1465 = vdwg.mxu0
        %1466 = vmatprep.subr.mxu0 0.0
        %1467 = vmatpush1.msra.mxu0 %v1199
        %1468 = vmatprep.subr.mxu0 0.0
        %1469 = vmatpush1.msra.mxu0 %v1202
        %1470 = vmatprep.subr.mxu0 0.0
        %1471 = vmatpush1.msra.mxu0 %v1205
        %1472 = vmatprep.subr.mxu0 0.0
        %1473 = vmatpush1.msra.mxu0 %v1226
        %1474 = vmatprep.subr.mxu0 0.0
        %1475 = vmatpush1.msra.mxu0 0.0
        %1476 = vmatprep.subr.mxu0 0.0
        %1477 = vmatpush1.msra.mxu0 0.0
        %1478 = vmatprep.subr.mxu0 0.0
        %1479 = vmatpush1.msra.mxu0 0.0
        %1480 = vmatprep.subr.mxu0 0.0
        %1481 = vmatpush1.msra.mxu0 0.0
        %1482 = vmatprep.subr.mxu0 0.0
        %1483 = vmatpush1.msra.mxu0 0.0
        %1484 = vmatprep.subr.mxu0 0.0
        %1485 = vmatpush1.msra.mxu0 0.0
        %1486 = vmatprep.subr.mxu0 0.0
        %1487 = vmatpush1.msra.mxu0 0.0
        %1488 = vmatprep.subr.mxu0 0.0
        %1489 = vmatpush1.msra.mxu0 0.0
        %1490 = vmatprep.subr.mxu0 0.0
        %1491 = vmatpush1.msra.mxu0 0.0
        %1492 = vmatprep.subr.mxu0 0.0
        %1493 = vmatpush1.msra.mxu0 0.0
        %1494 = vmatprep.subr.mxu0 0.0
        %1495 = vmatpush1.msra.mxu0 0.0
        %1496 = vmatprep.subr.mxu0 0.0
        %1497 = vmatpush1.msra.mxu0 0.0
        %1498 = vmatprep.subr.mxu0 0.0
        %1499 = vmatpush1.msra.mxu0 0.0
        %1500 = vmatprep.subr.mxu0 0.0
        %1501 = vmatpush1.msra.mxu0 0.0
        %1502 = vmatprep.subr.mxu0 0.0
        %1503 = vmatpush1.msra.mxu0 0.0
        %1504 = vmatprep.subr.mxu0 0.0
        %1505 = vmatpush1.msra.mxu0 0.0
        %1506 = vmatprep.subr.mxu0 0.0
        %1507 = vmatpush1.msra.mxu0 0.0
        %1508 = vmatprep.subr.mxu0 0.0
        %1509 = vmatpush1.msra.mxu0 0.0
        %1510 = vmatprep.subr.mxu0 0.0
        %1511 = vmatpush1.msra.mxu0 0.0
        %1512 = vmatprep.subr.mxu0 0.0
        %1513 = vmatpush1.msra.mxu0 0.0
        %1514 = vmatprep.subr.mxu0 0.0
        %1515 = vmatpush1.msra.mxu0 0.0
        %1516 = vmatprep.subr.mxu0 0.0
        %1517 = vmatpush1.msra.mxu0 0.0
        %1518 = vmatprep.subr.mxu0 0.0
        %1519 = vmatpush1.msra.mxu0 0.0
        %1520 = vmatprep.subr.mxu0 0.0
        %1521 = vmatpush1.msra.mxu0 0.0
        %1522 = vmatprep.subr.mxu0 0.0
        %1523 = vmatpush1.msra.mxu0 0.0
        %1524 = vmatprep.subr.mxu0 0.0
        %1525 = vmatpush1.msra.mxu0 0.0
        %1526 = vmatprep.subr.mxu0 0.0
        %1527 = vmatpush1.msra.mxu0 0.0
        %1528 = vmatprep.subr.mxu0 0.0
        %1529 = vmatpush1.msra.mxu0 0.0
        %1530 = vmatprep.mubr.f32.mxu0 0.0
        %1531 = vmatmul.mubr.f32.gmra.mrb[0].mxu0 %v1384
        %v1532 = vpop.f32.mrb[0].mxu0
        %v1533 = vadd.f32 0.0, %v1532
        %v1534 = vpop.f32.mrb[0].mxu0
        %1535 = vmatprep.mubr.f32.mxu0 0.0
        %1536 = vmatmul.mubr.f32.gmra.mrb[0].mxu0 %v1387
        %v1537 = vpop.f32.mrb[0].mxu0
        %v1538 = vadd.f32 0.0, %v1537
        %v1539 = vpop.f32.mrb[0].mxu0
        %1540 = vdwg.mxu0
        %v1541 = vmax.f32 %v1295, %v1456
        %v1542 = vmax.f32 %v1297, %v1458
        %v1543 = vmax.f32 %v1372, %v1533
        %v1544 = vmax.f32 %v1301, %v1462
        %v1545 = vmax.f32 %v1303, %v1464
        %v1546 = vmax.f32 %v1377, %v1538
        %v1547 = vld [vmem:[%s4] sm:$0xff]
        %v1548 = vld [vmem:[%s4 + $0x8] sm:$0xff]
        %v1549 = vld [vmem:[%s4 + $0x10] sm:$0xff]
        %v1550 = vld [vmem:[%s4 + $0x18] sm:$0xff]
        %v1551 = vld [vmem:[%s4 + $0x20] sm:$0xff]
        %v1552 = vld [vmem:[%s4 + $0x28] sm:$0xff]
        %v1553 = vld [vmem:[%s4 + $0x30] sm:$0xff]
        %v1554 = vld [vmem:[%s4 + $0x38] sm:$0xff]
        %v1555 = vld [vmem:[%s4 + $0x40] sm:$0xff]
        %v1556 = vld [vmem:[%s4 + $0x48] sm:$0xff]
        %v1557 = vld [vmem:[%s4 + $0x50] sm:$0xff]
        %v1558 = vld [vmem:[%s4 + $0x58] sm:$0xff]
        %v1559 = vld [vmem:[%s4 + $0x60] sm:$0xff]
        %v1560 = vld [vmem:[%s4 + $0x68] sm:$0xff]
        %v1561 = vld [vmem:[%s4 + $0x70] sm:$0xff]
        %v1562 = vld [vmem:[%s4 + $0x78] sm:$0xff]
        %v1563 = vld [vmem:[%s4 + $0x80] sm:$0xff]
        %v1564 = vld [vmem:[%s4 + $0x88] sm:$0xff]
        %v1565 = vld [vmem:[%s4 + $0x90] sm:$0xff]
        %v1566 = vld [vmem:[%s4 + $0x98] sm:$0xff]
        %v1567 = vld [vmem:[%s4 + $0xa0] sm:$0xff]
        %v1568 = vld [vmem:[%s4 + $0xa8] sm:$0xff]
        %v1569 = vld [vmem:[%s4 + $0xb0] sm:$0xff]
        %v1570 = vld [vmem:[%s4 + $0xb8] sm:$0xff]
        %v1571 = vld [vmem:[%s4 + $0xc0] sm:$0xff]
        %v1572 = vld [vmem:[%s4 + $0xc8] sm:$0xff]
        %v1573 = vld [vmem:[%s4 + $0xd0] sm:$0xff]
        %v1574 = vld [vmem:[%s4 + $0xd8] sm:$0xff]
        %v1575 = vld [vmem:[%s4 + $0xe0] sm:$0xff]
        %v1576 = vld [vmem:[%s4 + $0xe8] sm:$0xff]
        %v1577 = vld [vmem:[%s4 + $0xf0] sm:$0xff]
        %v1578 = vld [vmem:[%s4 + $0xf8] sm:$0xff]
        %v1579 = vld [vmem:[%s4 + $0x100] sm:$0xff]
        %v1580 = vld [vmem:[%s4 + $0x108] sm:$0xff]
        %v1581 = vld [vmem:[%s4 + $0x110] sm:$0xff]
        %v1582 = vld [vmem:[%s4 + $0x118] sm:$0xff]
        %v1583 = vld [vmem:[%s4 + $0x120] sm:$0xff]
        %v1584 = vld [vmem:[%s4 + $0x128] sm:$0xff]
        %v1585 = vld [vmem:[%s4 + $0x130] sm:$0xff]
        %v1586 = vld [vmem:[%s4 + $0x138] sm:$0xff]
        %v1587 = vld [vmem:[%s4 + $0x140] sm:$0xff]
        %v1588 = vld [vmem:[%s4 + $0x148] sm:$0xff]
        %v1589 = vld [vmem:[%s4 + $0x150] sm:$0xff]
        %v1590 = vld [vmem:[%s4 + $0x158] sm:$0xff]
        %v1591 = vld [vmem:[%s4 + $0x160] sm:$0xff]
        %v1592 = vld [vmem:[%s4 + $0x168] sm:$0xff]
        %v1593 = vld [vmem:[%s4 + $0x170] sm:$0xff]
        %v1594 = vld [vmem:[%s4 + $0x178] sm:$0xff]
        %v1595 = vld [vmem:[%s4 + $0x180] sm:$0xff]
        %v1596 = vld [vmem:[%s4 + $0x188] sm:$0xff]
        %v1597 = vld [vmem:[%s4 + $0x190] sm:$0xff]
        %v1598 = vld [vmem:[%s4 + $0x198] sm:$0xff]
        %v1599 = vld [vmem:[%s4 + $0x1a0] sm:$0xff]
        %v1600 = vld [vmem:[%s4 + $0x1a8] sm:$0xff]
        %v1601 = vld [vmem:[%s4 + $0x1b0] sm:$0xff]
        %v1602 = vld [vmem:[%s4 + $0x1b8] sm:$0xff]
        %v1603 = vld [vmem:[%s4 + $0x1c0] sm:$0xff]
        %v1604 = vld [vmem:[%s4 + $0x1c8] sm:$0xff]
        %v1605 = vld [vmem:[%s4 + $0x1d0] sm:$0xff]
        %v1606 = vld [vmem:[%s4 + $0x1d8] sm:$0xff]
        %v1607 = vld [vmem:[%s4 + $0x1e0] sm:$0xff]
        %v1608 = vld [vmem:[%s4 + $0x1e8] sm:$0xff]
        %v1609 = vld [vmem:[%s4 + $0x1f0] sm:$0xff]
        %v1610 = vld [vmem:[%s4 + $0x1f8] sm:$0xff]
        %v1611 = vld [vmem:[%s4 + $0x200] sm:$0xff]
        %v1612 = vld [vmem:[%s4 + $0x208] sm:$0xff]
        %v1613 = vld [vmem:[%s4 + $0x210] sm:$0xff]
        %v1614 = vld [vmem:[%s4 + $0x218] sm:$0xff]
        %v1615 = vld [vmem:[%s4 + $0x220] sm:$0xff]
        %v1616 = vld [vmem:[%s4 + $0x228] sm:$0xff]
        %v1617 = vld [vmem:[%s4 + $0x230] sm:$0xff]
        %v1618 = vld [vmem:[%s4 + $0x238] sm:$0xff]
        %v1619 = vld [vmem:[%s4 + $0x240] sm:$0xff]
        %v1620 = vld [vmem:[%s4 + $0x248] sm:$0xff]
        %v1621 = vld [vmem:[%s4 + $0x250] sm:$0xff]
        %v1622 = vld [vmem:[%s4 + $0x258] sm:$0xff]
        %v1623 = vld [vmem:[%s4 + $0x260] sm:$0xff]
        %v1624 = vld [vmem:[%s4 + $0x268] sm:$0xff]
        %v1625 = vld [vmem:[%s4 + $0x270] sm:$0xff]
        %v1626 = vld [vmem:[%s4 + $0x278] sm:$0xff]
        %v1627 = vld [vmem:[%s4 + $0x280] sm:$0xff]
        %v1628 = vld [vmem:[%s4 + $0x288] sm:$0xff]
        %v1629 = vld [vmem:[%s4 + $0x290] sm:$0xff]
        %v1630 = vld [vmem:[%s4 + $0x298] sm:$0xff]
        %vm1631 = vcmask 654336
        %v1633 = vsel %vm1631, %v1543, 0
        %v1636 = vsel %vm1631, %v1546, 0
        %1638 = vmatprep.subr.mxu0 %v1548
        %1639 = vmatpush1.msra.mxu0 %v1547
        %1640 = vmatprep.subr.mxu0 %v1550
        %1641 = vmatpush1.msra.mxu0 %v1549
        %1642 = vmatprep.subr.mxu0 %v1552
        %1643 = vmatpush1.msra.mxu0 %v1551
        %1644 = vmatprep.subr.mxu0 %v1554
        %1645 = vmatpush1.msra.mxu0 %v1553
        %1646 = vmatprep.subr.mxu0 %v1556
        %1647 = vmatpush1.msra.mxu0 %v1555
        %1648 = vmatprep.subr.mxu0 %v1558
        %1649 = vmatpush1.msra.mxu0 %v1557
        %1650 = vmatprep.subr.mxu0 %v1560
        %1651 = vmatpush1.msra.mxu0 %v1559
        %1652 = vmatprep.subr.mxu0 %v1562
        %1653 = vmatpush1.msra.mxu0 %v1561
        %1654 = vmatprep.subr.mxu0 %v1564
        %1655 = vmatpush1.msra.mxu0 %v1563
        %1656 = vmatprep.subr.mxu0 %v1566
        %1657 = vmatpush1.msra.mxu0 %v1565
        %1658 = vmatprep.subr.mxu0 %v1568
        %1659 = vmatpush1.msra.mxu0 %v1567
        %1660 = vmatprep.subr.mxu0 %v1570
        %1661 = vmatpush1.msra.mxu0 %v1569
        %1662 = vmatprep.subr.mxu0 %v1572
        %1663 = vmatpush1.msra.mxu0 %v1571
        %1664 = vmatprep.subr.mxu0 %v1574
        %1665 = vmatpush1.msra.mxu0 %v1573
        %1666 = vmatprep.subr.mxu0 %v1576
        %1667 = vmatpush1.msra.mxu0 %v1575
        %1668 = vmatprep.subr.mxu0 %v1578
        %1669 = vmatpush1.msra.mxu0 %v1577
        %1670 = vmatprep.subr.mxu0 %v1580
        %1671 = vmatpush1.msra.mxu0 %v1579
        %1672 = vmatprep.subr.mxu0 %v1582
        %1673 = vmatpush1.msra.mxu0 %v1581
        %1674 = vmatprep.subr.mxu0 %v1584
        %1675 = vmatpush1.msra.mxu0 %v1583
        %1676 = vmatprep.subr.mxu0 %v1586
        %1677 = vmatpush1.msra.mxu0 %v1585
        %1678 = vmatprep.subr.mxu0 %v1588
        %1679 = vmatpush1.msra.mxu0 %v1587
        %1680 = vmatprep.subr.mxu0 %v1590
        %1681 = vmatpush1.msra.mxu0 %v1589
        %1682 = vmatprep.subr.mxu0 %v1592
        %1683 = vmatpush1.msra.mxu0 %v1591
        %1684 = vmatprep.subr.mxu0 %v1594
        %1685 = vmatpush1.msra.mxu0 %v1593
        %1686 = vmatprep.subr.mxu0 %v1596
        %1687 = vmatpush1.msra.mxu0 %v1595
        %1688 = vmatprep.subr.mxu0 %v1598
        %1689 = vmatpush1.msra.mxu0 %v1597
        %1690 = vmatprep.subr.mxu0 %v1600
        %1691 = vmatpush1.msra.mxu0 %v1599
        %1692 = vmatprep.subr.mxu0 %v1602
        %1693 = vmatpush1.msra.mxu0 %v1601
        %1694 = vmatprep.subr.mxu0 %v1604
        %1695 = vmatpush1.msra.mxu0 %v1603
        %1696 = vmatprep.subr.mxu0 %v1606
        %1697 = vmatpush1.msra.mxu0 %v1605
        %1698 = vmatprep.subr.mxu0 %v1608
        %1699 = vmatpush1.msra.mxu0 %v1607
        %1700 = vmatprep.subr.mxu0 %v1610
        %1701 = vmatpush1.msra.mxu0 %v1609
        %1702 = vmatprep.mubr.f32.mxu0 %v1542
        %1703 = vmatmul.mubr.f32.gmra.mrb[0].mxu0 %v1541
        %v1704 = vpop.f32.mrb[0].mxu0
        %v1705 = vadd.f32 0.0, %v1704
        %v1706 = vpop.f32.mrb[0].mxu0
        %v1707 = vadd.f32 0.0, %v1706
        %1708 = vmatprep.mubr.f32.mxu0 %v1545
        %1709 = vmatmul.mubr.f32.gmra.mrb[0].mxu0 %v1544
        %v1710 = vpop.f32.mrb[0].mxu0
        %v1711 = vadd.f32 0.0, %v1710
        %v1712 = vpop.f32.mrb[0].mxu0
        %v1713 = vadd.f32 0.0, %v1712
        %1714 = vdwg.mxu0
        %1715 = vmatprep.subr.mxu0 %v1612
        %1716 = vmatpush1.msra.mxu0 %v1611
        %1717 = vmatprep.subr.mxu0 %v1614
        %1718 = vmatpush1.msra.mxu0 %v1613
        %1719 = vmatprep.subr.mxu0 %v1616
        %1720 = vmatpush1.msra.mxu0 %v1615
        %1721 = vmatprep.subr.mxu0 %v1618
        %1722 = vmatpush1.msra.mxu0 %v1617
        %1723 = vmatprep.subr.mxu0 %v1620
        %1724 = vmatpush1.msra.mxu0 %v1619
        %1725 = vmatprep.subr.mxu0 %v1622
        %1726 = vmatpush1.msra.mxu0 %v1621
        %1727 = vmatprep.subr.mxu0 %v1624
        %1728 = vmatpush1.msra.mxu0 %v1623
        %1729 = vmatprep.subr.mxu0 %v1626
        %1730 = vmatpush1.msra.mxu0 %v1625
        %1731 = vmatprep.subr.mxu0 %v1628
        %1732 = vmatpush1.msra.mxu0 %v1627
        %1733 = vmatprep.subr.mxu0 %v1630
        %1734 = vmatpush1.msra.mxu0 %v1629
        %1735 = vmatprep.subr.mxu0 0.0
        %1736 = vmatpush1.msra.mxu0 0.0
        %1737 = vmatprep.subr.mxu0 0.0
        %1738 = vmatpush1.msra.mxu0 0.0
        %1739 = vmatprep.subr.mxu0 0.0
        %1740 = vmatpush1.msra.mxu0 0.0
        %1741 = vmatprep.subr.mxu0 0.0
        %1742 = vmatpush1.msra.mxu0 0.0
        %1743 = vmatprep.subr.mxu0 0.0
        %1744 = vmatpush1.msra.mxu0 0.0
        %1745 = vmatprep.subr.mxu0 0.0
        %1746 = vmatpush1.msra.mxu0 0.0
        %1747 = vmatprep.subr.mxu0 0.0
        %1748 = vmatpush1.msra.mxu0 0.0
        %1749 = vmatprep.subr.mxu0 0.0
        %1750 = vmatpush1.msra.mxu0 0.0
        %1751 = vmatprep.subr.mxu0 0.0
        %1752 = vmatpush1.msra.mxu0 0.0
        %1753 = vmatprep.subr.mxu0 0.0
        %1754 = vmatpush1.msra.mxu0 0.0
        %1755 = vmatprep.subr.mxu0 0.0
        %1756 = vmatpush1.msra.mxu0 0.0
        %1757 = vmatprep.subr.mxu0 0.0
        %1758 = vmatpush1.msra.mxu0 0.0
        %1759 = vmatprep.subr.mxu0 0.0
        %1760 = vmatpush1.msra.mxu0 0.0
        %1761 = vmatprep.subr.mxu0 0.0
        %1762 = vmatpush1.msra.mxu0 0.0
        %1763 = vmatprep.subr.mxu0 0.0
        %1764 = vmatpush1.msra.mxu0 0.0
        %1765 = vmatprep.subr.mxu0 0.0
        %1766 = vmatpush1.msra.mxu0 0.0
        %1767 = vmatprep.subr.mxu0 0.0
        %1768 = vmatpush1.msra.mxu0 0.0
        %1769 = vmatprep.subr.mxu0 0.0
        %1770 = vmatpush1.msra.mxu0 0.0
        %1771 = vmatprep.subr.mxu0 0.0
        %1772 = vmatpush1.msra.mxu0 0.0
        %1773 = vmatprep.subr.mxu0 0.0
        %1774 = vmatpush1.msra.mxu0 0.0
        %1775 = vmatprep.subr.mxu0 0.0
        %1776 = vmatpush1.msra.mxu0 0.0
        %1777 = vmatprep.subr.mxu0 0.0
        %1778 = vmatpush1.msra.mxu0 0.0
        %1779 = vmatprep.mubr.f32.mxu0 0.0
        %1780 = vmatmul.mubr.f32.gmra.mrb[0].mxu0 %v1633
        %v1781 = vpop.f32.mrb[0].mxu0
        %v1782 = vadd.f32 %v1705, %v1781
        %v1783 = vpop.f32.mrb[0].mxu0
        %v1784 = vadd.f32 %v1707, %v1783
        %1785 = vmatprep.mubr.f32.mxu0 0.0
        %1786 = vmatmul.mubr.f32.gmra.mrb[0].mxu0 %v1636
        %v1787 = vpop.f32.mrb[0].mxu0
        %v1788 = vadd.f32 %v1711, %v1787
        %v1789 = vpop.f32.mrb[0].mxu0
        %v1790 = vadd.f32 %v1713, %v1789
        %1791 = vdwg.mxu0
        %s1792 = scalar_lea.vmem %s4, 672
        %v1793 = vld [vmem:[%s1792] sm:$0xff]
        %v1794 = vld [vmem:[%s1792 + $0x8] sm:$0xff]
        %v1795 = vld [vmem:[%s1792 + $0x10] sm:$0xff]
        %v1796 = vld [vmem:[%s1792 + $0x18] sm:$0xff]
        %v1797 = vld [vmem:[%s1792 + $0x20] sm:$0xff]
        %v1798 = vld [vmem:[%s1792 + $0x28] sm:$0xff]
        %v1799 = vld [vmem:[%s1792 + $0x30] sm:$0xff]
        %v1800 = vld [vmem:[%s1792 + $0x38] sm:$0xff]
        %v1801 = vld [vmem:[%s1792 + $0x40] sm:$0xff]
        %v1802 = vld [vmem:[%s1792 + $0x48] sm:$0xff]
        %v1803 = vld [vmem:[%s1792 + $0x50] sm:$0xff]
        %v1804 = vld [vmem:[%s1792 + $0x58] sm:$0xff]
        %v1805 = vld [vmem:[%s1792 + $0x60] sm:$0xff]
        %v1806 = vld [vmem:[%s1792 + $0x68] sm:$0xff]
        %v1807 = vld [vmem:[%s1792 + $0x70] sm:$0xff]
        %v1808 = vld [vmem:[%s1792 + $0x78] sm:$0xff]
        %v1809 = vld [vmem:[%s1792 + $0x80] sm:$0xff]
        %v1810 = vld [vmem:[%s1792 + $0x88] sm:$0xff]
        %v1811 = vld [vmem:[%s1792 + $0x90] sm:$0xff]
        %v1812 = vld [vmem:[%s1792 + $0x98] sm:$0xff]
        %v1813 = vld [vmem:[%s1792 + $0xa0] sm:$0xff]
        %v1814 = vld [vmem:[%s1792 + $0xa8] sm:$0xff]
        %v1815 = vld [vmem:[%s1792 + $0xb0] sm:$0xff]
        %v1816 = vld [vmem:[%s1792 + $0xb8] sm:$0xff]
        %v1817 = vld [vmem:[%s1792 + $0xc0] sm:$0xff]
        %v1818 = vld [vmem:[%s1792 + $0xc8] sm:$0xff]
        %v1819 = vld [vmem:[%s1792 + $0xd0] sm:$0xff]
        %v1820 = vld [vmem:[%s1792 + $0xd8] sm:$0xff]
        %v1821 = vld [vmem:[%s1792 + $0xe0] sm:$0xff]
        %v1822 = vld [vmem:[%s1792 + $0xe8] sm:$0xff]
        %v1823 = vld [vmem:[%s1792 + $0xf0] sm:$0xff]
        %v1824 = vld [vmem:[%s1792 + $0xf8] sm:$0xff]
        %v1825 = vld [vmem:[%s1792 + $0x100] sm:$0xff]
        %v1826 = vld [vmem:[%s1792 + $0x108] sm:$0xff]
        %v1827 = vld [vmem:[%s1792 + $0x110] sm:$0xff]
        %v1828 = vld [vmem:[%s1792 + $0x118] sm:$0xff]
        %v1829 = vld [vmem:[%s1792 + $0x120] sm:$0xff]
        %v1830 = vld [vmem:[%s1792 + $0x128] sm:$0xff]
        %v1831 = vld [vmem:[%s1792 + $0x130] sm:$0xff]
        %v1832 = vld [vmem:[%s1792 + $0x138] sm:$0xff]
        %v1833 = vld [vmem:[%s1792 + $0x140] sm:$0xff]
        %v1834 = vld [vmem:[%s1792 + $0x148] sm:$0xff]
        %v1835 = vld [vmem:[%s1792 + $0x150] sm:$0xff]
        %v1836 = vld [vmem:[%s1792 + $0x158] sm:$0xff]
        %v1837 = vld [vmem:[%s1792 + $0x160] sm:$0xff]
        %v1838 = vld [vmem:[%s1792 + $0x168] sm:$0xff]
        %v1839 = vld [vmem:[%s1792 + $0x170] sm:$0xff]
        %v1840 = vld [vmem:[%s1792 + $0x178] sm:$0xff]
        %v1841 = vld [vmem:[%s1792 + $0x180] sm:$0xff]
        %v1842 = vld [vmem:[%s1792 + $0x188] sm:$0xff]
        %v1843 = vld [vmem:[%s1792 + $0x190] sm:$0xff]
        %v1844 = vld [vmem:[%s1792 + $0x198] sm:$0xff]
        %v1845 = vld [vmem:[%s1792 + $0x1a0] sm:$0xff]
        %v1846 = vld [vmem:[%s1792 + $0x1a8] sm:$0xff]
        %v1847 = vld [vmem:[%s1792 + $0x1b0] sm:$0xff]
        %v1848 = vld [vmem:[%s1792 + $0x1b8] sm:$0xff]
        %v1849 = vld [vmem:[%s1792 + $0x1c0] sm:$0xff]
        %v1850 = vld [vmem:[%s1792 + $0x1c8] sm:$0xff]
        %v1851 = vld [vmem:[%s1792 + $0x1d0] sm:$0xff]
        %v1852 = vld [vmem:[%s1792 + $0x1d8] sm:$0xff]
        %v1853 = vld [vmem:[%s1792 + $0x1e0] sm:$0xff]
        %v1854 = vld [vmem:[%s1792 + $0x1e8] sm:$0xff]
        %v1855 = vld [vmem:[%s1792 + $0x1f0] sm:$0xff]
        %v1856 = vld [vmem:[%s1792 + $0x1f8] sm:$0xff]
        %v1857 = vld [vmem:[%s1792 + $0x200] sm:$0xff]
        %v1858 = vld [vmem:[%s1792 + $0x208] sm:$0xff]
        %v1859 = vld [vmem:[%s1792 + $0x210] sm:$0xff]
        %v1860 = vld [vmem:[%s1792 + $0x218] sm:$0xff]
        %v1861 = vld [vmem:[%s1792 + $0x220] sm:$0xff]
        %v1862 = vld [vmem:[%s1792 + $0x228] sm:$0xff]
        %v1863 = vld [vmem:[%s1792 + $0x230] sm:$0xff]
        %v1864 = vld [vmem:[%s1792 + $0x238] sm:$0xff]
        %v1865 = vld [vmem:[%s1792 + $0x240] sm:$0xff]
        %v1866 = vld [vmem:[%s1792 + $0x248] sm:$0xff]
        %v1867 = vld [vmem:[%s1792 + $0x250] sm:$0xff]
        %v1868 = vld [vmem:[%s1792 + $0x258] sm:$0xff]
        %v1869 = vld [vmem:[%s1792 + $0x260] sm:$0xff]
        %v1870 = vld [vmem:[%s1792 + $0x268] sm:$0xff]
        %v1871 = vld [vmem:[%s1792 + $0x270] sm:$0xff]
        %v1872 = vld [vmem:[%s1792 + $0x278] sm:$0xff]
        %v1873 = vld [vmem:[%s1792 + $0x280] sm:$0xff]
        %v1874 = vld [vmem:[%s1792 + $0x288] sm:$0xff]
        %v1875 = vld [vmem:[%s1792 + $0x290] sm:$0xff]
        %v1876 = vld [vmem:[%s1792 + $0x298] sm:$0xff]
        %1877 = vmatprep.subr.mxu0 %v1794
        %1878 = vmatpush1.msra.mxu0 %v1793
        %1879 = vmatprep.subr.mxu0 %v1796
        %1880 = vmatpush1.msra.mxu0 %v1795
        %1881 = vmatprep.subr.mxu0 %v1798
        %1882 = vmatpush1.msra.mxu0 %v1797
        %1883 = vmatprep.subr.mxu0 %v1800
        %1884 = vmatpush1.msra.mxu0 %v1799
        %1885 = vmatprep.subr.mxu0 %v1802
        %1886 = vmatpush1.msra.mxu0 %v1801
        %1887 = vmatprep.subr.mxu0 %v1804
        %1888 = vmatpush1.msra.mxu0 %v1803
        %1889 = vmatprep.subr.mxu0 %v1806
        %1890 = vmatpush1.msra.mxu0 %v1805
        %1891 = vmatprep.subr.mxu0 %v1808
        %1892 = vmatpush1.msra.mxu0 %v1807
        %1893 = vmatprep.subr.mxu0 %v1810
        %1894 = vmatpush1.msra.mxu0 %v1809
        %1895 = vmatprep.subr.mxu0 %v1812
        %1896 = vmatpush1.msra.mxu0 %v1811
        %1897 = vmatprep.subr.mxu0 %v1814
        %1898 = vmatpush1.msra.mxu0 %v1813
        %1899 = vmatprep.subr.mxu0 %v1816
        %1900 = vmatpush1.msra.mxu0 %v1815
        %1901 = vmatprep.subr.mxu0 %v1818
        %1902 = vmatpush1.msra.mxu0 %v1817
        %1903 = vmatprep.subr.mxu0 %v1820
        %1904 = vmatpush1.msra.mxu0 %v1819
        %1905 = vmatprep.subr.mxu0 %v1822
        %1906 = vmatpush1.msra.mxu0 %v1821
        %1907 = vmatprep.subr.mxu0 %v1824
        %1908 = vmatpush1.msra.mxu0 %v1823
        %1909 = vmatprep.subr.mxu0 %v1826
        %1910 = vmatpush1.msra.mxu0 %v1825
        %1911 = vmatprep.subr.mxu0 %v1828
        %1912 = vmatpush1.msra.mxu0 %v1827
        %1913 = vmatprep.subr.mxu0 %v1830
        %1914 = vmatpush1.msra.mxu0 %v1829
        %1915 = vmatprep.subr.mxu0 %v1832
        %1916 = vmatpush1.msra.mxu0 %v1831
        %1917 = vmatprep.subr.mxu0 %v1834
        %1918 = vmatpush1.msra.mxu0 %v1833
        %1919 = vmatprep.subr.mxu0 %v1836
        %1920 = vmatpush1.msra.mxu0 %v1835
        %1921 = vmatprep.subr.mxu0 %v1838
        %1922 = vmatpush1.msra.mxu0 %v1837
        %1923 = vmatprep.subr.mxu0 %v1840
        %1924 = vmatpush1.msra.mxu0 %v1839
        %1925 = vmatprep.subr.mxu0 %v1842
        %1926 = vmatpush1.msra.mxu0 %v1841
        %1927 = vmatprep.subr.mxu0 %v1844
        %1928 = vmatpush1.msra.mxu0 %v1843
        %1929 = vmatprep.subr.mxu0 %v1846
        %1930 = vmatpush1.msra.mxu0 %v1845
        %1931 = vmatprep.subr.mxu0 %v1848
        %1932 = vmatpush1.msra.mxu0 %v1847
        %1933 = vmatprep.subr.mxu0 %v1850
        %1934 = vmatpush1.msra.mxu0 %v1849
        %1935 = vmatprep.subr.mxu0 %v1852
        %1936 = vmatpush1.msra.mxu0 %v1851
        %1937 = vmatprep.subr.mxu0 %v1854
        %1938 = vmatpush1.msra.mxu0 %v1853
        %1939 = vmatprep.subr.mxu0 %v1856
        %1940 = vmatpush1.msra.mxu0 %v1855
        %1941 = vmatprep.mubr.f32.mxu0 %v1542
        %1942 = vmatmul.mubr.f32.gmra.mrb[0].mxu0 %v1541
        %v1943 = vpop.f32.mrb[0].mxu0
        %v1944 = vadd.f32 0.0, %v1943
        %v1945 = vpop.f32.mrb[0].mxu0
        %v1946 = vadd.f32 0.0, %v1945
        %1947 = vmatprep.mubr.f32.mxu0 %v1545
        %1948 = vmatmul.mubr.f32.gmra.mrb[0].mxu0 %v1544
        %v1949 = vpop.f32.mrb[0].mxu0
        %v1950 = vadd.f32 0.0, %v1949
        %v1951 = vpop.f32.mrb[0].mxu0
        %v1952 = vadd.f32 0.0, %v1951
        %1953 = vdwg.mxu0
        %1954 = vmatprep.subr.mxu0 %v1858
        %1955 = vmatpush1.msra.mxu0 %v1857
        %1956 = vmatprep.subr.mxu0 %v1860
        %1957 = vmatpush1.msra.mxu0 %v1859
        %1958 = vmatprep.subr.mxu0 %v1862
        %1959 = vmatpush1.msra.mxu0 %v1861
        %1960 = vmatprep.subr.mxu0 %v1864
        %1961 = vmatpush1.msra.mxu0 %v1863
        %1962 = vmatprep.subr.mxu0 %v1866
        %1963 = vmatpush1.msra.mxu0 %v1865
        %1964 = vmatprep.subr.mxu0 %v1868
        %1965 = vmatpush1.msra.mxu0 %v1867
        %1966 = vmatprep.subr.mxu0 %v1870
        %1967 = vmatpush1.msra.mxu0 %v1869
        %1968 = vmatprep.subr.mxu0 %v1872
        %1969 = vmatpush1.msra.mxu0 %v1871
        %1970 = vmatprep.subr.mxu0 %v1874
        %1971 = vmatpush1.msra.mxu0 %v1873
        %1972 = vmatprep.subr.mxu0 %v1876
        %1973 = vmatpush1.msra.mxu0 %v1875
        %1974 = vmatprep.subr.mxu0 0.0
        %1975 = vmatpush1.msra.mxu0 0.0
        %1976 = vmatprep.subr.mxu0 0.0
        %1977 = vmatpush1.msra.mxu0 0.0
        %1978 = vmatprep.subr.mxu0 0.0
        %1979 = vmatpush1.msra.mxu0 0.0
        %1980 = vmatprep.subr.mxu0 0.0
        %1981 = vmatpush1.msra.mxu0 0.0
        %1982 = vmatprep.subr.mxu0 0.0
        %1983 = vmatpush1.msra.mxu0 0.0
        %1984 = vmatprep.subr.mxu0 0.0
        %1985 = vmatpush1.msra.mxu0 0.0
        %1986 = vmatprep.subr.mxu0 0.0
        %1987 = vmatpush1.msra.mxu0 0.0
        %1988 = vmatprep.subr.mxu0 0.0
        %1989 = vmatpush1.msra.mxu0 0.0
        %1990 = vmatprep.subr.mxu0 0.0
        %1991 = vmatpush1.msra.mxu0 0.0
        %1992 = vmatprep.subr.mxu0 0.0
        %1993 = vmatpush1.msra.mxu0 0.0
        %1994 = vmatprep.subr.mxu0 0.0
        %1995 = vmatpush1.msra.mxu0 0.0
        %1996 = vmatprep.subr.mxu0 0.0
        %1997 = vmatpush1.msra.mxu0 0.0
        %1998 = vmatprep.subr.mxu0 0.0
        %1999 = vmatpush1.msra.mxu0 0.0
        %2000 = vmatprep.subr.mxu0 0.0
        %2001 = vmatpush1.msra.mxu0 0.0
        %2002 = vmatprep.subr.mxu0 0.0
        %2003 = vmatpush1.msra.mxu0 0.0
        %2004 = vmatprep.subr.mxu0 0.0
        %2005 = vmatpush1.msra.mxu0 0.0
        %2006 = vmatprep.subr.mxu0 0.0
        %2007 = vmatpush1.msra.mxu0 0.0
        %2008 = vmatprep.subr.mxu0 0.0
        %2009 = vmatpush1.msra.mxu0 0.0
        %2010 = vmatprep.subr.mxu0 0.0
        %2011 = vmatpush1.msra.mxu0 0.0
        %2012 = vmatprep.subr.mxu0 0.0
        %2013 = vmatpush1.msra.mxu0 0.0
        %2014 = vmatprep.subr.mxu0 0.0
        %2015 = vmatpush1.msra.mxu0 0.0
        %2016 = vmatprep.subr.mxu0 0.0
        %2017 = vmatpush1.msra.mxu0 0.0
        %2018 = vmatprep.mubr.f32.mxu0 0.0
        %2019 = vmatmul.mubr.f32.gmra.mrb[0].mxu0 %v1633
        %v2020 = vpop.f32.mrb[0].mxu0
        %v2021 = vadd.f32 %v1944, %v2020
        %v2022 = vpop.f32.mrb[0].mxu0
        %v2023 = vadd.f32 %v1946, %v2022
        %2024 = vmatprep.mubr.f32.mxu0 0.0
        %2025 = vmatmul.mubr.f32.gmra.mrb[0].mxu0 %v1636
        %v2026 = vpop.f32.mrb[0].mxu0
        %v2027 = vadd.f32 %v1950, %v2026
        %v2028 = vpop.f32.mrb[0].mxu0
        %v2029 = vadd.f32 %v1952, %v2028
        %2030 = vdwg.mxu0
        %v2031 = vmax.f32 %v1782, %v2021
        %v2032 = vmax.f32 %v1784, %v2023
        %v2033 = vmax.f32 %v1788, %v2027
        %v2034 = vmax.f32 %v1790, %v2029
        %2035 = vst [vmem:[#allocation2] sm:$0xff] %v2031
        %vm2036 = vcmask 523264
        %2037 = vst.msk [vmem:[#allocation2 + $0x8] sm:$0xff] %vm2036, %v2032
        %2038 = vst [vmem:[#allocation2 + $0x10] sm:$0xff] %v2033
        %2039 = vst.msk [vmem:[#allocation2 + $0x18] sm:$0xff] %vm2036, %v2034
        %v2040 = vld [vmem:[#allocation2] sm:$0xff]
        %v2041 = vld [vmem:[#allocation2 + $0x8] sm:$0xff]
        %v2042 = vld [vmem:[#allocation2 + $0x10] sm:$0x3f]
        %v2043 = vld [vmem:[#allocation2 + $0x18] sm:$0x3f]
        %v2044 = vld [vmem:[%s5] sm:$0xff]
        %v2045 = vld [vmem:[%s5 + $0x8] sm:$0xff]
        %v2046 = vld [vmem:[%s5 + $0x10] sm:$0xff]
        %v2047 = vld [vmem:[%s5 + $0x18] sm:$0xff]
        %v2048 = vld [vmem:[%s5 + $0x20] sm:$0xff]
        %v2049 = vld [vmem:[%s5 + $0x28] sm:$0xff]
        %v2050 = vld [vmem:[%s5 + $0x30] sm:$0xff]
        %v2051 = vld [vmem:[%s5 + $0x38] sm:$0xff]
        %v2052 = vld [vmem:[%s5 + $0x40] sm:$0xff]
        %v2053 = vld [vmem:[%s5 + $0x48] sm:$0xff]
        %v2054 = vld [vmem:[%s5 + $0x50] sm:$0xff]
        %v2055 = vld [vmem:[%s5 + $0x58] sm:$0xff]
        %v2056 = vld [vmem:[%s5 + $0x60] sm:$0xff]
        %v2057 = vld [vmem:[%s5 + $0x68] sm:$0xff]
        %v2058 = vld [vmem:[%s5 + $0x70] sm:$0xff]
        %v2059 = vld [vmem:[%s5 + $0x78] sm:$0xff]
        %v2060 = vld [vmem:[%s5 + $0x80] sm:$0xff]
        %v2061 = vld [vmem:[%s5 + $0x88] sm:$0xff]
        %v2062 = vld [vmem:[%s5 + $0x90] sm:$0xff]
        %v2063 = vld [vmem:[%s5 + $0x98] sm:$0xff]
        %v2064 = vld [vmem:[%s5 + $0xa0] sm:$0xff]
        %v2065 = vld [vmem:[%s5 + $0xa8] sm:$0xff]
        %v2066 = vld [vmem:[%s5 + $0xb0] sm:$0xff]
        %v2067 = vld [vmem:[%s5 + $0xb8] sm:$0xff]
        %v2068 = vld [vmem:[%s5 + $0xc0] sm:$0xff]
        %v2069 = vld [vmem:[%s5 + $0xc8] sm:$0xff]
        %v2070 = vld [vmem:[%s5 + $0xd0] sm:$0xff]
        %v2071 = vld [vmem:[%s5 + $0xd8] sm:$0xff]
        %v2072 = vld [vmem:[%s5 + $0xe0] sm:$0xff]
        %v2073 = vld [vmem:[%s5 + $0xe8] sm:$0xff]
        %v2074 = vld [vmem:[%s5 + $0xf0] sm:$0xff]
        %v2075 = vld [vmem:[%s5 + $0xf8] sm:$0xff]
        %v2076 = vld [vmem:[%s5 + $0x100] sm:$0xff]
        %v2077 = vld [vmem:[%s5 + $0x108] sm:$0xff]
        %v2078 = vld [vmem:[%s5 + $0x110] sm:$0xff]
        %v2079 = vld [vmem:[%s5 + $0x118] sm:$0xff]
        %v2080 = vld [vmem:[%s5 + $0x120] sm:$0xff]
        %v2081 = vld [vmem:[%s5 + $0x128] sm:$0xff]
        %v2082 = vld [vmem:[%s5 + $0x130] sm:$0xff]
        %v2083 = vld [vmem:[%s5 + $0x138] sm:$0xff]
        %v2084 = vld [vmem:[%s5 + $0x140] sm:$0xff]
        %v2085 = vld [vmem:[%s5 + $0x148] sm:$0xff]
        %v2086 = vld [vmem:[%s5 + $0x150] sm:$0xff]
        %v2087 = vld [vmem:[%s5 + $0x158] sm:$0xff]
        %v2088 = vld [vmem:[%s5 + $0x160] sm:$0xff]
        %v2089 = vld [vmem:[%s5 + $0x168] sm:$0xff]
        %v2090 = vld [vmem:[%s5 + $0x170] sm:$0xff]
        %v2091 = vld [vmem:[%s5 + $0x178] sm:$0xff]
        %v2092 = vld [vmem:[%s5 + $0x180] sm:$0xff]
        %v2093 = vld [vmem:[%s5 + $0x188] sm:$0xff]
        %v2094 = vld [vmem:[%s5 + $0x190] sm:$0xff]
        %v2095 = vld [vmem:[%s5 + $0x198] sm:$0xff]
        %v2096 = vld [vmem:[%s5 + $0x1a0] sm:$0xff]
        %v2097 = vld [vmem:[%s5 + $0x1a8] sm:$0xff]
        %v2098 = vld [vmem:[%s5 + $0x1b0] sm:$0xff]
        %v2099 = vld [vmem:[%s5 + $0x1b8] sm:$0xff]
        %v2100 = vld [vmem:[%s5 + $0x1c0] sm:$0xff]
        %v2101 = vld [vmem:[%s5 + $0x1c8] sm:$0xff]
        %v2102 = vld [vmem:[%s5 + $0x1d0] sm:$0xff]
        %v2103 = vld [vmem:[%s5 + $0x1d8] sm:$0xff]
        %v2104 = vld [vmem:[%s5 + $0x1e0] sm:$0xff]
        %v2105 = vld [vmem:[%s5 + $0x1e8] sm:$0xff]
        %v2106 = vld [vmem:[%s5 + $0x1f0] sm:$0xff]
        %v2107 = vld [vmem:[%s5 + $0x1f8] sm:$0xff]
        %v2108 = vld [vmem:[%s5 + $0x200] sm:$0xff]
        %v2109 = vld [vmem:[%s5 + $0x208] sm:$0xff]
        %v2110 = vld [vmem:[%s5 + $0x210] sm:$0xff]
        %v2111 = vld [vmem:[%s5 + $0x218] sm:$0xff]
        %v2112 = vld [vmem:[%s5 + $0x220] sm:$0xff]
        %v2113 = vld [vmem:[%s5 + $0x228] sm:$0xff]
        %v2114 = vld [vmem:[%s5 + $0x230] sm:$0xff]
        %v2115 = vld [vmem:[%s5 + $0x238] sm:$0xff]
        %v2116 = vld [vmem:[#allocation2] sm:$0xfe]
        %v2117 = vld [vmem:[#allocation2 + $0x8] sm:$0xfe]
        %v2118 = vld [vmem:[#allocation2 + $0x10] sm:$0x7f]
        %v2119 = vld [vmem:[#allocation2 + $0x18] sm:$0x7f]
        %s2120 = scalar_lea.vmem %s5, 576
        %v2121 = vld [vmem:[%s2120] sm:$0xff]
        %v2122 = vld [vmem:[%s2120 + $0x8] sm:$0xff]
        %v2123 = vld [vmem:[%s2120 + $0x10] sm:$0xff]
        %v2124 = vld [vmem:[%s2120 + $0x18] sm:$0xff]
        %v2125 = vld [vmem:[%s2120 + $0x20] sm:$0xff]
        %v2126 = vld [vmem:[%s2120 + $0x28] sm:$0xff]
        %v2127 = vld [vmem:[%s2120 + $0x30] sm:$0xff]
        %v2128 = vld [vmem:[%s2120 + $0x38] sm:$0xff]
        %v2129 = vld [vmem:[%s2120 + $0x40] sm:$0xff]
        %v2130 = vld [vmem:[%s2120 + $0x48] sm:$0xff]
        %v2131 = vld [vmem:[%s2120 + $0x50] sm:$0xff]
        %v2132 = vld [vmem:[%s2120 + $0x58] sm:$0xff]
        %v2133 = vld [vmem:[%s2120 + $0x60] sm:$0xff]
        %v2134 = vld [vmem:[%s2120 + $0x68] sm:$0xff]
        %v2135 = vld [vmem:[%s2120 + $0x70] sm:$0xff]
        %v2136 = vld [vmem:[%s2120 + $0x78] sm:$0xff]
        %v2137 = vld [vmem:[%s2120 + $0x80] sm:$0xff]
        %v2138 = vld [vmem:[%s2120 + $0x88] sm:$0xff]
        %v2139 = vld [vmem:[%s2120 + $0x90] sm:$0xff]
        %v2140 = vld [vmem:[%s2120 + $0x98] sm:$0xff]
        %v2141 = vld [vmem:[%s2120 + $0xa0] sm:$0xff]
        %v2142 = vld [vmem:[%s2120 + $0xa8] sm:$0xff]
        %v2143 = vld [vmem:[%s2120 + $0xb0] sm:$0xff]
        %v2144 = vld [vmem:[%s2120 + $0xb8] sm:$0xff]
        %v2145 = vld [vmem:[%s2120 + $0xc0] sm:$0xff]
        %v2146 = vld [vmem:[%s2120 + $0xc8] sm:$0xff]
        %v2147 = vld [vmem:[%s2120 + $0xd0] sm:$0xff]
        %v2148 = vld [vmem:[%s2120 + $0xd8] sm:$0xff]
        %v2149 = vld [vmem:[%s2120 + $0xe0] sm:$0xff]
        %v2150 = vld [vmem:[%s2120 + $0xe8] sm:$0xff]
        %v2151 = vld [vmem:[%s2120 + $0xf0] sm:$0xff]
        %v2152 = vld [vmem:[%s2120 + $0xf8] sm:$0xff]
        %v2153 = vld [vmem:[%s2120 + $0x100] sm:$0xff]
        %v2154 = vld [vmem:[%s2120 + $0x108] sm:$0xff]
        %v2155 = vld [vmem:[%s2120 + $0x110] sm:$0xff]
        %v2156 = vld [vmem:[%s2120 + $0x118] sm:$0xff]
        %v2157 = vld [vmem:[%s2120 + $0x120] sm:$0xff]
        %v2158 = vld [vmem:[%s2120 + $0x128] sm:$0xff]
        %v2159 = vld [vmem:[%s2120 + $0x130] sm:$0xff]
        %v2160 = vld [vmem:[%s2120 + $0x138] sm:$0xff]
        %v2161 = vld [vmem:[%s2120 + $0x140] sm:$0xff]
        %v2162 = vld [vmem:[%s2120 + $0x148] sm:$0xff]
        %v2163 = vld [vmem:[%s2120 + $0x150] sm:$0xff]
        %v2164 = vld [vmem:[%s2120 + $0x158] sm:$0xff]
        %v2165 = vld [vmem:[%s2120 + $0x160] sm:$0xff]
        %v2166 = vld [vmem:[%s2120 + $0x168] sm:$0xff]
        %v2167 = vld [vmem:[%s2120 + $0x170] sm:$0xff]
        %v2168 = vld [vmem:[%s2120 + $0x178] sm:$0xff]
        %v2169 = vld [vmem:[%s2120 + $0x180] sm:$0xff]
        %v2170 = vld [vmem:[%s2120 + $0x188] sm:$0xff]
        %v2171 = vld [vmem:[%s2120 + $0x190] sm:$0xff]
        %v2172 = vld [vmem:[%s2120 + $0x198] sm:$0xff]
        %v2173 = vld [vmem:[%s2120 + $0x1a0] sm:$0xff]
        %v2174 = vld [vmem:[%s2120 + $0x1a8] sm:$0xff]
        %v2175 = vld [vmem:[%s2120 + $0x1b0] sm:$0xff]
        %v2176 = vld [vmem:[%s2120 + $0x1b8] sm:$0xff]
        %v2177 = vld [vmem:[%s2120 + $0x1c0] sm:$0xff]
        %v2178 = vld [vmem:[%s2120 + $0x1c8] sm:$0xff]
        %v2179 = vld [vmem:[%s2120 + $0x1d0] sm:$0xff]
        %v2180 = vld [vmem:[%s2120 + $0x1d8] sm:$0xff]
        %v2181 = vld [vmem:[%s2120 + $0x1e0] sm:$0xff]
        %v2182 = vld [vmem:[%s2120 + $0x1e8] sm:$0xff]
        %v2183 = vld [vmem:[%s2120 + $0x1f0] sm:$0xff]
        %v2184 = vld [vmem:[%s2120 + $0x1f8] sm:$0xff]
        %v2185 = vld [vmem:[%s2120 + $0x200] sm:$0xff]
        %v2186 = vld [vmem:[%s2120 + $0x208] sm:$0xff]
        %v2187 = vld [vmem:[%s2120 + $0x210] sm:$0xff]
        %v2188 = vld [vmem:[%s2120 + $0x218] sm:$0xff]
        %v2189 = vld [vmem:[%s2120 + $0x220] sm:$0xff]
        %v2190 = vld [vmem:[%s2120 + $0x228] sm:$0xff]
        %v2191 = vld [vmem:[%s2120 + $0x230] sm:$0xff]
        %v2192 = vld [vmem:[%s2120 + $0x238] sm:$0xff]
        %vm2197 = vcmask 1046528
        %v2198 = vrot.slane %v2116, 1
        %v2199 = vrot.slane %v2118, 1
        %v2200 = vsel %vm2197, %v2198, %v2199
        %v2201 = vrot.slane %v2117, 1
        %v2202 = vrot.slane %v2119, 1
        %v2203 = vsel %vm2197, %v2201, %v2202
        %v2206 = vsel %vm2036, %v2203, 0
        %v2208 = vsel %vm2036, %v2202, 0
        %2210 = vmatprep.subr.mxu0 %v2122
        %2211 = vmatpush1.msra.mxu0 %v2121
        %2212 = vmatprep.subr.mxu0 %v2125
        %2213 = vmatpush1.msra.mxu0 %v2124
        %2214 = vmatprep.subr.mxu0 %v2128
        %2215 = vmatpush1.msra.mxu0 %v2127
        %2216 = vmatprep.subr.mxu0 %v2131
        %2217 = vmatpush1.msra.mxu0 %v2130
        %2218 = vmatprep.subr.mxu0 %v2134
        %2219 = vmatpush1.msra.mxu0 %v2133
        %2220 = vmatprep.subr.mxu0 %v2137
        %2221 = vmatpush1.msra.mxu0 %v2136
        %2222 = vmatprep.subr.mxu0 %v2140
        %2223 = vmatpush1.msra.mxu0 %v2139
        %2224 = vmatprep.subr.mxu0 %v2143
        %2225 = vmatpush1.msra.mxu0 %v2142
        %2226 = vmatprep.subr.mxu0 %v2146
        %2227 = vmatpush1.msra.mxu0 %v2145
        %2228 = vmatprep.subr.mxu0 %v2149
        %2229 = vmatpush1.msra.mxu0 %v2148
        %2230 = vmatprep.subr.mxu0 %v2152
        %2231 = vmatpush1.msra.mxu0 %v2151
        %2232 = vmatprep.subr.mxu0 %v2155
        %2233 = vmatpush1.msra.mxu0 %v2154
        %2234 = vmatprep.subr.mxu0 %v2158
        %2235 = vmatpush1.msra.mxu0 %v2157
        %2236 = vmatprep.subr.mxu0 %v2161
        %2237 = vmatpush1.msra.mxu0 %v2160
        %2238 = vmatprep.subr.mxu0 %v2164
        %2239 = vmatpush1.msra.mxu0 %v2163
        %2240 = vmatprep.subr.mxu0 %v2167
        %2241 = vmatpush1.msra.mxu0 %v2166
        %2242 = vmatprep.subr.mxu0 %v2170
        %2243 = vmatpush1.msra.mxu0 %v2169
        %2244 = vmatprep.subr.mxu0 %v2173
        %2245 = vmatpush1.msra.mxu0 %v2172
        %2246 = vmatprep.subr.mxu0 %v2176
        %2247 = vmatpush1.msra.mxu0 %v2175
        %2248 = vmatprep.subr.mxu0 %v2179
        %2249 = vmatpush1.msra.mxu0 %v2178
        %2250 = vmatprep.subr.mxu0 %v2182
        %2251 = vmatpush1.msra.mxu0 %v2181
        %2252 = vmatprep.subr.mxu0 %v2185
        %2253 = vmatpush1.msra.mxu0 %v2184
        %2254 = vmatprep.subr.mxu0 %v2188
        %2255 = vmatpush1.msra.mxu0 %v2187
        %2256 = vmatprep.subr.mxu0 %v2191
        %2257 = vmatpush1.msra.mxu0 %v2190
        %2258 = vmatprep.subr.mxu0 0.0
        %2259 = vmatpush1.msra.mxu0 0.0
        %2260 = vmatprep.subr.mxu0 0.0
        %2261 = vmatpush1.msra.mxu0 0.0
        %2262 = vmatprep.subr.mxu0 0.0
        %2263 = vmatpush1.msra.mxu0 0.0
        %2264 = vmatprep.subr.mxu0 0.0
        %2265 = vmatpush1.msra.mxu0 0.0
        %2266 = vmatprep.subr.mxu0 0.0
        %2267 = vmatpush1.msra.mxu0 0.0
        %2268 = vmatprep.subr.mxu0 0.0
        %2269 = vmatpush1.msra.mxu0 0.0
        %2270 = vmatprep.subr.mxu0 0.0
        %2271 = vmatpush1.msra.mxu0 0.0
        %2272 = vmatprep.subr.mxu0 0.0
        %2273 = vmatpush1.msra.mxu0 0.0
        %2274 = vmatprep.mubr.f32.mxu0 %v2206
        %2275 = vmatmul.mubr.f32.gmra.mrb[0].mxu0 %v2200
        %v2276 = vpop.f32.mrb[0].mxu0
        %v2277 = vadd.f32 0.0, %v2276
        %v2278 = vpop.f32.mrb[0].mxu0
        %v2279 = vadd.f32 0.0, %v2278
        %2280 = vmatprep.mubr.f32.mxu0 %v2208
        %2281 = vmatmul.mubr.f32.gmra.mrb[0].mxu0 %v2199
        %v2282 = vpop.f32.mrb[0].mxu0
        %v2283 = vadd.f32 0.0, %v2282
        %v2284 = vpop.f32.mrb[0].mxu0
        %v2285 = vadd.f32 0.0, %v2284
        %2286 = vdwg.mxu0
        %2287 = vmatprep.subr.mxu0 0.0
        %2288 = vmatpush1.msra.mxu0 %v2123
        %2289 = vmatprep.subr.mxu0 0.0
        %2290 = vmatpush1.msra.mxu0 %v2126
        %2291 = vmatprep.subr.mxu0 0.0
        %2292 = vmatpush1.msra.mxu0 %v2129
        %2293 = vmatprep.subr.mxu0 0.0
        %2294 = vmatpush1.msra.mxu0 %v2132
        %2295 = vmatprep.subr.mxu0 0.0
        %2296 = vmatpush1.msra.mxu0 %v2135
        %2297 = vmatprep.subr.mxu0 0.0
        %2298 = vmatpush1.msra.mxu0 %v2138
        %2299 = vmatprep.subr.mxu0 0.0
        %2300 = vmatpush1.msra.mxu0 %v2141
        %2301 = vmatprep.subr.mxu0 0.0
        %2302 = vmatpush1.msra.mxu0 %v2144
        %2303 = vmatprep.subr.mxu0 0.0
        %2304 = vmatpush1.msra.mxu0 %v2147
        %2305 = vmatprep.subr.mxu0 0.0
        %2306 = vmatpush1.msra.mxu0 %v2150
        %2307 = vmatprep.subr.mxu0 0.0
        %2308 = vmatpush1.msra.mxu0 %v2153
        %2309 = vmatprep.subr.mxu0 0.0
        %2310 = vmatpush1.msra.mxu0 %v2156
        %2311 = vmatprep.subr.mxu0 0.0
        %2312 = vmatpush1.msra.mxu0 %v2159
        %2313 = vmatprep.subr.mxu0 0.0
        %2314 = vmatpush1.msra.mxu0 %v2162
        %2315 = vmatprep.subr.mxu0 0.0
        %2316 = vmatpush1.msra.mxu0 %v2165
        %2317 = vmatprep.subr.mxu0 0.0
        %2318 = vmatpush1.msra.mxu0 %v2168
        %2319 = vmatprep.subr.mxu0 0.0
        %2320 = vmatpush1.msra.mxu0 %v2171
        %2321 = vmatprep.subr.mxu0 0.0
        %2322 = vmatpush1.msra.mxu0 %v2174
        %2323 = vmatprep.subr.mxu0 0.0
        %2324 = vmatpush1.msra.mxu0 %v2177
        %2325 = vmatprep.subr.mxu0 0.0
        %2326 = vmatpush1.msra.mxu0 %v2180
        %2327 = vmatprep.subr.mxu0 0.0
        %2328 = vmatpush1.msra.mxu0 %v2183
        %2329 = vmatprep.subr.mxu0 0.0
        %2330 = vmatpush1.msra.mxu0 %v2186
        %2331 = vmatprep.subr.mxu0 0.0
        %2332 = vmatpush1.msra.mxu0 %v2189
        %2333 = vmatprep.subr.mxu0 0.0
        %2334 = vmatpush1.msra.mxu0 %v2192
        %2335 = vmatprep.subr.mxu0 0.0
        %2336 = vmatpush1.msra.mxu0 0.0
        %2337 = vmatprep.subr.mxu0 0.0
        %2338 = vmatpush1.msra.mxu0 0.0
        %2339 = vmatprep.subr.mxu0 0.0
        %2340 = vmatpush1.msra.mxu0 0.0
        %2341 = vmatprep.subr.mxu0 0.0
        %2342 = vmatpush1.msra.mxu0 0.0
        %2343 = vmatprep.subr.mxu0 0.0
        %2344 = vmatpush1.msra.mxu0 0.0
        %2345 = vmatprep.subr.mxu0 0.0
        %2346 = vmatpush1.msra.mxu0 0.0
        %2347 = vmatprep.subr.mxu0 0.0
        %2348 = vmatpush1.msra.mxu0 0.0
        %2349 = vmatprep.subr.mxu0 0.0
        %2350 = vmatpush1.msra.mxu0 0.0
        %2351 = vmatprep.mubr.f32.mxu0 %v2206
        %2352 = vmatmul.mubr.f32.gmra.mrb[0].mxu0 %v2200
        %v2353 = vpop.f32.mrb[0].mxu0
        %v2354 = vadd.f32 0.0, %v2353
        %v2355 = vpop.f32.mrb[0].mxu0
        %2356 = vmatprep.mubr.f32.mxu0 %v2208
        %2357 = vmatmul.mubr.f32.gmra.mrb[0].mxu0 %v2199
        %v2358 = vpop.f32.mrb[0].mxu0
        %v2359 = vadd.f32 0.0, %v2358
        %v2360 = vpop.f32.mrb[0].mxu0
        %2361 = vdwg.mxu0
        %v2363 = vsel %vm2036, %v2041, 0
        %v2366 = vsel %vm2036, %v2043, 0
        %2368 = vmatprep.subr.mxu0 %v2045
        %2369 = vmatpush1.msra.mxu0 %v2044
        %2370 = vmatprep.subr.mxu0 %v2048
        %2371 = vmatpush1.msra.mxu0 %v2047
        %2372 = vmatprep.subr.mxu0 %v2051
        %2373 = vmatpush1.msra.mxu0 %v2050
        %2374 = vmatprep.subr.mxu0 %v2054
        %2375 = vmatpush1.msra.mxu0 %v2053
        %2376 = vmatprep.subr.mxu0 %v2057
        %2377 = vmatpush1.msra.mxu0 %v2056
        %2378 = vmatprep.subr.mxu0 %v2060
        %2379 = vmatpush1.msra.mxu0 %v2059
        %2380 = vmatprep.subr.mxu0 %v2063
        %2381 = vmatpush1.msra.mxu0 %v2062
        %2382 = vmatprep.subr.mxu0 %v2066
        %2383 = vmatpush1.msra.mxu0 %v2065
        %2384 = vmatprep.subr.mxu0 %v2069
        %2385 = vmatpush1.msra.mxu0 %v2068
        %2386 = vmatprep.subr.mxu0 %v2072
        %2387 = vmatpush1.msra.mxu0 %v2071
        %2388 = vmatprep.subr.mxu0 %v2075
        %2389 = vmatpush1.msra.mxu0 %v2074
        %2390 = vmatprep.subr.mxu0 %v2078
        %2391 = vmatpush1.msra.mxu0 %v2077
        %2392 = vmatprep.subr.mxu0 %v2081
        %2393 = vmatpush1.msra.mxu0 %v2080
        %2394 = vmatprep.subr.mxu0 %v2084
        %2395 = vmatpush1.msra.mxu0 %v2083
        %2396 = vmatprep.subr.mxu0 %v2087
        %2397 = vmatpush1.msra.mxu0 %v2086
        %2398 = vmatprep.subr.mxu0 %v2090
        %2399 = vmatpush1.msra.mxu0 %v2089
        %2400 = vmatprep.subr.mxu0 %v2093
        %2401 = vmatpush1.msra.mxu0 %v2092
        %2402 = vmatprep.subr.mxu0 %v2096
        %2403 = vmatpush1.msra.mxu0 %v2095
        %2404 = vmatprep.subr.mxu0 %v2099
        %2405 = vmatpush1.msra.mxu0 %v2098
        %2406 = vmatprep.subr.mxu0 %v2102
        %2407 = vmatpush1.msra.mxu0 %v2101
        %2408 = vmatprep.subr.mxu0 %v2105
        %2409 = vmatpush1.msra.mxu0 %v2104
        %2410 = vmatprep.subr.mxu0 %v2108
        %2411 = vmatpush1.msra.mxu0 %v2107
        %2412 = vmatprep.subr.mxu0 %v2111
        %2413 = vmatpush1.msra.mxu0 %v2110
        %2414 = vmatprep.subr.mxu0 %v2114
        %2415 = vmatpush1.msra.mxu0 %v2113
        %2416 = vmatprep.subr.mxu0 0.0
        %2417 = vmatpush1.msra.mxu0 0.0
        %2418 = vmatprep.subr.mxu0 0.0
        %2419 = vmatpush1.msra.mxu0 0.0
        %2420 = vmatprep.subr.mxu0 0.0
        %2421 = vmatpush1.msra.mxu0 0.0
        %2422 = vmatprep.subr.mxu0 0.0
        %2423 = vmatpush1.msra.mxu0 0.0
        %2424 = vmatprep.subr.mxu0 0.0
        %2425 = vmatpush1.msra.mxu0 0.0
        %2426 = vmatprep.subr.mxu0 0.0
        %2427 = vmatpush1.msra.mxu0 0.0
        %2428 = vmatprep.subr.mxu0 0.0
        %2429 = vmatpush1.msra.mxu0 0.0
        %2430 = vmatprep.subr.mxu0 0.0
        %2431 = vmatpush1.msra.mxu0 0.0
        %2432 = vmatprep.mubr.f32.mxu0 %v2363
        %2433 = vmatmul.mubr.f32.gmra.mrb[0].mxu0 %v2040
        %v2434 = vpop.f32.mrb[0].mxu0
        %v2435 = vadd.f32 %v2277, %v2434
        %v2436 = vpop.f32.mrb[0].mxu0
        %v2437 = vadd.f32 %v2279, %v2436
        %2438 = vmatprep.mubr.f32.mxu0 %v2366
        %2439 = vmatmul.mubr.f32.gmra.mrb[0].mxu0 %v2042
        %v2440 = vpop.f32.mrb[0].mxu0
        %v2441 = vadd.f32 %v2283, %v2440
        %v2442 = vpop.f32.mrb[0].mxu0
        %v2443 = vadd.f32 %v2285, %v2442
        %2444 = vdwg.mxu0
        %2445 = vmatprep.subr.mxu0 0.0
        %2446 = vmatpush1.msra.mxu0 %v2046
        %2447 = vmatprep.subr.mxu0 0.0
        %2448 = vmatpush1.msra.mxu0 %v2049
        %2449 = vmatprep.subr.mxu0 0.0
        %2450 = vmatpush1.msra.mxu0 %v2052
        %2451 = vmatprep.subr.mxu0 0.0
        %2452 = vmatpush1.msra.mxu0 %v2055
        %2453 = vmatprep.subr.mxu0 0.0
        %2454 = vmatpush1.msra.mxu0 %v2058
        %2455 = vmatprep.subr.mxu0 0.0
        %2456 = vmatpush1.msra.mxu0 %v2061
        %2457 = vmatprep.subr.mxu0 0.0
        %2458 = vmatpush1.msra.mxu0 %v2064
        %2459 = vmatprep.subr.mxu0 0.0
        %2460 = vmatpush1.msra.mxu0 %v2067
        %2461 = vmatprep.subr.mxu0 0.0
        %2462 = vmatpush1.msra.mxu0 %v2070
        %2463 = vmatprep.subr.mxu0 0.0
        %2464 = vmatpush1.msra.mxu0 %v2073
        %2465 = vmatprep.subr.mxu0 0.0
        %2466 = vmatpush1.msra.mxu0 %v2076
        %2467 = vmatprep.subr.mxu0 0.0
        %2468 = vmatpush1.msra.mxu0 %v2079
        %2469 = vmatprep.subr.mxu0 0.0
        %2470 = vmatpush1.msra.mxu0 %v2082
        %2471 = vmatprep.subr.mxu0 0.0
        %2472 = vmatpush1.msra.mxu0 %v2085
        %2473 = vmatprep.subr.mxu0 0.0
        %2474 = vmatpush1.msra.mxu0 %v2088
        %2475 = vmatprep.subr.mxu0 0.0
        %2476 = vmatpush1.msra.mxu0 %v2091
        %2477 = vmatprep.subr.mxu0 0.0
        %2478 = vmatpush1.msra.mxu0 %v2094
        %2479 = vmatprep.subr.mxu0 0.0
        %2480 = vmatpush1.msra.mxu0 %v2097
        %2481 = vmatprep.subr.mxu0 0.0
        %2482 = vmatpush1.msra.mxu0 %v2100
        %2483 = vmatprep.subr.mxu0 0.0
        %2484 = vmatpush1.msra.mxu0 %v2103
        %2485 = vmatprep.subr.mxu0 0.0
        %2486 = vmatpush1.msra.mxu0 %v2106
        %2487 = vmatprep.subr.mxu0 0.0
        %2488 = vmatpush1.msra.mxu0 %v2109
        %2489 = vmatprep.subr.mxu0 0.0
        %2490 = vmatpush1.msra.mxu0 %v2112
        %2491 = vmatprep.subr.mxu0 0.0
        %2492 = vmatpush1.msra.mxu0 %v2115
        %2493 = vmatprep.subr.mxu0 0.0
        %2494 = vmatpush1.msra.mxu0 0.0
        %2495 = vmatprep.subr.mxu0 0.0
        %2496 = vmatpush1.msra.mxu0 0.0
        %2497 = vmatprep.subr.mxu0 0.0
        %2498 = vmatpush1.msra.mxu0 0.0
        %2499 = vmatprep.subr.mxu0 0.0
        %2500 = vmatpush1.msra.mxu0 0.0
        %2501 = vmatprep.subr.mxu0 0.0
        %2502 = vmatpush1.msra.mxu0 0.0
        %2503 = vmatprep.subr.mxu0 0.0
        %2504 = vmatpush1.msra.mxu0 0.0
        %2505 = vmatprep.subr.mxu0 0.0
        %2506 = vmatpush1.msra.mxu0 0.0
        %2507 = vmatprep.subr.mxu0 0.0
        %2508 = vmatpush1.msra.mxu0 0.0
        %2509 = vmatprep.mubr.f32.mxu0 %v2363
        %2510 = vmatmul.mubr.f32.gmra.mrb[0].mxu0 %v2040
        %v2511 = vpop.f32.mrb[0].mxu0
        %v2512 = vadd.f32 %v2354, %v2511
        %v2513 = vpop.f32.mrb[0].mxu0
        %2514 = vmatprep.mubr.f32.mxu0 %v2366
        %2515 = vmatmul.mubr.f32.gmra.mrb[0].mxu0 %v2042
        %v2516 = vpop.f32.mrb[0].mxu0
        %v2517 = vadd.f32 %v2359, %v2516
        %v2518 = vpop.f32.mrb[0].mxu0
        %2519 = vdwg.mxu0
        %v2520 = vld [vmem:[#allocation2] sm:$0xfc]
        %v2521 = vld [vmem:[#allocation2 + $0x8] sm:$0xfc]
        %v2522 = vld [vmem:[#allocation2 + $0x10] sm:$0xff]
        %v2523 = vld [vmem:[#allocation2 + $0x18] sm:$0xff]
        %s2524 = scalar_lea.vmem %s5, 1152
        %v2525 = vld [vmem:[%s2524] sm:$0xff]
        %v2526 = vld [vmem:[%s2524 + $0x8] sm:$0xff]
        %v2527 = vld [vmem:[%s2524 + $0x10] sm:$0xff]
        %v2528 = vld [vmem:[%s2524 + $0x18] sm:$0xff]
        %v2529 = vld [vmem:[%s2524 + $0x20] sm:$0xff]
        %v2530 = vld [vmem:[%s2524 + $0x28] sm:$0xff]
        %v2531 = vld [vmem:[%s2524 + $0x30] sm:$0xff]
        %v2532 = vld [vmem:[%s2524 + $0x38] sm:$0xff]
        %v2533 = vld [vmem:[%s2524 + $0x40] sm:$0xff]
        %v2534 = vld [vmem:[%s2524 + $0x48] sm:$0xff]
        %v2535 = vld [vmem:[%s2524 + $0x50] sm:$0xff]
        %v2536 = vld [vmem:[%s2524 + $0x58] sm:$0xff]
        %v2537 = vld [vmem:[%s2524 + $0x60] sm:$0xff]
        %v2538 = vld [vmem:[%s2524 + $0x68] sm:$0xff]
        %v2539 = vld [vmem:[%s2524 + $0x70] sm:$0xff]
        %v2540 = vld [vmem:[%s2524 + $0x78] sm:$0xff]
        %v2541 = vld [vmem:[%s2524 + $0x80] sm:$0xff]
        %v2542 = vld [vmem:[%s2524 + $0x88] sm:$0xff]
        %v2543 = vld [vmem:[%s2524 + $0x90] sm:$0xff]
        %v2544 = vld [vmem:[%s2524 + $0x98] sm:$0xff]
        %v2545 = vld [vmem:[%s2524 + $0xa0] sm:$0xff]
        %v2546 = vld [vmem:[%s2524 + $0xa8] sm:$0xff]
        %v2547 = vld [vmem:[%s2524 + $0xb0] sm:$0xff]
        %v2548 = vld [vmem:[%s2524 + $0xb8] sm:$0xff]
        %v2549 = vld [vmem:[%s2524 + $0xc0] sm:$0xff]
        %v2550 = vld [vmem:[%s2524 + $0xc8] sm:$0xff]
        %v2551 = vld [vmem:[%s2524 + $0xd0] sm:$0xff]
        %v2552 = vld [vmem:[%s2524 + $0xd8] sm:$0xff]
        %v2553 = vld [vmem:[%s2524 + $0xe0] sm:$0xff]
        %v2554 = vld [vmem:[%s2524 + $0xe8] sm:$0xff]
        %v2555 = vld [vmem:[%s2524 + $0xf0] sm:$0xff]
        %v2556 = vld [vmem:[%s2524 + $0xf8] sm:$0xff]
        %v2557 = vld [vmem:[%s2524 + $0x100] sm:$0xff]
        %v2558 = vld [vmem:[%s2524 + $0x108] sm:$0xff]
        %v2559 = vld [vmem:[%s2524 + $0x110] sm:$0xff]
        %v2560 = vld [vmem:[%s2524 + $0x118] sm:$0xff]
        %v2561 = vld [vmem:[%s2524 + $0x120] sm:$0xff]
        %v2562 = vld [vmem:[%s2524 + $0x128] sm:$0xff]
        %v2563 = vld [vmem:[%s2524 + $0x130] sm:$0xff]
        %v2564 = vld [vmem:[%s2524 + $0x138] sm:$0xff]
        %v2565 = vld [vmem:[%s2524 + $0x140] sm:$0xff]
        %v2566 = vld [vmem:[%s2524 + $0x148] sm:$0xff]
        %v2567 = vld [vmem:[%s2524 + $0x150] sm:$0xff]
        %v2568 = vld [vmem:[%s2524 + $0x158] sm:$0xff]
        %v2569 = vld [vmem:[%s2524 + $0x160] sm:$0xff]
        %v2570 = vld [vmem:[%s2524 + $0x168] sm:$0xff]
        %v2571 = vld [vmem:[%s2524 + $0x170] sm:$0xff]
        %v2572 = vld [vmem:[%s2524 + $0x178] sm:$0xff]
        %v2573 = vld [vmem:[%s2524 + $0x180] sm:$0xff]
        %v2574 = vld [vmem:[%s2524 + $0x188] sm:$0xff]
        %v2575 = vld [vmem:[%s2524 + $0x190] sm:$0xff]
        %v2576 = vld [vmem:[%s2524 + $0x198] sm:$0xff]
        %v2577 = vld [vmem:[%s2524 + $0x1a0] sm:$0xff]
        %v2578 = vld [vmem:[%s2524 + $0x1a8] sm:$0xff]
        %v2579 = vld [vmem:[%s2524 + $0x1b0] sm:$0xff]
        %v2580 = vld [vmem:[%s2524 + $0x1b8] sm:$0xff]
        %v2581 = vld [vmem:[%s2524 + $0x1c0] sm:$0xff]
        %v2582 = vld [vmem:[%s2524 + $0x1c8] sm:$0xff]
        %v2583 = vld [vmem:[%s2524 + $0x1d0] sm:$0xff]
        %v2584 = vld [vmem:[%s2524 + $0x1d8] sm:$0xff]
        %v2585 = vld [vmem:[%s2524 + $0x1e0] sm:$0xff]
        %v2586 = vld [vmem:[%s2524 + $0x1e8] sm:$0xff]
        %v2587 = vld [vmem:[%s2524 + $0x1f0] sm:$0xff]
        %v2588 = vld [vmem:[%s2524 + $0x1f8] sm:$0xff]
        %v2589 = vld [vmem:[%s2524 + $0x200] sm:$0xff]
        %v2590 = vld [vmem:[%s2524 + $0x208] sm:$0xff]
        %v2591 = vld [vmem:[%s2524 + $0x210] sm:$0xff]
        %v2592 = vld [vmem:[%s2524 + $0x218] sm:$0xff]
        %v2593 = vld [vmem:[%s2524 + $0x220] sm:$0xff]
        %v2594 = vld [vmem:[%s2524 + $0x228] sm:$0xff]
        %v2595 = vld [vmem:[%s2524 + $0x230] sm:$0xff]
        %v2596 = vld [vmem:[%s2524 + $0x238] sm:$0xff]
        %v2601 = vrot.slane %v2520, 2
        %v2602 = vrot.slane %v2522, 2
        %v2603 = vsel %vm565, %v2601, %v2602
        %v2604 = vrot.slane %v2521, 2
        %v2605 = vrot.slane %v2523, 2
        %v2606 = vsel %vm565, %v2604, %v2605
        %v2609 = vsel %vm2036, %v2606, 0
        %v2611 = vsel %vm2036, %v2605, 0
        %2613 = vmatprep.subr.mxu0 %v2526
        %2614 = vmatpush1.msra.mxu0 %v2525
        %2615 = vmatprep.subr.mxu0 %v2529
        %2616 = vmatpush1.msra.mxu0 %v2528
        %2617 = vmatprep.subr.mxu0 %v2532
        %2618 = vmatpush1.msra.mxu0 %v2531
        %2619 = vmatprep.subr.mxu0 %v2535
        %2620 = vmatpush1.msra.mxu0 %v2534
        %2621 = vmatprep.subr.mxu0 %v2538
        %2622 = vmatpush1.msra.mxu0 %v2537
        %2623 = vmatprep.subr.mxu0 %v2541
        %2624 = vmatpush1.msra.mxu0 %v2540
        %2625 = vmatprep.subr.mxu0 %v2544
        %2626 = vmatpush1.msra.mxu0 %v2543
        %2627 = vmatprep.subr.mxu0 %v2547
        %2628 = vmatpush1.msra.mxu0 %v2546
        %2629 = vmatprep.subr.mxu0 %v2550
        %2630 = vmatpush1.msra.mxu0 %v2549
        %2631 = vmatprep.subr.mxu0 %v2553
        %2632 = vmatpush1.msra.mxu0 %v2552
        %2633 = vmatprep.subr.mxu0 %v2556
        %2634 = vmatpush1.msra.mxu0 %v2555
        %2635 = vmatprep.subr.mxu0 %v2559
        %2636 = vmatpush1.msra.mxu0 %v2558
        %2637 = vmatprep.subr.mxu0 %v2562
        %2638 = vmatpush1.msra.mxu0 %v2561
        %2639 = vmatprep.subr.mxu0 %v2565
        %2640 = vmatpush1.msra.mxu0 %v2564
        %2641 = vmatprep.subr.mxu0 %v2568
        %2642 = vmatpush1.msra.mxu0 %v2567
        %2643 = vmatprep.subr.mxu0 %v2571
        %2644 = vmatpush1.msra.mxu0 %v2570
        %2645 = vmatprep.subr.mxu0 %v2574
        %2646 = vmatpush1.msra.mxu0 %v2573
        %2647 = vmatprep.subr.mxu0 %v2577
        %2648 = vmatpush1.msra.mxu0 %v2576
        %2649 = vmatprep.subr.mxu0 %v2580
        %2650 = vmatpush1.msra.mxu0 %v2579
        %2651 = vmatprep.subr.mxu0 %v2583
        %2652 = vmatpush1.msra.mxu0 %v2582
        %2653 = vmatprep.subr.mxu0 %v2586
        %2654 = vmatpush1.msra.mxu0 %v2585
        %2655 = vmatprep.subr.mxu0 %v2589
        %2656 = vmatpush1.msra.mxu0 %v2588
        %2657 = vmatprep.subr.mxu0 %v2592
        %2658 = vmatpush1.msra.mxu0 %v2591
        %2659 = vmatprep.subr.mxu0 %v2595
        %2660 = vmatpush1.msra.mxu0 %v2594
        %2661 = vmatprep.subr.mxu0 0.0
        %2662 = vmatpush1.msra.mxu0 0.0
        %2663 = vmatprep.subr.mxu0 0.0
        %2664 = vmatpush1.msra.mxu0 0.0
        %2665 = vmatprep.subr.mxu0 0.0
        %2666 = vmatpush1.msra.mxu0 0.0
        %2667 = vmatprep.subr.mxu0 0.0
        %2668 = vmatpush1.msra.mxu0 0.0
        %2669 = vmatprep.subr.mxu0 0.0
        %2670 = vmatpush1.msra.mxu0 0.0
        %2671 = vmatprep.subr.mxu0 0.0
        %2672 = vmatpush1.msra.mxu0 0.0
        %2673 = vmatprep.subr.mxu0 0.0
        %2674 = vmatpush1.msra.mxu0 0.0
        %2675 = vmatprep.subr.mxu0 0.0
        %2676 = vmatpush1.msra.mxu0 0.0
        %2677 = vmatprep.mubr.f32.mxu0 %v2609
        %2678 = vmatmul.mubr.f32.gmra.mrb[0].mxu0 %v2603
        %v2679 = vpop.f32.mrb[0].mxu0
        %v2680 = vadd.f32 0.0, %v2679
        %v2681 = vpop.f32.mrb[0].mxu0
        %v2682 = vadd.f32 0.0, %v2681
        %2683 = vmatprep.mubr.f32.mxu0 %v2611
        %2684 = vmatmul.mubr.f32.gmra.mrb[0].mxu0 %v2602
        %v2685 = vpop.f32.mrb[0].mxu0
        %v2686 = vadd.f32 0.0, %v2685
        %v2687 = vpop.f32.mrb[0].mxu0
        %v2688 = vadd.f32 0.0, %v2687
        %2689 = vdwg.mxu0
        %2690 = vmatprep.subr.mxu0 0.0
        %2691 = vmatpush1.msra.mxu0 %v2527
        %2692 = vmatprep.subr.mxu0 0.0
        %2693 = vmatpush1.msra.mxu0 %v2530
        %2694 = vmatprep.subr.mxu0 0.0
        %2695 = vmatpush1.msra.mxu0 %v2533
        %2696 = vmatprep.subr.mxu0 0.0
        %2697 = vmatpush1.msra.mxu0 %v2536
        %2698 = vmatprep.subr.mxu0 0.0
        %2699 = vmatpush1.msra.mxu0 %v2539
        %2700 = vmatprep.subr.mxu0 0.0
        %2701 = vmatpush1.msra.mxu0 %v2542
        %2702 = vmatprep.subr.mxu0 0.0
        %2703 = vmatpush1.msra.mxu0 %v2545
        %2704 = vmatprep.subr.mxu0 0.0
        %2705 = vmatpush1.msra.mxu0 %v2548
        %2706 = vmatprep.subr.mxu0 0.0
        %2707 = vmatpush1.msra.mxu0 %v2551
        %2708 = vmatprep.subr.mxu0 0.0
        %2709 = vmatpush1.msra.mxu0 %v2554
        %2710 = vmatprep.subr.mxu0 0.0
        %2711 = vmatpush1.msra.mxu0 %v2557
        %2712 = vmatprep.subr.mxu0 0.0
        %2713 = vmatpush1.msra.mxu0 %v2560
        %2714 = vmatprep.subr.mxu0 0.0
        %2715 = vmatpush1.msra.mxu0 %v2563
        %2716 = vmatprep.subr.mxu0 0.0
        %2717 = vmatpush1.msra.mxu0 %v2566
        %2718 = vmatprep.subr.mxu0 0.0
        %2719 = vmatpush1.msra.mxu0 %v2569
        %2720 = vmatprep.subr.mxu0 0.0
        %2721 = vmatpush1.msra.mxu0 %v2572
        %2722 = vmatprep.subr.mxu0 0.0
        %2723 = vmatpush1.msra.mxu0 %v2575
        %2724 = vmatprep.subr.mxu0 0.0
        %2725 = vmatpush1.msra.mxu0 %v2578
        %2726 = vmatprep.subr.mxu0 0.0
        %2727 = vmatpush1.msra.mxu0 %v2581
        %2728 = vmatprep.subr.mxu0 0.0
        %2729 = vmatpush1.msra.mxu0 %v2584
        %2730 = vmatprep.subr.mxu0 0.0
        %2731 = vmatpush1.msra.mxu0 %v2587
        %2732 = vmatprep.subr.mxu0 0.0
        %2733 = vmatpush1.msra.mxu0 %v2590
        %2734 = vmatprep.subr.mxu0 0.0
        %2735 = vmatpush1.msra.mxu0 %v2593
        %2736 = vmatprep.subr.mxu0 0.0
        %2737 = vmatpush1.msra.mxu0 %v2596
        %2738 = vmatprep.subr.mxu0 0.0
        %2739 = vmatpush1.msra.mxu0 0.0
        %2740 = vmatprep.subr.mxu0 0.0
        %2741 = vmatpush1.msra.mxu0 0.0
        %2742 = vmatprep.subr.mxu0 0.0
        %2743 = vmatpush1.msra.mxu0 0.0
        %2744 = vmatprep.subr.mxu0 0.0
        %2745 = vmatpush1.msra.mxu0 0.0
        %2746 = vmatprep.subr.mxu0 0.0
        %2747 = vmatpush1.msra.mxu0 0.0
        %2748 = vmatprep.subr.mxu0 0.0
        %2749 = vmatpush1.msra.mxu0 0.0
        %2750 = vmatprep.subr.mxu0 0.0
        %2751 = vmatpush1.msra.mxu0 0.0
        %2752 = vmatprep.subr.mxu0 0.0
        %2753 = vmatpush1.msra.mxu0 0.0
        %2754 = vmatprep.mubr.f32.mxu0 %v2609
        %2755 = vmatmul.mubr.f32.gmra.mrb[0].mxu0 %v2603
        %v2756 = vpop.f32.mrb[0].mxu0
        %v2757 = vadd.f32 0.0, %v2756
        %v2758 = vpop.f32.mrb[0].mxu0
        %2759 = vmatprep.mubr.f32.mxu0 %v2611
        %2760 = vmatmul.mubr.f32.gmra.mrb[0].mxu0 %v2602
        %v2761 = vpop.f32.mrb[0].mxu0
        %v2762 = vadd.f32 0.0, %v2761
        %v2763 = vpop.f32.mrb[0].mxu0
        %2764 = vdwg.mxu0
        %v2765 = vadd.f32 %v2435, %v2680
        %v2766 = vadd.f32 %v2437, %v2682
        %v2767 = vadd.f32 %v2512, %v2757
        %v2768 = vadd.f32 %v2441, %v2686
        %v2769 = vadd.f32 %v2443, %v2688
        %v2770 = vadd.f32 %v2517, %v2762
        %v2771 = vld [vmem:[%s6] sm:$0x7]
        %v2773 = vlaneseq
        %v2774 = vshrl.u32 %v2773, 7
        %v2775 = vsub.s32 0, %v2774
        %v2776 = vrot.slane %v2771, %v2775
        %v2777 = vlaneseq
        %v2778 = vshrl.u32 %v2777, 7
        %v2779 = vsub.s32 1, %v2778
        %v2780 = vrot.slane %v2771, %v2779
        %v2781 = vlaneseq
        %v2782 = vshrl.u32 %v2781, 7
        %v2783 = vsub.s32 2, %v2782
        %v2784 = vrot.slane %v2771, %v2783
        %v2788 = vadd.f32 %v2765, %v2776
        %v2789 = vadd.f32 %v2766, %v2780
        %v2790 = vadd.f32 %v2767, %v2784
        %v2791 = vadd.f32 %v2768, %v2776
        %v2792 = vadd.f32 %v2769, %v2780
        %v2793 = vadd.f32 %v2770, %v2784
        %v2794 = vmax.f32 %v2788, 0.0
        %v2795 = vmax.f32 %v2789, 0.0
        %v2796 = vmax.f32 %v2790, 0.0
        %v2797 = vmax.f32 %v2791, 0.0
        %v2798 = vmax.f32 %v2792, 0.0
        %v2799 = vmax.f32 %v2793, 0.0
        %v2800 = vld [vmem:[%s7] sm:$0xff]
        %v2801 = vld [vmem:[%s7 + $0x8] sm:$0x1]
        %vm2802 = vcmask 113664
        %v2804 = vsel %vm2802, %v2800, 0
        %v2807 = vsel %vm2802, %v2801, 0
        %v2810 = vsel %vm565, %v2797, 0
        %v2813 = vsel %vm565, %v2798, 0
        %v2816 = vsel %vm565, %v2799, 0
        %2818 = vmatprep.subr.mxu0 %v2795
        %2819 = vmatpush1.msra.mxu0 %v2794
        %2820 = vmatprep.subr.mxu0 %v2813
        %2821 = vmatpush1.msra.mxu0 %v2810
        %2822 = vmatprep.subr.mxu0 0.0
        %2823 = vmatpush1.msra.mxu0 0.0
        %2824 = vmatprep.subr.mxu0 0.0
        %2825 = vmatpush1.msra.mxu0 0.0
        %2826 = vmatprep.subr.mxu0 0.0
        %2827 = vmatpush1.msra.mxu0 0.0
        %2828 = vmatprep.subr.mxu0 0.0
        %2829 = vmatpush1.msra.mxu0 0.0
        %2830 = vmatprep.subr.mxu0 0.0
        %2831 = vmatpush1.msra.mxu0 0.0
        %2832 = vmatprep.subr.mxu0 0.0
        %2833 = vmatpush1.msra.mxu0 0.0
        %2834 = vmatprep.subr.mxu0 0.0
        %2835 = vmatpush1.msra.mxu0 0.0
        %2836 = vmatprep.subr.mxu0 0.0
        %2837 = vmatpush1.msra.mxu0 0.0
        %2838 = vmatprep.subr.mxu0 0.0
        %2839 = vmatpush1.msra.mxu0 0.0
        %2840 = vmatprep.subr.mxu0 0.0
        %2841 = vmatpush1.msra.mxu0 0.0
        %2842 = vmatprep.subr.mxu0 0.0
        %2843 = vmatpush1.msra.mxu0 0.0
        %2844 = vmatprep.subr.mxu0 0.0
        %2845 = vmatpush1.msra.mxu0 0.0
        %2846 = vmatprep.subr.mxu0 0.0
        %2847 = vmatpush1.msra.mxu0 0.0
        %2848 = vmatprep.subr.mxu0 0.0
        %2849 = vmatpush1.msra.mxu0 0.0
        %2850 = vmatprep.subr.mxu0 0.0
        %2851 = vmatpush1.msra.mxu0 0.0
        %2852 = vmatprep.subr.mxu0 0.0
        %2853 = vmatpush1.msra.mxu0 0.0
        %2854 = vmatprep.subr.mxu0 0.0
        %2855 = vmatpush1.msra.mxu0 0.0
        %2856 = vmatprep.subr.mxu0 0.0
        %2857 = vmatpush1.msra.mxu0 0.0
        %2858 = vmatprep.subr.mxu0 0.0
        %2859 = vmatpush1.msra.mxu0 0.0
        %2860 = vmatprep.subr.mxu0 0.0
        %2861 = vmatpush1.msra.mxu0 0.0
        %2862 = vmatprep.subr.mxu0 0.0
        %2863 = vmatpush1.msra.mxu0 0.0
        %2864 = vmatprep.subr.mxu0 0.0
        %2865 = vmatpush1.msra.mxu0 0.0
        %2866 = vmatprep.subr.mxu0 0.0
        %2867 = vmatpush1.msra.mxu0 0.0
        %2868 = vmatprep.subr.mxu0 0.0
        %2869 = vmatpush1.msra.mxu0 0.0
        %2870 = vmatprep.subr.mxu0 0.0
        %2871 = vmatpush1.msra.mxu0 0.0
        %2872 = vmatprep.subr.mxu0 0.0
        %2873 = vmatpush1.msra.mxu0 0.0
        %2874 = vmatprep.subr.mxu0 0.0
        %2875 = vmatpush1.msra.mxu0 0.0
        %2876 = vmatprep.subr.mxu0 0.0
        %2877 = vmatpush1.msra.mxu0 0.0
        %2878 = vmatprep.subr.mxu0 0.0
        %2879 = vmatpush1.msra.mxu0 0.0
        %2880 = vmatprep.subr.mxu0 0.0
        %2881 = vmatpush1.msra.mxu0 0.0
        %2882 = vmatprep.mubr.f32.mxu0 0.0
        %2883 = vmatmul.mubr.f32.gmra.mrb[0].mxu0 %v2804
        %v2884 = vpop.f32.mrb[0].mxu0
        %v2885 = vadd.f32 0.0, %v2884
        %v2886 = vpop.f32.mrb[0].mxu0
        %v2887 = vadd.f32 0.0, %v2886
        %2888 = vmatprep.mubr.f32.mxu0 0.0
        %2889 = vmatmul.mubr.f32.gmra.mrb[0].mxu0 %v2807
        %v2890 = vpop.f32.mrb[0].mxu0
        %v2891 = vadd.f32 0.0, %v2890
        %v2892 = vpop.f32.mrb[0].mxu0
        %v2893 = vadd.f32 0.0, %v2892
        %2894 = vdwg.mxu0
        %2895 = vmatprep.subr.mxu0 0.0
        %2896 = vmatpush1.msra.mxu0 %v2796
        %2897 = vmatprep.subr.mxu0 0.0
        %2898 = vmatpush1.msra.mxu0 %v2816
        %2899 = vmatprep.subr.mxu0 0.0
        %2900 = vmatpush1.msra.mxu0 0.0
        %2901 = vmatprep.subr.mxu0 0.0
        %2902 = vmatpush1.msra.mxu0 0.0
        %2903 = vmatprep.subr.mxu0 0.0
        %2904 = vmatpush1.msra.mxu0 0.0
        %2905 = vmatprep.subr.mxu0 0.0
        %2906 = vmatpush1.msra.mxu0 0.0
        %2907 = vmatprep.subr.mxu0 0.0
        %2908 = vmatpush1.msra.mxu0 0.0
        %2909 = vmatprep.subr.mxu0 0.0
        %2910 = vmatpush1.msra.mxu0 0.0
        %2911 = vmatprep.subr.mxu0 0.0
        %2912 = vmatpush1.msra.mxu0 0.0
        %2913 = vmatprep.subr.mxu0 0.0
        %2914 = vmatpush1.msra.mxu0 0.0
        %2915 = vmatprep.subr.mxu0 0.0
        %2916 = vmatpush1.msra.mxu0 0.0
        %2917 = vmatprep.subr.mxu0 0.0
        %2918 = vmatpush1.msra.mxu0 0.0
        %2919 = vmatprep.subr.mxu0 0.0
        %2920 = vmatpush1.msra.mxu0 0.0
        %2921 = vmatprep.subr.mxu0 0.0
        %2922 = vmatpush1.msra.mxu0 0.0
        %2923 = vmatprep.subr.mxu0 0.0
        %2924 = vmatpush1.msra.mxu0 0.0
        %2925 = vmatprep.subr.mxu0 0.0
        %2926 = vmatpush1.msra.mxu0 0.0
        %2927 = vmatprep.subr.mxu0 0.0
        %2928 = vmatpush1.msra.mxu0 0.0
        %2929 = vmatprep.subr.mxu0 0.0
        %2930 = vmatpush1.msra.mxu0 0.0
        %2931 = vmatprep.subr.mxu0 0.0
        %2932 = vmatpush1.msra.mxu0 0.0
        %2933 = vmatprep.subr.mxu0 0.0
        %2934 = vmatpush1.msra.mxu0 0.0
        %2935 = vmatprep.subr.mxu0 0.0
        %2936 = vmatpush1.msra.mxu0 0.0
        %2937 = vmatprep.subr.mxu0 0.0
        %2938 = vmatpush1.msra.mxu0 0.0
        %2939 = vmatprep.subr.mxu0 0.0
        %2940 = vmatpush1.msra.mxu0 0.0
        %2941 = vmatprep.subr.mxu0 0.0
        %2942 = vmatpush1.msra.mxu0 0.0
        %2943 = vmatprep.subr.mxu0 0.0
        %2944 = vmatpush1.msra.mxu0 0.0
        %2945 = vmatprep.subr.mxu0 0.0
        %2946 = vmatpush1.msra.mxu0 0.0
        %2947 = vmatprep.subr.mxu0 0.0
        %2948 = vmatpush1.msra.mxu0 0.0
        %2949 = vmatprep.subr.mxu0 0.0
        %2950 = vmatpush1.msra.mxu0 0.0
        %2951 = vmatprep.subr.mxu0 0.0
        %2952 = vmatpush1.msra.mxu0 0.0
        %2953 = vmatprep.subr.mxu0 0.0
        %2954 = vmatpush1.msra.mxu0 0.0
        %2955 = vmatprep.subr.mxu0 0.0
        %2956 = vmatpush1.msra.mxu0 0.0
        %2957 = vmatprep.subr.mxu0 0.0
        %2958 = vmatpush1.msra.mxu0 0.0
        %2959 = vmatprep.mubr.f32.mxu0 0.0
        %2960 = vmatmul.mubr.f32.gmra.mrb[0].mxu0 %v2804
        %v2961 = vpop.f32.mrb[0].mxu0
        %v2962 = vadd.f32 0.0, %v2961
        %v2963 = vpop.f32.mrb[0].mxu0
        %2964 = vmatprep.mubr.f32.mxu0 0.0
        %2965 = vmatmul.mubr.f32.gmra.mrb[0].mxu0 %v2807
        %v2966 = vpop.f32.mrb[0].mxu0
        %v2967 = vadd.f32 0.0, %v2966
        %v2968 = vpop.f32.mrb[0].mxu0
        %2969 = vdwg.mxu0
        %s2970 = scalar_lea.vmem %s7, 16
        %v2971 = vld [vmem:[%s2970] sm:$0xff]
        %v2972 = vld [vmem:[%s2970 + $0x8] sm:$0x1]
        %v2974 = vsel %vm2802, %v2971, 0
        %v2977 = vsel %vm2802, %v2972, 0
        %2979 = vmatprep.subr.mxu0 %v2795
        %2980 = vmatpush1.msra.mxu0 %v2794
        %2981 = vmatprep.subr.mxu0 %v2813
        %2982 = vmatpush1.msra.mxu0 %v2810
        %2983 = vmatprep.subr.mxu0 0.0
        %2984 = vmatpush1.msra.mxu0 0.0
        %2985 = vmatprep.subr.mxu0 0.0
        %2986 = vmatpush1.msra.mxu0 0.0
        %2987 = vmatprep.subr.mxu0 0.0
        %2988 = vmatpush1.msra.mxu0 0.0
        %2989 = vmatprep.subr.mxu0 0.0
        %2990 = vmatpush1.msra.mxu0 0.0
        %2991 = vmatprep.subr.mxu0 0.0
        %2992 = vmatpush1.msra.mxu0 0.0
        %2993 = vmatprep.subr.mxu0 0.0
        %2994 = vmatpush1.msra.mxu0 0.0
        %2995 = vmatprep.subr.mxu0 0.0
        %2996 = vmatpush1.msra.mxu0 0.0
        %2997 = vmatprep.subr.mxu0 0.0
        %2998 = vmatpush1.msra.mxu0 0.0
        %2999 = vmatprep.subr.mxu0 0.0
        %3000 = vmatpush1.msra.mxu0 0.0
        %3001 = vmatprep.subr.mxu0 0.0
        %3002 = vmatpush1.msra.mxu0 0.0
        %3003 = vmatprep.subr.mxu0 0.0
        %3004 = vmatpush1.msra.mxu0 0.0
        %3005 = vmatprep.subr.mxu0 0.0
        %3006 = vmatpush1.msra.mxu0 0.0
        %3007 = vmatprep.subr.mxu0 0.0
        %3008 = vmatpush1.msra.mxu0 0.0
        %3009 = vmatprep.subr.mxu0 0.0
        %3010 = vmatpush1.msra.mxu0 0.0
        %3011 = vmatprep.subr.mxu0 0.0
        %3012 = vmatpush1.msra.mxu0 0.0
        %3013 = vmatprep.subr.mxu0 0.0
        %3014 = vmatpush1.msra.mxu0 0.0
        %3015 = vmatprep.subr.mxu0 0.0
        %3016 = vmatpush1.msra.mxu0 0.0
        %3017 = vmatprep.subr.mxu0 0.0
        %3018 = vmatpush1.msra.mxu0 0.0
        %3019 = vmatprep.subr.mxu0 0.0
        %3020 = vmatpush1.msra.mxu0 0.0
        %3021 = vmatprep.subr.mxu0 0.0
        %3022 = vmatpush1.msra.mxu0 0.0
        %3023 = vmatprep.subr.mxu0 0.0
        %3024 = vmatpush1.msra.mxu0 0.0
        %3025 = vmatprep.subr.mxu0 0.0
        %3026 = vmatpush1.msra.mxu0 0.0
        %3027 = vmatprep.subr.mxu0 0.0
        %3028 = vmatpush1.msra.mxu0 0.0
        %3029 = vmatprep.subr.mxu0 0.0
        %3030 = vmatpush1.msra.mxu0 0.0
        %3031 = vmatprep.subr.mxu0 0.0
        %3032 = vmatpush1.msra.mxu0 0.0
        %3033 = vmatprep.subr.mxu0 0.0
        %3034 = vmatpush1.msra.mxu0 0.0
        %3035 = vmatprep.subr.mxu0 0.0
        %3036 = vmatpush1.msra.mxu0 0.0
        %3037 = vmatprep.subr.mxu0 0.0
        %3038 = vmatpush1.msra.mxu0 0.0
        %3039 = vmatprep.subr.mxu0 0.0
        %3040 = vmatpush1.msra.mxu0 0.0
        %3041 = vmatprep.subr.mxu0 0.0
        %3042 = vmatpush1.msra.mxu0 0.0
        %3043 = vmatprep.mubr.f32.mxu0 0.0
        %3044 = vmatmul.mubr.f32.gmra.mrb[0].mxu0 %v2974
        %v3045 = vpop.f32.mrb[0].mxu0
        %v3046 = vadd.f32 0.0, %v3045
        %v3047 = vpop.f32.mrb[0].mxu0
        %v3048 = vadd.f32 0.0, %v3047
        %3049 = vmatprep.mubr.f32.mxu0 0.0
        %3050 = vmatmul.mubr.f32.gmra.mrb[0].mxu0 %v2977
        %v3051 = vpop.f32.mrb[0].mxu0
        %v3052 = vadd.f32 0.0, %v3051
        %v3053 = vpop.f32.mrb[0].mxu0
        %v3054 = vadd.f32 0.0, %v3053
        %3055 = vdwg.mxu0
        %3056 = vmatprep.subr.mxu0 0.0
        %3057 = vmatpush1.msra.mxu0 %v2796
        %3058 = vmatprep.subr.mxu0 0.0
        %3059 = vmatpush1.msra.mxu0 %v2816
        %3060 = vmatprep.subr.mxu0 0.0
        %3061 = vmatpush1.msra.mxu0 0.0
        %3062 = vmatprep.subr.mxu0 0.0
        %3063 = vmatpush1.msra.mxu0 0.0
        %3064 = vmatprep.subr.mxu0 0.0
        %3065 = vmatpush1.msra.mxu0 0.0
        %3066 = vmatprep.subr.mxu0 0.0
        %3067 = vmatpush1.msra.mxu0 0.0
        %3068 = vmatprep.subr.mxu0 0.0
        %3069 = vmatpush1.msra.mxu0 0.0
        %3070 = vmatprep.subr.mxu0 0.0
        %3071 = vmatpush1.msra.mxu0 0.0
        %3072 = vmatprep.subr.mxu0 0.0
        %3073 = vmatpush1.msra.mxu0 0.0
        %3074 = vmatprep.subr.mxu0 0.0
        %3075 = vmatpush1.msra.mxu0 0.0
        %3076 = vmatprep.subr.mxu0 0.0
        %3077 = vmatpush1.msra.mxu0 0.0
        %3078 = vmatprep.subr.mxu0 0.0
        %3079 = vmatpush1.msra.mxu0 0.0
        %3080 = vmatprep.subr.mxu0 0.0
        %3081 = vmatpush1.msra.mxu0 0.0
        %3082 = vmatprep.subr.mxu0 0.0
        %3083 = vmatpush1.msra.mxu0 0.0
        %3084 = vmatprep.subr.mxu0 0.0
        %3085 = vmatpush1.msra.mxu0 0.0
        %3086 = vmatprep.subr.mxu0 0.0
        %3087 = vmatpush1.msra.mxu0 0.0
        %3088 = vmatprep.subr.mxu0 0.0
        %3089 = vmatpush1.msra.mxu0 0.0
        %3090 = vmatprep.subr.mxu0 0.0
        %3091 = vmatpush1.msra.mxu0 0.0
        %3092 = vmatprep.subr.mxu0 0.0
        %3093 = vmatpush1.msra.mxu0 0.0
        %3094 = vmatprep.subr.mxu0 0.0
        %3095 = vmatpush1.msra.mxu0 0.0
        %3096 = vmatprep.subr.mxu0 0.0
        %3097 = vmatpush1.msra.mxu0 0.0
        %3098 = vmatprep.subr.mxu0 0.0
        %3099 = vmatpush1.msra.mxu0 0.0
        %3100 = vmatprep.subr.mxu0 0.0
        %3101 = vmatpush1.msra.mxu0 0.0
        %3102 = vmatprep.subr.mxu0 0.0
        %3103 = vmatpush1.msra.mxu0 0.0
        %3104 = vmatprep.subr.mxu0 0.0
        %3105 = vmatpush1.msra.mxu0 0.0
        %3106 = vmatprep.subr.mxu0 0.0
        %3107 = vmatpush1.msra.mxu0 0.0
        %3108 = vmatprep.subr.mxu0 0.0
        %3109 = vmatpush1.msra.mxu0 0.0
        %3110 = vmatprep.subr.mxu0 0.0
        %3111 = vmatpush1.msra.mxu0 0.0
        %3112 = vmatprep.subr.mxu0 0.0
        %3113 = vmatpush1.msra.mxu0 0.0
        %3114 = vmatprep.subr.mxu0 0.0
        %3115 = vmatpush1.msra.mxu0 0.0
        %3116 = vmatprep.subr.mxu0 0.0
        %3117 = vmatpush1.msra.mxu0 0.0
        %3118 = vmatprep.subr.mxu0 0.0
        %3119 = vmatpush1.msra.mxu0 0.0
        %3120 = vmatprep.mubr.f32.mxu0 0.0
        %3121 = vmatmul.mubr.f32.gmra.mrb[0].mxu0 %v2974
        %v3122 = vpop.f32.mrb[0].mxu0
        %v3123 = vadd.f32 0.0, %v3122
        %v3124 = vpop.f32.mrb[0].mxu0
        %3125 = vmatprep.mubr.f32.mxu0 0.0
        %3126 = vmatmul.mubr.f32.gmra.mrb[0].mxu0 %v2977
        %v3127 = vpop.f32.mrb[0].mxu0
        %v3128 = vadd.f32 0.0, %v3127
        %v3129 = vpop.f32.mrb[0].mxu0
        %3130 = vdwg.mxu0
        %v3131 = vmax.f32 %v2885, %v3046
        %v3132 = vmax.f32 %v2887, %v3048
        %v3133 = vmax.f32 %v2962, %v3123
        %v3134 = vmax.f32 %v2891, %v3052
        %v3135 = vmax.f32 %v2893, %v3054
        %v3136 = vmax.f32 %v2967, %v3128
        %v3137 = vld [vmem:[%s8] sm:$0xff]
        %v3138 = vld [vmem:[%s8 + $0x8] sm:$0xff]
        %v3139 = vld [vmem:[%s8 + $0x10] sm:$0xff]
        %v3140 = vld [vmem:[%s8 + $0x18] sm:$0xff]
        %v3141 = vld [vmem:[%s8 + $0x20] sm:$0xff]
        %v3142 = vld [vmem:[%s8 + $0x28] sm:$0xff]
        %v3143 = vld [vmem:[%s8 + $0x30] sm:$0xff]
        %v3144 = vld [vmem:[%s8 + $0x38] sm:$0xff]
        %v3145 = vld [vmem:[%s8 + $0x40] sm:$0xff]
        %v3146 = vld [vmem:[%s8 + $0x48] sm:$0xff]
        %v3147 = vld [vmem:[%s8 + $0x50] sm:$0xff]
        %v3148 = vld [vmem:[%s8 + $0x58] sm:$0xff]
        %v3149 = vld [vmem:[%s8 + $0x60] sm:$0xff]
        %v3150 = vld [vmem:[%s8 + $0x68] sm:$0xff]
        %v3151 = vld [vmem:[%s8 + $0x70] sm:$0xff]
        %v3152 = vld [vmem:[%s8 + $0x78] sm:$0xff]
        %v3153 = vld [vmem:[%s8 + $0x80] sm:$0xff]
        %v3154 = vld [vmem:[%s8 + $0x88] sm:$0xff]
        %v3155 = vld [vmem:[%s8 + $0x90] sm:$0xff]
        %v3156 = vld [vmem:[%s8 + $0x98] sm:$0xff]
        %v3157 = vld [vmem:[%s8 + $0xa0] sm:$0xff]
        %v3158 = vld [vmem:[%s8 + $0xa8] sm:$0xff]
        %v3159 = vld [vmem:[%s8 + $0xb0] sm:$0xff]
        %v3160 = vld [vmem:[%s8 + $0xb8] sm:$0xff]
        %v3161 = vld [vmem:[%s8 + $0xc0] sm:$0xff]
        %v3162 = vld [vmem:[%s8 + $0xc8] sm:$0xff]
        %v3163 = vld [vmem:[%s8 + $0xd0] sm:$0xff]
        %v3164 = vld [vmem:[%s8 + $0xd8] sm:$0xff]
        %v3165 = vld [vmem:[%s8 + $0xe0] sm:$0xff]
        %v3166 = vld [vmem:[%s8 + $0xe8] sm:$0xff]
        %v3167 = vld [vmem:[%s8 + $0xf0] sm:$0xff]
        %v3168 = vld [vmem:[%s8 + $0xf8] sm:$0xff]
        %v3169 = vld [vmem:[%s8 + $0x100] sm:$0xff]
        %v3170 = vld [vmem:[%s8 + $0x108] sm:$0xff]
        %v3171 = vld [vmem:[%s8 + $0x110] sm:$0xff]
        %v3172 = vld [vmem:[%s8 + $0x118] sm:$0xff]
        %v3173 = vld [vmem:[%s8 + $0x120] sm:$0xff]
        %v3174 = vld [vmem:[%s8 + $0x128] sm:$0xff]
        %v3175 = vld [vmem:[%s8 + $0x130] sm:$0xff]
        %v3176 = vld [vmem:[%s8 + $0x138] sm:$0xff]
        %v3177 = vld [vmem:[%s8 + $0x140] sm:$0xff]
        %v3178 = vld [vmem:[%s8 + $0x148] sm:$0xff]
        %v3179 = vld [vmem:[%s8 + $0x150] sm:$0xff]
        %v3180 = vld [vmem:[%s8 + $0x158] sm:$0xff]
        %v3181 = vld [vmem:[%s8 + $0x160] sm:$0xff]
        %v3182 = vld [vmem:[%s8 + $0x168] sm:$0xff]
        %v3183 = vld [vmem:[%s8 + $0x170] sm:$0xff]
        %v3184 = vld [vmem:[%s8 + $0x178] sm:$0xff]
        %v3185 = vld [vmem:[%s8 + $0x180] sm:$0xff]
        %v3186 = vld [vmem:[%s8 + $0x188] sm:$0xff]
        %v3187 = vld [vmem:[%s8 + $0x190] sm:$0xff]
        %v3188 = vld [vmem:[%s8 + $0x198] sm:$0xff]
        %v3189 = vld [vmem:[%s8 + $0x1a0] sm:$0xff]
        %v3190 = vld [vmem:[%s8 + $0x1a8] sm:$0xff]
        %v3191 = vld [vmem:[%s8 + $0x1b0] sm:$0xff]
        %v3192 = vld [vmem:[%s8 + $0x1b8] sm:$0xff]
        %v3193 = vld [vmem:[%s8 + $0x1c0] sm:$0xff]
        %v3194 = vld [vmem:[%s8 + $0x1c8] sm:$0xff]
        %v3195 = vld [vmem:[%s8 + $0x1d0] sm:$0xff]
        %v3196 = vld [vmem:[%s8 + $0x1d8] sm:$0xff]
        %v3197 = vld [vmem:[%s8 + $0x1e0] sm:$0xff]
        %v3198 = vld [vmem:[%s8 + $0x1e8] sm:$0xff]
        %v3199 = vld [vmem:[%s8 + $0x1f0] sm:$0xff]
        %v3200 = vld [vmem:[%s8 + $0x1f8] sm:$0xff]
        %v3201 = vld [vmem:[%s8 + $0x200] sm:$0xff]
        %v3202 = vld [vmem:[%s8 + $0x208] sm:$0xff]
        %v3203 = vld [vmem:[%s8 + $0x210] sm:$0xff]
        %v3204 = vld [vmem:[%s8 + $0x218] sm:$0xff]
        %v3205 = vld [vmem:[%s8 + $0x220] sm:$0xff]
        %v3206 = vld [vmem:[%s8 + $0x228] sm:$0xff]
        %v3207 = vld [vmem:[%s8 + $0x230] sm:$0xff]
        %v3208 = vld [vmem:[%s8 + $0x238] sm:$0xff]
        %v3209 = vld [vmem:[%s8 + $0x240] sm:$0xff]
        %v3210 = vld [vmem:[%s8 + $0x248] sm:$0xff]
        %v3211 = vld [vmem:[%s8 + $0x250] sm:$0xff]
        %v3212 = vld [vmem:[%s8 + $0x258] sm:$0xff]
        %v3213 = vld [vmem:[%s8 + $0x260] sm:$0xff]
        %v3214 = vld [vmem:[%s8 + $0x268] sm:$0xff]
        %v3215 = vld [vmem:[%s8 + $0x270] sm:$0xff]
        %v3216 = vld [vmem:[%s8 + $0x278] sm:$0xff]
        %v3217 = vld [vmem:[%s8 + $0x280] sm:$0xff]
        %v3218 = vld [vmem:[%s8 + $0x288] sm:$0xff]
        %v3219 = vld [vmem:[%s8 + $0x290] sm:$0xff]
        %v3220 = vld [vmem:[%s8 + $0x298] sm:$0xff]
        %v3222 = vsel %vm1631, %v3133, 0
        %v3225 = vsel %vm1631, %v3136, 0
        %3227 = vmatprep.subr.mxu0 %v3138
        %3228 = vmatpush1.msra.mxu0 %v3137
        %3229 = vmatprep.subr.mxu0 %v3140
        %3230 = vmatpush1.msra.mxu0 %v3139
        %3231 = vmatprep.subr.mxu0 %v3142
        %3232 = vmatpush1.msra.mxu0 %v3141
        %3233 = vmatprep.subr.mxu0 %v3144
        %3234 = vmatpush1.msra.mxu0 %v3143
        %3235 = vmatprep.subr.mxu0 %v3146
        %3236 = vmatpush1.msra.mxu0 %v3145
        %3237 = vmatprep.subr.mxu0 %v3148
        %3238 = vmatpush1.msra.mxu0 %v3147
        %3239 = vmatprep.subr.mxu0 %v3150
        %3240 = vmatpush1.msra.mxu0 %v3149
        %3241 = vmatprep.subr.mxu0 %v3152
        %3242 = vmatpush1.msra.mxu0 %v3151
        %3243 = vmatprep.subr.mxu0 %v3154
        %3244 = vmatpush1.msra.mxu0 %v3153
        %3245 = vmatprep.subr.mxu0 %v3156
        %3246 = vmatpush1.msra.mxu0 %v3155
        %3247 = vmatprep.subr.mxu0 %v3158
        %3248 = vmatpush1.msra.mxu0 %v3157
        %3249 = vmatprep.subr.mxu0 %v3160
        %3250 = vmatpush1.msra.mxu0 %v3159
        %3251 = vmatprep.subr.mxu0 %v3162
        %3252 = vmatpush1.msra.mxu0 %v3161
        %3253 = vmatprep.subr.mxu0 %v3164
        %3254 = vmatpush1.msra.mxu0 %v3163
        %3255 = vmatprep.subr.mxu0 %v3166
        %3256 = vmatpush1.msra.mxu0 %v3165
        %3257 = vmatprep.subr.mxu0 %v3168
        %3258 = vmatpush1.msra.mxu0 %v3167
        %3259 = vmatprep.subr.mxu0 %v3170
        %3260 = vmatpush1.msra.mxu0 %v3169
        %3261 = vmatprep.subr.mxu0 %v3172
        %3262 = vmatpush1.msra.mxu0 %v3171
        %3263 = vmatprep.subr.mxu0 %v3174
        %3264 = vmatpush1.msra.mxu0 %v3173
        %3265 = vmatprep.subr.mxu0 %v3176
        %3266 = vmatpush1.msra.mxu0 %v3175
        %3267 = vmatprep.subr.mxu0 %v3178
        %3268 = vmatpush1.msra.mxu0 %v3177
        %3269 = vmatprep.subr.mxu0 %v3180
        %3270 = vmatpush1.msra.mxu0 %v3179
        %3271 = vmatprep.subr.mxu0 %v3182
        %3272 = vmatpush1.msra.mxu0 %v3181
        %3273 = vmatprep.subr.mxu0 %v3184
        %3274 = vmatpush1.msra.mxu0 %v3183
        %3275 = vmatprep.subr.mxu0 %v3186
        %3276 = vmatpush1.msra.mxu0 %v3185
        %3277 = vmatprep.subr.mxu0 %v3188
        %3278 = vmatpush1.msra.mxu0 %v3187
        %3279 = vmatprep.subr.mxu0 %v3190
        %3280 = vmatpush1.msra.mxu0 %v3189
        %3281 = vmatprep.subr.mxu0 %v3192
        %3282 = vmatpush1.msra.mxu0 %v3191
        %3283 = vmatprep.subr.mxu0 %v3194
        %3284 = vmatpush1.msra.mxu0 %v3193
        %3285 = vmatprep.subr.mxu0 %v3196
        %3286 = vmatpush1.msra.mxu0 %v3195
        %3287 = vmatprep.subr.mxu0 %v3198
        %3288 = vmatpush1.msra.mxu0 %v3197
        %3289 = vmatprep.subr.mxu0 %v3200
        %3290 = vmatpush1.msra.mxu0 %v3199
        %3291 = vmatprep.mubr.f32.mxu0 %v3132
        %3292 = vmatmul.mubr.f32.gmra.mrb[0].mxu0 %v3131
        %v3293 = vpop.f32.mrb[0].mxu0
        %v3294 = vadd.f32 0.0, %v3293
        %v3295 = vpop.f32.mrb[0].mxu0
        %v3296 = vadd.f32 0.0, %v3295
        %3297 = vmatprep.mubr.f32.mxu0 %v3135
        %3298 = vmatmul.mubr.f32.gmra.mrb[0].mxu0 %v3134
        %v3299 = vpop.f32.mrb[0].mxu0
        %v3300 = vadd.f32 0.0, %v3299
        %v3301 = vpop.f32.mrb[0].mxu0
        %v3302 = vadd.f32 0.0, %v3301
        %3303 = vdwg.mxu0
        %3304 = vmatprep.subr.mxu0 %v3202
        %3305 = vmatpush1.msra.mxu0 %v3201
        %3306 = vmatprep.subr.mxu0 %v3204
        %3307 = vmatpush1.msra.mxu0 %v3203
        %3308 = vmatprep.subr.mxu0 %v3206
        %3309 = vmatpush1.msra.mxu0 %v3205
        %3310 = vmatprep.subr.mxu0 %v3208
        %3311 = vmatpush1.msra.mxu0 %v3207
        %3312 = vmatprep.subr.mxu0 %v3210
        %3313 = vmatpush1.msra.mxu0 %v3209
        %3314 = vmatprep.subr.mxu0 %v3212
        %3315 = vmatpush1.msra.mxu0 %v3211
        %3316 = vmatprep.subr.mxu0 %v3214
        %3317 = vmatpush1.msra.mxu0 %v3213
        %3318 = vmatprep.subr.mxu0 %v3216
        %3319 = vmatpush1.msra.mxu0 %v3215
        %3320 = vmatprep.subr.mxu0 %v3218
        %3321 = vmatpush1.msra.mxu0 %v3217
        %3322 = vmatprep.subr.mxu0 %v3220
        %3323 = vmatpush1.msra.mxu0 %v3219
        %3324 = vmatprep.subr.mxu0 0.0
        %3325 = vmatpush1.msra.mxu0 0.0
        %3326 = vmatprep.subr.mxu0 0.0
        %3327 = vmatpush1.msra.mxu0 0.0
        %3328 = vmatprep.subr.mxu0 0.0
        %3329 = vmatpush1.msra.mxu0 0.0
        %3330 = vmatprep.subr.mxu0 0.0
        %3331 = vmatpush1.msra.mxu0 0.0
        %3332 = vmatprep.subr.mxu0 0.0
        %3333 = vmatpush1.msra.mxu0 0.0
        %3334 = vmatprep.subr.mxu0 0.0
        %3335 = vmatpush1.msra.mxu0 0.0
        %3336 = vmatprep.subr.mxu0 0.0
        %3337 = vmatpush1.msra.mxu0 0.0
        %3338 = vmatprep.subr.mxu0 0.0
        %3339 = vmatpush1.msra.mxu0 0.0
        %3340 = vmatprep.subr.mxu0 0.0
        %3341 = vmatpush1.msra.mxu0 0.0
        %3342 = vmatprep.subr.mxu0 0.0
        %3343 = vmatpush1.msra.mxu0 0.0
        %3344 = vmatprep.subr.mxu0 0.0
        %3345 = vmatpush1.msra.mxu0 0.0
        %3346 = vmatprep.subr.mxu0 0.0
        %3347 = vmatpush1.msra.mxu0 0.0
        %3348 = vmatprep.subr.mxu0 0.0
        %3349 = vmatpush1.msra.mxu0 0.0
        %3350 = vmatprep.subr.mxu0 0.0
        %3351 = vmatpush1.msra.mxu0 0.0
        %3352 = vmatprep.subr.mxu0 0.0
        %3353 = vmatpush1.msra.mxu0 0.0
        %3354 = vmatprep.subr.mxu0 0.0
        %3355 = vmatpush1.msra.mxu0 0.0
        %3356 = vmatprep.subr.mxu0 0.0
        %3357 = vmatpush1.msra.mxu0 0.0
        %3358 = vmatprep.subr.mxu0 0.0
        %3359 = vmatpush1.msra.mxu0 0.0
        %3360 = vmatprep.subr.mxu0 0.0
        %3361 = vmatpush1.msra.mxu0 0.0
        %3362 = vmatprep.subr.mxu0 0.0
        %3363 = vmatpush1.msra.mxu0 0.0
        %3364 = vmatprep.subr.mxu0 0.0
        %3365 = vmatpush1.msra.mxu0 0.0
        %3366 = vmatprep.subr.mxu0 0.0
        %3367 = vmatpush1.msra.mxu0 0.0
        %3368 = vmatprep.mubr.f32.mxu0 0.0
        %3369 = vmatmul.mubr.f32.gmra.mrb[0].mxu0 %v3222
        %v3370 = vpop.f32.mrb[0].mxu0
        %v3371 = vadd.f32 %v3294, %v3370
        %v3372 = vpop.f32.mrb[0].mxu0
        %v3373 = vadd.f32 %v3296, %v3372
        %3374 = vmatprep.mubr.f32.mxu0 0.0
        %3375 = vmatmul.mubr.f32.gmra.mrb[0].mxu0 %v3225
        %v3376 = vpop.f32.mrb[0].mxu0
        %v3377 = vadd.f32 %v3300, %v3376
        %v3378 = vpop.f32.mrb[0].mxu0
        %v3379 = vadd.f32 %v3302, %v3378
        %3380 = vdwg.mxu0
        %s3381 = scalar_lea.vmem %s8, 672
        %v3382 = vld [vmem:[%s3381] sm:$0xff]
        %v3383 = vld [vmem:[%s3381 + $0x8] sm:$0xff]
        %v3384 = vld [vmem:[%s3381 + $0x10] sm:$0xff]
        %v3385 = vld [vmem:[%s3381 + $0x18] sm:$0xff]
        %v3386 = vld [vmem:[%s3381 + $0x20] sm:$0xff]
        %v3387 = vld [vmem:[%s3381 + $0x28] sm:$0xff]
        %v3388 = vld [vmem:[%s3381 + $0x30] sm:$0xff]
        %v3389 = vld [vmem:[%s3381 + $0x38] sm:$0xff]
        %v3390 = vld [vmem:[%s3381 + $0x40] sm:$0xff]
        %v3391 = vld [vmem:[%s3381 + $0x48] sm:$0xff]
        %v3392 = vld [vmem:[%s3381 + $0x50] sm:$0xff]
        %v3393 = vld [vmem:[%s3381 + $0x58] sm:$0xff]
        %v3394 = vld [vmem:[%s3381 + $0x60] sm:$0xff]
        %v3395 = vld [vmem:[%s3381 + $0x68] sm:$0xff]
        %v3396 = vld [vmem:[%s3381 + $0x70] sm:$0xff]
        %v3397 = vld [vmem:[%s3381 + $0x78] sm:$0xff]
        %v3398 = vld [vmem:[%s3381 + $0x80] sm:$0xff]
        %v3399 = vld [vmem:[%s3381 + $0x88] sm:$0xff]
        %v3400 = vld [vmem:[%s3381 + $0x90] sm:$0xff]
        %v3401 = vld [vmem:[%s3381 + $0x98] sm:$0xff]
        %v3402 = vld [vmem:[%s3381 + $0xa0] sm:$0xff]
        %v3403 = vld [vmem:[%s3381 + $0xa8] sm:$0xff]
        %v3404 = vld [vmem:[%s3381 + $0xb0] sm:$0xff]
        %v3405 = vld [vmem:[%s3381 + $0xb8] sm:$0xff]
        %v3406 = vld [vmem:[%s3381 + $0xc0] sm:$0xff]
        %v3407 = vld [vmem:[%s3381 + $0xc8] sm:$0xff]
        %v3408 = vld [vmem:[%s3381 + $0xd0] sm:$0xff]
        %v3409 = vld [vmem:[%s3381 + $0xd8] sm:$0xff]
        %v3410 = vld [vmem:[%s3381 + $0xe0] sm:$0xff]
        %v3411 = vld [vmem:[%s3381 + $0xe8] sm:$0xff]
        %v3412 = vld [vmem:[%s3381 + $0xf0] sm:$0xff]
        %v3413 = vld [vmem:[%s3381 + $0xf8] sm:$0xff]
        %v3414 = vld [vmem:[%s3381 + $0x100] sm:$0xff]
        %v3415 = vld [vmem:[%s3381 + $0x108] sm:$0xff]
        %v3416 = vld [vmem:[%s3381 + $0x110] sm:$0xff]
        %v3417 = vld [vmem:[%s3381 + $0x118] sm:$0xff]
        %v3418 = vld [vmem:[%s3381 + $0x120] sm:$0xff]
        %v3419 = vld [vmem:[%s3381 + $0x128] sm:$0xff]
        %v3420 = vld [vmem:[%s3381 + $0x130] sm:$0xff]
        %v3421 = vld [vmem:[%s3381 + $0x138] sm:$0xff]
        %v3422 = vld [vmem:[%s3381 + $0x140] sm:$0xff]
        %v3423 = vld [vmem:[%s3381 + $0x148] sm:$0xff]
        %v3424 = vld [vmem:[%s3381 + $0x150] sm:$0xff]
        %v3425 = vld [vmem:[%s3381 + $0x158] sm:$0xff]
        %v3426 = vld [vmem:[%s3381 + $0x160] sm:$0xff]
        %v3427 = vld [vmem:[%s3381 + $0x168] sm:$0xff]
        %v3428 = vld [vmem:[%s3381 + $0x170] sm:$0xff]
        %v3429 = vld [vmem:[%s3381 + $0x178] sm:$0xff]
        %v3430 = vld [vmem:[%s3381 + $0x180] sm:$0xff]
        %v3431 = vld [vmem:[%s3381 + $0x188] sm:$0xff]
        %v3432 = vld [vmem:[%s3381 + $0x190] sm:$0xff]
        %v3433 = vld [vmem:[%s3381 + $0x198] sm:$0xff]
        %v3434 = vld [vmem:[%s3381 + $0x1a0] sm:$0xff]
        %v3435 = vld [vmem:[%s3381 + $0x1a8] sm:$0xff]
        %v3436 = vld [vmem:[%s3381 + $0x1b0] sm:$0xff]
        %v3437 = vld [vmem:[%s3381 + $0x1b8] sm:$0xff]
        %v3438 = vld [vmem:[%s3381 + $0x1c0] sm:$0xff]
        %v3439 = vld [vmem:[%s3381 + $0x1c8] sm:$0xff]
        %v3440 = vld [vmem:[%s3381 + $0x1d0] sm:$0xff]
        %v3441 = vld [vmem:[%s3381 + $0x1d8] sm:$0xff]
        %v3442 = vld [vmem:[%s3381 + $0x1e0] sm:$0xff]
        %v3443 = vld [vmem:[%s3381 + $0x1e8] sm:$0xff]
        %v3444 = vld [vmem:[%s3381 + $0x1f0] sm:$0xff]
        %v3445 = vld [vmem:[%s3381 + $0x1f8] sm:$0xff]
        %v3446 = vld [vmem:[%s3381 + $0x200] sm:$0xff]
        %v3447 = vld [vmem:[%s3381 + $0x208] sm:$0xff]
        %v3448 = vld [vmem:[%s3381 + $0x210] sm:$0xff]
        %v3449 = vld [vmem:[%s3381 + $0x218] sm:$0xff]
        %v3450 = vld [vmem:[%s3381 + $0x220] sm:$0xff]
        %v3451 = vld [vmem:[%s3381 + $0x228] sm:$0xff]
        %v3452 = vld [vmem:[%s3381 + $0x230] sm:$0xff]
        %v3453 = vld [vmem:[%s3381 + $0x238] sm:$0xff]
        %v3454 = vld [vmem:[%s3381 + $0x240] sm:$0xff]
        %v3455 = vld [vmem:[%s3381 + $0x248] sm:$0xff]
        %v3456 = vld [vmem:[%s3381 + $0x250] sm:$0xff]
        %v3457 = vld [vmem:[%s3381 + $0x258] sm:$0xff]
        %v3458 = vld [vmem:[%s3381 + $0x260] sm:$0xff]
        %v3459 = vld [vmem:[%s3381 + $0x268] sm:$0xff]
        %v3460 = vld [vmem:[%s3381 + $0x270] sm:$0xff]
        %v3461 = vld [vmem:[%s3381 + $0x278] sm:$0xff]
        %v3462 = vld [vmem:[%s3381 + $0x280] sm:$0xff]
        %v3463 = vld [vmem:[%s3381 + $0x288] sm:$0xff]
        %v3464 = vld [vmem:[%s3381 + $0x290] sm:$0xff]
        %v3465 = vld [vmem:[%s3381 + $0x298] sm:$0xff]
        %3466 = vmatprep.subr.mxu0 %v3383
        %3467 = vmatpush1.msra.mxu0 %v3382
        %3468 = vmatprep.subr.mxu0 %v3385
        %3469 = vmatpush1.msra.mxu0 %v3384
        %3470 = vmatprep.subr.mxu0 %v3387
        %3471 = vmatpush1.msra.mxu0 %v3386
        %3472 = vmatprep.subr.mxu0 %v3389
        %3473 = vmatpush1.msra.mxu0 %v3388
        %3474 = vmatprep.subr.mxu0 %v3391
        %3475 = vmatpush1.msra.mxu0 %v3390
        %3476 = vmatprep.subr.mxu0 %v3393
        %3477 = vmatpush1.msra.mxu0 %v3392
        %3478 = vmatprep.subr.mxu0 %v3395
        %3479 = vmatpush1.msra.mxu0 %v3394
        %3480 = vmatprep.subr.mxu0 %v3397
        %3481 = vmatpush1.msra.mxu0 %v3396
        %3482 = vmatprep.subr.mxu0 %v3399
        %3483 = vmatpush1.msra.mxu0 %v3398
        %3484 = vmatprep.subr.mxu0 %v3401
        %3485 = vmatpush1.msra.mxu0 %v3400
        %3486 = vmatprep.subr.mxu0 %v3403
        %3487 = vmatpush1.msra.mxu0 %v3402
        %3488 = vmatprep.subr.mxu0 %v3405
        %3489 = vmatpush1.msra.mxu0 %v3404
        %3490 = vmatprep.subr.mxu0 %v3407
        %3491 = vmatpush1.msra.mxu0 %v3406
        %3492 = vmatprep.subr.mxu0 %v3409
        %3493 = vmatpush1.msra.mxu0 %v3408
        %3494 = vmatprep.subr.mxu0 %v3411
        %3495 = vmatpush1.msra.mxu0 %v3410
        %3496 = vmatprep.subr.mxu0 %v3413
        %3497 = vmatpush1.msra.mxu0 %v3412
        %3498 = vmatprep.subr.mxu0 %v3415
        %3499 = vmatpush1.msra.mxu0 %v3414
        %3500 = vmatprep.subr.mxu0 %v3417
        %3501 = vmatpush1.msra.mxu0 %v3416
        %3502 = vmatprep.subr.mxu0 %v3419
        %3503 = vmatpush1.msra.mxu0 %v3418
        %3504 = vmatprep.subr.mxu0 %v3421
        %3505 = vmatpush1.msra.mxu0 %v3420
        %3506 = vmatprep.subr.mxu0 %v3423
        %3507 = vmatpush1.msra.mxu0 %v3422
        %3508 = vmatprep.subr.mxu0 %v3425
        %3509 = vmatpush1.msra.mxu0 %v3424
        %3510 = vmatprep.subr.mxu0 %v3427
        %3511 = vmatpush1.msra.mxu0 %v3426
        %3512 = vmatprep.subr.mxu0 %v3429
        %3513 = vmatpush1.msra.mxu0 %v3428
        %3514 = vmatprep.subr.mxu0 %v3431
        %3515 = vmatpush1.msra.mxu0 %v3430
        %3516 = vmatprep.subr.mxu0 %v3433
        %3517 = vmatpush1.msra.mxu0 %v3432
        %3518 = vmatprep.subr.mxu0 %v3435
        %3519 = vmatpush1.msra.mxu0 %v3434
        %3520 = vmatprep.subr.mxu0 %v3437
        %3521 = vmatpush1.msra.mxu0 %v3436
        %3522 = vmatprep.subr.mxu0 %v3439
        %3523 = vmatpush1.msra.mxu0 %v3438
        %3524 = vmatprep.subr.mxu0 %v3441
        %3525 = vmatpush1.msra.mxu0 %v3440
        %3526 = vmatprep.subr.mxu0 %v3443
        %3527 = vmatpush1.msra.mxu0 %v3442
        %3528 = vmatprep.subr.mxu0 %v3445
        %3529 = vmatpush1.msra.mxu0 %v3444
        %3530 = vmatprep.mubr.f32.mxu0 %v3132
        %3531 = vmatmul.mubr.f32.gmra.mrb[0].mxu0 %v3131
        %v3532 = vpop.f32.mrb[0].mxu0
        %v3533 = vadd.f32 0.0, %v3532
        %v3534 = vpop.f32.mrb[0].mxu0
        %v3535 = vadd.f32 0.0, %v3534
        %3536 = vmatprep.mubr.f32.mxu0 %v3135
        %3537 = vmatmul.mubr.f32.gmra.mrb[0].mxu0 %v3134
        %v3538 = vpop.f32.mrb[0].mxu0
        %v3539 = vadd.f32 0.0, %v3538
        %v3540 = vpop.f32.mrb[0].mxu0
        %v3541 = vadd.f32 0.0, %v3540
        %3542 = vdwg.mxu0
        %3543 = vmatprep.subr.mxu0 %v3447
        %3544 = vmatpush1.msra.mxu0 %v3446
        %3545 = vmatprep.subr.mxu0 %v3449
        %3546 = vmatpush1.msra.mxu0 %v3448
        %3547 = vmatprep.subr.mxu0 %v3451
        %3548 = vmatpush1.msra.mxu0 %v3450
        %3549 = vmatprep.subr.mxu0 %v3453
        %3550 = vmatpush1.msra.mxu0 %v3452
        %3551 = vmatprep.subr.mxu0 %v3455
        %3552 = vmatpush1.msra.mxu0 %v3454
        %3553 = vmatprep.subr.mxu0 %v3457
        %3554 = vmatpush1.msra.mxu0 %v3456
        %3555 = vmatprep.subr.mxu0 %v3459
        %3556 = vmatpush1.msra.mxu0 %v3458
        %3557 = vmatprep.subr.mxu0 %v3461
        %3558 = vmatpush1.msra.mxu0 %v3460
        %3559 = vmatprep.subr.mxu0 %v3463
        %3560 = vmatpush1.msra.mxu0 %v3462
        %3561 = vmatprep.subr.mxu0 %v3465
        %3562 = vmatpush1.msra.mxu0 %v3464
        %3563 = vmatprep.subr.mxu0 0.0
        %3564 = vmatpush1.msra.mxu0 0.0
        %3565 = vmatprep.subr.mxu0 0.0
        %3566 = vmatpush1.msra.mxu0 0.0
        %3567 = vmatprep.subr.mxu0 0.0
        %3568 = vmatpush1.msra.mxu0 0.0
        %3569 = vmatprep.subr.mxu0 0.0
        %3570 = vmatpush1.msra.mxu0 0.0
        %3571 = vmatprep.subr.mxu0 0.0
        %3572 = vmatpush1.msra.mxu0 0.0
        %3573 = vmatprep.subr.mxu0 0.0
        %3574 = vmatpush1.msra.mxu0 0.0
        %3575 = vmatprep.subr.mxu0 0.0
        %3576 = vmatpush1.msra.mxu0 0.0
        %3577 = vmatprep.subr.mxu0 0.0
        %3578 = vmatpush1.msra.mxu0 0.0
        %3579 = vmatprep.subr.mxu0 0.0
        %3580 = vmatpush1.msra.mxu0 0.0
        %3581 = vmatprep.subr.mxu0 0.0
        %3582 = vmatpush1.msra.mxu0 0.0
        %3583 = vmatprep.subr.mxu0 0.0
        %3584 = vmatpush1.msra.mxu0 0.0
        %3585 = vmatprep.subr.mxu0 0.0
        %3586 = vmatpush1.msra.mxu0 0.0
        %3587 = vmatprep.subr.mxu0 0.0
        %3588 = vmatpush1.msra.mxu0 0.0
        %3589 = vmatprep.subr.mxu0 0.0
        %3590 = vmatpush1.msra.mxu0 0.0
        %3591 = vmatprep.subr.mxu0 0.0
        %3592 = vmatpush1.msra.mxu0 0.0
        %3593 = vmatprep.subr.mxu0 0.0
        %3594 = vmatpush1.msra.mxu0 0.0
        %3595 = vmatprep.subr.mxu0 0.0
        %3596 = vmatpush1.msra.mxu0 0.0
        %3597 = vmatprep.subr.mxu0 0.0
        %3598 = vmatpush1.msra.mxu0 0.0
        %3599 = vmatprep.subr.mxu0 0.0
        %3600 = vmatpush1.msra.mxu0 0.0
        %3601 = vmatprep.subr.mxu0 0.0
        %3602 = vmatpush1.msra.mxu0 0.0
        %3603 = vmatprep.subr.mxu0 0.0
        %3604 = vmatpush1.msra.mxu0 0.0
        %3605 = vmatprep.subr.mxu0 0.0
        %3606 = vmatpush1.msra.mxu0 0.0
        %3607 = vmatprep.mubr.f32.mxu0 0.0
        %3608 = vmatmul.mubr.f32.gmra.mrb[0].mxu0 %v3222
        %v3609 = vpop.f32.mrb[0].mxu0
        %v3610 = vadd.f32 %v3533, %v3609
        %v3611 = vpop.f32.mrb[0].mxu0
        %v3612 = vadd.f32 %v3535, %v3611
        %3613 = vmatprep.mubr.f32.mxu0 0.0
        %3614 = vmatmul.mubr.f32.gmra.mrb[0].mxu0 %v3225
        %v3615 = vpop.f32.mrb[0].mxu0
        %v3616 = vadd.f32 %v3539, %v3615
        %v3617 = vpop.f32.mrb[0].mxu0
        %v3618 = vadd.f32 %v3541, %v3617
        %3619 = vdwg.mxu0
        %v3620 = vmax.f32 %v3371, %v3610
        %v3621 = vmax.f32 %v3373, %v3612
        %v3622 = vmax.f32 %v3377, %v3616
        %v3623 = vmax.f32 %v3379, %v3618
        %3624 = vst [vmem:[#allocation3] sm:$0xff] %v3620
        %vm3625 = vcmask 719872
        %3626 = vst.msk [vmem:[#allocation3 + $0x8] sm:$0xff] %vm3625, %v3621
        %3627 = vst [vmem:[#allocation3 + $0x10] sm:$0x1] %v3622
        %vm3628 = vcmask 712704
        %3629 = vst.msk [vmem:[#allocation3 + $0x18] sm:$0x1] %vm3628, %v3623
        %v3630 = vld [vmem:[#allocation3] sm:$0x7f]
        %v3631 = vld [vmem:[#allocation3 + $0x8] sm:$0x7f]
        %v3632 = vld [vmem:[%s9] sm:$0xff]
        %v3633 = vld [vmem:[%s9 + $0x8] sm:$0xff]
        %v3634 = vld [vmem:[%s9 + $0x10] sm:$0xff]
        %v3635 = vld [vmem:[%s9 + $0x18] sm:$0xff]
        %v3636 = vld [vmem:[%s9 + $0x20] sm:$0xff]
        %v3637 = vld [vmem:[%s9 + $0x28] sm:$0xff]
        %v3638 = vld [vmem:[%s9 + $0x30] sm:$0xff]
        %v3639 = vld [vmem:[%s9 + $0x38] sm:$0xff]
        %v3640 = vld [vmem:[%s9 + $0x40] sm:$0xff]
        %v3641 = vld [vmem:[%s9 + $0x48] sm:$0xff]
        %v3642 = vld [vmem:[%s9 + $0x50] sm:$0xff]
        %v3643 = vld [vmem:[%s9 + $0x58] sm:$0xff]
        %v3644 = vld [vmem:[%s9 + $0x60] sm:$0xff]
        %v3645 = vld [vmem:[%s9 + $0x68] sm:$0xff]
        %v3646 = vld [vmem:[%s9 + $0x70] sm:$0xff]
        %v3647 = vld [vmem:[%s9 + $0x78] sm:$0xff]
        %v3648 = vld [vmem:[%s9 + $0x80] sm:$0xff]
        %v3649 = vld [vmem:[%s9 + $0x88] sm:$0xff]
        %v3650 = vld [vmem:[%s9 + $0x90] sm:$0xff]
        %v3651 = vld [vmem:[%s9 + $0x98] sm:$0xff]
        %v3652 = vld [vmem:[%s9 + $0xa0] sm:$0xff]
        %v3653 = vld [vmem:[%s9 + $0xa8] sm:$0xff]
        %v3654 = vld [vmem:[%s9 + $0xb0] sm:$0xff]
        %v3655 = vld [vmem:[%s9 + $0xb8] sm:$0xff]
        %v3656 = vld [vmem:[%s9 + $0xc0] sm:$0xff]
        %v3657 = vld [vmem:[%s9 + $0xc8] sm:$0xff]
        %v3658 = vld [vmem:[%s9 + $0xd0] sm:$0xff]
        %v3659 = vld [vmem:[%s9 + $0xd8] sm:$0xff]
        %v3660 = vld [vmem:[%s9 + $0xe0] sm:$0xff]
        %v3661 = vld [vmem:[%s9 + $0xe8] sm:$0xff]
        %v3662 = vld [vmem:[%s9 + $0xf0] sm:$0xff]
        %v3663 = vld [vmem:[%s9 + $0xf8] sm:$0xff]
        %v3664 = vld [vmem:[%s9 + $0x100] sm:$0xff]
        %v3665 = vld [vmem:[%s9 + $0x108] sm:$0xff]
        %v3666 = vld [vmem:[%s9 + $0x110] sm:$0xff]
        %v3667 = vld [vmem:[%s9 + $0x118] sm:$0xff]
        %v3668 = vld [vmem:[%s9 + $0x120] sm:$0xff]
        %v3669 = vld [vmem:[%s9 + $0x128] sm:$0xff]
        %v3670 = vld [vmem:[%s9 + $0x130] sm:$0xff]
        %v3671 = vld [vmem:[%s9 + $0x138] sm:$0xff]
        %v3672 = vld [vmem:[%s9 + $0x140] sm:$0xff]
        %v3673 = vld [vmem:[%s9 + $0x148] sm:$0xff]
        %v3674 = vld [vmem:[%s9 + $0x150] sm:$0xff]
        %v3675 = vld [vmem:[%s9 + $0x158] sm:$0xff]
        %v3676 = vld [vmem:[%s9 + $0x160] sm:$0xff]
        %v3677 = vld [vmem:[%s9 + $0x168] sm:$0xff]
        %v3678 = vld [vmem:[%s9 + $0x170] sm:$0xff]
        %v3679 = vld [vmem:[%s9 + $0x178] sm:$0xff]
        %v3680 = vld [vmem:[%s9 + $0x180] sm:$0xff]
        %v3681 = vld [vmem:[%s9 + $0x188] sm:$0xff]
        %v3682 = vld [vmem:[%s9 + $0x190] sm:$0xff]
        %v3683 = vld [vmem:[%s9 + $0x198] sm:$0xff]
        %v3684 = vld [vmem:[%s9 + $0x1a0] sm:$0xff]
        %v3685 = vld [vmem:[%s9 + $0x1a8] sm:$0xff]
        %v3686 = vld [vmem:[%s9 + $0x1b0] sm:$0xff]
        %v3687 = vld [vmem:[%s9 + $0x1b8] sm:$0xff]
        %v3688 = vld [vmem:[%s9 + $0x1c0] sm:$0xff]
        %v3689 = vld [vmem:[%s9 + $0x1c8] sm:$0xff]
        %v3690 = vld [vmem:[%s9 + $0x1d0] sm:$0xff]
        %v3691 = vld [vmem:[%s9 + $0x1d8] sm:$0xff]
        %v3692 = vld [vmem:[%s9 + $0x1e0] sm:$0xff]
        %v3693 = vld [vmem:[%s9 + $0x1e8] sm:$0xff]
        %v3694 = vld [vmem:[%s9 + $0x1f0] sm:$0xff]
        %v3695 = vld [vmem:[%s9 + $0x1f8] sm:$0xff]
        %v3696 = vld [vmem:[%s9 + $0x200] sm:$0xff]
        %v3697 = vld [vmem:[%s9 + $0x208] sm:$0xff]
        %v3698 = vld [vmem:[%s9 + $0x210] sm:$0xff]
        %v3699 = vld [vmem:[%s9 + $0x218] sm:$0xff]
        %v3700 = vld [vmem:[%s9 + $0x220] sm:$0xff]
        %v3701 = vld [vmem:[%s9 + $0x228] sm:$0xff]
        %v3702 = vld [vmem:[%s9 + $0x230] sm:$0xff]
        %v3703 = vld [vmem:[%s9 + $0x238] sm:$0xff]
        %v3704 = vld [vmem:[%s9 + $0x240] sm:$0xff]
        %v3705 = vld [vmem:[%s9 + $0x248] sm:$0xff]
        %v3706 = vld [vmem:[%s9 + $0x250] sm:$0xff]
        %v3707 = vld [vmem:[%s9 + $0x258] sm:$0xff]
        %v3708 = vld [vmem:[%s9 + $0x260] sm:$0xff]
        %v3709 = vld [vmem:[%s9 + $0x268] sm:$0xff]
        %v3710 = vld [vmem:[%s9 + $0x270] sm:$0xff]
        %v3711 = vld [vmem:[%s9 + $0x278] sm:$0xff]
        %v3712 = vld [vmem:[%s9 + $0x280] sm:$0xff]
        %v3713 = vld [vmem:[#allocation3] sm:$0xfe]
        %v3714 = vld [vmem:[#allocation3 + $0x8] sm:$0xfe]
        %s3715 = scalar_lea.vmem %s9, 648
        %v3716 = vld [vmem:[%s3715] sm:$0xff]
        %v3717 = vld [vmem:[%s3715 + $0x8] sm:$0xff]
        %v3718 = vld [vmem:[%s3715 + $0x10] sm:$0xff]
        %v3719 = vld [vmem:[%s3715 + $0x18] sm:$0xff]
        %v3720 = vld [vmem:[%s3715 + $0x20] sm:$0xff]
        %v3721 = vld [vmem:[%s3715 + $0x28] sm:$0xff]
        %v3722 = vld [vmem:[%s3715 + $0x30] sm:$0xff]
        %v3723 = vld [vmem:[%s3715 + $0x38] sm:$0xff]
        %v3724 = vld [vmem:[%s3715 + $0x40] sm:$0xff]
        %v3725 = vld [vmem:[%s3715 + $0x48] sm:$0xff]
        %v3726 = vld [vmem:[%s3715 + $0x50] sm:$0xff]
        %v3727 = vld [vmem:[%s3715 + $0x58] sm:$0xff]
        %v3728 = vld [vmem:[%s3715 + $0x60] sm:$0xff]
        %v3729 = vld [vmem:[%s3715 + $0x68] sm:$0xff]
        %v3730 = vld [vmem:[%s3715 + $0x70] sm:$0xff]
        %v3731 = vld [vmem:[%s3715 + $0x78] sm:$0xff]
        %v3732 = vld [vmem:[%s3715 + $0x80] sm:$0xff]
        %v3733 = vld [vmem:[%s3715 + $0x88] sm:$0xff]
        %v3734 = vld [vmem:[%s3715 + $0x90] sm:$0xff]
        %v3735 = vld [vmem:[%s3715 + $0x98] sm:$0xff]
        %v3736 = vld [vmem:[%s3715 + $0xa0] sm:$0xff]
        %v3737 = vld [vmem:[%s3715 + $0xa8] sm:$0xff]
        %v3738 = vld [vmem:[%s3715 + $0xb0] sm:$0xff]
        %v3739 = vld [vmem:[%s3715 + $0xb8] sm:$0xff]
        %v3740 = vld [vmem:[%s3715 + $0xc0] sm:$0xff]
        %v3741 = vld [vmem:[%s3715 + $0xc8] sm:$0xff]
        %v3742 = vld [vmem:[%s3715 + $0xd0] sm:$0xff]
        %v3743 = vld [vmem:[%s3715 + $0xd8] sm:$0xff]
        %v3744 = vld [vmem:[%s3715 + $0xe0] sm:$0xff]
        %v3745 = vld [vmem:[%s3715 + $0xe8] sm:$0xff]
        %v3746 = vld [vmem:[%s3715 + $0xf0] sm:$0xff]
        %v3747 = vld [vmem:[%s3715 + $0xf8] sm:$0xff]
        %v3748 = vld [vmem:[%s3715 + $0x100] sm:$0xff]
        %v3749 = vld [vmem:[%s3715 + $0x108] sm:$0xff]
        %v3750 = vld [vmem:[%s3715 + $0x110] sm:$0xff]
        %v3751 = vld [vmem:[%s3715 + $0x118] sm:$0xff]
        %v3752 = vld [vmem:[%s3715 + $0x120] sm:$0xff]
        %v3753 = vld [vmem:[%s3715 + $0x128] sm:$0xff]
        %v3754 = vld [vmem:[%s3715 + $0x130] sm:$0xff]
        %v3755 = vld [vmem:[%s3715 + $0x138] sm:$0xff]
        %v3756 = vld [vmem:[%s3715 + $0x140] sm:$0xff]
        %v3757 = vld [vmem:[%s3715 + $0x148] sm:$0xff]
        %v3758 = vld [vmem:[%s3715 + $0x150] sm:$0xff]
        %v3759 = vld [vmem:[%s3715 + $0x158] sm:$0xff]
        %v3760 = vld [vmem:[%s3715 + $0x160] sm:$0xff]
        %v3761 = vld [vmem:[%s3715 + $0x168] sm:$0xff]
        %v3762 = vld [vmem:[%s3715 + $0x170] sm:$0xff]
        %v3763 = vld [vmem:[%s3715 + $0x178] sm:$0xff]
        %v3764 = vld [vmem:[%s3715 + $0x180] sm:$0xff]
        %v3765 = vld [vmem:[%s3715 + $0x188] sm:$0xff]
        %v3766 = vld [vmem:[%s3715 + $0x190] sm:$0xff]
        %v3767 = vld [vmem:[%s3715 + $0x198] sm:$0xff]
        %v3768 = vld [vmem:[%s3715 + $0x1a0] sm:$0xff]
        %v3769 = vld [vmem:[%s3715 + $0x1a8] sm:$0xff]
        %v3770 = vld [vmem:[%s3715 + $0x1b0] sm:$0xff]
        %v3771 = vld [vmem:[%s3715 + $0x1b8] sm:$0xff]
        %v3772 = vld [vmem:[%s3715 + $0x1c0] sm:$0xff]
        %v3773 = vld [vmem:[%s3715 + $0x1c8] sm:$0xff]
        %v3774 = vld [vmem:[%s3715 + $0x1d0] sm:$0xff]
        %v3775 = vld [vmem:[%s3715 + $0x1d8] sm:$0xff]
        %v3776 = vld [vmem:[%s3715 + $0x1e0] sm:$0xff]
        %v3777 = vld [vmem:[%s3715 + $0x1e8] sm:$0xff]
        %v3778 = vld [vmem:[%s3715 + $0x1f0] sm:$0xff]
        %v3779 = vld [vmem:[%s3715 + $0x1f8] sm:$0xff]
        %v3780 = vld [vmem:[%s3715 + $0x200] sm:$0xff]
        %v3781 = vld [vmem:[%s3715 + $0x208] sm:$0xff]
        %v3782 = vld [vmem:[%s3715 + $0x210] sm:$0xff]
        %v3783 = vld [vmem:[%s3715 + $0x218] sm:$0xff]
        %v3784 = vld [vmem:[%s3715 + $0x220] sm:$0xff]
        %v3785 = vld [vmem:[%s3715 + $0x228] sm:$0xff]
        %v3786 = vld [vmem:[%s3715 + $0x230] sm:$0xff]
        %v3787 = vld [vmem:[%s3715 + $0x238] sm:$0xff]
        %v3788 = vld [vmem:[%s3715 + $0x240] sm:$0xff]
        %v3789 = vld [vmem:[%s3715 + $0x248] sm:$0xff]
        %v3790 = vld [vmem:[%s3715 + $0x250] sm:$0xff]
        %v3791 = vld [vmem:[%s3715 + $0x258] sm:$0xff]
        %v3792 = vld [vmem:[%s3715 + $0x260] sm:$0xff]
        %v3793 = vld [vmem:[%s3715 + $0x268] sm:$0xff]
        %v3794 = vld [vmem:[%s3715 + $0x270] sm:$0xff]
        %v3795 = vld [vmem:[%s3715 + $0x278] sm:$0xff]
        %v3796 = vld [vmem:[%s3715 + $0x280] sm:$0xff]
        %v3799 = vrot.slane %v3713, 1
        %v3800 = vrot.slane %v3714, 1
        %v3802 = vsel %vm3625, %v3800, 0
        %3804 = vmatprep.subr.mxu0 %v3717
        %3805 = vmatpush1.msra.mxu0 %v3716
        %3806 = vmatprep.subr.mxu0 %v3720
        %3807 = vmatpush1.msra.mxu0 %v3719
        %3808 = vmatprep.subr.mxu0 %v3723
        %3809 = vmatpush1.msra.mxu0 %v3722
        %3810 = vmatprep.subr.mxu0 %v3726
        %3811 = vmatpush1.msra.mxu0 %v3725
        %3812 = vmatprep.subr.mxu0 %v3729
        %3813 = vmatpush1.msra.mxu0 %v3728
        %3814 = vmatprep.subr.mxu0 %v3732
        %3815 = vmatpush1.msra.mxu0 %v3731
        %3816 = vmatprep.subr.mxu0 %v3735
        %3817 = vmatpush1.msra.mxu0 %v3734
        %3818 = vmatprep.subr.mxu0 %v3738
        %3819 = vmatpush1.msra.mxu0 %v3737
        %3820 = vmatprep.subr.mxu0 %v3741
        %3821 = vmatpush1.msra.mxu0 %v3740
        %3822 = vmatprep.subr.mxu0 %v3744
        %3823 = vmatpush1.msra.mxu0 %v3743
        %3824 = vmatprep.subr.mxu0 %v3747
        %3825 = vmatpush1.msra.mxu0 %v3746
        %3826 = vmatprep.subr.mxu0 %v3750
        %3827 = vmatpush1.msra.mxu0 %v3749
        %3828 = vmatprep.subr.mxu0 %v3753
        %3829 = vmatpush1.msra.mxu0 %v3752
        %3830 = vmatprep.subr.mxu0 %v3756
        %3831 = vmatpush1.msra.mxu0 %v3755
        %3832 = vmatprep.subr.mxu0 %v3759
        %3833 = vmatpush1.msra.mxu0 %v3758
        %3834 = vmatprep.subr.mxu0 %v3762
        %3835 = vmatpush1.msra.mxu0 %v3761
        %3836 = vmatprep.subr.mxu0 %v3765
        %3837 = vmatpush1.msra.mxu0 %v3764
        %3838 = vmatprep.subr.mxu0 %v3768
        %3839 = vmatpush1.msra.mxu0 %v3767
        %3840 = vmatprep.subr.mxu0 %v3771
        %3841 = vmatpush1.msra.mxu0 %v3770
        %3842 = vmatprep.subr.mxu0 %v3774
        %3843 = vmatpush1.msra.mxu0 %v3773
        %3844 = vmatprep.subr.mxu0 %v3777
        %3845 = vmatpush1.msra.mxu0 %v3776
        %3846 = vmatprep.subr.mxu0 %v3780
        %3847 = vmatpush1.msra.mxu0 %v3779
        %3848 = vmatprep.subr.mxu0 %v3783
        %3849 = vmatpush1.msra.mxu0 %v3782
        %3850 = vmatprep.subr.mxu0 %v3786
        %3851 = vmatpush1.msra.mxu0 %v3785
        %3852 = vmatprep.subr.mxu0 %v3789
        %3853 = vmatpush1.msra.mxu0 %v3788
        %3854 = vmatprep.subr.mxu0 %v3792
        %3855 = vmatpush1.msra.mxu0 %v3791
        %3856 = vmatprep.subr.mxu0 %v3795
        %3857 = vmatpush1.msra.mxu0 %v3794
        %3858 = vmatprep.subr.mxu0 0.0
        %3859 = vmatpush1.msra.mxu0 0.0
        %3860 = vmatprep.subr.mxu0 0.0
        %3861 = vmatpush1.msra.mxu0 0.0
        %3862 = vmatprep.subr.mxu0 0.0
        %3863 = vmatpush1.msra.mxu0 0.0
        %3864 = vmatprep.subr.mxu0 0.0
        %3865 = vmatpush1.msra.mxu0 0.0
        %3866 = vmatprep.subr.mxu0 0.0
        %3867 = vmatpush1.msra.mxu0 0.0
        %3868 = vmatprep.mubr.f32.mxu0 %v3802
        %3869 = vmatmul.mubr.f32.gmra.mrb[0].mxu0 %v3799
        %v3870 = vpop.f32.mrb[0].mxu0
        %v3871 = vadd.f32 0.0, %v3870
        %v3872 = vpop.f32.mrb[0].mxu0
        %v3873 = vadd.f32 0.0, %v3872
        %3874 = vdwg.mxu0
        %3875 = vmatprep.subr.mxu0 0.0
        %3876 = vmatpush1.msra.mxu0 %v3718
        %3877 = vmatprep.subr.mxu0 0.0
        %3878 = vmatpush1.msra.mxu0 %v3721
        %3879 = vmatprep.subr.mxu0 0.0
        %3880 = vmatpush1.msra.mxu0 %v3724
        %3881 = vmatprep.subr.mxu0 0.0
        %3882 = vmatpush1.msra.mxu0 %v3727
        %3883 = vmatprep.subr.mxu0 0.0
        %3884 = vmatpush1.msra.mxu0 %v3730
        %3885 = vmatprep.subr.mxu0 0.0
        %3886 = vmatpush1.msra.mxu0 %v3733
        %3887 = vmatprep.subr.mxu0 0.0
        %3888 = vmatpush1.msra.mxu0 %v3736
        %3889 = vmatprep.subr.mxu0 0.0
        %3890 = vmatpush1.msra.mxu0 %v3739
        %3891 = vmatprep.subr.mxu0 0.0
        %3892 = vmatpush1.msra.mxu0 %v3742
        %3893 = vmatprep.subr.mxu0 0.0
        %3894 = vmatpush1.msra.mxu0 %v3745
        %3895 = vmatprep.subr.mxu0 0.0
        %3896 = vmatpush1.msra.mxu0 %v3748
        %3897 = vmatprep.subr.mxu0 0.0
        %3898 = vmatpush1.msra.mxu0 %v3751
        %3899 = vmatprep.subr.mxu0 0.0
        %3900 = vmatpush1.msra.mxu0 %v3754
        %3901 = vmatprep.subr.mxu0 0.0
        %3902 = vmatpush1.msra.mxu0 %v3757
        %3903 = vmatprep.subr.mxu0 0.0
        %3904 = vmatpush1.msra.mxu0 %v3760
        %3905 = vmatprep.subr.mxu0 0.0
        %3906 = vmatpush1.msra.mxu0 %v3763
        %3907 = vmatprep.subr.mxu0 0.0
        %3908 = vmatpush1.msra.mxu0 %v3766
        %3909 = vmatprep.subr.mxu0 0.0
        %3910 = vmatpush1.msra.mxu0 %v3769
        %3911 = vmatprep.subr.mxu0 0.0
        %3912 = vmatpush1.msra.mxu0 %v3772
        %3913 = vmatprep.subr.mxu0 0.0
        %3914 = vmatpush1.msra.mxu0 %v3775
        %3915 = vmatprep.subr.mxu0 0.0
        %3916 = vmatpush1.msra.mxu0 %v3778
        %3917 = vmatprep.subr.mxu0 0.0
        %3918 = vmatpush1.msra.mxu0 %v3781
        %3919 = vmatprep.subr.mxu0 0.0
        %3920 = vmatpush1.msra.mxu0 %v3784
        %3921 = vmatprep.subr.mxu0 0.0
        %3922 = vmatpush1.msra.mxu0 %v3787
        %3923 = vmatprep.subr.mxu0 0.0
        %3924 = vmatpush1.msra.mxu0 %v3790
        %3925 = vmatprep.subr.mxu0 0.0
        %3926 = vmatpush1.msra.mxu0 %v3793
        %3927 = vmatprep.subr.mxu0 0.0
        %3928 = vmatpush1.msra.mxu0 %v3796
        %3929 = vmatprep.subr.mxu0 0.0
        %3930 = vmatpush1.msra.mxu0 0.0
        %3931 = vmatprep.subr.mxu0 0.0
        %3932 = vmatpush1.msra.mxu0 0.0
        %3933 = vmatprep.subr.mxu0 0.0
        %3934 = vmatpush1.msra.mxu0 0.0
        %3935 = vmatprep.subr.mxu0 0.0
        %3936 = vmatpush1.msra.mxu0 0.0
        %3937 = vmatprep.subr.mxu0 0.0
        %3938 = vmatpush1.msra.mxu0 0.0
        %3939 = vmatprep.mubr.f32.mxu0 %v3802
        %3940 = vmatmul.mubr.f32.gmra.mrb[0].mxu0 %v3799
        %v3941 = vpop.f32.mrb[0].mxu0
        %v3942 = vadd.f32 0.0, %v3941
        %v3943 = vpop.f32.mrb[0].mxu0
        %3944 = vdwg.mxu0
        %v3946 = vsel %vm3625, %v3631, 0
        %3948 = vmatprep.subr.mxu0 %v3633
        %3949 = vmatpush1.msra.mxu0 %v3632
        %3950 = vmatprep.subr.mxu0 %v3636
        %3951 = vmatpush1.msra.mxu0 %v3635
        %3952 = vmatprep.subr.mxu0 %v3639
        %3953 = vmatpush1.msra.mxu0 %v3638
        %3954 = vmatprep.subr.mxu0 %v3642
        %3955 = vmatpush1.msra.mxu0 %v3641
        %3956 = vmatprep.subr.mxu0 %v3645
        %3957 = vmatpush1.msra.mxu0 %v3644
        %3958 = vmatprep.subr.mxu0 %v3648
        %3959 = vmatpush1.msra.mxu0 %v3647
        %3960 = vmatprep.subr.mxu0 %v3651
        %3961 = vmatpush1.msra.mxu0 %v3650
        %3962 = vmatprep.subr.mxu0 %v3654
        %3963 = vmatpush1.msra.mxu0 %v3653
        %3964 = vmatprep.subr.mxu0 %v3657
        %3965 = vmatpush1.msra.mxu0 %v3656
        %3966 = vmatprep.subr.mxu0 %v3660
        %3967 = vmatpush1.msra.mxu0 %v3659
        %3968 = vmatprep.subr.mxu0 %v3663
        %3969 = vmatpush1.msra.mxu0 %v3662
        %3970 = vmatprep.subr.mxu0 %v3666
        %3971 = vmatpush1.msra.mxu0 %v3665
        %3972 = vmatprep.subr.mxu0 %v3669
        %3973 = vmatpush1.msra.mxu0 %v3668
        %3974 = vmatprep.subr.mxu0 %v3672
        %3975 = vmatpush1.msra.mxu0 %v3671
        %3976 = vmatprep.subr.mxu0 %v3675
        %3977 = vmatpush1.msra.mxu0 %v3674
        %3978 = vmatprep.subr.mxu0 %v3678
        %3979 = vmatpush1.msra.mxu0 %v3677
        %3980 = vmatprep.subr.mxu0 %v3681
        %3981 = vmatpush1.msra.mxu0 %v3680
        %3982 = vmatprep.subr.mxu0 %v3684
        %3983 = vmatpush1.msra.mxu0 %v3683
        %3984 = vmatprep.subr.mxu0 %v3687
        %3985 = vmatpush1.msra.mxu0 %v3686
        %3986 = vmatprep.subr.mxu0 %v3690
        %3987 = vmatpush1.msra.mxu0 %v3689
        %3988 = vmatprep.subr.mxu0 %v3693
        %3989 = vmatpush1.msra.mxu0 %v3692
        %3990 = vmatprep.subr.mxu0 %v3696
        %3991 = vmatpush1.msra.mxu0 %v3695
        %3992 = vmatprep.subr.mxu0 %v3699
        %3993 = vmatpush1.msra.mxu0 %v3698
        %3994 = vmatprep.subr.mxu0 %v3702
        %3995 = vmatpush1.msra.mxu0 %v3701
        %3996 = vmatprep.subr.mxu0 %v3705
        %3997 = vmatpush1.msra.mxu0 %v3704
        %3998 = vmatprep.subr.mxu0 %v3708
        %3999 = vmatpush1.msra.mxu0 %v3707
        %4000 = vmatprep.subr.mxu0 %v3711
        %4001 = vmatpush1.msra.mxu0 %v3710
        %4002 = vmatprep.subr.mxu0 0.0
        %4003 = vmatpush1.msra.mxu0 0.0
        %4004 = vmatprep.subr.mxu0 0.0
        %4005 = vmatpush1.msra.mxu0 0.0
        %4006 = vmatprep.subr.mxu0 0.0
        %4007 = vmatpush1.msra.mxu0 0.0
        %4008 = vmatprep.subr.mxu0 0.0
        %4009 = vmatpush1.msra.mxu0 0.0
        %4010 = vmatprep.subr.mxu0 0.0
        %4011 = vmatpush1.msra.mxu0 0.0
        %4012 = vmatprep.mubr.f32.mxu0 %v3946
        %4013 = vmatmul.mubr.f32.gmra.mrb[0].mxu0 %v3630
        %v4014 = vpop.f32.mrb[0].mxu0
        %v4015 = vadd.f32 %v3871, %v4014
        %v4016 = vpop.f32.mrb[0].mxu0
        %v4017 = vadd.f32 %v3873, %v4016
        %4018 = vdwg.mxu0
        %4019 = vmatprep.subr.mxu0 0.0
        %4020 = vmatpush1.msra.mxu0 %v3634
        %4021 = vmatprep.subr.mxu0 0.0
        %4022 = vmatpush1.msra.mxu0 %v3637
        %4023 = vmatprep.subr.mxu0 0.0
        %4024 = vmatpush1.msra.mxu0 %v3640
        %4025 = vmatprep.subr.mxu0 0.0
        %4026 = vmatpush1.msra.mxu0 %v3643
        %4027 = vmatprep.subr.mxu0 0.0
        %4028 = vmatpush1.msra.mxu0 %v3646
        %4029 = vmatprep.subr.mxu0 0.0
        %4030 = vmatpush1.msra.mxu0 %v3649
        %4031 = vmatprep.subr.mxu0 0.0
        %4032 = vmatpush1.msra.mxu0 %v3652
        %4033 = vmatprep.subr.mxu0 0.0
        %4034 = vmatpush1.msra.mxu0 %v3655
        %4035 = vmatprep.subr.mxu0 0.0
        %4036 = vmatpush1.msra.mxu0 %v3658
        %4037 = vmatprep.subr.mxu0 0.0
        %4038 = vmatpush1.msra.mxu0 %v3661
        %4039 = vmatprep.subr.mxu0 0.0
        %4040 = vmatpush1.msra.mxu0 %v3664
        %4041 = vmatprep.subr.mxu0 0.0
        %4042 = vmatpush1.msra.mxu0 %v3667
        %4043 = vmatprep.subr.mxu0 0.0
        %4044 = vmatpush1.msra.mxu0 %v3670
        %4045 = vmatprep.subr.mxu0 0.0
        %4046 = vmatpush1.msra.mxu0 %v3673
        %4047 = vmatprep.subr.mxu0 0.0
        %4048 = vmatpush1.msra.mxu0 %v3676
        %4049 = vmatprep.subr.mxu0 0.0
        %4050 = vmatpush1.msra.mxu0 %v3679
        %4051 = vmatprep.subr.mxu0 0.0
        %4052 = vmatpush1.msra.mxu0 %v3682
        %4053 = vmatprep.subr.mxu0 0.0
        %4054 = vmatpush1.msra.mxu0 %v3685
        %4055 = vmatprep.subr.mxu0 0.0
        %4056 = vmatpush1.msra.mxu0 %v3688
        %4057 = vmatprep.subr.mxu0 0.0
        %4058 = vmatpush1.msra.mxu0 %v3691
        %4059 = vmatprep.subr.mxu0 0.0
        %4060 = vmatpush1.msra.mxu0 %v3694
        %4061 = vmatprep.subr.mxu0 0.0
        %4062 = vmatpush1.msra.mxu0 %v3697
        %4063 = vmatprep.subr.mxu0 0.0
        %4064 = vmatpush1.msra.mxu0 %v3700
        %4065 = vmatprep.subr.mxu0 0.0
        %4066 = vmatpush1.msra.mxu0 %v3703
        %4067 = vmatprep.subr.mxu0 0.0
        %4068 = vmatpush1.msra.mxu0 %v3706
        %4069 = vmatprep.subr.mxu0 0.0
        %4070 = vmatpush1.msra.mxu0 %v3709
        %4071 = vmatprep.subr.mxu0 0.0
        %4072 = vmatpush1.msra.mxu0 %v3712
        %4073 = vmatprep.subr.mxu0 0.0
        %4074 = vmatpush1.msra.mxu0 0.0
        %4075 = vmatprep.subr.mxu0 0.0
        %4076 = vmatpush1.msra.mxu0 0.0
        %4077 = vmatprep.subr.mxu0 0.0
        %4078 = vmatpush1.msra.mxu0 0.0
        %4079 = vmatprep.subr.mxu0 0.0
        %4080 = vmatpush1.msra.mxu0 0.0
        %4081 = vmatprep.subr.mxu0 0.0
        %4082 = vmatpush1.msra.mxu0 0.0
        %4083 = vmatprep.mubr.f32.mxu0 %v3946
        %4084 = vmatmul.mubr.f32.gmra.mrb[0].mxu0 %v3630
        %v4085 = vpop.f32.mrb[0].mxu0
        %v4086 = vadd.f32 %v3942, %v4085
        %v4087 = vpop.f32.mrb[0].mxu0
        %4088 = vdwg.mxu0
        %v4089 = vld [vmem:[#allocation3] sm:$0xfc]
        %v4090 = vld [vmem:[#allocation3 + $0x8] sm:$0xfc]
        %v4091 = vld [vmem:[#allocation3 + $0x10] sm:$0x1]
        %v4092 = vld [vmem:[#allocation3 + $0x18] sm:$0x1]
        %s4093 = scalar_lea.vmem %s9, 1296
        %v4094 = vld [vmem:[%s4093] sm:$0xff]
        %v4095 = vld [vmem:[%s4093 + $0x8] sm:$0xff]
        %v4096 = vld [vmem:[%s4093 + $0x10] sm:$0xff]
        %v4097 = vld [vmem:[%s4093 + $0x18] sm:$0xff]
        %v4098 = vld [vmem:[%s4093 + $0x20] sm:$0xff]
        %v4099 = vld [vmem:[%s4093 + $0x28] sm:$0xff]
        %v4100 = vld [vmem:[%s4093 + $0x30] sm:$0xff]
        %v4101 = vld [vmem:[%s4093 + $0x38] sm:$0xff]
        %v4102 = vld [vmem:[%s4093 + $0x40] sm:$0xff]
        %v4103 = vld [vmem:[%s4093 + $0x48] sm:$0xff]
        %v4104 = vld [vmem:[%s4093 + $0x50] sm:$0xff]
        %v4105 = vld [vmem:[%s4093 + $0x58] sm:$0xff]
        %v4106 = vld [vmem:[%s4093 + $0x60] sm:$0xff]
        %v4107 = vld [vmem:[%s4093 + $0x68] sm:$0xff]
        %v4108 = vld [vmem:[%s4093 + $0x70] sm:$0xff]
        %v4109 = vld [vmem:[%s4093 + $0x78] sm:$0xff]
        %v4110 = vld [vmem:[%s4093 + $0x80] sm:$0xff]
        %v4111 = vld [vmem:[%s4093 + $0x88] sm:$0xff]
        %v4112 = vld [vmem:[%s4093 + $0x90] sm:$0xff]
        %v4113 = vld [vmem:[%s4093 + $0x98] sm:$0xff]
        %v4114 = vld [vmem:[%s4093 + $0xa0] sm:$0xff]
        %v4115 = vld [vmem:[%s4093 + $0xa8] sm:$0xff]
        %v4116 = vld [vmem:[%s4093 + $0xb0] sm:$0xff]
        %v4117 = vld [vmem:[%s4093 + $0xb8] sm:$0xff]
        %v4118 = vld [vmem:[%s4093 + $0xc0] sm:$0xff]
        %v4119 = vld [vmem:[%s4093 + $0xc8] sm:$0xff]
        %v4120 = vld [vmem:[%s4093 + $0xd0] sm:$0xff]
        %v4121 = vld [vmem:[%s4093 + $0xd8] sm:$0xff]
        %v4122 = vld [vmem:[%s4093 + $0xe0] sm:$0xff]
        %v4123 = vld [vmem:[%s4093 + $0xe8] sm:$0xff]
        %v4124 = vld [vmem:[%s4093 + $0xf0] sm:$0xff]
        %v4125 = vld [vmem:[%s4093 + $0xf8] sm:$0xff]
        %v4126 = vld [vmem:[%s4093 + $0x100] sm:$0xff]
        %v4127 = vld [vmem:[%s4093 + $0x108] sm:$0xff]
        %v4128 = vld [vmem:[%s4093 + $0x110] sm:$0xff]
        %v4129 = vld [vmem:[%s4093 + $0x118] sm:$0xff]
        %v4130 = vld [vmem:[%s4093 + $0x120] sm:$0xff]
        %v4131 = vld [vmem:[%s4093 + $0x128] sm:$0xff]
        %v4132 = vld [vmem:[%s4093 + $0x130] sm:$0xff]
        %v4133 = vld [vmem:[%s4093 + $0x138] sm:$0xff]
        %v4134 = vld [vmem:[%s4093 + $0x140] sm:$0xff]
        %v4135 = vld [vmem:[%s4093 + $0x148] sm:$0xff]
        %v4136 = vld [vmem:[%s4093 + $0x150] sm:$0xff]
        %v4137 = vld [vmem:[%s4093 + $0x158] sm:$0xff]
        %v4138 = vld [vmem:[%s4093 + $0x160] sm:$0xff]
        %v4139 = vld [vmem:[%s4093 + $0x168] sm:$0xff]
        %v4140 = vld [vmem:[%s4093 + $0x170] sm:$0xff]
        %v4141 = vld [vmem:[%s4093 + $0x178] sm:$0xff]
        %v4142 = vld [vmem:[%s4093 + $0x180] sm:$0xff]
        %v4143 = vld [vmem:[%s4093 + $0x188] sm:$0xff]
        %v4144 = vld [vmem:[%s4093 + $0x190] sm:$0xff]
        %v4145 = vld [vmem:[%s4093 + $0x198] sm:$0xff]
        %v4146 = vld [vmem:[%s4093 + $0x1a0] sm:$0xff]
        %v4147 = vld [vmem:[%s4093 + $0x1a8] sm:$0xff]
        %v4148 = vld [vmem:[%s4093 + $0x1b0] sm:$0xff]
        %v4149 = vld [vmem:[%s4093 + $0x1b8] sm:$0xff]
        %v4150 = vld [vmem:[%s4093 + $0x1c0] sm:$0xff]
        %v4151 = vld [vmem:[%s4093 + $0x1c8] sm:$0xff]
        %v4152 = vld [vmem:[%s4093 + $0x1d0] sm:$0xff]
        %v4153 = vld [vmem:[%s4093 + $0x1d8] sm:$0xff]
        %v4154 = vld [vmem:[%s4093 + $0x1e0] sm:$0xff]
        %v4155 = vld [vmem:[%s4093 + $0x1e8] sm:$0xff]
        %v4156 = vld [vmem:[%s4093 + $0x1f0] sm:$0xff]
        %v4157 = vld [vmem:[%s4093 + $0x1f8] sm:$0xff]
        %v4158 = vld [vmem:[%s4093 + $0x200] sm:$0xff]
        %v4159 = vld [vmem:[%s4093 + $0x208] sm:$0xff]
        %v4160 = vld [vmem:[%s4093 + $0x210] sm:$0xff]
        %v4161 = vld [vmem:[%s4093 + $0x218] sm:$0xff]
        %v4162 = vld [vmem:[%s4093 + $0x220] sm:$0xff]
        %v4163 = vld [vmem:[%s4093 + $0x228] sm:$0xff]
        %v4164 = vld [vmem:[%s4093 + $0x230] sm:$0xff]
        %v4165 = vld [vmem:[%s4093 + $0x238] sm:$0xff]
        %v4166 = vld [vmem:[%s4093 + $0x240] sm:$0xff]
        %v4167 = vld [vmem:[%s4093 + $0x248] sm:$0xff]
        %v4168 = vld [vmem:[%s4093 + $0x250] sm:$0xff]
        %v4169 = vld [vmem:[%s4093 + $0x258] sm:$0xff]
        %v4170 = vld [vmem:[%s4093 + $0x260] sm:$0xff]
        %v4171 = vld [vmem:[%s4093 + $0x268] sm:$0xff]
        %v4172 = vld [vmem:[%s4093 + $0x270] sm:$0xff]
        %v4173 = vld [vmem:[%s4093 + $0x278] sm:$0xff]
        %v4174 = vld [vmem:[%s4093 + $0x280] sm:$0xff]
        %v4179 = vrot.slane %v4089, 2
        %v4180 = vrot.slane %v4091, 2
        %v4181 = vsel %vm565, %v4179, %v4180
        %v4182 = vrot.slane %v4090, 2
        %v4183 = vrot.slane %v4092, 2
        %v4184 = vsel %vm565, %v4182, %v4183
        %v4186 = vsel %vm3625, %v4184, 0
        %4188 = vmatprep.subr.mxu0 %v4095
        %4189 = vmatpush1.msra.mxu0 %v4094
        %4190 = vmatprep.subr.mxu0 %v4098
        %4191 = vmatpush1.msra.mxu0 %v4097
        %4192 = vmatprep.subr.mxu0 %v4101
        %4193 = vmatpush1.msra.mxu0 %v4100
        %4194 = vmatprep.subr.mxu0 %v4104
        %4195 = vmatpush1.msra.mxu0 %v4103
        %4196 = vmatprep.subr.mxu0 %v4107
        %4197 = vmatpush1.msra.mxu0 %v4106
        %4198 = vmatprep.subr.mxu0 %v4110
        %4199 = vmatpush1.msra.mxu0 %v4109
        %4200 = vmatprep.subr.mxu0 %v4113
        %4201 = vmatpush1.msra.mxu0 %v4112
        %4202 = vmatprep.subr.mxu0 %v4116
        %4203 = vmatpush1.msra.mxu0 %v4115
        %4204 = vmatprep.subr.mxu0 %v4119
        %4205 = vmatpush1.msra.mxu0 %v4118
        %4206 = vmatprep.subr.mxu0 %v4122
        %4207 = vmatpush1.msra.mxu0 %v4121
        %4208 = vmatprep.subr.mxu0 %v4125
        %4209 = vmatpush1.msra.mxu0 %v4124
        %4210 = vmatprep.subr.mxu0 %v4128
        %4211 = vmatpush1.msra.mxu0 %v4127
        %4212 = vmatprep.subr.mxu0 %v4131
        %4213 = vmatpush1.msra.mxu0 %v4130
        %4214 = vmatprep.subr.mxu0 %v4134
        %4215 = vmatpush1.msra.mxu0 %v4133
        %4216 = vmatprep.subr.mxu0 %v4137
        %4217 = vmatpush1.msra.mxu0 %v4136
        %4218 = vmatprep.subr.mxu0 %v4140
        %4219 = vmatpush1.msra.mxu0 %v4139
        %4220 = vmatprep.subr.mxu0 %v4143
        %4221 = vmatpush1.msra.mxu0 %v4142
        %4222 = vmatprep.subr.mxu0 %v4146
        %4223 = vmatpush1.msra.mxu0 %v4145
        %4224 = vmatprep.subr.mxu0 %v4149
        %4225 = vmatpush1.msra.mxu0 %v4148
        %4226 = vmatprep.subr.mxu0 %v4152
        %4227 = vmatpush1.msra.mxu0 %v4151
        %4228 = vmatprep.subr.mxu0 %v4155
        %4229 = vmatpush1.msra.mxu0 %v4154
        %4230 = vmatprep.subr.mxu0 %v4158
        %4231 = vmatpush1.msra.mxu0 %v4157
        %4232 = vmatprep.subr.mxu0 %v4161
        %4233 = vmatpush1.msra.mxu0 %v4160
        %4234 = vmatprep.subr.mxu0 %v4164
        %4235 = vmatpush1.msra.mxu0 %v4163
        %4236 = vmatprep.subr.mxu0 %v4167
        %4237 = vmatpush1.msra.mxu0 %v4166
        %4238 = vmatprep.subr.mxu0 %v4170
        %4239 = vmatpush1.msra.mxu0 %v4169
        %4240 = vmatprep.subr.mxu0 %v4173
        %4241 = vmatpush1.msra.mxu0 %v4172
        %4242 = vmatprep.subr.mxu0 0.0
        %4243 = vmatpush1.msra.mxu0 0.0
        %4244 = vmatprep.subr.mxu0 0.0
        %4245 = vmatpush1.msra.mxu0 0.0
        %4246 = vmatprep.subr.mxu0 0.0
        %4247 = vmatpush1.msra.mxu0 0.0
        %4248 = vmatprep.subr.mxu0 0.0
        %4249 = vmatpush1.msra.mxu0 0.0
        %4250 = vmatprep.subr.mxu0 0.0
        %4251 = vmatpush1.msra.mxu0 0.0
        %4252 = vmatprep.mubr.f32.mxu0 %v4186
        %4253 = vmatmul.mubr.f32.gmra.mrb[0].mxu0 %v4181
        %v4254 = vpop.f32.mrb[0].mxu0
        %v4255 = vadd.f32 0.0, %v4254
        %v4256 = vpop.f32.mrb[0].mxu0
        %v4257 = vadd.f32 0.0, %v4256
        %4258 = vdwg.mxu0
        %4259 = vmatprep.subr.mxu0 0.0
        %4260 = vmatpush1.msra.mxu0 %v4096
        %4261 = vmatprep.subr.mxu0 0.0
        %4262 = vmatpush1.msra.mxu0 %v4099
        %4263 = vmatprep.subr.mxu0 0.0
        %4264 = vmatpush1.msra.mxu0 %v4102
        %4265 = vmatprep.subr.mxu0 0.0
        %4266 = vmatpush1.msra.mxu0 %v4105
        %4267 = vmatprep.subr.mxu0 0.0
        %4268 = vmatpush1.msra.mxu0 %v4108
        %4269 = vmatprep.subr.mxu0 0.0
        %4270 = vmatpush1.msra.mxu0 %v4111
        %4271 = vmatprep.subr.mxu0 0.0
        %4272 = vmatpush1.msra.mxu0 %v4114
        %4273 = vmatprep.subr.mxu0 0.0
        %4274 = vmatpush1.msra.mxu0 %v4117
        %4275 = vmatprep.subr.mxu0 0.0
        %4276 = vmatpush1.msra.mxu0 %v4120
        %4277 = vmatprep.subr.mxu0 0.0
        %4278 = vmatpush1.msra.mxu0 %v4123
        %4279 = vmatprep.subr.mxu0 0.0
        %4280 = vmatpush1.msra.mxu0 %v4126
        %4281 = vmatprep.subr.mxu0 0.0
        %4282 = vmatpush1.msra.mxu0 %v4129
        %4283 = vmatprep.subr.mxu0 0.0
        %4284 = vmatpush1.msra.mxu0 %v4132
        %4285 = vmatprep.subr.mxu0 0.0
        %4286 = vmatpush1.msra.mxu0 %v4135
        %4287 = vmatprep.subr.mxu0 0.0
        %4288 = vmatpush1.msra.mxu0 %v4138
        %4289 = vmatprep.subr.mxu0 0.0
        %4290 = vmatpush1.msra.mxu0 %v4141
        %4291 = vmatprep.subr.mxu0 0.0
        %4292 = vmatpush1.msra.mxu0 %v4144
        %4293 = vmatprep.subr.mxu0 0.0
        %4294 = vmatpush1.msra.mxu0 %v4147
        %4295 = vmatprep.subr.mxu0 0.0
        %4296 = vmatpush1.msra.mxu0 %v4150
        %4297 = vmatprep.subr.mxu0 0.0
        %4298 = vmatpush1.msra.mxu0 %v4153
        %4299 = vmatprep.subr.mxu0 0.0
        %4300 = vmatpush1.msra.mxu0 %v4156
        %4301 = vmatprep.subr.mxu0 0.0
        %4302 = vmatpush1.msra.mxu0 %v4159
        %4303 = vmatprep.subr.mxu0 0.0
        %4304 = vmatpush1.msra.mxu0 %v4162
        %4305 = vmatprep.subr.mxu0 0.0
        %4306 = vmatpush1.msra.mxu0 %v4165
        %4307 = vmatprep.subr.mxu0 0.0
        %4308 = vmatpush1.msra.mxu0 %v4168
        %4309 = vmatprep.subr.mxu0 0.0
        %4310 = vmatpush1.msra.mxu0 %v4171
        %4311 = vmatprep.subr.mxu0 0.0
        %4312 = vmatpush1.msra.mxu0 %v4174
        %4313 = vmatprep.subr.mxu0 0.0
        %4314 = vmatpush1.msra.mxu0 0.0
        %4315 = vmatprep.subr.mxu0 0.0
        %4316 = vmatpush1.msra.mxu0 0.0
        %4317 = vmatprep.subr.mxu0 0.0
        %4318 = vmatpush1.msra.mxu0 0.0
        %4319 = vmatprep.subr.mxu0 0.0
        %4320 = vmatpush1.msra.mxu0 0.0
        %4321 = vmatprep.subr.mxu0 0.0
        %4322 = vmatpush1.msra.mxu0 0.0
        %4323 = vmatprep.mubr.f32.mxu0 %v4186
        %4324 = vmatmul.mubr.f32.gmra.mrb[0].mxu0 %v4181
        %v4325 = vpop.f32.mrb[0].mxu0
        %v4326 = vadd.f32 0.0, %v4325
        %v4327 = vpop.f32.mrb[0].mxu0
        %4328 = vdwg.mxu0
        %v4329 = vadd.f32 %v4015, %v4255
        %v4330 = vadd.f32 %v4017, %v4257
        %v4331 = vadd.f32 %v4086, %v4326
        %v4332 = vld [vmem:[%s10] sm:$0x7]
        %v4334 = vlaneseq
        %v4335 = vshrl.u32 %v4334, 7
        %v4336 = vsub.s32 0, %v4335
        %v4337 = vrot.slane %v4332, %v4336
        %v4338 = vlaneseq
        %v4339 = vshrl.u32 %v4338, 7
        %v4340 = vsub.s32 1, %v4339
        %v4341 = vrot.slane %v4332, %v4340
        %v4342 = vlaneseq
        %v4343 = vshrl.u32 %v4342, 7
        %v4344 = vsub.s32 2, %v4343
        %v4345 = vrot.slane %v4332, %v4344
        %v4349 = vadd.f32 %v4329, %v4337
        %v4350 = vadd.f32 %v4330, %v4341
        %v4351 = vadd.f32 %v4331, %v4345
        %v4352 = vmax.f32 %v4349, 0.0
        %v4353 = vmax.f32 %v4350, 0.0
        %v4354 = vmax.f32 %v4351, 0.0
        %v4355 = vld [vmem:[%s11] sm:$0x7]
        %vm4356 = vcmask 56320
        %v4358 = vsel %vm4356, %v4355, 0
        %v4361 = vsel %vm2197, %v4352, 0
        %v4364 = vsel %vm2197, %v4353, 0
        %v4367 = vsel %vm2197, %v4354, 0
        %4369 = vmatprep.subr.mxu0 %v4364
        %4370 = vmatpush1.msra.mxu0 %v4361
        %4371 = vmatprep.subr.mxu0 0.0
        %4372 = vmatpush1.msra.mxu0 0.0
        %4373 = vmatprep.subr.mxu0 0.0
        %4374 = vmatpush1.msra.mxu0 0.0
        %4375 = vmatprep.subr.mxu0 0.0
        %4376 = vmatpush1.msra.mxu0 0.0
        %4377 = vmatprep.subr.mxu0 0.0
        %4378 = vmatpush1.msra.mxu0 0.0
        %4379 = vmatprep.subr.mxu0 0.0
        %4380 = vmatpush1.msra.mxu0 0.0
        %4381 = vmatprep.subr.mxu0 0.0
        %4382 = vmatpush1.msra.mxu0 0.0
        %4383 = vmatprep.subr.mxu0 0.0
        %4384 = vmatpush1.msra.mxu0 0.0
        %4385 = vmatprep.subr.mxu0 0.0
        %4386 = vmatpush1.msra.mxu0 0.0
        %4387 = vmatprep.subr.mxu0 0.0
        %4388 = vmatpush1.msra.mxu0 0.0
        %4389 = vmatprep.subr.mxu0 0.0
        %4390 = vmatpush1.msra.mxu0 0.0
        %4391 = vmatprep.subr.mxu0 0.0
        %4392 = vmatpush1.msra.mxu0 0.0
        %4393 = vmatprep.subr.mxu0 0.0
        %4394 = vmatpush1.msra.mxu0 0.0
        %4395 = vmatprep.subr.mxu0 0.0
        %4396 = vmatpush1.msra.mxu0 0.0
        %4397 = vmatprep.subr.mxu0 0.0
        %4398 = vmatpush1.msra.mxu0 0.0
        %4399 = vmatprep.subr.mxu0 0.0
        %4400 = vmatpush1.msra.mxu0 0.0
        %4401 = vmatprep.subr.mxu0 0.0
        %4402 = vmatpush1.msra.mxu0 0.0
        %4403 = vmatprep.subr.mxu0 0.0
        %4404 = vmatpush1.msra.mxu0 0.0
        %4405 = vmatprep.subr.mxu0 0.0
        %4406 = vmatpush1.msra.mxu0 0.0
        %4407 = vmatprep.subr.mxu0 0.0
        %4408 = vmatpush1.msra.mxu0 0.0
        %4409 = vmatprep.subr.mxu0 0.0
        %4410 = vmatpush1.msra.mxu0 0.0
        %4411 = vmatprep.subr.mxu0 0.0
        %4412 = vmatpush1.msra.mxu0 0.0
        %4413 = vmatprep.subr.mxu0 0.0
        %4414 = vmatpush1.msra.mxu0 0.0
        %4415 = vmatprep.subr.mxu0 0.0
        %4416 = vmatpush1.msra.mxu0 0.0
        %4417 = vmatprep.subr.mxu0 0.0
        %4418 = vmatpush1.msra.mxu0 0.0
        %4419 = vmatprep.subr.mxu0 0.0
        %4420 = vmatpush1.msra.mxu0 0.0
        %4421 = vmatprep.subr.mxu0 0.0
        %4422 = vmatpush1.msra.mxu0 0.0
        %4423 = vmatprep.subr.mxu0 0.0
        %4424 = vmatpush1.msra.mxu0 0.0
        %4425 = vmatprep.subr.mxu0 0.0
        %4426 = vmatpush1.msra.mxu0 0.0
        %4427 = vmatprep.subr.mxu0 0.0
        %4428 = vmatpush1.msra.mxu0 0.0
        %4429 = vmatprep.subr.mxu0 0.0
        %4430 = vmatpush1.msra.mxu0 0.0
        %4431 = vmatprep.subr.mxu0 0.0
        %4432 = vmatpush1.msra.mxu0 0.0
        %4433 = vmatprep.mubr.f32.mxu0 0.0
        %4434 = vmatmul.mubr.f32.gmra.mrb[0].mxu0 %v4358
        %v4435 = vpop.f32.mrb[0].mxu0
        %v4436 = vadd.f32 0.0, %v4435
        %v4437 = vpop.f32.mrb[0].mxu0
        %v4438 = vadd.f32 0.0, %v4437
        %4439 = vdwg.mxu0
        %4440 = vmatprep.subr.mxu0 0.0
        %4441 = vmatpush1.msra.mxu0 %v4367
        %4442 = vmatprep.subr.mxu0 0.0
        %4443 = vmatpush1.msra.mxu0 0.0
        %4444 = vmatprep.subr.mxu0 0.0
        %4445 = vmatpush1.msra.mxu0 0.0
        %4446 = vmatprep.subr.mxu0 0.0
        %4447 = vmatpush1.msra.mxu0 0.0
        %4448 = vmatprep.subr.mxu0 0.0
        %4449 = vmatpush1.msra.mxu0 0.0
        %4450 = vmatprep.subr.mxu0 0.0
        %4451 = vmatpush1.msra.mxu0 0.0
        %4452 = vmatprep.subr.mxu0 0.0
        %4453 = vmatpush1.msra.mxu0 0.0
        %4454 = vmatprep.subr.mxu0 0.0
        %4455 = vmatpush1.msra.mxu0 0.0
        %4456 = vmatprep.subr.mxu0 0.0
        %4457 = vmatpush1.msra.mxu0 0.0
        %4458 = vmatprep.subr.mxu0 0.0
        %4459 = vmatpush1.msra.mxu0 0.0
        %4460 = vmatprep.subr.mxu0 0.0
        %4461 = vmatpush1.msra.mxu0 0.0
        %4462 = vmatprep.subr.mxu0 0.0
        %4463 = vmatpush1.msra.mxu0 0.0
        %4464 = vmatprep.subr.mxu0 0.0
        %4465 = vmatpush1.msra.mxu0 0.0
        %4466 = vmatprep.subr.mxu0 0.0
        %4467 = vmatpush1.msra.mxu0 0.0
        %4468 = vmatprep.subr.mxu0 0.0
        %4469 = vmatpush1.msra.mxu0 0.0
        %4470 = vmatprep.subr.mxu0 0.0
        %4471 = vmatpush1.msra.mxu0 0.0
        %4472 = vmatprep.subr.mxu0 0.0
        %4473 = vmatpush1.msra.mxu0 0.0
        %4474 = vmatprep.subr.mxu0 0.0
        %4475 = vmatpush1.msra.mxu0 0.0
        %4476 = vmatprep.subr.mxu0 0.0
        %4477 = vmatpush1.msra.mxu0 0.0
        %4478 = vmatprep.subr.mxu0 0.0
        %4479 = vmatpush1.msra.mxu0 0.0
        %4480 = vmatprep.subr.mxu0 0.0
        %4481 = vmatpush1.msra.mxu0 0.0
        %4482 = vmatprep.subr.mxu0 0.0
        %4483 = vmatpush1.msra.mxu0 0.0
        %4484 = vmatprep.subr.mxu0 0.0
        %4485 = vmatpush1.msra.mxu0 0.0
        %4486 = vmatprep.subr.mxu0 0.0
        %4487 = vmatpush1.msra.mxu0 0.0
        %4488 = vmatprep.subr.mxu0 0.0
        %4489 = vmatpush1.msra.mxu0 0.0
        %4490 = vmatprep.subr.mxu0 0.0
        %4491 = vmatpush1.msra.mxu0 0.0
        %4492 = vmatprep.subr.mxu0 0.0
        %4493 = vmatpush1.msra.mxu0 0.0
        %4494 = vmatprep.subr.mxu0 0.0
        %4495 = vmatpush1.msra.mxu0 0.0
        %4496 = vmatprep.subr.mxu0 0.0
        %4497 = vmatpush1.msra.mxu0 0.0
        %4498 = vmatprep.subr.mxu0 0.0
        %4499 = vmatpush1.msra.mxu0 0.0
        %4500 = vmatprep.subr.mxu0 0.0
        %4501 = vmatpush1.msra.mxu0 0.0
        %4502 = vmatprep.subr.mxu0 0.0
        %4503 = vmatpush1.msra.mxu0 0.0
        %4504 = vmatprep.mubr.f32.mxu0 0.0
        %4505 = vmatmul.mubr.f32.gmra.mrb[0].mxu0 %v4358
        %v4506 = vpop.f32.mrb[0].mxu0
        %v4507 = vadd.f32 0.0, %v4506
        %v4508 = vpop.f32.mrb[0].mxu0
        %4509 = vdwg.mxu0
        %s4510 = scalar_lea.vmem %s11, 4
        %v4511 = vld [vmem:[%s4510] sm:$0x7]
        %v4513 = vsel %vm4356, %v4511, 0
        %4515 = vmatprep.subr.mxu0 %v4364
        %4516 = vmatpush1.msra.mxu0 %v4361
        %4517 = vmatprep.subr.mxu0 0.0
        %4518 = vmatpush1.msra.mxu0 0.0
        %4519 = vmatprep.subr.mxu0 0.0
        %4520 = vmatpush1.msra.mxu0 0.0
        %4521 = vmatprep.subr.mxu0 0.0
        %4522 = vmatpush1.msra.mxu0 0.0
        %4523 = vmatprep.subr.mxu0 0.0
        %4524 = vmatpush1.msra.mxu0 0.0
        %4525 = vmatprep.subr.mxu0 0.0
        %4526 = vmatpush1.msra.mxu0 0.0
        %4527 = vmatprep.subr.mxu0 0.0
        %4528 = vmatpush1.msra.mxu0 0.0
        %4529 = vmatprep.subr.mxu0 0.0
        %4530 = vmatpush1.msra.mxu0 0.0
        %4531 = vmatprep.subr.mxu0 0.0
        %4532 = vmatpush1.msra.mxu0 0.0
        %4533 = vmatprep.subr.mxu0 0.0
        %4534 = vmatpush1.msra.mxu0 0.0
        %4535 = vmatprep.subr.mxu0 0.0
        %4536 = vmatpush1.msra.mxu0 0.0
        %4537 = vmatprep.subr.mxu0 0.0
        %4538 = vmatpush1.msra.mxu0 0.0
        %4539 = vmatprep.subr.mxu0 0.0
        %4540 = vmatpush1.msra.mxu0 0.0
        %4541 = vmatprep.subr.mxu0 0.0
        %4542 = vmatpush1.msra.mxu0 0.0
        %4543 = vmatprep.subr.mxu0 0.0
        %4544 = vmatpush1.msra.mxu0 0.0
        %4545 = vmatprep.subr.mxu0 0.0
        %4546 = vmatpush1.msra.mxu0 0.0
        %4547 = vmatprep.subr.mxu0 0.0
        %4548 = vmatpush1.msra.mxu0 0.0
        %4549 = vmatprep.subr.mxu0 0.0
        %4550 = vmatpush1.msra.mxu0 0.0
        %4551 = vmatprep.subr.mxu0 0.0
        %4552 = vmatpush1.msra.mxu0 0.0
        %4553 = vmatprep.subr.mxu0 0.0
        %4554 = vmatpush1.msra.mxu0 0.0
        %4555 = vmatprep.subr.mxu0 0.0
        %4556 = vmatpush1.msra.mxu0 0.0
        %4557 = vmatprep.subr.mxu0 0.0
        %4558 = vmatpush1.msra.mxu0 0.0
        %4559 = vmatprep.subr.mxu0 0.0
        %4560 = vmatpush1.msra.mxu0 0.0
        %4561 = vmatprep.subr.mxu0 0.0
        %4562 = vmatpush1.msra.mxu0 0.0
        %4563 = vmatprep.subr.mxu0 0.0
        %4564 = vmatpush1.msra.mxu0 0.0
        %4565 = vmatprep.subr.mxu0 0.0
        %4566 = vmatpush1.msra.mxu0 0.0
        %4567 = vmatprep.subr.mxu0 0.0
        %4568 = vmatpush1.msra.mxu0 0.0
        %4569 = vmatprep.subr.mxu0 0.0
        %4570 = vmatpush1.msra.mxu0 0.0
        %4571 = vmatprep.subr.mxu0 0.0
        %4572 = vmatpush1.msra.mxu0 0.0
        %4573 = vmatprep.subr.mxu0 0.0
        %4574 = vmatpush1.msra.mxu0 0.0
        %4575 = vmatprep.subr.mxu0 0.0
        %4576 = vmatpush1.msra.mxu0 0.0
        %4577 = vmatprep.subr.mxu0 0.0
        %4578 = vmatpush1.msra.mxu0 0.0
        %4579 = vmatprep.mubr.f32.mxu0 0.0
        %4580 = vmatmul.mubr.f32.gmra.mrb[0].mxu0 %v4513
        %v4581 = vpop.f32.mrb[0].mxu0
        %v4582 = vadd.f32 0.0, %v4581
        %v4583 = vpop.f32.mrb[0].mxu0
        %v4584 = vadd.f32 0.0, %v4583
        %4585 = vdwg.mxu0
        %4586 = vmatprep.subr.mxu0 0.0
        %4587 = vmatpush1.msra.mxu0 %v4367
        %4588 = vmatprep.subr.mxu0 0.0
        %4589 = vmatpush1.msra.mxu0 0.0
        %4590 = vmatprep.subr.mxu0 0.0
        %4591 = vmatpush1.msra.mxu0 0.0
        %4592 = vmatprep.subr.mxu0 0.0
        %4593 = vmatpush1.msra.mxu0 0.0
        %4594 = vmatprep.subr.mxu0 0.0
        %4595 = vmatpush1.msra.mxu0 0.0
        %4596 = vmatprep.subr.mxu0 0.0
        %4597 = vmatpush1.msra.mxu0 0.0
        %4598 = vmatprep.subr.mxu0 0.0
        %4599 = vmatpush1.msra.mxu0 0.0
        %4600 = vmatprep.subr.mxu0 0.0
        %4601 = vmatpush1.msra.mxu0 0.0
        %4602 = vmatprep.subr.mxu0 0.0
        %4603 = vmatpush1.msra.mxu0 0.0
        %4604 = vmatprep.subr.mxu0 0.0
        %4605 = vmatpush1.msra.mxu0 0.0
        %4606 = vmatprep.subr.mxu0 0.0
        %4607 = vmatpush1.msra.mxu0 0.0
        %4608 = vmatprep.subr.mxu0 0.0
        %4609 = vmatpush1.msra.mxu0 0.0
        %4610 = vmatprep.subr.mxu0 0.0
        %4611 = vmatpush1.msra.mxu0 0.0
        %4612 = vmatprep.subr.mxu0 0.0
        %4613 = vmatpush1.msra.mxu0 0.0
        %4614 = vmatprep.subr.mxu0 0.0
        %4615 = vmatpush1.msra.mxu0 0.0
        %4616 = vmatprep.subr.mxu0 0.0
        %4617 = vmatpush1.msra.mxu0 0.0
        %4618 = vmatprep.subr.mxu0 0.0
        %4619 = vmatpush1.msra.mxu0 0.0
        %4620 = vmatprep.subr.mxu0 0.0
        %4621 = vmatpush1.msra.mxu0 0.0
        %4622 = vmatprep.subr.mxu0 0.0
        %4623 = vmatpush1.msra.mxu0 0.0
        %4624 = vmatprep.subr.mxu0 0.0
        %4625 = vmatpush1.msra.mxu0 0.0
        %4626 = vmatprep.subr.mxu0 0.0
        %4627 = vmatpush1.msra.mxu0 0.0
        %4628 = vmatprep.subr.mxu0 0.0
        %4629 = vmatpush1.msra.mxu0 0.0
        %4630 = vmatprep.subr.mxu0 0.0
        %4631 = vmatpush1.msra.mxu0 0.0
        %4632 = vmatprep.subr.mxu0 0.0
        %4633 = vmatpush1.msra.mxu0 0.0
        %4634 = vmatprep.subr.mxu0 0.0
        %4635 = vmatpush1.msra.mxu0 0.0
        %4636 = vmatprep.subr.mxu0 0.0
        %4637 = vmatpush1.msra.mxu0 0.0
        %4638 = vmatprep.subr.mxu0 0.0
        %4639 = vmatpush1.msra.mxu0 0.0
        %4640 = vmatprep.subr.mxu0 0.0
        %4641 = vmatpush1.msra.mxu0 0.0
        %4642 = vmatprep.subr.mxu0 0.0
        %4643 = vmatpush1.msra.mxu0 0.0
        %4644 = vmatprep.subr.mxu0 0.0
        %4645 = vmatpush1.msra.mxu0 0.0
        %4646 = vmatprep.subr.mxu0 0.0
        %4647 = vmatpush1.msra.mxu0 0.0
        %4648 = vmatprep.subr.mxu0 0.0
        %4649 = vmatpush1.msra.mxu0 0.0
        %4650 = vmatprep.mubr.f32.mxu0 0.0
        %4651 = vmatmul.mubr.f32.gmra.mrb[0].mxu0 %v4513
        %v4652 = vpop.f32.mrb[0].mxu0
        %v4653 = vadd.f32 0.0, %v4652
        %v4654 = vpop.f32.mrb[0].mxu0
        %4655 = vdwg.mxu0
        %v4656 = vmax.f32 %v4436, %v4582
        %v4657 = vmax.f32 %v4438, %v4584
        %v4658 = vmax.f32 %v4507, %v4653
        %v4659 = vld [vmem:[%s12] sm:$0xff]
        %v4660 = vld [vmem:[%s12 + $0x8] sm:$0xff]
        %v4661 = vld [vmem:[%s12 + $0x10] sm:$0xff]
        %v4662 = vld [vmem:[%s12 + $0x18] sm:$0xff]
        %v4663 = vld [vmem:[%s12 + $0x20] sm:$0xff]
        %v4664 = vld [vmem:[%s12 + $0x28] sm:$0xff]
        %v4665 = vld [vmem:[%s12 + $0x30] sm:$0xff]
        %v4666 = vld [vmem:[%s12 + $0x38] sm:$0xff]
        %v4667 = vld [vmem:[%s12 + $0x40] sm:$0xff]
        %v4668 = vld [vmem:[%s12 + $0x48] sm:$0xff]
        %v4669 = vld [vmem:[%s12 + $0x50] sm:$0xff]
        %v4670 = vld [vmem:[%s12 + $0x58] sm:$0xff]
        %v4671 = vld [vmem:[%s12 + $0x60] sm:$0xff]
        %v4672 = vld [vmem:[%s12 + $0x68] sm:$0xff]
        %v4673 = vld [vmem:[%s12 + $0x70] sm:$0xff]
        %v4674 = vld [vmem:[%s12 + $0x78] sm:$0xff]
        %v4675 = vld [vmem:[%s12 + $0x80] sm:$0xff]
        %v4676 = vld [vmem:[%s12 + $0x88] sm:$0xff]
        %v4677 = vld [vmem:[%s12 + $0x90] sm:$0xff]
        %v4678 = vld [vmem:[%s12 + $0x98] sm:$0xff]
        %v4679 = vld [vmem:[%s12 + $0xa0] sm:$0xff]
        %v4680 = vld [vmem:[%s12 + $0xa8] sm:$0xff]
        %v4681 = vld [vmem:[%s12 + $0xb0] sm:$0xff]
        %v4682 = vld [vmem:[%s12 + $0xb8] sm:$0xff]
        %v4683 = vld [vmem:[%s12 + $0xc0] sm:$0xff]
        %v4684 = vld [vmem:[%s12 + $0xc8] sm:$0xff]
        %v4685 = vld [vmem:[%s12 + $0xd0] sm:$0xff]
        %v4686 = vld [vmem:[%s12 + $0xd8] sm:$0xff]
        %v4687 = vld [vmem:[%s12 + $0xe0] sm:$0xff]
        %v4688 = vld [vmem:[%s12 + $0xe8] sm:$0xff]
        %v4689 = vld [vmem:[%s12 + $0xf0] sm:$0xff]
        %v4690 = vld [vmem:[%s12 + $0xf8] sm:$0xff]
        %v4691 = vld [vmem:[%s12 + $0x100] sm:$0xff]
        %v4692 = vld [vmem:[%s12 + $0x108] sm:$0xff]
        %v4693 = vld [vmem:[%s12 + $0x110] sm:$0xff]
        %v4694 = vld [vmem:[%s12 + $0x118] sm:$0xff]
        %v4695 = vld [vmem:[%s12 + $0x120] sm:$0xff]
        %v4696 = vld [vmem:[%s12 + $0x128] sm:$0xff]
        %v4697 = vld [vmem:[%s12 + $0x130] sm:$0xff]
        %v4698 = vld [vmem:[%s12 + $0x138] sm:$0xff]
        %v4699 = vld [vmem:[%s12 + $0x140] sm:$0xff]
        %v4700 = vld [vmem:[%s12 + $0x148] sm:$0xff]
        %v4701 = vld [vmem:[%s12 + $0x150] sm:$0xff]
        %v4702 = vld [vmem:[%s12 + $0x158] sm:$0xff]
        %v4703 = vld [vmem:[%s12 + $0x160] sm:$0xff]
        %v4704 = vld [vmem:[%s12 + $0x168] sm:$0xff]
        %v4705 = vld [vmem:[%s12 + $0x170] sm:$0xff]
        %v4706 = vld [vmem:[%s12 + $0x178] sm:$0xff]
        %v4707 = vld [vmem:[%s12 + $0x180] sm:$0xff]
        %v4708 = vld [vmem:[%s12 + $0x188] sm:$0xff]
        %v4709 = vld [vmem:[%s12 + $0x190] sm:$0xff]
        %v4710 = vld [vmem:[%s12 + $0x198] sm:$0xff]
        %v4711 = vld [vmem:[%s12 + $0x1a0] sm:$0xff]
        %v4712 = vld [vmem:[%s12 + $0x1a8] sm:$0xff]
        %v4713 = vld [vmem:[%s12 + $0x1b0] sm:$0xff]
        %v4714 = vld [vmem:[%s12 + $0x1b8] sm:$0xff]
        %v4715 = vld [vmem:[%s12 + $0x1c0] sm:$0xff]
        %v4716 = vld [vmem:[%s12 + $0x1c8] sm:$0xff]
        %v4717 = vld [vmem:[%s12 + $0x1d0] sm:$0xff]
        %v4718 = vld [vmem:[%s12 + $0x1d8] sm:$0xff]
        %v4719 = vld [vmem:[%s12 + $0x1e0] sm:$0xff]
        %v4720 = vld [vmem:[%s12 + $0x1e8] sm:$0xff]
        %v4721 = vld [vmem:[%s12 + $0x1f0] sm:$0xff]
        %v4722 = vld [vmem:[%s12 + $0x1f8] sm:$0xff]
        %v4723 = vld [vmem:[%s12 + $0x200] sm:$0xff]
        %v4724 = vld [vmem:[%s12 + $0x208] sm:$0xff]
        %v4725 = vld [vmem:[%s12 + $0x210] sm:$0xff]
        %v4726 = vld [vmem:[%s12 + $0x218] sm:$0xff]
        %v4727 = vld [vmem:[%s12 + $0x220] sm:$0xff]
        %v4728 = vld [vmem:[%s12 + $0x228] sm:$0xff]
        %v4729 = vld [vmem:[%s12 + $0x230] sm:$0xff]
        %v4730 = vld [vmem:[%s12 + $0x238] sm:$0xff]
        %v4731 = vld [vmem:[%s12 + $0x240] sm:$0xff]
        %v4732 = vld [vmem:[%s12 + $0x248] sm:$0xff]
        %v4733 = vld [vmem:[%s12 + $0x250] sm:$0xff]
        %v4734 = vld [vmem:[%s12 + $0x258] sm:$0xff]
        %v4735 = vld [vmem:[%s12 + $0x260] sm:$0xff]
        %v4736 = vld [vmem:[%s12 + $0x268] sm:$0xff]
        %v4737 = vld [vmem:[%s12 + $0x270] sm:$0xff]
        %v4738 = vld [vmem:[%s12 + $0x278] sm:$0xff]
        %v4739 = vld [vmem:[%s12 + $0x280] sm:$0xff]
        %v4740 = vld [vmem:[%s12 + $0x288] sm:$0xff]
        %v4741 = vld [vmem:[%s12 + $0x290] sm:$0xff]
        %v4742 = vld [vmem:[%s12 + $0x298] sm:$0xff]
        %v4744 = vsel %vm1631, %v4658, 0
        %4746 = vmatprep.subr.mxu0 %v4660
        %4747 = vmatpush1.msra.mxu0 %v4659
        %4748 = vmatprep.subr.mxu0 %v4662
        %4749 = vmatpush1.msra.mxu0 %v4661
        %4750 = vmatprep.subr.mxu0 %v4664
        %4751 = vmatpush1.msra.mxu0 %v4663
        %4752 = vmatprep.subr.mxu0 %v4666
        %4753 = vmatpush1.msra.mxu0 %v4665
        %4754 = vmatprep.subr.mxu0 %v4668
        %4755 = vmatpush1.msra.mxu0 %v4667
        %4756 = vmatprep.subr.mxu0 %v4670
        %4757 = vmatpush1.msra.mxu0 %v4669
        %4758 = vmatprep.subr.mxu0 %v4672
        %4759 = vmatpush1.msra.mxu0 %v4671
        %4760 = vmatprep.subr.mxu0 %v4674
        %4761 = vmatpush1.msra.mxu0 %v4673
        %4762 = vmatprep.subr.mxu0 %v4676
        %4763 = vmatpush1.msra.mxu0 %v4675
        %4764 = vmatprep.subr.mxu0 %v4678
        %4765 = vmatpush1.msra.mxu0 %v4677
        %4766 = vmatprep.subr.mxu0 %v4680
        %4767 = vmatpush1.msra.mxu0 %v4679
        %4768 = vmatprep.subr.mxu0 %v4682
        %4769 = vmatpush1.msra.mxu0 %v4681
        %4770 = vmatprep.subr.mxu0 %v4684
        %4771 = vmatpush1.msra.mxu0 %v4683
        %4772 = vmatprep.subr.mxu0 %v4686
        %4773 = vmatpush1.msra.mxu0 %v4685
        %4774 = vmatprep.subr.mxu0 %v4688
        %4775 = vmatpush1.msra.mxu0 %v4687
        %4776 = vmatprep.subr.mxu0 %v4690
        %4777 = vmatpush1.msra.mxu0 %v4689
        %4778 = vmatprep.subr.mxu0 %v4692
        %4779 = vmatpush1.msra.mxu0 %v4691
        %4780 = vmatprep.subr.mxu0 %v4694
        %4781 = vmatpush1.msra.mxu0 %v4693
        %4782 = vmatprep.subr.mxu0 %v4696
        %4783 = vmatpush1.msra.mxu0 %v4695
        %4784 = vmatprep.subr.mxu0 %v4698
        %4785 = vmatpush1.msra.mxu0 %v4697
        %4786 = vmatprep.subr.mxu0 %v4700
        %4787 = vmatpush1.msra.mxu0 %v4699
        %4788 = vmatprep.subr.mxu0 %v4702
        %4789 = vmatpush1.msra.mxu0 %v4701
        %4790 = vmatprep.subr.mxu0 %v4704
        %4791 = vmatpush1.msra.mxu0 %v4703
        %4792 = vmatprep.subr.mxu0 %v4706
        %4793 = vmatpush1.msra.mxu0 %v4705
        %4794 = vmatprep.subr.mxu0 %v4708
        %4795 = vmatpush1.msra.mxu0 %v4707
        %4796 = vmatprep.subr.mxu0 %v4710
        %4797 = vmatpush1.msra.mxu0 %v4709
        %4798 = vmatprep.subr.mxu0 %v4712
        %4799 = vmatpush1.msra.mxu0 %v4711
        %4800 = vmatprep.subr.mxu0 %v4714
        %4801 = vmatpush1.msra.mxu0 %v4713
        %4802 = vmatprep.subr.mxu0 %v4716
        %4803 = vmatpush1.msra.mxu0 %v4715
        %4804 = vmatprep.subr.mxu0 %v4718
        %4805 = vmatpush1.msra.mxu0 %v4717
        %4806 = vmatprep.subr.mxu0 %v4720
        %4807 = vmatpush1.msra.mxu0 %v4719
        %4808 = vmatprep.subr.mxu0 %v4722
        %4809 = vmatpush1.msra.mxu0 %v4721
        %4810 = vmatprep.mubr.f32.mxu0 %v4657
        %4811 = vmatmul.mubr.f32.gmra.mrb[0].mxu0 %v4656
        %v4812 = vpop.f32.mrb[0].mxu0
        %v4813 = vadd.f32 0.0, %v4812
        %v4814 = vpop.f32.mrb[0].mxu0
        %v4815 = vadd.f32 0.0, %v4814
        %4816 = vdwg.mxu0
        %4817 = vmatprep.subr.mxu0 %v4724
        %4818 = vmatpush1.msra.mxu0 %v4723
        %4819 = vmatprep.subr.mxu0 %v4726
        %4820 = vmatpush1.msra.mxu0 %v4725
        %4821 = vmatprep.subr.mxu0 %v4728
        %4822 = vmatpush1.msra.mxu0 %v4727
        %4823 = vmatprep.subr.mxu0 %v4730
        %4824 = vmatpush1.msra.mxu0 %v4729
        %4825 = vmatprep.subr.mxu0 %v4732
        %4826 = vmatpush1.msra.mxu0 %v4731
        %4827 = vmatprep.subr.mxu0 %v4734
        %4828 = vmatpush1.msra.mxu0 %v4733
        %4829 = vmatprep.subr.mxu0 %v4736
        %4830 = vmatpush1.msra.mxu0 %v4735
        %4831 = vmatprep.subr.mxu0 %v4738
        %4832 = vmatpush1.msra.mxu0 %v4737
        %4833 = vmatprep.subr.mxu0 %v4740
        %4834 = vmatpush1.msra.mxu0 %v4739
        %4835 = vmatprep.subr.mxu0 %v4742
        %4836 = vmatpush1.msra.mxu0 %v4741
        %4837 = vmatprep.subr.mxu0 0.0
        %4838 = vmatpush1.msra.mxu0 0.0
        %4839 = vmatprep.subr.mxu0 0.0
        %4840 = vmatpush1.msra.mxu0 0.0
        %4841 = vmatprep.subr.mxu0 0.0
        %4842 = vmatpush1.msra.mxu0 0.0
        %4843 = vmatprep.subr.mxu0 0.0
        %4844 = vmatpush1.msra.mxu0 0.0
        %4845 = vmatprep.subr.mxu0 0.0
        %4846 = vmatpush1.msra.mxu0 0.0
        %4847 = vmatprep.subr.mxu0 0.0
        %4848 = vmatpush1.msra.mxu0 0.0
        %4849 = vmatprep.subr.mxu0 0.0
        %4850 = vmatpush1.msra.mxu0 0.0
        %4851 = vmatprep.subr.mxu0 0.0
        %4852 = vmatpush1.msra.mxu0 0.0
        %4853 = vmatprep.subr.mxu0 0.0
        %4854 = vmatpush1.msra.mxu0 0.0
        %4855 = vmatprep.subr.mxu0 0.0
        %4856 = vmatpush1.msra.mxu0 0.0
        %4857 = vmatprep.subr.mxu0 0.0
        %4858 = vmatpush1.msra.mxu0 0.0
        %4859 = vmatprep.subr.mxu0 0.0
        %4860 = vmatpush1.msra.mxu0 0.0
        %4861 = vmatprep.subr.mxu0 0.0
        %4862 = vmatpush1.msra.mxu0 0.0
        %4863 = vmatprep.subr.mxu0 0.0
        %4864 = vmatpush1.msra.mxu0 0.0
        %4865 = vmatprep.subr.mxu0 0.0
        %4866 = vmatpush1.msra.mxu0 0.0
        %4867 = vmatprep.subr.mxu0 0.0
        %4868 = vmatpush1.msra.mxu0 0.0
        %4869 = vmatprep.subr.mxu0 0.0
        %4870 = vmatpush1.msra.mxu0 0.0
        %4871 = vmatprep.subr.mxu0 0.0
        %4872 = vmatpush1.msra.mxu0 0.0
        %4873 = vmatprep.subr.mxu0 0.0
        %4874 = vmatpush1.msra.mxu0 0.0
        %4875 = vmatprep.subr.mxu0 0.0
        %4876 = vmatpush1.msra.mxu0 0.0
        %4877 = vmatprep.subr.mxu0 0.0
        %4878 = vmatpush1.msra.mxu0 0.0
        %4879 = vmatprep.subr.mxu0 0.0
        %4880 = vmatpush1.msra.mxu0 0.0
        %4881 = vmatprep.mubr.f32.mxu0 0.0
        %4882 = vmatmul.mubr.f32.gmra.mrb[0].mxu0 %v4744
        %v4883 = vpop.f32.mrb[0].mxu0
        %v4884 = vadd.f32 %v4813, %v4883
        %v4885 = vpop.f32.mrb[0].mxu0
        %v4886 = vadd.f32 %v4815, %v4885
        %4887 = vdwg.mxu0
        %s4888 = scalar_lea.vmem %s12, 672
        %v4889 = vld [vmem:[%s4888] sm:$0xff]
        %v4890 = vld [vmem:[%s4888 + $0x8] sm:$0xff]
        %v4891 = vld [vmem:[%s4888 + $0x10] sm:$0xff]
        %v4892 = vld [vmem:[%s4888 + $0x18] sm:$0xff]
        %v4893 = vld [vmem:[%s4888 + $0x20] sm:$0xff]
        %v4894 = vld [vmem:[%s4888 + $0x28] sm:$0xff]
        %v4895 = vld [vmem:[%s4888 + $0x30] sm:$0xff]
        %v4896 = vld [vmem:[%s4888 + $0x38] sm:$0xff]
        %v4897 = vld [vmem:[%s4888 + $0x40] sm:$0xff]
        %v4898 = vld [vmem:[%s4888 + $0x48] sm:$0xff]
        %v4899 = vld [vmem:[%s4888 + $0x50] sm:$0xff]
        %v4900 = vld [vmem:[%s4888 + $0x58] sm:$0xff]
        %v4901 = vld [vmem:[%s4888 + $0x60] sm:$0xff]
        %v4902 = vld [vmem:[%s4888 + $0x68] sm:$0xff]
        %v4903 = vld [vmem:[%s4888 + $0x70] sm:$0xff]
        %v4904 = vld [vmem:[%s4888 + $0x78] sm:$0xff]
        %v4905 = vld [vmem:[%s4888 + $0x80] sm:$0xff]
        %v4906 = vld [vmem:[%s4888 + $0x88] sm:$0xff]
        %v4907 = vld [vmem:[%s4888 + $0x90] sm:$0xff]
        %v4908 = vld [vmem:[%s4888 + $0x98] sm:$0xff]
        %v4909 = vld [vmem:[%s4888 + $0xa0] sm:$0xff]
        %v4910 = vld [vmem:[%s4888 + $0xa8] sm:$0xff]
        %v4911 = vld [vmem:[%s4888 + $0xb0] sm:$0xff]
        %v4912 = vld [vmem:[%s4888 + $0xb8] sm:$0xff]
        %v4913 = vld [vmem:[%s4888 + $0xc0] sm:$0xff]
        %v4914 = vld [vmem:[%s4888 + $0xc8] sm:$0xff]
        %v4915 = vld [vmem:[%s4888 + $0xd0] sm:$0xff]
        %v4916 = vld [vmem:[%s4888 + $0xd8] sm:$0xff]
        %v4917 = vld [vmem:[%s4888 + $0xe0] sm:$0xff]
        %v4918 = vld [vmem:[%s4888 + $0xe8] sm:$0xff]
        %v4919 = vld [vmem:[%s4888 + $0xf0] sm:$0xff]
        %v4920 = vld [vmem:[%s4888 + $0xf8] sm:$0xff]
        %v4921 = vld [vmem:[%s4888 + $0x100] sm:$0xff]
        %v4922 = vld [vmem:[%s4888 + $0x108] sm:$0xff]
        %v4923 = vld [vmem:[%s4888 + $0x110] sm:$0xff]
        %v4924 = vld [vmem:[%s4888 + $0x118] sm:$0xff]
        %v4925 = vld [vmem:[%s4888 + $0x120] sm:$0xff]
        %v4926 = vld [vmem:[%s4888 + $0x128] sm:$0xff]
        %v4927 = vld [vmem:[%s4888 + $0x130] sm:$0xff]
        %v4928 = vld [vmem:[%s4888 + $0x138] sm:$0xff]
        %v4929 = vld [vmem:[%s4888 + $0x140] sm:$0xff]
        %v4930 = vld [vmem:[%s4888 + $0x148] sm:$0xff]
        %v4931 = vld [vmem:[%s4888 + $0x150] sm:$0xff]
        %v4932 = vld [vmem:[%s4888 + $0x158] sm:$0xff]
        %v4933 = vld [vmem:[%s4888 + $0x160] sm:$0xff]
        %v4934 = vld [vmem:[%s4888 + $0x168] sm:$0xff]
        %v4935 = vld [vmem:[%s4888 + $0x170] sm:$0xff]
        %v4936 = vld [vmem:[%s4888 + $0x178] sm:$0xff]
        %v4937 = vld [vmem:[%s4888 + $0x180] sm:$0xff]
        %v4938 = vld [vmem:[%s4888 + $0x188] sm:$0xff]
        %v4939 = vld [vmem:[%s4888 + $0x190] sm:$0xff]
        %v4940 = vld [vmem:[%s4888 + $0x198] sm:$0xff]
        %v4941 = vld [vmem:[%s4888 + $0x1a0] sm:$0xff]
        %v4942 = vld [vmem:[%s4888 + $0x1a8] sm:$0xff]
        %v4943 = vld [vmem:[%s4888 + $0x1b0] sm:$0xff]
        %v4944 = vld [vmem:[%s4888 + $0x1b8] sm:$0xff]
        %v4945 = vld [vmem:[%s4888 + $0x1c0] sm:$0xff]
        %v4946 = vld [vmem:[%s4888 + $0x1c8] sm:$0xff]
        %v4947 = vld [vmem:[%s4888 + $0x1d0] sm:$0xff]
        %v4948 = vld [vmem:[%s4888 + $0x1d8] sm:$0xff]
        %v4949 = vld [vmem:[%s4888 + $0x1e0] sm:$0xff]
        %v4950 = vld [vmem:[%s4888 + $0x1e8] sm:$0xff]
        %v4951 = vld [vmem:[%s4888 + $0x1f0] sm:$0xff]
        %v4952 = vld [vmem:[%s4888 + $0x1f8] sm:$0xff]
        %v4953 = vld [vmem:[%s4888 + $0x200] sm:$0xff]
        %v4954 = vld [vmem:[%s4888 + $0x208] sm:$0xff]
        %v4955 = vld [vmem:[%s4888 + $0x210] sm:$0xff]
        %v4956 = vld [vmem:[%s4888 + $0x218] sm:$0xff]
        %v4957 = vld [vmem:[%s4888 + $0x220] sm:$0xff]
        %v4958 = vld [vmem:[%s4888 + $0x228] sm:$0xff]
        %v4959 = vld [vmem:[%s4888 + $0x230] sm:$0xff]
        %v4960 = vld [vmem:[%s4888 + $0x238] sm:$0xff]
        %v4961 = vld [vmem:[%s4888 + $0x240] sm:$0xff]
        %v4962 = vld [vmem:[%s4888 + $0x248] sm:$0xff]
        %v4963 = vld [vmem:[%s4888 + $0x250] sm:$0xff]
        %v4964 = vld [vmem:[%s4888 + $0x258] sm:$0xff]
        %v4965 = vld [vmem:[%s4888 + $0x260] sm:$0xff]
        %v4966 = vld [vmem:[%s4888 + $0x268] sm:$0xff]
        %v4967 = vld [vmem:[%s4888 + $0x270] sm:$0xff]
        %v4968 = vld [vmem:[%s4888 + $0x278] sm:$0xff]
        %v4969 = vld [vmem:[%s4888 + $0x280] sm:$0xff]
        %v4970 = vld [vmem:[%s4888 + $0x288] sm:$0xff]
        %v4971 = vld [vmem:[%s4888 + $0x290] sm:$0xff]
        %v4972 = vld [vmem:[%s4888 + $0x298] sm:$0xff]
        %4973 = vmatprep.subr.mxu0 %v4890
        %4974 = vmatpush1.msra.mxu0 %v4889
        %4975 = vmatprep.subr.mxu0 %v4892
        %4976 = vmatpush1.msra.mxu0 %v4891
        %4977 = vmatprep.subr.mxu0 %v4894
        %4978 = vmatpush1.msra.mxu0 %v4893
        %4979 = vmatprep.subr.mxu0 %v4896
        %4980 = vmatpush1.msra.mxu0 %v4895
        %4981 = vmatprep.subr.mxu0 %v4898
        %4982 = vmatpush1.msra.mxu0 %v4897
        %4983 = vmatprep.subr.mxu0 %v4900
        %4984 = vmatpush1.msra.mxu0 %v4899
        %4985 = vmatprep.subr.mxu0 %v4902
        %4986 = vmatpush1.msra.mxu0 %v4901
        %4987 = vmatprep.subr.mxu0 %v4904
        %4988 = vmatpush1.msra.mxu0 %v4903
        %4989 = vmatprep.subr.mxu0 %v4906
        %4990 = vmatpush1.msra.mxu0 %v4905
        %4991 = vmatprep.subr.mxu0 %v4908
        %4992 = vmatpush1.msra.mxu0 %v4907
        %4993 = vmatprep.subr.mxu0 %v4910
        %4994 = vmatpush1.msra.mxu0 %v4909
        %4995 = vmatprep.subr.mxu0 %v4912
        %4996 = vmatpush1.msra.mxu0 %v4911
        %4997 = vmatprep.subr.mxu0 %v4914
        %4998 = vmatpush1.msra.mxu0 %v4913
        %4999 = vmatprep.subr.mxu0 %v4916
        %5000 = vmatpush1.msra.mxu0 %v4915
        %5001 = vmatprep.subr.mxu0 %v4918
        %5002 = vmatpush1.msra.mxu0 %v4917
        %5003 = vmatprep.subr.mxu0 %v4920
        %5004 = vmatpush1.msra.mxu0 %v4919
        %5005 = vmatprep.subr.mxu0 %v4922
        %5006 = vmatpush1.msra.mxu0 %v4921
        %5007 = vmatprep.subr.mxu0 %v4924
        %5008 = vmatpush1.msra.mxu0 %v4923
        %5009 = vmatprep.subr.mxu0 %v4926
        %5010 = vmatpush1.msra.mxu0 %v4925
        %5011 = vmatprep.subr.mxu0 %v4928
        %5012 = vmatpush1.msra.mxu0 %v4927
        %5013 = vmatprep.subr.mxu0 %v4930
        %5014 = vmatpush1.msra.mxu0 %v4929
        %5015 = vmatprep.subr.mxu0 %v4932
        %5016 = vmatpush1.msra.mxu0 %v4931
        %5017 = vmatprep.subr.mxu0 %v4934
        %5018 = vmatpush1.msra.mxu0 %v4933
        %5019 = vmatprep.subr.mxu0 %v4936
        %5020 = vmatpush1.msra.mxu0 %v4935
        %5021 = vmatprep.subr.mxu0 %v4938
        %5022 = vmatpush1.msra.mxu0 %v4937
        %5023 = vmatprep.subr.mxu0 %v4940
        %5024 = vmatpush1.msra.mxu0 %v4939
        %5025 = vmatprep.subr.mxu0 %v4942
        %5026 = vmatpush1.msra.mxu0 %v4941
        %5027 = vmatprep.subr.mxu0 %v4944
        %5028 = vmatpush1.msra.mxu0 %v4943
        %5029 = vmatprep.subr.mxu0 %v4946
        %5030 = vmatpush1.msra.mxu0 %v4945
        %5031 = vmatprep.subr.mxu0 %v4948
        %5032 = vmatpush1.msra.mxu0 %v4947
        %5033 = vmatprep.subr.mxu0 %v4950
        %5034 = vmatpush1.msra.mxu0 %v4949
        %5035 = vmatprep.subr.mxu0 %v4952
        %5036 = vmatpush1.msra.mxu0 %v4951
        %5037 = vmatprep.mubr.f32.mxu0 %v4657
        %5038 = vmatmul.mubr.f32.gmra.mrb[0].mxu0 %v4656
        %v5039 = vpop.f32.mrb[0].mxu0
        %v5040 = vadd.f32 0.0, %v5039
        %v5041 = vpop.f32.mrb[0].mxu0
        %v5042 = vadd.f32 0.0, %v5041
        %5043 = vdwg.mxu0
        %5044 = vmatprep.subr.mxu0 %v4954
        %5045 = vmatpush1.msra.mxu0 %v4953
        %5046 = vmatprep.subr.mxu0 %v4956
        %5047 = vmatpush1.msra.mxu0 %v4955
        %5048 = vmatprep.subr.mxu0 %v4958
        %5049 = vmatpush1.msra.mxu0 %v4957
        %5050 = vmatprep.subr.mxu0 %v4960
        %5051 = vmatpush1.msra.mxu0 %v4959
        %5052 = vmatprep.subr.mxu0 %v4962
        %5053 = vmatpush1.msra.mxu0 %v4961
        %5054 = vmatprep.subr.mxu0 %v4964
        %5055 = vmatpush1.msra.mxu0 %v4963
        %5056 = vmatprep.subr.mxu0 %v4966
        %5057 = vmatpush1.msra.mxu0 %v4965
        %5058 = vmatprep.subr.mxu0 %v4968
        %5059 = vmatpush1.msra.mxu0 %v4967
        %5060 = vmatprep.subr.mxu0 %v4970
        %5061 = vmatpush1.msra.mxu0 %v4969
        %5062 = vmatprep.subr.mxu0 %v4972
        %5063 = vmatpush1.msra.mxu0 %v4971
        %5064 = vmatprep.subr.mxu0 0.0
        %5065 = vmatpush1.msra.mxu0 0.0
        %5066 = vmatprep.subr.mxu0 0.0
        %5067 = vmatpush1.msra.mxu0 0.0
        %5068 = vmatprep.subr.mxu0 0.0
        %5069 = vmatpush1.msra.mxu0 0.0
        %5070 = vmatprep.subr.mxu0 0.0
        %5071 = vmatpush1.msra.mxu0 0.0
        %5072 = vmatprep.subr.mxu0 0.0
        %5073 = vmatpush1.msra.mxu0 0.0
        %5074 = vmatprep.subr.mxu0 0.0
        %5075 = vmatpush1.msra.mxu0 0.0
        %5076 = vmatprep.subr.mxu0 0.0
        %5077 = vmatpush1.msra.mxu0 0.0
        %5078 = vmatprep.subr.mxu0 0.0
        %5079 = vmatpush1.msra.mxu0 0.0
        %5080 = vmatprep.subr.mxu0 0.0
        %5081 = vmatpush1.msra.mxu0 0.0
        %5082 = vmatprep.subr.mxu0 0.0
        %5083 = vmatpush1.msra.mxu0 0.0
        %5084 = vmatprep.subr.mxu0 0.0
        %5085 = vmatpush1.msra.mxu0 0.0
        %5086 = vmatprep.subr.mxu0 0.0
        %5087 = vmatpush1.msra.mxu0 0.0
        %5088 = vmatprep.subr.mxu0 0.0
        %5089 = vmatpush1.msra.mxu0 0.0
        %5090 = vmatprep.subr.mxu0 0.0
        %5091 = vmatpush1.msra.mxu0 0.0
        %5092 = vmatprep.subr.mxu0 0.0
        %5093 = vmatpush1.msra.mxu0 0.0
        %5094 = vmatprep.subr.mxu0 0.0
        %5095 = vmatpush1.msra.mxu0 0.0
        %5096 = vmatprep.subr.mxu0 0.0
        %5097 = vmatpush1.msra.mxu0 0.0
        %5098 = vmatprep.subr.mxu0 0.0
        %5099 = vmatpush1.msra.mxu0 0.0
        %5100 = vmatprep.subr.mxu0 0.0
        %5101 = vmatpush1.msra.mxu0 0.0
        %5102 = vmatprep.subr.mxu0 0.0
        %5103 = vmatpush1.msra.mxu0 0.0
        %5104 = vmatprep.subr.mxu0 0.0
        %5105 = vmatpush1.msra.mxu0 0.0
        %5106 = vmatprep.subr.mxu0 0.0
        %5107 = vmatpush1.msra.mxu0 0.0
        %5108 = vmatprep.mubr.f32.mxu0 0.0
        %5109 = vmatmul.mubr.f32.gmra.mrb[0].mxu0 %v4744
        %v5110 = vpop.f32.mrb[0].mxu0
        %v5111 = vadd.f32 %v5040, %v5110
        %v5112 = vpop.f32.mrb[0].mxu0
        %v5113 = vadd.f32 %v5042, %v5112
        %5114 = vdwg.mxu0
        %v5115 = vmax.f32 %v4884, %v5111
        %v5116 = vmax.f32 %v4886, %v5113
        %v5119 = vcombine.low %v5115, %v5116
        %vm5121 = vcmask 1042432
        %vm5122 = vcmask 129028
        %vm5123 = vmor %vm5122, %vm5121
        %5124 = vst.msk [vmem:[#allocation4] sm:$0x77] %vm5123, %v5119
        %v5125 = vld [vmem:[%s14] sm:$0x1]
        %v5126 = vld [vmem:[#allocation4] ss:$4 sm:$0x3]
        %v5127 = vld [vmem:[%s13] sm:$0xff]
        %v5128 = vld [vmem:[%s13 + $0x8] sm:$0xff]
        %v5129 = vld [vmem:[%s13 + $0x10] sm:$0xff]
        %v5130 = vld [vmem:[%s13 + $0x18] sm:$0xff]
        %v5131 = vld [vmem:[%s13 + $0x20] sm:$0xff]
        %v5132 = vld [vmem:[%s13 + $0x28] sm:$0xff]
        %v5133 = vld [vmem:[%s13 + $0x30] sm:$0xff]
        %v5134 = vld [vmem:[%s13 + $0x38] sm:$0xff]
        %v5135 = vld [vmem:[%s13 + $0x40] sm:$0xff]
        %v5136 = vld [vmem:[%s13 + $0x48] sm:$0xff]
        %v5137 = vld [vmem:[%s13 + $0x50] sm:$0xff]
        %v5138 = vld [vmem:[%s13 + $0x58] sm:$0xff]
        %v5139 = vld [vmem:[%s13 + $0x60] sm:$0xff]
        %v5140 = vld [vmem:[%s13 + $0x68] sm:$0xff]
        %v5141 = vld [vmem:[%s13 + $0x70] sm:$0xff]
        %v5142 = vld [vmem:[%s13 + $0x78] sm:$0xff]
        %v5143 = vld [vmem:[%s13 + $0x80] sm:$0xff]
        %v5144 = vld [vmem:[%s13 + $0x88] sm:$0xff]
        %v5146 = vlaneseq
        %v5147 = vshrl.u32 %v5146, 7
        %v5148 = vsub.s32 0, %v5147
        %v5149 = vrot.slane %v5126, %v5148
        %v5150 = vlaneseq
        %v5151 = vshrl.u32 %v5150, 7
        %v5152 = vsub.s32 1, %v5151
        %v5153 = vrot.slane %v5126, %v5152
        %vm5155 = vcmask 130048
        %v5156 = vsel %vm5155, %v5153, 0
        %5158 = vmatprep.subr.mxu0 0.0
        %5159 = vmatpush1.msra.mxu0 %v5127
        %5160 = vmatprep.subr.mxu0 0.0
        %5161 = vmatpush1.msra.mxu0 %v5128
        %5162 = vmatprep.subr.mxu0 0.0
        %5163 = vmatpush1.msra.mxu0 %v5129
        %5164 = vmatprep.subr.mxu0 0.0
        %5165 = vmatpush1.msra.mxu0 %v5130
        %5166 = vmatprep.subr.mxu0 0.0
        %5167 = vmatpush1.msra.mxu0 %v5131
        %5168 = vmatprep.subr.mxu0 0.0
        %5169 = vmatpush1.msra.mxu0 %v5132
        %5170 = vmatprep.subr.mxu0 0.0
        %5171 = vmatpush1.msra.mxu0 %v5133
        %5172 = vmatprep.subr.mxu0 0.0
        %5173 = vmatpush1.msra.mxu0 %v5134
        %5174 = vmatprep.subr.mxu0 0.0
        %5175 = vmatpush1.msra.mxu0 %v5135
        %5176 = vmatprep.subr.mxu0 0.0
        %5177 = vmatpush1.msra.mxu0 %v5136
        %5178 = vmatprep.subr.mxu0 0.0
        %5179 = vmatpush1.msra.mxu0 %v5137
        %5180 = vmatprep.subr.mxu0 0.0
        %5181 = vmatpush1.msra.mxu0 %v5138
        %5182 = vmatprep.subr.mxu0 0.0
        %5183 = vmatpush1.msra.mxu0 %v5139
        %5184 = vmatprep.subr.mxu0 0.0
        %5185 = vmatpush1.msra.mxu0 %v5140
        %5186 = vmatprep.subr.mxu0 0.0
        %5187 = vmatpush1.msra.mxu0 %v5141
        %5188 = vmatprep.subr.mxu0 0.0
        %5189 = vmatpush1.msra.mxu0 %v5142
        %5190 = vmatprep.subr.mxu0 0.0
        %5191 = vmatpush1.msra.mxu0 %v5143
        %5192 = vmatprep.subr.mxu0 0.0
        %5193 = vmatpush1.msra.mxu0 %v5144
        %5194 = vmatprep.subr.mxu0 0.0
        %5195 = vmatpush1.msra.mxu0 0.0
        %5196 = vmatprep.subr.mxu0 0.0
        %5197 = vmatpush1.msra.mxu0 0.0
        %5198 = vmatprep.subr.mxu0 0.0
        %5199 = vmatpush1.msra.mxu0 0.0
        %5200 = vmatprep.subr.mxu0 0.0
        %5201 = vmatpush1.msra.mxu0 0.0
        %5202 = vmatprep.subr.mxu0 0.0
        %5203 = vmatpush1.msra.mxu0 0.0
        %5204 = vmatprep.subr.mxu0 0.0
        %5205 = vmatpush1.msra.mxu0 0.0
        %5206 = vmatprep.subr.mxu0 0.0
        %5207 = vmatpush1.msra.mxu0 0.0
        %5208 = vmatprep.subr.mxu0 0.0
        %5209 = vmatpush1.msra.mxu0 0.0
        %5210 = vmatprep.subr.mxu0 0.0
        %5211 = vmatpush1.msra.mxu0 0.0
        %5212 = vmatprep.subr.mxu0 0.0
        %5213 = vmatpush1.msra.mxu0 0.0
        %5214 = vmatprep.subr.mxu0 0.0
        %5215 = vmatpush1.msra.mxu0 0.0
        %5216 = vmatprep.subr.mxu0 0.0
        %5217 = vmatpush1.msra.mxu0 0.0
        %5218 = vmatprep.subr.mxu0 0.0
        %5219 = vmatpush1.msra.mxu0 0.0
        %5220 = vmatprep.subr.mxu0 0.0
        %5221 = vmatpush1.msra.mxu0 0.0
        %5222 = vmatprep.mubr.f32.mxu0 %v5156
        %5223 = vmatmul.mubr.f32.gmra.mrb[0].mxu0 %v5149
        %v5224 = vpop.f32.mrb[0].mxu0
        %v5225 = vadd.f32 0.0, %v5224
        %v5226 = vpop.f32.mrb[0].mxu0
        %5227 = vdwg.mxu0
        %v5228 = vadd.f32 %v5125, %v5225
        %s5229 = scalar_lea.vmem [#allocation4], 1
        %v5230 = vld [vmem:[%s5229] ss:$4 sm:$0x3]
        %s5231 = scalar_lea.vmem %s13, 144
        %v5232 = vld [vmem:[%s5231] sm:$0xff]
        %v5233 = vld [vmem:[%s5231 + $0x8] sm:$0xff]
        %v5234 = vld [vmem:[%s5231 + $0x10] sm:$0xff]
        %v5235 = vld [vmem:[%s5231 + $0x18] sm:$0xff]
        %v5236 = vld [vmem:[%s5231 + $0x20] sm:$0xff]
        %v5237 = vld [vmem:[%s5231 + $0x28] sm:$0xff]
        %v5238 = vld [vmem:[%s5231 + $0x30] sm:$0xff]
        %v5239 = vld [vmem:[%s5231 + $0x38] sm:$0xff]
        %v5240 = vld [vmem:[%s5231 + $0x40] sm:$0xff]
        %v5241 = vld [vmem:[%s5231 + $0x48] sm:$0xff]
        %v5242 = vld [vmem:[%s5231 + $0x50] sm:$0xff]
        %v5243 = vld [vmem:[%s5231 + $0x58] sm:$0xff]
        %v5244 = vld [vmem:[%s5231 + $0x60] sm:$0xff]
        %v5245 = vld [vmem:[%s5231 + $0x68] sm:$0xff]
        %v5246 = vld [vmem:[%s5231 + $0x70] sm:$0xff]
        %v5247 = vld [vmem:[%s5231 + $0x78] sm:$0xff]
        %v5248 = vld [vmem:[%s5231 + $0x80] sm:$0xff]
        %v5249 = vld [vmem:[%s5231 + $0x88] sm:$0xff]
        %v5251 = vlaneseq
        %v5252 = vshrl.u32 %v5251, 7
        %v5253 = vsub.s32 0, %v5252
        %v5254 = vrot.slane %v5230, %v5253
        %v5255 = vlaneseq
        %v5256 = vshrl.u32 %v5255, 7
        %v5257 = vsub.s32 1, %v5256
        %v5258 = vrot.slane %v5230, %v5257
        %v5260 = vsel %vm5155, %v5258, 0
        %5262 = vmatprep.subr.mxu0 0.0
        %5263 = vmatpush1.msra.mxu0 %v5232
        %5264 = vmatprep.subr.mxu0 0.0
        %5265 = vmatpush1.msra.mxu0 %v5233
        %5266 = vmatprep.subr.mxu0 0.0
        %5267 = vmatpush1.msra.mxu0 %v5234
        %5268 = vmatprep.subr.mxu0 0.0
        %5269 = vmatpush1.msra.mxu0 %v5235
        %5270 = vmatprep.subr.mxu0 0.0
        %5271 = vmatpush1.msra.mxu0 %v5236
        %5272 = vmatprep.subr.mxu0 0.0
        %5273 = vmatpush1.msra.mxu0 %v5237
        %5274 = vmatprep.subr.mxu0 0.0
        %5275 = vmatpush1.msra.mxu0 %v5238
        %5276 = vmatprep.subr.mxu0 0.0
        %5277 = vmatpush1.msra.mxu0 %v5239
        %5278 = vmatprep.subr.mxu0 0.0
        %5279 = vmatpush1.msra.mxu0 %v5240
        %5280 = vmatprep.subr.mxu0 0.0
        %5281 = vmatpush1.msra.mxu0 %v5241
        %5282 = vmatprep.subr.mxu0 0.0
        %5283 = vmatpush1.msra.mxu0 %v5242
        %5284 = vmatprep.subr.mxu0 0.0
        %5285 = vmatpush1.msra.mxu0 %v5243
        %5286 = vmatprep.subr.mxu0 0.0
        %5287 = vmatpush1.msra.mxu0 %v5244
        %5288 = vmatprep.subr.mxu0 0.0
        %5289 = vmatpush1.msra.mxu0 %v5245
        %5290 = vmatprep.subr.mxu0 0.0
        %5291 = vmatpush1.msra.mxu0 %v5246
        %5292 = vmatprep.subr.mxu0 0.0
        %5293 = vmatpush1.msra.mxu0 %v5247
        %5294 = vmatprep.subr.mxu0 0.0
        %5295 = vmatpush1.msra.mxu0 %v5248
        %5296 = vmatprep.subr.mxu0 0.0
        %5297 = vmatpush1.msra.mxu0 %v5249
        %5298 = vmatprep.subr.mxu0 0.0
        %5299 = vmatpush1.msra.mxu0 0.0
        %5300 = vmatprep.subr.mxu0 0.0
        %5301 = vmatpush1.msra.mxu0 0.0
        %5302 = vmatprep.subr.mxu0 0.0
        %5303 = vmatpush1.msra.mxu0 0.0
        %5304 = vmatprep.subr.mxu0 0.0
        %5305 = vmatpush1.msra.mxu0 0.0
        %5306 = vmatprep.subr.mxu0 0.0
        %5307 = vmatpush1.msra.mxu0 0.0
        %5308 = vmatprep.subr.mxu0 0.0
        %5309 = vmatpush1.msra.mxu0 0.0
        %5310 = vmatprep.subr.mxu0 0.0
        %5311 = vmatpush1.msra.mxu0 0.0
        %5312 = vmatprep.subr.mxu0 0.0
        %5313 = vmatpush1.msra.mxu0 0.0
        %5314 = vmatprep.subr.mxu0 0.0
        %5315 = vmatpush1.msra.mxu0 0.0
        %5316 = vmatprep.subr.mxu0 0.0
        %5317 = vmatpush1.msra.mxu0 0.0
        %5318 = vmatprep.subr.mxu0 0.0
        %5319 = vmatpush1.msra.mxu0 0.0
        %5320 = vmatprep.subr.mxu0 0.0
        %5321 = vmatpush1.msra.mxu0 0.0
        %5322 = vmatprep.subr.mxu0 0.0
        %5323 = vmatpush1.msra.mxu0 0.0
        %5324 = vmatprep.subr.mxu0 0.0
        %5325 = vmatpush1.msra.mxu0 0.0
        %5326 = vmatprep.mubr.f32.mxu0 %v5260
        %5327 = vmatmul.mubr.f32.gmra.mrb[0].mxu0 %v5254
        %v5328 = vpop.f32.mrb[0].mxu0
        %v5329 = vadd.f32 0.0, %v5328
        %v5330 = vpop.f32.mrb[0].mxu0
        %5331 = vdwg.mxu0
        %v5332 = vadd.f32 %v5228, %v5329
        %s5333 = scalar_lea.vmem [#allocation4], 2
        %v5334 = vld [vmem:[%s5333] ss:$4 sm:$0x3]
        %s5335 = scalar_lea.vmem %s13, 288
        %v5336 = vld [vmem:[%s5335] sm:$0xff]
        %v5337 = vld [vmem:[%s5335 + $0x8] sm:$0xff]
        %v5338 = vld [vmem:[%s5335 + $0x10] sm:$0xff]
        %v5339 = vld [vmem:[%s5335 + $0x18] sm:$0xff]
        %v5340 = vld [vmem:[%s5335 + $0x20] sm:$0xff]
        %v5341 = vld [vmem:[%s5335 + $0x28] sm:$0xff]
        %v5342 = vld [vmem:[%s5335 + $0x30] sm:$0xff]
        %v5343 = vld [vmem:[%s5335 + $0x38] sm:$0xff]
        %v5344 = vld [vmem:[%s5335 + $0x40] sm:$0xff]
        %v5345 = vld [vmem:[%s5335 + $0x48] sm:$0xff]
        %v5346 = vld [vmem:[%s5335 + $0x50] sm:$0xff]
        %v5347 = vld [vmem:[%s5335 + $0x58] sm:$0xff]
        %v5348 = vld [vmem:[%s5335 + $0x60] sm:$0xff]
        %v5349 = vld [vmem:[%s5335 + $0x68] sm:$0xff]
        %v5350 = vld [vmem:[%s5335 + $0x70] sm:$0xff]
        %v5351 = vld [vmem:[%s5335 + $0x78] sm:$0xff]
        %v5352 = vld [vmem:[%s5335 + $0x80] sm:$0xff]
        %v5353 = vld [vmem:[%s5335 + $0x88] sm:$0xff]
        %v5355 = vlaneseq
        %v5356 = vshrl.u32 %v5355, 7
        %v5357 = vsub.s32 0, %v5356
        %v5358 = vrot.slane %v5334, %v5357
        %v5359 = vlaneseq
        %v5360 = vshrl.u32 %v5359, 7
        %v5361 = vsub.s32 1, %v5360
        %v5362 = vrot.slane %v5334, %v5361
        %v5364 = vsel %vm5155, %v5362, 0
        %5366 = vmatprep.subr.mxu0 0.0
        %5367 = vmatpush1.msra.mxu0 %v5336
        %5368 = vmatprep.subr.mxu0 0.0
        %5369 = vmatpush1.msra.mxu0 %v5337
        %5370 = vmatprep.subr.mxu0 0.0
        %5371 = vmatpush1.msra.mxu0 %v5338
        %5372 = vmatprep.subr.mxu0 0.0
        %5373 = vmatpush1.msra.mxu0 %v5339
        %5374 = vmatprep.subr.mxu0 0.0
        %5375 = vmatpush1.msra.mxu0 %v5340
        %5376 = vmatprep.subr.mxu0 0.0
        %5377 = vmatpush1.msra.mxu0 %v5341
        %5378 = vmatprep.subr.mxu0 0.0
        %5379 = vmatpush1.msra.mxu0 %v5342
        %5380 = vmatprep.subr.mxu0 0.0
        %5381 = vmatpush1.msra.mxu0 %v5343
        %5382 = vmatprep.subr.mxu0 0.0
        %5383 = vmatpush1.msra.mxu0 %v5344
        %5384 = vmatprep.subr.mxu0 0.0
        %5385 = vmatpush1.msra.mxu0 %v5345
        %5386 = vmatprep.subr.mxu0 0.0
        %5387 = vmatpush1.msra.mxu0 %v5346
        %5388 = vmatprep.subr.mxu0 0.0
        %5389 = vmatpush1.msra.mxu0 %v5347
        %5390 = vmatprep.subr.mxu0 0.0
        %5391 = vmatpush1.msra.mxu0 %v5348
        %5392 = vmatprep.subr.mxu0 0.0
        %5393 = vmatpush1.msra.mxu0 %v5349
        %5394 = vmatprep.subr.mxu0 0.0
        %5395 = vmatpush1.msra.mxu0 %v5350
        %5396 = vmatprep.subr.mxu0 0.0
        %5397 = vmatpush1.msra.mxu0 %v5351
        %5398 = vmatprep.subr.mxu0 0.0
        %5399 = vmatpush1.msra.mxu0 %v5352
        %5400 = vmatprep.subr.mxu0 0.0
        %5401 = vmatpush1.msra.mxu0 %v5353
        %5402 = vmatprep.subr.mxu0 0.0
        %5403 = vmatpush1.msra.mxu0 0.0
        %5404 = vmatprep.subr.mxu0 0.0
        %5405 = vmatpush1.msra.mxu0 0.0
        %5406 = vmatprep.subr.mxu0 0.0
        %5407 = vmatpush1.msra.mxu0 0.0
        %5408 = vmatprep.subr.mxu0 0.0
        %5409 = vmatpush1.msra.mxu0 0.0
        %5410 = vmatprep.subr.mxu0 0.0
        %5411 = vmatpush1.msra.mxu0 0.0
        %5412 = vmatprep.subr.mxu0 0.0
        %5413 = vmatpush1.msra.mxu0 0.0
        %5414 = vmatprep.subr.mxu0 0.0
        %5415 = vmatpush1.msra.mxu0 0.0
        %5416 = vmatprep.subr.mxu0 0.0
        %5417 = vmatpush1.msra.mxu0 0.0
        %5418 = vmatprep.subr.mxu0 0.0
        %5419 = vmatpush1.msra.mxu0 0.0
        %5420 = vmatprep.subr.mxu0 0.0
        %5421 = vmatpush1.msra.mxu0 0.0
        %5422 = vmatprep.subr.mxu0 0.0
        %5423 = vmatpush1.msra.mxu0 0.0
        %5424 = vmatprep.subr.mxu0 0.0
        %5425 = vmatpush1.msra.mxu0 0.0
        %5426 = vmatprep.subr.mxu0 0.0
        %5427 = vmatpush1.msra.mxu0 0.0
        %5428 = vmatprep.subr.mxu0 0.0
        %5429 = vmatpush1.msra.mxu0 0.0
        %5430 = vmatprep.mubr.f32.mxu0 %v5364
        %5431 = vmatmul.mubr.f32.gmra.mrb[0].mxu0 %v5358
        %v5432 = vpop.f32.mrb[0].mxu0
        %v5433 = vadd.f32 0.0, %v5432
        %v5434 = vpop.f32.mrb[0].mxu0
        %5435 = vdwg.mxu0
        %v5436 = vadd.f32 %v5332, %v5433
        %v5437 = vmul.f32 %v5436, %v5436
        %vm5438 = vcmask 8192
        %v5439 = vsel %vm5438, %v5437, 0.0
        %5440 = vadd.xlane.f32.xlu0 %v5439
        %v5441 = vpop.xlane.xlu0 %5440
        %v5442 = vmax.f32 %v5441, 1e-24
        %v5443 = vrsqrt.pop %v5442
        %v5444 = vmul.f32 %v5436, %v5443
        %v5445 = vld [vmem:[%s15] sm:$0x3]
        %vm5446 = vcmask 15360
        %v5448 = vsel %vm5446, %v5444, 0
        %vm5450 = vcmask 1041408
        %v5452 = vsel %vm5450, %v5445, 0
        %5454 = vmatprep.subr.mxu0 0.0
        %5455 = vmatpush1.msra.mxu0 %v5452
        %5456 = vmatprep.subr.mxu0 0.0
        %5457 = vmatpush1.msra.mxu0 0.0
        %5458 = vmatprep.subr.mxu0 0.0
        %5459 = vmatpush1.msra.mxu0 0.0
        %5460 = vmatprep.subr.mxu0 0.0
        %5461 = vmatpush1.msra.mxu0 0.0
        %5462 = vmatprep.subr.mxu0 0.0
        %5463 = vmatpush1.msra.mxu0 0.0
        %5464 = vmatprep.subr.mxu0 0.0
        %5465 = vmatpush1.msra.mxu0 0.0
        %5466 = vmatprep.subr.mxu0 0.0
        %5467 = vmatpush1.msra.mxu0 0.0
        %5468 = vmatprep.subr.mxu0 0.0
        %5469 = vmatpush1.msra.mxu0 0.0
        %5470 = vmatprep.subr.mxu0 0.0
        %5471 = vmatpush1.msra.mxu0 0.0
        %5472 = vmatprep.subr.mxu0 0.0
        %5473 = vmatpush1.msra.mxu0 0.0
        %5474 = vmatprep.subr.mxu0 0.0
        %5475 = vmatpush1.msra.mxu0 0.0
        %5476 = vmatprep.subr.mxu0 0.0
        %5477 = vmatpush1.msra.mxu0 0.0
        %5478 = vmatprep.subr.mxu0 0.0
        %5479 = vmatpush1.msra.mxu0 0.0
        %5480 = vmatprep.subr.mxu0 0.0
        %5481 = vmatpush1.msra.mxu0 0.0
        %5482 = vmatprep.subr.mxu0 0.0
        %5483 = vmatpush1.msra.mxu0 0.0
        %5484 = vmatprep.subr.mxu0 0.0
        %5485 = vmatpush1.msra.mxu0 0.0
        %5486 = vmatprep.subr.mxu0 0.0
        %5487 = vmatpush1.msra.mxu0 0.0
        %5488 = vmatprep.subr.mxu0 0.0
        %5489 = vmatpush1.msra.mxu0 0.0
        %5490 = vmatprep.subr.mxu0 0.0
        %5491 = vmatpush1.msra.mxu0 0.0
        %5492 = vmatprep.subr.mxu0 0.0
        %5493 = vmatpush1.msra.mxu0 0.0
        %5494 = vmatprep.subr.mxu0 0.0
        %5495 = vmatpush1.msra.mxu0 0.0
        %5496 = vmatprep.subr.mxu0 0.0
        %5497 = vmatpush1.msra.mxu0 0.0
        %5498 = vmatprep.subr.mxu0 0.0
        %5499 = vmatpush1.msra.mxu0 0.0
        %5500 = vmatprep.subr.mxu0 0.0
        %5501 = vmatpush1.msra.mxu0 0.0
        %5502 = vmatprep.subr.mxu0 0.0
        %5503 = vmatpush1.msra.mxu0 0.0
        %5504 = vmatprep.subr.mxu0 0.0
        %5505 = vmatpush1.msra.mxu0 0.0
        %5506 = vmatprep.subr.mxu0 0.0
        %5507 = vmatpush1.msra.mxu0 0.0
        %5508 = vmatprep.subr.mxu0 0.0
        %5509 = vmatpush1.msra.mxu0 0.0
        %5510 = vmatprep.subr.mxu0 0.0
        %5511 = vmatpush1.msra.mxu0 0.0
        %5512 = vmatprep.subr.mxu0 0.0
        %5513 = vmatpush1.msra.mxu0 0.0
        %5514 = vmatprep.subr.mxu0 0.0
        %5515 = vmatpush1.msra.mxu0 0.0
        %5516 = vmatprep.subr.mxu0 0.0
        %5517 = vmatpush1.msra.mxu0 0.0
        %5518 = vmatprep.mubr.f32.mxu0 0.0
        %5519 = vmatmul.mubr.f32.gmra.mrb[0].mxu0 %v5448
        %v5520 = vpop.f32.mrb[0].mxu0
        %v5521 = vadd.f32 0.0, %v5520
        %v5522 = vpop.f32.mrb[0].mxu0
        %5523 = vdwg.mxu0
        %vm5524 = vcmask 73728
        %5525 = vst.msk [vmem:[%s513] sm:$0x1] %vm5524, %v5521
        %s5526 = sand.u32 %s379, 1
        %s5527 = scalar_lea.sflag [#allocation6], %s5526
        %s5528 = sand.u32 %s379, 1
        %s5529 = scalar_lea.vmem [#allocation5], %s5528
        // Predicated region
        $region85: #{model_forward.1} parent=83 // pred_check
          %p5530 = pneg %p389
        $region86: #{model_forward.1} parent=83 // pred_check_branch
          %5532 = sbr.rel (%p5530) target = $region88
        $region87: #{model_forward.1} parent=83 // pred_region
          %s5534 = ssub.s32 16, 16
          %5535 = vsyncadd %s5527, %s5534
          %s5536 = smul.addr %s30, 16
          %s5537 = scalar_lea.hbm %s16, %s5536
          %s5539 = sshll.u32 %s5529, 4
          %s5540 = int_to_ptr.vmem [resolvable:$true] %s5539
          %5542 = dma.vmem_to_hbm [thread:$0]  %s5540, 16, %s5537, %s5527
        $region88: #{model_forward.1} parent=83 // pred_fallthru
          _
      $region84: #{model_forward.1} parent=5 // pred_fallthru
        _
      %p5543 = scmp.le.s32.totalorder 2, %s25
      // Predicated region
      $region89: #{model_forward.1} parent=5 // pred_check
        %p5544 = pneg %p5543
      $region90: #{model_forward.1} parent=5 // pred_check_branch
        %5546 = sbr.rel (%p5544) target = $region92
      $region91: #{model_forward.1} parent=5 // pred_region
        %s5547 = ssub.s32 %s25, 2
        // Predicated region
        $region93: #{model_forward.1} parent=91 // pred_check
          %p5548 = pneg %p395
        $region94: #{model_forward.1} parent=91 // pred_check_branch
          %5550 = sbr.rel (%p5548) target = $region96
        $region95: #{model_forward.1} parent=91 // pred_region
          %s5551 = sand.u32 %s380, 1
          %s5552 = scalar_lea.sflag [#allocation6], %s5551
          %s5553 = sand.u32 %s380, 1
          %s5554 = scalar_lea.vmem [#allocation5], %s5553
          %5555 = dma.done %s5552, 16
        $region96: #{model_forward.1} parent=91 // pred_fallthru
          _
      $region92: #{model_forward.1} parent=5 // pred_fallthru
        _
    $region6: #{model_forward.1} parent=1 // loop_footer
      %s29 = sadd.s32 1, %s25
    $region7: #{model_forward.1} parent=1 // loop_footer_branch
      %24 = sbr.rel target = $region3
    $region8: #{model_forward.1} parent=1 // loop_exit
      _
    %5556 = vsyncpa [#allocation6], 1
    %s5557 = scalar_lea.sflag [#allocation6], 1
    %5558 = vsyncpa %s5557, 1

</llo_original>
